<compile_context>
chip_gen: v7x
topology: tpu7x:2x2x1
jax: 0.10.0
libtpu: 0.0.40
codegen_flags: <defaults>
</compile_context>

<pallas_src>
import functools

import jax
import jax.numpy as jnp
import numpy as np
from jax.experimental import pallas as pl
from jax.experimental.pallas import tpu as pltpu

LN_EPS = 1e-5             # PyTorch nn.LayerNorm default
_INV_SQRT2 = 0.7071067811865476


def _ln_normalize(t):
    """(x - mean) * rsqrt(var + eps) over the last axis (affine applied by caller)."""
    mu = jnp.mean(t, axis=-1, keepdims=True)
    var = jnp.mean((t - mu) ** 2, axis=-1, keepdims=True)
    return (t - mu) * jax.lax.rsqrt(var + LN_EPS)


def _gelu_exact(x):
    # nn.GELU() default = exact erf-based GELU
    return 0.5 * x * (1.0 + jax.lax.erf(x * _INV_SQRT2))


# ---------------------------------------------------------------------------
# Pallas kernel: one full TransformerBlock (pos-emb + self-attn + cross-attn
# + FeedForward, all residual) for the WHOLE batch in one grid step.
# ---------------------------------------------------------------------------
def resampler_block_kernel(
    x_ref,       # (B, N, F)  latent tokens
    ctx_ref,     # (B, M, F)  context tokens (already pos-embedded)
    pos_ref,     # (N, F)     block positional embedding rows
    sa_ng_ref, sa_nb_ref, sa_cg_ref, sa_cb_ref,        # self-attn norms, (1, F)
    sa_wq_ref, sa_wk_ref, sa_wv_ref,                   # (H, F, d)
    sa_wo_ref,                                         # (H, d, F)
    ca_ng_ref, ca_nb_ref, ca_cg_ref, ca_cb_ref,        # cross-attn norms, (1, F)
    ca_wq_ref, ca_wk_ref, ca_wv_ref,                   # (H, F, d)
    ca_wo_ref,                                         # (H, d, F)
    w1_ref, b1_ref,                                    # (F, F*mult), (1, F*mult)
    w2_ref, b2_ref,                                    # (F*mult, F), (1, F)
    out_ref,     # (B, N, F)
    *, num_heads, head_features,
):
    B, N, F = x_ref.shape
    M = ctx_ref.shape[1]
    H, d = num_heads, head_features
    scale = d ** -0.5

    # positional embedding + fold batch into rows (pure leading-dim reshapes)
    x2 = (x_ref[...] + pos_ref[...]).reshape(B * N, F)     # (B*N, F)
    c2 = ctx_ref[...].reshape(B * M, F)                    # (B*M, F)

    def mha(q_rows, kv_rows, n_q, n_kv, wq_s, wk_s, wv_s, wo_s):
        """Multi-head attention; q_rows/kv_rows are pre-normalized (B*n, F)."""
        acc = jnp.zeros((B * n_q, F), jnp.float32)
        for h in range(H):  # unrolled at trace time; d=8 matmuls are tiny either way
            qh = jnp.dot(q_rows, wq_s[h], preferred_element_type=jnp.float32)
            kh = jnp.dot(kv_rows, wk_s[h], preferred_element_type=jnp.float32)
            vh = jnp.dot(kv_rows, wv_s[h], preferred_element_type=jnp.float32)
            qh = qh.reshape(B, n_q, d)
            kh = kh.reshape(B, n_kv, d)
            vh = vh.reshape(B, n_kv, d)
            # scores contract last axes directly (no transpose / relayout)
            sim = jnp.einsum("bnd,bmd->bnm", qh, kh,
                             preferred_element_type=jnp.float32) * scale
            sim = sim - jnp.max(sim, axis=-1, keepdims=True)
            prob = jnp.exp(sim)
            prob = prob * pl.reciprocal(
                jnp.sum(prob, axis=-1, keepdims=True), approx=True)
            oh = jnp.einsum("bnm,bmd->bnd", prob, vh,
                            preferred_element_type=jnp.float32)
            # fuse the head-concat + output projection: accumulate o_h @ Wout_h
            acc = acc + jnp.dot(oh.reshape(B * n_q, d), wo_s[h],
                                preferred_element_type=jnp.float32)
        return acc

    # ---- self-attention: norm and norm_context both act on x -> shared stats ----
    xhat = _ln_normalize(x2)
    xq = xhat * sa_ng_ref[...] + sa_nb_ref[...]
    xc = xhat * sa_cg_ref[...] + sa_cb_ref[...]
    x2 = x2 + mha(xq, xc, N, N,
                  sa_wq_ref[...], sa_wk_ref[...], sa_wv_ref[...], sa_wo_ref[...])

    # ---- cross-attention: query norm on updated x, context norm on ctx ----
    xq2 = _ln_normalize(x2) * ca_ng_ref[...] + ca_nb_ref[...]
    cc = _ln_normalize(c2) * ca_cg_ref[...] + ca_cb_ref[...]
    x2 = x2 + mha(xq2, cc, N, M,
                  ca_wq_ref[...], ca_wk_ref[...], ca_wv_ref[...], ca_wo_ref[...])

    # ---- FeedForward: Linear -> GELU -> Linear, + residual ----
    hmid = _gelu_exact(
        jnp.dot(x2, w1_ref[...], preferred_element_type=jnp.float32) + b1_ref[...])
    x2 = x2 + jnp.dot(hmid, w2_ref[...], preferred_element_type=jnp.float32) + b2_ref[...]

    out_ref[...] = x2.reshape(B, N, F)


# ---------------------------------------------------------------------------
# Wrappers
# ---------------------------------------------------------------------------
def _stack_heads_in(w, H, d):
    # (F, H*d) -> (H, F, d) ; wrapper-side, free at trace time
    F = w.shape[0]
    return jnp.transpose(w.reshape(F, H, d), (1, 0, 2))


def _stack_heads_out(w, H, d):
    # (H*d, F) -> (H, d, F)
    F = w.shape[1]
    return w.reshape(H, d, F)


def resampler_block(x, ctx, bp, *, num_heads, head_features):
    B, N, F = x.shape
    M = ctx.shape[1]
    H, d = num_heads, head_features
    mid = H * d

    def attn_inputs(a):
        wk = a["wkv"][:, :mid]          # pre-split kv projection (review item)
        wv = a["wkv"][:, mid:]
        return (
            a["norm_g"], a["norm_b"], a["normc_g"], a["normc_b"],
            _stack_heads_in(a["wq"], H, d),
            _stack_heads_in(wk, H, d),
            _stack_heads_in(wv, H, d),
            _stack_heads_out(a["wout"], H, d),
        )

    inputs = (
        x, ctx, bp["pos_table"][:N],
        *attn_inputs(bp["self_attn"]),
        *attn_inputs(bp["cross_attn"]),
        bp["w1"], bp["b1"], bp["w2"], bp["b2"],
    )

    kernel = functools.partial(
        resampler_block_kernel, num_heads=H, head_features=d)

    def full_spec(a):
        n = a.ndim
        return pl.BlockSpec(a.shape, lambda i, _n=n: (0,) * _n)

    return pl.pallas_call(
        kernel,
        out_shape=jax.ShapeDtypeStruct((B, N, F), jnp.float32),
        grid=(1,),                       # single step: whole batch per invocation
        in_specs=[full_spec(a) for a in inputs],
        out_specs=pl.BlockSpec((B, N, F), lambda i: (0, 0, 0)),
        compiler_params=pltpu.CompilerParams(
            dimension_semantics=("arbitrary",)),
    )(*inputs)


def resampler_forward(context, params, *, num_heads, head_features):
    """Resampler.forward (use_random=False, no masks)."""
    B, M, F = context.shape
    # context positional embedding (one tiny elementwise add, wrapper side)
    ctx = context + params["ctx_pos_table"][:M][None]
    # repeat the learned latent embedding over the batch
    N = params["embedding"].shape[0]
    x = jnp.broadcast_to(params["embedding"][None], (B, N, F))
    for bp in params["blocks"]:
        x = resampler_block(x, ctx, bp,
                            num_heads=num_heads, head_features=head_features)
    return x


# ---------------------------------------------------------------------------
# Pure-JAX reference (mirrors the PyTorch Resampler forward) for verification.
# Uses the original (unstacked) weight layout so it also checks the wrapper's
# per-head weight restructuring.
# ---------------------------------------------------------------------------
def _ref_attention(x, context, a, *, num_heads, head_features):
    B, Nq, F = x.shape
    H, d = num_heads, head_features
    mid = H * d
    xn = _ln_normalize(x) * a["norm_g"] + a["norm_b"]
    cn = _ln_normalize(context) * a["normc_g"] + a["normc_b"]
    q = xn @ a["wq"]
    kv = cn @ a["wkv"]
    k, v = kv[..., :mid], kv[..., mid:]

    def split(t):
        b, n, _ = t.shape
        return t.reshape(b, n, H, d).transpose(0, 2, 1, 3)

    q, k, v = split(q), split(k), split(v)
    sim = jnp.einsum("bhnd,bhmd->bhnm", q, k) * (d ** -0.5)
    attn = jax.nn.softmax(sim.astype(jnp.float32), axis=-1)
    o = jnp.einsum("bhnm,bhmd->bhnd", attn, v)
    o = o.transpose(0, 2, 1, 3).reshape(B, Nq, mid)
    return o @ a["wout"]


def _ref_block(x, ctx, bp, *, num_heads, head_features):
    x = x + bp["pos_table"][: x.shape[1]][None]
    x = _ref_attention(x, x, bp["self_attn"],
                       num_heads=num_heads, head_features=head_features) + x
    x = _ref_attention(x, ctx, bp["cross_attn"],
                       num_heads=num_heads, head_features=head_features) + x
    h = _gelu_exact(x @ bp["w1"] + bp["b1"])
    return (h @ bp["w2"] + bp["b2"]) + x


def reference_resampler(context, params, *, num_heads, head_features):
    B, M, F = context.shape
    ctx = context + params["ctx_pos_table"][:M][None]
    N = params["embedding"].shape[0]
    x = jnp.broadcast_to(params["embedding"][None], (B, N, F))
    for bp in params["blocks"]:
        x = _ref_block(x, ctx, bp,
                       num_heads=num_heads, head_features=head_features)
    return x


# ---------------------------------------------------------------------------
# Deterministic parameter init (PyTorch-like layouts)
# ---------------------------------------------------------------------------
def init_attention_params(key, features, mid):
    ks = jax.random.split(key, 7)
    s = 0.02
    return dict(
        norm_g=1.0 + 0.1 * jax.random.normal(ks[0], (1, features), jnp.float32),
        norm_b=0.1 * jax.random.normal(ks[1], (1, features), jnp.float32),
        normc_g=1.0 + 0.1 * jax.random.normal(ks[2], (1, features), jnp.float32),
        normc_b=0.1 * jax.random.normal(ks[3], (1, features), jnp.float32),
        wq=s * jax.random.normal(ks[4], (features, mid), jnp.float32),
        wkv=s * jax.random.normal(ks[5], (features, 2 * mid), jnp.float32),
        wout=s * jax.random.normal(ks[6], (mid, features), jnp.float32),
    )


def init_block_params(key, *, features, num_heads, head_features, multiplier, max_length):
    mid = num_heads * head_features
    ffd = features * multiplier
    ks = jax.random.split(key, 7)
    s = 0.02
    return dict(
        pos_table=s * jax.random.normal(ks[0], (max_length, features), jnp.float32),
        self_attn=init_attention_params(ks[1], features, mid),
        cross_attn=init_attention_params(ks[2], features, mid),
        w1=s * jax.random.normal(ks[3], (features, ffd), jnp.float32),
        b1=s * jax.random.normal(ks[4], (1, ffd), jnp.float32),
        w2=s * jax.random.normal(ks[5], (ffd, features), jnp.float32),
        b2=s * jax.random.normal(ks[6], (1, features), jnp.float32),
    )


def init_resampler_params(key, *, features, in_tokens, out_tokens, num_layers,
                          num_heads, head_features, multiplier):
    ks = jax.random.split(key, num_layers + 2)
    return dict(
        embedding=jax.random.normal(ks[0], (out_tokens, features), jnp.float32),
        ctx_pos_table=0.02 * jax.random.normal(ks[1], (in_tokens, features), jnp.float32),
        blocks=[
            init_block_params(
                ks[2 + i], features=features, num_heads=num_heads,
                head_features=head_features, multiplier=multiplier,
                max_length=out_tokens)
            for i in range(num_layers)
        ],
    )


if __name__ == "__main__":
    # Resampler(features=32, in_tokens=16, out_tokens=8, num_layers=2,
    #           head_features=8, num_heads=4, multiplier=2)
    # defaults: causal=False, use_cross_attention=True, use_positional_embedding=True,
    #           use_random=False, no masks.
    B, F = 2, 32
    num_heads, head_features, multiplier = 4, 8, 2
    num_layers = 2
    in_tokens, out_tokens = 16, 8

    root = jax.random.PRNGKey(0)
    pkey, ckey = jax.random.split(root)

    params = init_resampler_params(
        pkey, features=F, in_tokens=in_tokens, out_tokens=out_tokens,
        num_layers=num_layers, num_heads=num_heads,
        head_features=head_features, multiplier=multiplier)
    context = jax.random.normal(ckey, (B, in_tokens, F), jnp.float32)

    out = resampler_forward(context, params,
                            num_heads=num_heads, head_features=head_features)
    out = jax.block_until_ready(out)

    ref = reference_resampler(context, params,
                              num_heads=num_heads, head_features=head_features)
    # Tolerance relaxed slightly (2e-3) solely because the kernel uses the EUP
    # approximate reciprocal for the softmax denominator; all other math is f32.
    np.testing.assert_allclose(np.asarray(out), np.asarray(ref), rtol=2e-3, atol=2e-3)

    print("KERNEL_OK")
</pallas_src>

<mosaic_0001>
module attributes {stable_mosaic.version = 11 : i64} {
  func.func @resampler_block_kernel(%arg0: i32, %arg1: memref<2x8x32xf32, #tpu.memory_space<vmem>>, %arg2: memref<2x16x32xf32, #tpu.memory_space<vmem>>, %arg3: memref<8x32xf32, #tpu.memory_space<vmem>>, %arg4: memref<1x32xf32, #tpu.memory_space<vmem>>, %arg5: memref<1x32xf32, #tpu.memory_space<vmem>>, %arg6: memref<1x32xf32, #tpu.memory_space<vmem>>, %arg7: memref<1x32xf32, #tpu.memory_space<vmem>>, %arg8: memref<4x32x8xf32, #tpu.memory_space<vmem>>, %arg9: memref<4x32x8xf32, #tpu.memory_space<vmem>>, %arg10: memref<4x32x8xf32, #tpu.memory_space<vmem>>, %arg11: memref<4x8x32xf32, #tpu.memory_space<vmem>>, %arg12: memref<1x32xf32, #tpu.memory_space<vmem>>, %arg13: memref<1x32xf32, #tpu.memory_space<vmem>>, %arg14: memref<1x32xf32, #tpu.memory_space<vmem>>, %arg15: memref<1x32xf32, #tpu.memory_space<vmem>>, %arg16: memref<4x32x8xf32, #tpu.memory_space<vmem>>, %arg17: memref<4x32x8xf32, #tpu.memory_space<vmem>>, %arg18: memref<4x32x8xf32, #tpu.memory_space<vmem>>, %arg19: memref<4x8x32xf32, #tpu.memory_space<vmem>>, %arg20: memref<32x64xf32, #tpu.memory_space<vmem>>, %arg21: memref<1x64xf32, #tpu.memory_space<vmem>>, %arg22: memref<64x32xf32, #tpu.memory_space<vmem>>, %arg23: memref<1x32xf32, #tpu.memory_space<vmem>>, %arg24: memref<2x8x32xf32, #tpu.memory_space<vmem>>) attributes {dimension_semantics = [#tpu.dimension_semantics<arbitrary>], iteration_bounds = array<i64: 1>, scalar_prefetch = 0 : i64, scratch_operands = 0 : i64, tpu.core_type = #tpu.core_type<tc>, window_params = [{pipeline_mode = #tpu.pipeline_mode<synchronous>, transform_indices = @transform_0, window_bounds = array<i64: 2, 8, 32>}, {pipeline_mode = #tpu.pipeline_mode<synchronous>, transform_indices = @transform_1, window_bounds = array<i64: 2, 16, 32>}, {pipeline_mode = #tpu.pipeline_mode<synchronous>, transform_indices = @transform_2, window_bounds = array<i64: 8, 32>}, {pipeline_mode = #tpu.pipeline_mode<synchronous>, transform_indices = @transform_3, window_bounds = array<i64: 1, 32>}, {pipeline_mode = #tpu.pipeline_mode<synchronous>, transform_indices = @transform_4, window_bounds = array<i64: 1, 32>}, {pipeline_mode = #tpu.pipeline_mode<synchronous>, transform_indices = @transform_5, window_bounds = array<i64: 1, 32>}, {pipeline_mode = #tpu.pipeline_mode<synchronous>, transform_indices = @transform_6, window_bounds = array<i64: 1, 32>}, {pipeline_mode = #tpu.pipeline_mode<synchronous>, transform_indices = @transform_7, window_bounds = array<i64: 4, 32, 8>}, {pipeline_mode = #tpu.pipeline_mode<synchronous>, transform_indices = @transform_8, window_bounds = array<i64: 4, 32, 8>}, {pipeline_mode = #tpu.pipeline_mode<synchronous>, transform_indices = @transform_9, window_bounds = array<i64: 4, 32, 8>}, {pipeline_mode = #tpu.pipeline_mode<synchronous>, transform_indices = @transform_10, window_bounds = array<i64: 4, 8, 32>}, {pipeline_mode = #tpu.pipeline_mode<synchronous>, transform_indices = @transform_11, window_bounds = array<i64: 1, 32>}, {pipeline_mode = #tpu.pipeline_mode<synchronous>, transform_indices = @transform_12, window_bounds = array<i64: 1, 32>}, {pipeline_mode = #tpu.pipeline_mode<synchronous>, transform_indices = @transform_13, window_bounds = array<i64: 1, 32>}, {pipeline_mode = #tpu.pipeline_mode<synchronous>, transform_indices = @transform_14, window_bounds = array<i64: 1, 32>}, {pipeline_mode = #tpu.pipeline_mode<synchronous>, transform_indices = @transform_15, window_bounds = array<i64: 4, 32, 8>}, {pipeline_mode = #tpu.pipeline_mode<synchronous>, transform_indices = @transform_16, window_bounds = array<i64: 4, 32, 8>}, {pipeline_mode = #tpu.pipeline_mode<synchronous>, transform_indices = @transform_17, window_bounds = array<i64: 4, 32, 8>}, {pipeline_mode = #tpu.pipeline_mode<synchronous>, transform_indices = @transform_18, window_bounds = array<i64: 4, 8, 32>}, {pipeline_mode = #tpu.pipeline_mode<synchronous>, transform_indices = @transform_19, window_bounds = array<i64: 32, 64>}, {pipeline_mode = #tpu.pipeline_mode<synchronous>, transform_indices = @transform_20, window_bounds = array<i64: 1, 64>}, {pipeline_mode = #tpu.pipeline_mode<synchronous>, transform_indices = @transform_21, window_bounds = array<i64: 64, 32>}, {pipeline_mode = #tpu.pipeline_mode<synchronous>, transform_indices = @transform_22, window_bounds = array<i64: 1, 32>}, {pipeline_mode = #tpu.pipeline_mode<synchronous>, transform_indices = @transform_23, window_bounds = array<i64: 2, 8, 32>}]} {
    %c0 = arith.constant 0 : index
    %c0_0 = arith.constant 0 : index
    %c0_1 = arith.constant 0 : index
    %0 = vector.load %arg1[%c0, %c0_0, %c0_1] : memref<2x8x32xf32, #tpu.memory_space<vmem>>, vector<2x8x32xf32>
    %c0_2 = arith.constant 0 : index
    %c0_3 = arith.constant 0 : index
    %1 = vector.load %arg3[%c0_2, %c0_3] : memref<8x32xf32, #tpu.memory_space<vmem>>, vector<8x32xf32>
    %2 = vector.shape_cast %1 : vector<8x32xf32> to vector<1x8x32xf32>
    %3 = vector.broadcast %2 : vector<1x8x32xf32> to vector<2x8x32xf32>
    %4 = arith.addf %0, %3 : vector<2x8x32xf32>
    %5 = vector.shape_cast %4 : vector<2x8x32xf32> to vector<16x32xf32>
    %c0_4 = arith.constant 0 : index
    %c0_5 = arith.constant 0 : index
    %c0_6 = arith.constant 0 : index
    %6 = vector.load %arg2[%c0_4, %c0_5, %c0_6] : memref<2x16x32xf32, #tpu.memory_space<vmem>>, vector<2x16x32xf32>
    %7 = vector.shape_cast %6 : vector<2x16x32xf32> to vector<32x32xf32>
    %cst = arith.constant dense<0.000000e+00> : vector<16xf32>
    %8 = vector.multi_reduction <add>, %5, %cst [1] : vector<16x32xf32> to vector<16xf32>
    %9 = vector.shape_cast %8 : vector<16xf32> to vector<16x1xf32>
    %cst_7 = arith.constant 3.200000e+01 : f32
    %10 = vector.broadcast %cst_7 : f32 to vector<16x1xf32>
    %11 = arith.divf %9, %10 : vector<16x1xf32>
    %12 = vector.broadcast %11 : vector<16x1xf32> to vector<16x32xf32>
    %13 = arith.subf %5, %12 : vector<16x32xf32>
    %14 = arith.mulf %13, %13 : vector<16x32xf32>
    %cst_8 = arith.constant dense<0.000000e+00> : vector<16xf32>
    %15 = vector.multi_reduction <add>, %14, %cst_8 [1] : vector<16x32xf32> to vector<16xf32>
    %16 = vector.shape_cast %15 : vector<16xf32> to vector<16x1xf32>
    %cst_9 = arith.constant 3.200000e+01 : f32
    %17 = vector.broadcast %cst_9 : f32 to vector<16x1xf32>
    %18 = arith.divf %16, %17 : vector<16x1xf32>
    %19 = vector.broadcast %11 : vector<16x1xf32> to vector<16x32xf32>
    %20 = arith.subf %5, %19 : vector<16x32xf32>
    %cst_10 = arith.constant 9.99999974E-6 : f32
    %21 = vector.broadcast %cst_10 : f32 to vector<16x1xf32>
    %22 = arith.addf %18, %21 : vector<16x1xf32>
    %23 = math.rsqrt %22 : vector<16x1xf32>
    %24 = vector.broadcast %23 : vector<16x1xf32> to vector<16x32xf32>
    %25 = arith.mulf %20, %24 : vector<16x32xf32>
    %c0_11 = arith.constant 0 : index
    %c0_12 = arith.constant 0 : index
    %26 = vector.load %arg4[%c0_11, %c0_12] : memref<1x32xf32, #tpu.memory_space<vmem>>, vector<1x32xf32>
    %27 = vector.broadcast %26 : vector<1x32xf32> to vector<16x32xf32>
    %28 = arith.mulf %25, %27 : vector<16x32xf32>
    %c0_13 = arith.constant 0 : index
    %c0_14 = arith.constant 0 : index
    %29 = vector.load %arg5[%c0_13, %c0_14] : memref<1x32xf32, #tpu.memory_space<vmem>>, vector<1x32xf32>
    %30 = vector.broadcast %29 : vector<1x32xf32> to vector<16x32xf32>
    %31 = arith.addf %28, %30 : vector<16x32xf32>
    %c0_15 = arith.constant 0 : index
    %c0_16 = arith.constant 0 : index
    %32 = vector.load %arg6[%c0_15, %c0_16] : memref<1x32xf32, #tpu.memory_space<vmem>>, vector<1x32xf32>
    %33 = vector.broadcast %32 : vector<1x32xf32> to vector<16x32xf32>
    %34 = arith.mulf %25, %33 : vector<16x32xf32>
    %c0_17 = arith.constant 0 : index
    %c0_18 = arith.constant 0 : index
    %35 = vector.load %arg7[%c0_17, %c0_18] : memref<1x32xf32, #tpu.memory_space<vmem>>, vector<1x32xf32>
    %36 = vector.broadcast %35 : vector<1x32xf32> to vector<16x32xf32>
    %37 = arith.addf %34, %36 : vector<16x32xf32>
    %c0_19 = arith.constant 0 : index
    %c0_20 = arith.constant 0 : index
    %c0_21 = arith.constant 0 : index
    %38 = vector.load %arg8[%c0_19, %c0_20, %c0_21] : memref<4x32x8xf32, #tpu.memory_space<vmem>>, vector<4x32x8xf32>
    %c0_22 = arith.constant 0 : index
    %c0_23 = arith.constant 0 : index
    %c0_24 = arith.constant 0 : index
    %39 = vector.load %arg9[%c0_22, %c0_23, %c0_24] : memref<4x32x8xf32, #tpu.memory_space<vmem>>, vector<4x32x8xf32>
    %c0_25 = arith.constant 0 : index
    %c0_26 = arith.constant 0 : index
    %c0_27 = arith.constant 0 : index
    %40 = vector.load %arg10[%c0_25, %c0_26, %c0_27] : memref<4x32x8xf32, #tpu.memory_space<vmem>>, vector<4x32x8xf32>
    %c0_28 = arith.constant 0 : index
    %c0_29 = arith.constant 0 : index
    %c0_30 = arith.constant 0 : index
    %41 = vector.load %arg11[%c0_28, %c0_29, %c0_30] : memref<4x8x32xf32, #tpu.memory_space<vmem>>, vector<4x8x32xf32>
    %cst_31 = arith.constant 0.000000e+00 : f32
    %42 = vector.broadcast %cst_31 : f32 to vector<16x32xf32>
    %43 = vector.extract_strided_slice %38 {offsets = [0, 0, 0], sizes = [1, 32, 8], strides = [1, 1, 1]} : vector<4x32x8xf32> to vector<1x32x8xf32>
    %44 = vector.shape_cast %43 : vector<1x32x8xf32> to vector<32x8xf32>
    %cst_32 = arith.constant dense<0.000000e+00> : vector<16x8xf32>
    %45 = tpu.matmul %31, %44, %cst_32 {dimension_numbers = #tpu.dot_dimension_numbers<[1], [0], [0], [1], [0, 0, 1, 1], [], []>} : vector<16x32xf32>, vector<32x8xf32>, vector<16x8xf32> -> vector<16x8xf32>
    %46 = vector.extract_strided_slice %39 {offsets = [0, 0, 0], sizes = [1, 32, 8], strides = [1, 1, 1]} : vector<4x32x8xf32> to vector<1x32x8xf32>
    %47 = vector.shape_cast %46 : vector<1x32x8xf32> to vector<32x8xf32>
    %cst_33 = arith.constant dense<0.000000e+00> : vector<16x8xf32>
    %48 = tpu.matmul %37, %47, %cst_33 {dimension_numbers = #tpu.dot_dimension_numbers<[1], [0], [0], [1], [0, 0, 1, 1], [], []>} : vector<16x32xf32>, vector<32x8xf32>, vector<16x8xf32> -> vector<16x8xf32>
    %49 = vector.extract_strided_slice %40 {offsets = [0, 0, 0], sizes = [1, 32, 8], strides = [1, 1, 1]} : vector<4x32x8xf32> to vector<1x32x8xf32>
    %50 = vector.shape_cast %49 : vector<1x32x8xf32> to vector<32x8xf32>
    %cst_34 = arith.constant dense<0.000000e+00> : vector<16x8xf32>
    %51 = tpu.matmul %37, %50, %cst_34 {dimension_numbers = #tpu.dot_dimension_numbers<[1], [0], [0], [1], [0, 0, 1, 1], [], []>} : vector<16x32xf32>, vector<32x8xf32>, vector<16x8xf32> -> vector<16x8xf32>
    %52 = vector.shape_cast %45 : vector<16x8xf32> to vector<2x8x8xf32>
    %53 = vector.shape_cast %48 : vector<16x8xf32> to vector<2x8x8xf32>
    %54 = vector.shape_cast %51 : vector<16x8xf32> to vector<2x8x8xf32>
    "tpu.trace_start"() <{level = 10 : i32, message = "bnd,bmd->bnm"}> : () -> ()
    %cst_35 = arith.constant dense<0.000000e+00> : vector<2x8x8xf32>
    %55 = tpu.matmul %52, %53, %cst_35 {dimension_numbers = #tpu.dot_dimension_numbers<[2], [2], [1], [1], [0, 0, 0, 1, 1, 1], [0], [0]>} : vector<2x8x8xf32>, vector<2x8x8xf32>, vector<2x8x8xf32> -> vector<2x8x8xf32>
    "tpu.trace_stop"() : () -> ()
    %cst_36 = arith.constant 0.353553385 : f32
    %56 = vector.broadcast %cst_36 : f32 to vector<2x8x8xf32>
    %57 = arith.mulf %55, %56 : vector<2x8x8xf32>
    %cst_37 = arith.constant dense<0xFF800000> : vector<2x8xf32>
    %58 = vector.multi_reduction <maximumf>, %57, %cst_37 [2] : vector<2x8x8xf32> to vector<2x8xf32>
    %59 = vector.shape_cast %58 : vector<2x8xf32> to vector<2x8x1xf32>
    %60 = vector.broadcast %59 : vector<2x8x1xf32> to vector<2x8x8xf32>
    %61 = arith.subf %57, %60 : vector<2x8x8xf32>
    %62 = math.exp %61 : vector<2x8x8xf32>
    %cst_38 = arith.constant dense<0.000000e+00> : vector<2x8xf32>
    %63 = vector.multi_reduction <add>, %62, %cst_38 [2] : vector<2x8x8xf32> to vector<2x8xf32>
    %64 = vector.shape_cast %63 : vector<2x8xf32> to vector<2x8x1xf32>
    %65 = tpu.reciprocal %64 {approx = true} : vector<2x8x1xf32> -> vector<2x8x1xf32>
    %66 = vector.broadcast %65 : vector<2x8x1xf32> to vector<2x8x8xf32>
    %67 = arith.mulf %62, %66 : vector<2x8x8xf32>
    "tpu.trace_start"() <{level = 10 : i32, message = "bnm,bmd->bnd"}> : () -> ()
    %cst_39 = arith.constant dense<0.000000e+00> : vector<2x8x8xf32>
    %68 = tpu.matmul %67, %54, %cst_39 {dimension_numbers = #tpu.dot_dimension_numbers<[2], [1], [1], [2], [0, 0, 0, 1, 1, 2], [0], [0]>} : vector<2x8x8xf32>, vector<2x8x8xf32>, vector<2x8x8xf32> -> vector<2x8x8xf32>
    "tpu.trace_stop"() : () -> ()
    %69 = vector.shape_cast %68 : vector<2x8x8xf32> to vector<16x8xf32>
    %70 = vector.extract_strided_slice %41 {offsets = [0, 0, 0], sizes = [1, 8, 32], strides = [1, 1, 1]} : vector<4x8x32xf32> to vector<1x8x32xf32>
    %71 = vector.shape_cast %70 : vector<1x8x32xf32> to vector<8x32xf32>
    %cst_40 = arith.constant dense<0.000000e+00> : vector<16x32xf32>
    %72 = tpu.matmul %69, %71, %cst_40 {dimension_numbers = #tpu.dot_dimension_numbers<[1], [0], [0], [1], [0, 0, 1, 1], [], []>} : vector<16x8xf32>, vector<8x32xf32>, vector<16x32xf32> -> vector<16x32xf32>
    %73 = arith.addf %42, %72 : vector<16x32xf32>
    %74 = vector.extract_strided_slice %38 {offsets = [1, 0, 0], sizes = [1, 32, 8], strides = [1, 1, 1]} : vector<4x32x8xf32> to vector<1x32x8xf32>
    %75 = vector.shape_cast %74 : vector<1x32x8xf32> to vector<32x8xf32>
    %cst_41 = arith.constant dense<0.000000e+00> : vector<16x8xf32>
    %76 = tpu.matmul %31, %75, %cst_41 {dimension_numbers = #tpu.dot_dimension_numbers<[1], [0], [0], [1], [0, 0, 1, 1], [], []>} : vector<16x32xf32>, vector<32x8xf32>, vector<16x8xf32> -> vector<16x8xf32>
    %77 = vector.extract_strided_slice %39 {offsets = [1, 0, 0], sizes = [1, 32, 8], strides = [1, 1, 1]} : vector<4x32x8xf32> to vector<1x32x8xf32>
    %78 = vector.shape_cast %77 : vector<1x32x8xf32> to vector<32x8xf32>
    %cst_42 = arith.constant dense<0.000000e+00> : vector<16x8xf32>
    %79 = tpu.matmul %37, %78, %cst_42 {dimension_numbers = #tpu.dot_dimension_numbers<[1], [0], [0], [1], [0, 0, 1, 1], [], []>} : vector<16x32xf32>, vector<32x8xf32>, vector<16x8xf32> -> vector<16x8xf32>
    %80 = vector.extract_strided_slice %40 {offsets = [1, 0, 0], sizes = [1, 32, 8], strides = [1, 1, 1]} : vector<4x32x8xf32> to vector<1x32x8xf32>
    %81 = vector.shape_cast %80 : vector<1x32x8xf32> to vector<32x8xf32>
    %cst_43 = arith.constant dense<0.000000e+00> : vector<16x8xf32>
    %82 = tpu.matmul %37, %81, %cst_43 {dimension_numbers = #tpu.dot_dimension_numbers<[1], [0], [0], [1], [0, 0, 1, 1], [], []>} : vector<16x32xf32>, vector<32x8xf32>, vector<16x8xf32> -> vector<16x8xf32>
    %83 = vector.shape_cast %76 : vector<16x8xf32> to vector<2x8x8xf32>
    %84 = vector.shape_cast %79 : vector<16x8xf32> to vector<2x8x8xf32>
    %85 = vector.shape_cast %82 : vector<16x8xf32> to vector<2x8x8xf32>
    "tpu.trace_start"() <{level = 10 : i32, message = "bnd,bmd->bnm"}> : () -> ()
    %cst_44 = arith.constant dense<0.000000e+00> : vector<2x8x8xf32>
    %86 = tpu.matmul %83, %84, %cst_44 {dimension_numbers = #tpu.dot_dimension_numbers<[2], [2], [1], [1], [0, 0, 0, 1, 1, 1], [0], [0]>} : vector<2x8x8xf32>, vector<2x8x8xf32>, vector<2x8x8xf32> -> vector<2x8x8xf32>
    "tpu.trace_stop"() : () -> ()
    %cst_45 = arith.constant 0.353553385 : f32
    %87 = vector.broadcast %cst_45 : f32 to vector<2x8x8xf32>
    %88 = arith.mulf %86, %87 : vector<2x8x8xf32>
    %cst_46 = arith.constant dense<0xFF800000> : vector<2x8xf32>
    %89 = vector.multi_reduction <maximumf>, %88, %cst_46 [2] : vector<2x8x8xf32> to vector<2x8xf32>
    %90 = vector.shape_cast %89 : vector<2x8xf32> to vector<2x8x1xf32>
    %91 = vector.broadcast %90 : vector<2x8x1xf32> to vector<2x8x8xf32>
    %92 = arith.subf %88, %91 : vector<2x8x8xf32>
    %93 = math.exp %92 : vector<2x8x8xf32>
    %cst_47 = arith.constant dense<0.000000e+00> : vector<2x8xf32>
    %94 = vector.multi_reduction <add>, %93, %cst_47 [2] : vector<2x8x8xf32> to vector<2x8xf32>
    %95 = vector.shape_cast %94 : vector<2x8xf32> to vector<2x8x1xf32>
    %96 = tpu.reciprocal %95 {approx = true} : vector<2x8x1xf32> -> vector<2x8x1xf32>
    %97 = vector.broadcast %96 : vector<2x8x1xf32> to vector<2x8x8xf32>
    %98 = arith.mulf %93, %97 : vector<2x8x8xf32>
    "tpu.trace_start"() <{level = 10 : i32, message = "bnm,bmd->bnd"}> : () -> ()
    %cst_48 = arith.constant dense<0.000000e+00> : vector<2x8x8xf32>
    %99 = tpu.matmul %98, %85, %cst_48 {dimension_numbers = #tpu.dot_dimension_numbers<[2], [1], [1], [2], [0, 0, 0, 1, 1, 2], [0], [0]>} : vector<2x8x8xf32>, vector<2x8x8xf32>, vector<2x8x8xf32> -> vector<2x8x8xf32>
    "tpu.trace_stop"() : () -> ()
    %100 = vector.shape_cast %99 : vector<2x8x8xf32> to vector<16x8xf32>
    %101 = vector.extract_strided_slice %41 {offsets = [1, 0, 0], sizes = [1, 8, 32], strides = [1, 1, 1]} : vector<4x8x32xf32> to vector<1x8x32xf32>
    %102 = vector.shape_cast %101 : vector<1x8x32xf32> to vector<8x32xf32>
    %cst_49 = arith.constant dense<0.000000e+00> : vector<16x32xf32>
    %103 = tpu.matmul %100, %102, %cst_49 {dimension_numbers = #tpu.dot_dimension_numbers<[1], [0], [0], [1], [0, 0, 1, 1], [], []>} : vector<16x8xf32>, vector<8x32xf32>, vector<16x32xf32> -> vector<16x32xf32>
    %104 = arith.addf %73, %103 : vector<16x32xf32>
    %105 = vector.extract_strided_slice %38 {offsets = [2, 0, 0], sizes = [1, 32, 8], strides = [1, 1, 1]} : vector<4x32x8xf32> to vector<1x32x8xf32>
    %106 = vector.shape_cast %105 : vector<1x32x8xf32> to vector<32x8xf32>
    %cst_50 = arith.constant dense<0.000000e+00> : vector<16x8xf32>
    %107 = tpu.matmul %31, %106, %cst_50 {dimension_numbers = #tpu.dot_dimension_numbers<[1], [0], [0], [1], [0, 0, 1, 1], [], []>} : vector<16x32xf32>, vector<32x8xf32>, vector<16x8xf32> -> vector<16x8xf32>
    %108 = vector.extract_strided_slice %39 {offsets = [2, 0, 0], sizes = [1, 32, 8], strides = [1, 1, 1]} : vector<4x32x8xf32> to vector<1x32x8xf32>
    %109 = vector.shape_cast %108 : vector<1x32x8xf32> to vector<32x8xf32>
    %cst_51 = arith.constant dense<0.000000e+00> : vector<16x8xf32>
    %110 = tpu.matmul %37, %109, %cst_51 {dimension_numbers = #tpu.dot_dimension_numbers<[1], [0], [0], [1], [0, 0, 1, 1], [], []>} : vector<16x32xf32>, vector<32x8xf32>, vector<16x8xf32> -> vector<16x8xf32>
    %111 = vector.extract_strided_slice %40 {offsets = [2, 0, 0], sizes = [1, 32, 8], strides = [1, 1, 1]} : vector<4x32x8xf32> to vector<1x32x8xf32>
    %112 = vector.shape_cast %111 : vector<1x32x8xf32> to vector<32x8xf32>
    %cst_52 = arith.constant dense<0.000000e+00> : vector<16x8xf32>
    %113 = tpu.matmul %37, %112, %cst_52 {dimension_numbers = #tpu.dot_dimension_numbers<[1], [0], [0], [1], [0, 0, 1, 1], [], []>} : vector<16x32xf32>, vector<32x8xf32>, vector<16x8xf32> -> vector<16x8xf32>
    %114 = vector.shape_cast %107 : vector<16x8xf32> to vector<2x8x8xf32>
    %115 = vector.shape_cast %110 : vector<16x8xf32> to vector<2x8x8xf32>
    %116 = vector.shape_cast %113 : vector<16x8xf32> to vector<2x8x8xf32>
    "tpu.trace_start"() <{level = 10 : i32, message = "bnd,bmd->bnm"}> : () -> ()
    %cst_53 = arith.constant dense<0.000000e+00> : vector<2x8x8xf32>
    %117 = tpu.matmul %114, %115, %cst_53 {dimension_numbers = #tpu.dot_dimension_numbers<[2], [2], [1], [1], [0, 0, 0, 1, 1, 1], [0], [0]>} : vector<2x8x8xf32>, vector<2x8x8xf32>, vector<2x8x8xf32> -> vector<2x8x8xf32>
    "tpu.trace_stop"() : () -> ()
    %cst_54 = arith.constant 0.353553385 : f32
    %118 = vector.broadcast %cst_54 : f32 to vector<2x8x8xf32>
    %119 = arith.mulf %117, %118 : vector<2x8x8xf32>
    %cst_55 = arith.constant dense<0xFF800000> : vector<2x8xf32>
    %120 = vector.multi_reduction <maximumf>, %119, %cst_55 [2] : vector<2x8x8xf32> to vector<2x8xf32>
    %121 = vector.shape_cast %120 : vector<2x8xf32> to vector<2x8x1xf32>
    %122 = vector.broadcast %121 : vector<2x8x1xf32> to vector<2x8x8xf32>
    %123 = arith.subf %119, %122 : vector<2x8x8xf32>
    %124 = math.exp %123 : vector<2x8x8xf32>
    %cst_56 = arith.constant dense<0.000000e+00> : vector<2x8xf32>
    %125 = vector.multi_reduction <add>, %124, %cst_56 [2] : vector<2x8x8xf32> to vector<2x8xf32>
    %126 = vector.shape_cast %125 : vector<2x8xf32> to vector<2x8x1xf32>
    %127 = tpu.reciprocal %126 {approx = true} : vector<2x8x1xf32> -> vector<2x8x1xf32>
    %128 = vector.broadcast %127 : vector<2x8x1xf32> to vector<2x8x8xf32>
    %129 = arith.mulf %124, %128 : vector<2x8x8xf32>
    "tpu.trace_start"() <{level = 10 : i32, message = "bnm,bmd->bnd"}> : () -> ()
    %cst_57 = arith.constant dense<0.000000e+00> : vector<2x8x8xf32>
    %130 = tpu.matmul %129, %116, %cst_57 {dimension_numbers = #tpu.dot_dimension_numbers<[2], [1], [1], [2], [0, 0, 0, 1, 1, 2], [0], [0]>} : vector<2x8x8xf32>, vector<2x8x8xf32>, vector<2x8x8xf32> -> vector<2x8x8xf32>
    "tpu.trace_stop"() : () -> ()
    %131 = vector.shape_cast %130 : vector<2x8x8xf32> to vector<16x8xf32>
    %132 = vector.extract_strided_slice %41 {offsets = [2, 0, 0], sizes = [1, 8, 32], strides = [1, 1, 1]} : vector<4x8x32xf32> to vector<1x8x32xf32>
    %133 = vector.shape_cast %132 : vector<1x8x32xf32> to vector<8x32xf32>
    %cst_58 = arith.constant dense<0.000000e+00> : vector<16x32xf32>
    %134 = tpu.matmul %131, %133, %cst_58 {dimension_numbers = #tpu.dot_dimension_numbers<[1], [0], [0], [1], [0, 0, 1, 1], [], []>} : vector<16x8xf32>, vector<8x32xf32>, vector<16x32xf32> -> vector<16x32xf32>
    %135 = arith.addf %104, %134 : vector<16x32xf32>
    %136 = vector.extract_strided_slice %38 {offsets = [3, 0, 0], sizes = [1, 32, 8], strides = [1, 1, 1]} : vector<4x32x8xf32> to vector<1x32x8xf32>
    %137 = vector.shape_cast %136 : vector<1x32x8xf32> to vector<32x8xf32>
    %cst_59 = arith.constant dense<0.000000e+00> : vector<16x8xf32>
    %138 = tpu.matmul %31, %137, %cst_59 {dimension_numbers = #tpu.dot_dimension_numbers<[1], [0], [0], [1], [0, 0, 1, 1], [], []>} : vector<16x32xf32>, vector<32x8xf32>, vector<16x8xf32> -> vector<16x8xf32>
    %139 = vector.extract_strided_slice %39 {offsets = [3, 0, 0], sizes = [1, 32, 8], strides = [1, 1, 1]} : vector<4x32x8xf32> to vector<1x32x8xf32>
    %140 = vector.shape_cast %139 : vector<1x32x8xf32> to vector<32x8xf32>
    %cst_60 = arith.constant dense<0.000000e+00> : vector<16x8xf32>
    %141 = tpu.matmul %37, %140, %cst_60 {dimension_numbers = #tpu.dot_dimension_numbers<[1], [0], [0], [1], [0, 0, 1, 1], [], []>} : vector<16x32xf32>, vector<32x8xf32>, vector<16x8xf32> -> vector<16x8xf32>
    %142 = vector.extract_strided_slice %40 {offsets = [3, 0, 0], sizes = [1, 32, 8], strides = [1, 1, 1]} : vector<4x32x8xf32> to vector<1x32x8xf32>
    %143 = vector.shape_cast %142 : vector<1x32x8xf32> to vector<32x8xf32>
    %cst_61 = arith.constant dense<0.000000e+00> : vector<16x8xf32>
    %144 = tpu.matmul %37, %143, %cst_61 {dimension_numbers = #tpu.dot_dimension_numbers<[1], [0], [0], [1], [0, 0, 1, 1], [], []>} : vector<16x32xf32>, vector<32x8xf32>, vector<16x8xf32> -> vector<16x8xf32>
    %145 = vector.shape_cast %138 : vector<16x8xf32> to vector<2x8x8xf32>
    %146 = vector.shape_cast %141 : vector<16x8xf32> to vector<2x8x8xf32>
    %147 = vector.shape_cast %144 : vector<16x8xf32> to vector<2x8x8xf32>
    "tpu.trace_start"() <{level = 10 : i32, message = "bnd,bmd->bnm"}> : () -> ()
    %cst_62 = arith.constant dense<0.000000e+00> : vector<2x8x8xf32>
    %148 = tpu.matmul %145, %146, %cst_62 {dimension_numbers = #tpu.dot_dimension_numbers<[2], [2], [1], [1], [0, 0, 0, 1, 1, 1], [0], [0]>} : vector<2x8x8xf32>, vector<2x8x8xf32>, vector<2x8x8xf32> -> vector<2x8x8xf32>
    "tpu.trace_stop"() : () -> ()
    %cst_63 = arith.constant 0.353553385 : f32
    %149 = vector.broadcast %cst_63 : f32 to vector<2x8x8xf32>
    %150 = arith.mulf %148, %149 : vector<2x8x8xf32>
    %cst_64 = arith.constant dense<0xFF800000> : vector<2x8xf32>
    %151 = vector.multi_reduction <maximumf>, %150, %cst_64 [2] : vector<2x8x8xf32> to vector<2x8xf32>
    %152 = vector.shape_cast %151 : vector<2x8xf32> to vector<2x8x1xf32>
    %153 = vector.broadcast %152 : vector<2x8x1xf32> to vector<2x8x8xf32>
    %154 = arith.subf %150, %153 : vector<2x8x8xf32>
    %155 = math.exp %154 : vector<2x8x8xf32>
    %cst_65 = arith.constant dense<0.000000e+00> : vector<2x8xf32>
    %156 = vector.multi_reduction <add>, %155, %cst_65 [2] : vector<2x8x8xf32> to vector<2x8xf32>
    %157 = vector.shape_cast %156 : vector<2x8xf32> to vector<2x8x1xf32>
    %158 = tpu.reciprocal %157 {approx = true} : vector<2x8x1xf32> -> vector<2x8x1xf32>
    %159 = vector.broadcast %158 : vector<2x8x1xf32> to vector<2x8x8xf32>
    %160 = arith.mulf %155, %159 : vector<2x8x8xf32>
    "tpu.trace_start"() <{level = 10 : i32, message = "bnm,bmd->bnd"}> : () -> ()
    %cst_66 = arith.constant dense<0.000000e+00> : vector<2x8x8xf32>
    %161 = tpu.matmul %160, %147, %cst_66 {dimension_numbers = #tpu.dot_dimension_numbers<[2], [1], [1], [2], [0, 0, 0, 1, 1, 2], [0], [0]>} : vector<2x8x8xf32>, vector<2x8x8xf32>, vector<2x8x8xf32> -> vector<2x8x8xf32>
    "tpu.trace_stop"() : () -> ()
    %162 = vector.shape_cast %161 : vector<2x8x8xf32> to vector<16x8xf32>
    %163 = vector.extract_strided_slice %41 {offsets = [3, 0, 0], sizes = [1, 8, 32], strides = [1, 1, 1]} : vector<4x8x32xf32> to vector<1x8x32xf32>
    %164 = vector.shape_cast %163 : vector<1x8x32xf32> to vector<8x32xf32>
    %cst_67 = arith.constant dense<0.000000e+00> : vector<16x32xf32>
    %165 = tpu.matmul %162, %164, %cst_67 {dimension_numbers = #tpu.dot_dimension_numbers<[1], [0], [0], [1], [0, 0, 1, 1], [], []>} : vector<16x8xf32>, vector<8x32xf32>, vector<16x32xf32> -> vector<16x32xf32>
    %166 = arith.addf %135, %165 : vector<16x32xf32>
    %167 = arith.addf %5, %166 : vector<16x32xf32>
    %cst_68 = arith.constant dense<0.000000e+00> : vector<16xf32>
    %168 = vector.multi_reduction <add>, %167, %cst_68 [1] : vector<16x32xf32> to vector<16xf32>
    %169 = vector.shape_cast %168 : vector<16xf32> to vector<16x1xf32>
    %cst_69 = arith.constant 3.200000e+01 : f32
    %170 = vector.broadcast %cst_69 : f32 to vector<16x1xf32>
    %171 = arith.divf %169, %170 : vector<16x1xf32>
    %172 = vector.broadcast %171 : vector<16x1xf32> to vector<16x32xf32>
    %173 = arith.subf %167, %172 : vector<16x32xf32>
    %174 = arith.mulf %173, %173 : vector<16x32xf32>
    %cst_70 = arith.constant dense<0.000000e+00> : vector<16xf32>
    %175 = vector.multi_reduction <add>, %174, %cst_70 [1] : vector<16x32xf32> to vector<16xf32>
    %176 = vector.shape_cast %175 : vector<16xf32> to vector<16x1xf32>
    %cst_71 = arith.constant 3.200000e+01 : f32
    %177 = vector.broadcast %cst_71 : f32 to vector<16x1xf32>
    %178 = arith.divf %176, %177 : vector<16x1xf32>
    %179 = vector.broadcast %171 : vector<16x1xf32> to vector<16x32xf32>
    %180 = arith.subf %167, %179 : vector<16x32xf32>
    %cst_72 = arith.constant 9.99999974E-6 : f32
    %181 = vector.broadcast %cst_72 : f32 to vector<16x1xf32>
    %182 = arith.addf %178, %181 : vector<16x1xf32>
    %183 = math.rsqrt %182 : vector<16x1xf32>
    %184 = vector.broadcast %183 : vector<16x1xf32> to vector<16x32xf32>
    %185 = arith.mulf %180, %184 : vector<16x32xf32>
    %c0_73 = arith.constant 0 : index
    %c0_74 = arith.constant 0 : index
    %186 = vector.load %arg12[%c0_73, %c0_74] : memref<1x32xf32, #tpu.memory_space<vmem>>, vector<1x32xf32>
    %187 = vector.broadcast %186 : vector<1x32xf32> to vector<16x32xf32>
    %188 = arith.mulf %185, %187 : vector<16x32xf32>
    %c0_75 = arith.constant 0 : index
    %c0_76 = arith.constant 0 : index
    %189 = vector.load %arg13[%c0_75, %c0_76] : memref<1x32xf32, #tpu.memory_space<vmem>>, vector<1x32xf32>
    %190 = vector.broadcast %189 : vector<1x32xf32> to vector<16x32xf32>
    %191 = arith.addf %188, %190 : vector<16x32xf32>
    %cst_77 = arith.constant dense<0.000000e+00> : vector<32xf32>
    %192 = vector.multi_reduction <add>, %7, %cst_77 [1] : vector<32x32xf32> to vector<32xf32>
    %193 = vector.shape_cast %192 : vector<32xf32> to vector<32x1xf32>
    %cst_78 = arith.constant 3.200000e+01 : f32
    %194 = vector.broadcast %cst_78 : f32 to vector<32x1xf32>
    %195 = arith.divf %193, %194 : vector<32x1xf32>
    %196 = vector.broadcast %195 : vector<32x1xf32> to vector<32x32xf32>
    %197 = arith.subf %7, %196 : vector<32x32xf32>
    %198 = arith.mulf %197, %197 : vector<32x32xf32>
    %cst_79 = arith.constant dense<0.000000e+00> : vector<32xf32>
    %199 = vector.multi_reduction <add>, %198, %cst_79 [1] : vector<32x32xf32> to vector<32xf32>
    %200 = vector.shape_cast %199 : vector<32xf32> to vector<32x1xf32>
    %cst_80 = arith.constant 3.200000e+01 : f32
    %201 = vector.broadcast %cst_80 : f32 to vector<32x1xf32>
    %202 = arith.divf %200, %201 : vector<32x1xf32>
    %203 = vector.broadcast %195 : vector<32x1xf32> to vector<32x32xf32>
    %204 = arith.subf %7, %203 : vector<32x32xf32>
    %cst_81 = arith.constant 9.99999974E-6 : f32
    %205 = vector.broadcast %cst_81 : f32 to vector<32x1xf32>
    %206 = arith.addf %202, %205 : vector<32x1xf32>
    %207 = math.rsqrt %206 : vector<32x1xf32>
    %208 = vector.broadcast %207 : vector<32x1xf32> to vector<32x32xf32>
    %209 = arith.mulf %204, %208 : vector<32x32xf32>
    %c0_82 = arith.constant 0 : index
    %c0_83 = arith.constant 0 : index
    %210 = vector.load %arg14[%c0_82, %c0_83] : memref<1x32xf32, #tpu.memory_space<vmem>>, vector<1x32xf32>
    %211 = vector.broadcast %210 : vector<1x32xf32> to vector<32x32xf32>
    %212 = arith.mulf %209, %211 : vector<32x32xf32>
    %c0_84 = arith.constant 0 : index
    %c0_85 = arith.constant 0 : index
    %213 = vector.load %arg15[%c0_84, %c0_85] : memref<1x32xf32, #tpu.memory_space<vmem>>, vector<1x32xf32>
    %214 = vector.broadcast %213 : vector<1x32xf32> to vector<32x32xf32>
    %215 = arith.addf %212, %214 : vector<32x32xf32>
    %c0_86 = arith.constant 0 : index
    %c0_87 = arith.constant 0 : index
    %c0_88 = arith.constant 0 : index
    %216 = vector.load %arg16[%c0_86, %c0_87, %c0_88] : memref<4x32x8xf32, #tpu.memory_space<vmem>>, vector<4x32x8xf32>
    %c0_89 = arith.constant 0 : index
    %c0_90 = arith.constant 0 : index
    %c0_91 = arith.constant 0 : index
    %217 = vector.load %arg17[%c0_89, %c0_90, %c0_91] : memref<4x32x8xf32, #tpu.memory_space<vmem>>, vector<4x32x8xf32>
    %c0_92 = arith.constant 0 : index
    %c0_93 = arith.constant 0 : index
    %c0_94 = arith.constant 0 : index
    %218 = vector.load %arg18[%c0_92, %c0_93, %c0_94] : memref<4x32x8xf32, #tpu.memory_space<vmem>>, vector<4x32x8xf32>
    %c0_95 = arith.constant 0 : index
    %c0_96 = arith.constant 0 : index
    %c0_97 = arith.constant 0 : index
    %219 = vector.load %arg19[%c0_95, %c0_96, %c0_97] : memref<4x8x32xf32, #tpu.memory_space<vmem>>, vector<4x8x32xf32>
    %cst_98 = arith.constant 0.000000e+00 : f32
    %220 = vector.broadcast %cst_98 : f32 to vector<16x32xf32>
    %221 = vector.extract_strided_slice %216 {offsets = [0, 0, 0], sizes = [1, 32, 8], strides = [1, 1, 1]} : vector<4x32x8xf32> to vector<1x32x8xf32>
    %222 = vector.shape_cast %221 : vector<1x32x8xf32> to vector<32x8xf32>
    %cst_99 = arith.constant dense<0.000000e+00> : vector<16x8xf32>
    %223 = tpu.matmul %191, %222, %cst_99 {dimension_numbers = #tpu.dot_dimension_numbers<[1], [0], [0], [1], [0, 0, 1, 1], [], []>} : vector<16x32xf32>, vector<32x8xf32>, vector<16x8xf32> -> vector<16x8xf32>
    %224 = vector.extract_strided_slice %217 {offsets = [0, 0, 0], sizes = [1, 32, 8], strides = [1, 1, 1]} : vector<4x32x8xf32> to vector<1x32x8xf32>
    %225 = vector.shape_cast %224 : vector<1x32x8xf32> to vector<32x8xf32>
    %cst_100 = arith.constant dense<0.000000e+00> : vector<32x8xf32>
    %226 = tpu.matmul %215, %225, %cst_100 {dimension_numbers = #tpu.dot_dimension_numbers<[1], [0], [0], [1], [0, 0, 1, 1], [], []>} : vector<32x32xf32>, vector<32x8xf32>, vector<32x8xf32> -> vector<32x8xf32>
    %227 = vector.extract_strided_slice %218 {offsets = [0, 0, 0], sizes = [1, 32, 8], strides = [1, 1, 1]} : vector<4x32x8xf32> to vector<1x32x8xf32>
    %228 = vector.shape_cast %227 : vector<1x32x8xf32> to vector<32x8xf32>
    %cst_101 = arith.constant dense<0.000000e+00> : vector<32x8xf32>
    %229 = tpu.matmul %215, %228, %cst_101 {dimension_numbers = #tpu.dot_dimension_numbers<[1], [0], [0], [1], [0, 0, 1, 1], [], []>} : vector<32x32xf32>, vector<32x8xf32>, vector<32x8xf32> -> vector<32x8xf32>
    %230 = vector.shape_cast %223 : vector<16x8xf32> to vector<2x8x8xf32>
    %231 = vector.shape_cast %226 : vector<32x8xf32> to vector<2x16x8xf32>
    %232 = vector.shape_cast %229 : vector<32x8xf32> to vector<2x16x8xf32>
    "tpu.trace_start"() <{level = 10 : i32, message = "bnd,bmd->bnm"}> : () -> ()
    %cst_102 = arith.constant dense<0.000000e+00> : vector<2x8x16xf32>
    %233 = tpu.matmul %230, %231, %cst_102 {dimension_numbers = #tpu.dot_dimension_numbers<[2], [2], [1], [1], [0, 0, 0, 1, 1, 1], [0], [0]>} : vector<2x8x8xf32>, vector<2x16x8xf32>, vector<2x8x16xf32> -> vector<2x8x16xf32>
    "tpu.trace_stop"() : () -> ()
    %cst_103 = arith.constant 0.353553385 : f32
    %234 = vector.broadcast %cst_103 : f32 to vector<2x8x16xf32>
    %235 = arith.mulf %233, %234 : vector<2x8x16xf32>
    %cst_104 = arith.constant dense<0xFF800000> : vector<2x8xf32>
    %236 = vector.multi_reduction <maximumf>, %235, %cst_104 [2] : vector<2x8x16xf32> to vector<2x8xf32>
    %237 = vector.shape_cast %236 : vector<2x8xf32> to vector<2x8x1xf32>
    %238 = vector.broadcast %237 : vector<2x8x1xf32> to vector<2x8x16xf32>
    %239 = arith.subf %235, %238 : vector<2x8x16xf32>
    %240 = math.exp %239 : vector<2x8x16xf32>
    %cst_105 = arith.constant dense<0.000000e+00> : vector<2x8xf32>
    %241 = vector.multi_reduction <add>, %240, %cst_105 [2] : vector<2x8x16xf32> to vector<2x8xf32>
    %242 = vector.shape_cast %241 : vector<2x8xf32> to vector<2x8x1xf32>
    %243 = tpu.reciprocal %242 {approx = true} : vector<2x8x1xf32> -> vector<2x8x1xf32>
    %244 = vector.broadcast %243 : vector<2x8x1xf32> to vector<2x8x16xf32>
    %245 = arith.mulf %240, %244 : vector<2x8x16xf32>
    "tpu.trace_start"() <{level = 10 : i32, message = "bnm,bmd->bnd"}> : () -> ()
    %cst_106 = arith.constant dense<0.000000e+00> : vector<2x8x8xf32>
    %246 = tpu.matmul %245, %232, %cst_106 {dimension_numbers = #tpu.dot_dimension_numbers<[2], [1], [1], [2], [0, 0, 0, 1, 1, 2], [0], [0]>} : vector<2x8x16xf32>, vector<2x16x8xf32>, vector<2x8x8xf32> -> vector<2x8x8xf32>
    "tpu.trace_stop"() : () -> ()
    %247 = vector.shape_cast %246 : vector<2x8x8xf32> to vector<16x8xf32>
    %248 = vector.extract_strided_slice %219 {offsets = [0, 0, 0], sizes = [1, 8, 32], strides = [1, 1, 1]} : vector<4x8x32xf32> to vector<1x8x32xf32>
    %249 = vector.shape_cast %248 : vector<1x8x32xf32> to vector<8x32xf32>
    %cst_107 = arith.constant dense<0.000000e+00> : vector<16x32xf32>
    %250 = tpu.matmul %247, %249, %cst_107 {dimension_numbers = #tpu.dot_dimension_numbers<[1], [0], [0], [1], [0, 0, 1, 1], [], []>} : vector<16x8xf32>, vector<8x32xf32>, vector<16x32xf32> -> vector<16x32xf32>
    %251 = arith.addf %220, %250 : vector<16x32xf32>
    %252 = vector.extract_strided_slice %216 {offsets = [1, 0, 0], sizes = [1, 32, 8], strides = [1, 1, 1]} : vector<4x32x8xf32> to vector<1x32x8xf32>
    %253 = vector.shape_cast %252 : vector<1x32x8xf32> to vector<32x8xf32>
    %cst_108 = arith.constant dense<0.000000e+00> : vector<16x8xf32>
    %254 = tpu.matmul %191, %253, %cst_108 {dimension_numbers = #tpu.dot_dimension_numbers<[1], [0], [0], [1], [0, 0, 1, 1], [], []>} : vector<16x32xf32>, vector<32x8xf32>, vector<16x8xf32> -> vector<16x8xf32>
    %255 = vector.extract_strided_slice %217 {offsets = [1, 0, 0], sizes = [1, 32, 8], strides = [1, 1, 1]} : vector<4x32x8xf32> to vector<1x32x8xf32>
    %256 = vector.shape_cast %255 : vector<1x32x8xf32> to vector<32x8xf32>
    %cst_109 = arith.constant dense<0.000000e+00> : vector<32x8xf32>
    %257 = tpu.matmul %215, %256, %cst_109 {dimension_numbers = #tpu.dot_dimension_numbers<[1], [0], [0], [1], [0, 0, 1, 1], [], []>} : vector<32x32xf32>, vector<32x8xf32>, vector<32x8xf32> -> vector<32x8xf32>
    %258 = vector.extract_strided_slice %218 {offsets = [1, 0, 0], sizes = [1, 32, 8], strides = [1, 1, 1]} : vector<4x32x8xf32> to vector<1x32x8xf32>
    %259 = vector.shape_cast %258 : vector<1x32x8xf32> to vector<32x8xf32>
    %cst_110 = arith.constant dense<0.000000e+00> : vector<32x8xf32>
    %260 = tpu.matmul %215, %259, %cst_110 {dimension_numbers = #tpu.dot_dimension_numbers<[1], [0], [0], [1], [0, 0, 1, 1], [], []>} : vector<32x32xf32>, vector<32x8xf32>, vector<32x8xf32> -> vector<32x8xf32>
    %261 = vector.shape_cast %254 : vector<16x8xf32> to vector<2x8x8xf32>
    %262 = vector.shape_cast %257 : vector<32x8xf32> to vector<2x16x8xf32>
    %263 = vector.shape_cast %260 : vector<32x8xf32> to vector<2x16x8xf32>
    "tpu.trace_start"() <{level = 10 : i32, message = "bnd,bmd->bnm"}> : () -> ()
    %cst_111 = arith.constant dense<0.000000e+00> : vector<2x8x16xf32>
    %264 = tpu.matmul %261, %262, %cst_111 {dimension_numbers = #tpu.dot_dimension_numbers<[2], [2], [1], [1], [0, 0, 0, 1, 1, 1], [0], [0]>} : vector<2x8x8xf32>, vector<2x16x8xf32>, vector<2x8x16xf32> -> vector<2x8x16xf32>
    "tpu.trace_stop"() : () -> ()
    %cst_112 = arith.constant 0.353553385 : f32
    %265 = vector.broadcast %cst_112 : f32 to vector<2x8x16xf32>
    %266 = arith.mulf %264, %265 : vector<2x8x16xf32>
    %cst_113 = arith.constant dense<0xFF800000> : vector<2x8xf32>
    %267 = vector.multi_reduction <maximumf>, %266, %cst_113 [2] : vector<2x8x16xf32> to vector<2x8xf32>
    %268 = vector.shape_cast %267 : vector<2x8xf32> to vector<2x8x1xf32>
    %269 = vector.broadcast %268 : vector<2x8x1xf32> to vector<2x8x16xf32>
    %270 = arith.subf %266, %269 : vector<2x8x16xf32>
    %271 = math.exp %270 : vector<2x8x16xf32>
    %cst_114 = arith.constant dense<0.000000e+00> : vector<2x8xf32>
    %272 = vector.multi_reduction <add>, %271, %cst_114 [2] : vector<2x8x16xf32> to vector<2x8xf32>
    %273 = vector.shape_cast %272 : vector<2x8xf32> to vector<2x8x1xf32>
    %274 = tpu.reciprocal %273 {approx = true} : vector<2x8x1xf32> -> vector<2x8x1xf32>
    %275 = vector.broadcast %274 : vector<2x8x1xf32> to vector<2x8x16xf32>
    %276 = arith.mulf %271, %275 : vector<2x8x16xf32>
    "tpu.trace_start"() <{level = 10 : i32, message = "bnm,bmd->bnd"}> : () -> ()
    %cst_115 = arith.constant dense<0.000000e+00> : vector<2x8x8xf32>
    %277 = tpu.matmul %276, %263, %cst_115 {dimension_numbers = #tpu.dot_dimension_numbers<[2], [1], [1], [2], [0, 0, 0, 1, 1, 2], [0], [0]>} : vector<2x8x16xf32>, vector<2x16x8xf32>, vector<2x8x8xf32> -> vector<2x8x8xf32>
    "tpu.trace_stop"() : () -> ()
    %278 = vector.shape_cast %277 : vector<2x8x8xf32> to vector<16x8xf32>
    %279 = vector.extract_strided_slice %219 {offsets = [1, 0, 0], sizes = [1, 8, 32], strides = [1, 1, 1]} : vector<4x8x32xf32> to vector<1x8x32xf32>
    %280 = vector.shape_cast %279 : vector<1x8x32xf32> to vector<8x32xf32>
    %cst_116 = arith.constant dense<0.000000e+00> : vector<16x32xf32>
    %281 = tpu.matmul %278, %280, %cst_116 {dimension_numbers = #tpu.dot_dimension_numbers<[1], [0], [0], [1], [0, 0, 1, 1], [], []>} : vector<16x8xf32>, vector<8x32xf32>, vector<16x32xf32> -> vector<16x32xf32>
    %282 = arith.addf %251, %281 : vector<16x32xf32>
    %283 = vector.extract_strided_slice %216 {offsets = [2, 0, 0], sizes = [1, 32, 8], strides = [1, 1, 1]} : vector<4x32x8xf32> to vector<1x32x8xf32>
    %284 = vector.shape_cast %283 : vector<1x32x8xf32> to vector<32x8xf32>
    %cst_117 = arith.constant dense<0.000000e+00> : vector<16x8xf32>
    %285 = tpu.matmul %191, %284, %cst_117 {dimension_numbers = #tpu.dot_dimension_numbers<[1], [0], [0], [1], [0, 0, 1, 1], [], []>} : vector<16x32xf32>, vector<32x8xf32>, vector<16x8xf32> -> vector<16x8xf32>
    %286 = vector.extract_strided_slice %217 {offsets = [2, 0, 0], sizes = [1, 32, 8], strides = [1, 1, 1]} : vector<4x32x8xf32> to vector<1x32x8xf32>
    %287 = vector.shape_cast %286 : vector<1x32x8xf32> to vector<32x8xf32>
    %cst_118 = arith.constant dense<0.000000e+00> : vector<32x8xf32>
    %288 = tpu.matmul %215, %287, %cst_118 {dimension_numbers = #tpu.dot_dimension_numbers<[1], [0], [0], [1], [0, 0, 1, 1], [], []>} : vector<32x32xf32>, vector<32x8xf32>, vector<32x8xf32> -> vector<32x8xf32>
    %289 = vector.extract_strided_slice %218 {offsets = [2, 0, 0], sizes = [1, 32, 8], strides = [1, 1, 1]} : vector<4x32x8xf32> to vector<1x32x8xf32>
    %290 = vector.shape_cast %289 : vector<1x32x8xf32> to vector<32x8xf32>
    %cst_119 = arith.constant dense<0.000000e+00> : vector<32x8xf32>
    %291 = tpu.matmul %215, %290, %cst_119 {dimension_numbers = #tpu.dot_dimension_numbers<[1], [0], [0], [1], [0, 0, 1, 1], [], []>} : vector<32x32xf32>, vector<32x8xf32>, vector<32x8xf32> -> vector<32x8xf32>
    %292 = vector.shape_cast %285 : vector<16x8xf32> to vector<2x8x8xf32>
    %293 = vector.shape_cast %288 : vector<32x8xf32> to vector<2x16x8xf32>
    %294 = vector.shape_cast %291 : vector<32x8xf32> to vector<2x16x8xf32>
    "tpu.trace_start"() <{level = 10 : i32, message = "bnd,bmd->bnm"}> : () -> ()
    %cst_120 = arith.constant dense<0.000000e+00> : vector<2x8x16xf32>
    %295 = tpu.matmul %292, %293, %cst_120 {dimension_numbers = #tpu.dot_dimension_numbers<[2], [2], [1], [1], [0, 0, 0, 1, 1, 1], [0], [0]>} : vector<2x8x8xf32>, vector<2x16x8xf32>, vector<2x8x16xf32> -> vector<2x8x16xf32>
    "tpu.trace_stop"() : () -> ()
    %cst_121 = arith.constant 0.353553385 : f32
    %296 = vector.broadcast %cst_121 : f32 to vector<2x8x16xf32>
    %297 = arith.mulf %295, %296 : vector<2x8x16xf32>
    %cst_122 = arith.constant dense<0xFF800000> : vector<2x8xf32>
    %298 = vector.multi_reduction <maximumf>, %297, %cst_122 [2] : vector<2x8x16xf32> to vector<2x8xf32>
    %299 = vector.shape_cast %298 : vector<2x8xf32> to vector<2x8x1xf32>
    %300 = vector.broadcast %299 : vector<2x8x1xf32> to vector<2x8x16xf32>
    %301 = arith.subf %297, %300 : vector<2x8x16xf32>
    %302 = math.exp %301 : vector<2x8x16xf32>
    %cst_123 = arith.constant dense<0.000000e+00> : vector<2x8xf32>
    %303 = vector.multi_reduction <add>, %302, %cst_123 [2] : vector<2x8x16xf32> to vector<2x8xf32>
    %304 = vector.shape_cast %303 : vector<2x8xf32> to vector<2x8x1xf32>
    %305 = tpu.reciprocal %304 {approx = true} : vector<2x8x1xf32> -> vector<2x8x1xf32>
    %306 = vector.broadcast %305 : vector<2x8x1xf32> to vector<2x8x16xf32>
    %307 = arith.mulf %302, %306 : vector<2x8x16xf32>
    "tpu.trace_start"() <{level = 10 : i32, message = "bnm,bmd->bnd"}> : () -> ()
    %cst_124 = arith.constant dense<0.000000e+00> : vector<2x8x8xf32>
    %308 = tpu.matmul %307, %294, %cst_124 {dimension_numbers = #tpu.dot_dimension_numbers<[2], [1], [1], [2], [0, 0, 0, 1, 1, 2], [0], [0]>} : vector<2x8x16xf32>, vector<2x16x8xf32>, vector<2x8x8xf32> -> vector<2x8x8xf32>
    "tpu.trace_stop"() : () -> ()
    %309 = vector.shape_cast %308 : vector<2x8x8xf32> to vector<16x8xf32>
    %310 = vector.extract_strided_slice %219 {offsets = [2, 0, 0], sizes = [1, 8, 32], strides = [1, 1, 1]} : vector<4x8x32xf32> to vector<1x8x32xf32>
    %311 = vector.shape_cast %310 : vector<1x8x32xf32> to vector<8x32xf32>
    %cst_125 = arith.constant dense<0.000000e+00> : vector<16x32xf32>
    %312 = tpu.matmul %309, %311, %cst_125 {dimension_numbers = #tpu.dot_dimension_numbers<[1], [0], [0], [1], [0, 0, 1, 1], [], []>} : vector<16x8xf32>, vector<8x32xf32>, vector<16x32xf32> -> vector<16x32xf32>
    %313 = arith.addf %282, %312 : vector<16x32xf32>
    %314 = vector.extract_strided_slice %216 {offsets = [3, 0, 0], sizes = [1, 32, 8], strides = [1, 1, 1]} : vector<4x32x8xf32> to vector<1x32x8xf32>
    %315 = vector.shape_cast %314 : vector<1x32x8xf32> to vector<32x8xf32>
    %cst_126 = arith.constant dense<0.000000e+00> : vector<16x8xf32>
    %316 = tpu.matmul %191, %315, %cst_126 {dimension_numbers = #tpu.dot_dimension_numbers<[1], [0], [0], [1], [0, 0, 1, 1], [], []>} : vector<16x32xf32>, vector<32x8xf32>, vector<16x8xf32> -> vector<16x8xf32>
    %317 = vector.extract_strided_slice %217 {offsets = [3, 0, 0], sizes = [1, 32, 8], strides = [1, 1, 1]} : vector<4x32x8xf32> to vector<1x32x8xf32>
    %318 = vector.shape_cast %317 : vector<1x32x8xf32> to vector<32x8xf32>
    %cst_127 = arith.constant dense<0.000000e+00> : vector<32x8xf32>
    %319 = tpu.matmul %215, %318, %cst_127 {dimension_numbers = #tpu.dot_dimension_numbers<[1], [0], [0], [1], [0, 0, 1, 1], [], []>} : vector<32x32xf32>, vector<32x8xf32>, vector<32x8xf32> -> vector<32x8xf32>
    %320 = vector.extract_strided_slice %218 {offsets = [3, 0, 0], sizes = [1, 32, 8], strides = [1, 1, 1]} : vector<4x32x8xf32> to vector<1x32x8xf32>
    %321 = vector.shape_cast %320 : vector<1x32x8xf32> to vector<32x8xf32>
    %cst_128 = arith.constant dense<0.000000e+00> : vector<32x8xf32>
    %322 = tpu.matmul %215, %321, %cst_128 {dimension_numbers = #tpu.dot_dimension_numbers<[1], [0], [0], [1], [0, 0, 1, 1], [], []>} : vector<32x32xf32>, vector<32x8xf32>, vector<32x8xf32> -> vector<32x8xf32>
    %323 = vector.shape_cast %316 : vector<16x8xf32> to vector<2x8x8xf32>
    %324 = vector.shape_cast %319 : vector<32x8xf32> to vector<2x16x8xf32>
    %325 = vector.shape_cast %322 : vector<32x8xf32> to vector<2x16x8xf32>
    "tpu.trace_start"() <{level = 10 : i32, message = "bnd,bmd->bnm"}> : () -> ()
    %cst_129 = arith.constant dense<0.000000e+00> : vector<2x8x16xf32>
    %326 = tpu.matmul %323, %324, %cst_129 {dimension_numbers = #tpu.dot_dimension_numbers<[2], [2], [1], [1], [0, 0, 0, 1, 1, 1], [0], [0]>} : vector<2x8x8xf32>, vector<2x16x8xf32>, vector<2x8x16xf32> -> vector<2x8x16xf32>
    "tpu.trace_stop"() : () -> ()
    %cst_130 = arith.constant 0.353553385 : f32
    %327 = vector.broadcast %cst_130 : f32 to vector<2x8x16xf32>
    %328 = arith.mulf %326, %327 : vector<2x8x16xf32>
    %cst_131 = arith.constant dense<0xFF800000> : vector<2x8xf32>
    %329 = vector.multi_reduction <maximumf>, %328, %cst_131 [2] : vector<2x8x16xf32> to vector<2x8xf32>
    %330 = vector.shape_cast %329 : vector<2x8xf32> to vector<2x8x1xf32>
    %331 = vector.broadcast %330 : vector<2x8x1xf32> to vector<2x8x16xf32>
    %332 = arith.subf %328, %331 : vector<2x8x16xf32>
    %333 = math.exp %332 : vector<2x8x16xf32>
    %cst_132 = arith.constant dense<0.000000e+00> : vector<2x8xf32>
    %334 = vector.multi_reduction <add>, %333, %cst_132 [2] : vector<2x8x16xf32> to vector<2x8xf32>
    %335 = vector.shape_cast %334 : vector<2x8xf32> to vector<2x8x1xf32>
    %336 = tpu.reciprocal %335 {approx = true} : vector<2x8x1xf32> -> vector<2x8x1xf32>
    %337 = vector.broadcast %336 : vector<2x8x1xf32> to vector<2x8x16xf32>
    %338 = arith.mulf %333, %337 : vector<2x8x16xf32>
    "tpu.trace_start"() <{level = 10 : i32, message = "bnm,bmd->bnd"}> : () -> ()
    %cst_133 = arith.constant dense<0.000000e+00> : vector<2x8x8xf32>
    %339 = tpu.matmul %338, %325, %cst_133 {dimension_numbers = #tpu.dot_dimension_numbers<[2], [1], [1], [2], [0, 0, 0, 1, 1, 2], [0], [0]>} : vector<2x8x16xf32>, vector<2x16x8xf32>, vector<2x8x8xf32> -> vector<2x8x8xf32>
    "tpu.trace_stop"() : () -> ()
    %340 = vector.shape_cast %339 : vector<2x8x8xf32> to vector<16x8xf32>
    %341 = vector.extract_strided_slice %219 {offsets = [3, 0, 0], sizes = [1, 8, 32], strides = [1, 1, 1]} : vector<4x8x32xf32> to vector<1x8x32xf32>
    %342 = vector.shape_cast %341 : vector<1x8x32xf32> to vector<8x32xf32>
    %cst_134 = arith.constant dense<0.000000e+00> : vector<16x32xf32>
    %343 = tpu.matmul %340, %342, %cst_134 {dimension_numbers = #tpu.dot_dimension_numbers<[1], [0], [0], [1], [0, 0, 1, 1], [], []>} : vector<16x8xf32>, vector<8x32xf32>, vector<16x32xf32> -> vector<16x32xf32>
    %344 = arith.addf %313, %343 : vector<16x32xf32>
    %345 = arith.addf %167, %344 : vector<16x32xf32>
    %c0_135 = arith.constant 0 : index
    %c0_136 = arith.constant 0 : index
    %346 = vector.load %arg20[%c0_135, %c0_136] : memref<32x64xf32, #tpu.memory_space<vmem>>, vector<32x64xf32>
    %cst_137 = arith.constant dense<0.000000e+00> : vector<16x64xf32>
    %347 = tpu.matmul %345, %346, %cst_137 {dimension_numbers = #tpu.dot_dimension_numbers<[1], [0], [0], [1], [0, 0, 1, 1], [], []>} : vector<16x32xf32>, vector<32x64xf32>, vector<16x64xf32> -> vector<16x64xf32>
    %c0_138 = arith.constant 0 : index
    %c0_139 = arith.constant 0 : index
    %348 = vector.load %arg21[%c0_138, %c0_139] : memref<1x64xf32, #tpu.memory_space<vmem>>, vector<1x64xf32>
    %349 = vector.broadcast %348 : vector<1x64xf32> to vector<16x64xf32>
    %350 = arith.addf %347, %349 : vector<16x64xf32>
    %cst_140 = arith.constant 5.000000e-01 : f32
    %351 = vector.broadcast %cst_140 : f32 to vector<16x64xf32>
    %352 = arith.mulf %351, %350 : vector<16x64xf32>
    %cst_141 = arith.constant 0.707106769 : f32
    %353 = vector.broadcast %cst_141 : f32 to vector<16x64xf32>
    %354 = arith.mulf %350, %353 : vector<16x64xf32>
    %355 = math.erf %354 : vector<16x64xf32>
    %cst_142 = arith.constant 1.000000e+00 : f32
    %356 = vector.broadcast %cst_142 : f32 to vector<16x64xf32>
    %357 = arith.addf %356, %355 : vector<16x64xf32>
    %358 = arith.mulf %352, %357 : vector<16x64xf32>
    %c0_143 = arith.constant 0 : index
    %c0_144 = arith.constant 0 : index
    %359 = vector.load %arg22[%c0_143, %c0_144] : memref<64x32xf32, #tpu.memory_space<vmem>>, vector<64x32xf32>
    %cst_145 = arith.constant dense<0.000000e+00> : vector<16x32xf32>
    %360 = tpu.matmul %358, %359, %cst_145 {dimension_numbers = #tpu.dot_dimension_numbers<[1], [0], [0], [1], [0, 0, 1, 1], [], []>} : vector<16x64xf32>, vector<64x32xf32>, vector<16x32xf32> -> vector<16x32xf32>
    %361 = arith.addf %345, %360 : vector<16x32xf32>
    %c0_146 = arith.constant 0 : index
    %c0_147 = arith.constant 0 : index
    %362 = vector.load %arg23[%c0_146, %c0_147] : memref<1x32xf32, #tpu.memory_space<vmem>>, vector<1x32xf32>
    %363 = vector.broadcast %362 : vector<1x32xf32> to vector<16x32xf32>
    %364 = arith.addf %361, %363 : vector<16x32xf32>
    %365 = vector.shape_cast %364 : vector<16x32xf32> to vector<2x8x32xf32>
    %c0_148 = arith.constant 0 : index
    %c0_149 = arith.constant 0 : index
    %c0_150 = arith.constant 0 : index
    %366 = vector.load %arg24[%c0_148, %c0_149, %c0_150] : memref<2x8x32xf32, #tpu.memory_space<vmem>>, vector<2x8x32xf32>
    tpu.vector_store %arg24[%c0_148, %c0_149, %c0_150], %365 {strides = array<i32>} : memref<2x8x32xf32, #tpu.memory_space<vmem>>, vector<2x8x32xf32>,
    return
  }
  func.func @transform_0(%arg0: i32) -> (i32, i32, i32) {
    %c0_i32 = arith.constant 0 : i32
    %c0_i32_0 = arith.constant 0 : i32
    %c0_i32_1 = arith.constant 0 : i32
    %c0_i32_2 = arith.constant 0 : i32
    return %c0_i32, %c0_i32_0, %c0_i32_1 : i32, i32, i32
  }
  func.func @transform_1(%arg0: i32) -> (i32, i32, i32) {
    %c0_i32 = arith.constant 0 : i32
    %c0_i32_0 = arith.constant 0 : i32
    %c0_i32_1 = arith.constant 0 : i32
    %c0_i32_2 = arith.constant 0 : i32
    return %c0_i32, %c0_i32_0, %c0_i32_1 : i32, i32, i32
  }
  func.func @transform_2(%arg0: i32) -> (i32, i32) {
    %c0_i32 = arith.constant 0 : i32
    %c0_i32_0 = arith.constant 0 : i32
    %c0_i32_1 = arith.constant 0 : i32
    return %c0_i32, %c0_i32_0 : i32, i32
  }
  func.func @transform_3(%arg0: i32) -> (i32, i32) {
    %c0_i32 = arith.constant 0 : i32
    %c0_i32_0 = arith.constant 0 : i32
    %c0_i32_1 = arith.constant 0 : i32
    return %c0_i32, %c0_i32_0 : i32, i32
  }
  func.func @transform_4(%arg0: i32) -> (i32, i32) {
    %c0_i32 = arith.constant 0 : i32
    %c0_i32_0 = arith.constant 0 : i32
    %c0_i32_1 = arith.constant 0 : i32
    return %c0_i32, %c0_i32_0 : i32, i32
  }
  func.func @transform_5(%arg0: i32) -> (i32, i32) {
    %c0_i32 = arith.constant 0 : i32
    %c0_i32_0 = arith.constant 0 : i32
    %c0_i32_1 = arith.constant 0 : i32
    return %c0_i32, %c0_i32_0 : i32, i32
  }
  func.func @transform_6(%arg0: i32) -> (i32, i32) {
    %c0_i32 = arith.constant 0 : i32
    %c0_i32_0 = arith.constant 0 : i32
    %c0_i32_1 = arith.constant 0 : i32
    return %c0_i32, %c0_i32_0 : i32, i32
  }
  func.func @transform_7(%arg0: i32) -> (i32, i32, i32) {
    %c0_i32 = arith.constant 0 : i32
    %c0_i32_0 = arith.constant 0 : i32
    %c0_i32_1 = arith.constant 0 : i32
    %c0_i32_2 = arith.constant 0 : i32
    return %c0_i32, %c0_i32_0, %c0_i32_1 : i32, i32, i32
  }
  func.func @transform_8(%arg0: i32) -> (i32, i32, i32) {
    %c0_i32 = arith.constant 0 : i32
    %c0_i32_0 = arith.constant 0 : i32
    %c0_i32_1 = arith.constant 0 : i32
    %c0_i32_2 = arith.constant 0 : i32
    return %c0_i32, %c0_i32_0, %c0_i32_1 : i32, i32, i32
  }
  func.func @transform_9(%arg0: i32) -> (i32, i32, i32) {
    %c0_i32 = arith.constant 0 : i32
    %c0_i32_0 = arith.constant 0 : i32
    %c0_i32_1 = arith.constant 0 : i32
    %c0_i32_2 = arith.constant 0 : i32
    return %c0_i32, %c0_i32_0, %c0_i32_1 : i32, i32, i32
  }
  func.func @transform_10(%arg0: i32) -> (i32, i32, i32) {
    %c0_i32 = arith.constant 0 : i32
    %c0_i32_0 = arith.constant 0 : i32
    %c0_i32_1 = arith.constant 0 : i32
    %c0_i32_2 = arith.constant 0 : i32
    return %c0_i32, %c0_i32_0, %c0_i32_1 : i32, i32, i32
  }
  func.func @transform_11(%arg0: i32) -> (i32, i32) {
    %c0_i32 = arith.constant 0 : i32
    %c0_i32_0 = arith.constant 0 : i32
    %c0_i32_1 = arith.constant 0 : i32
    return %c0_i32, %c0_i32_0 : i32, i32
  }
  func.func @transform_12(%arg0: i32) -> (i32, i32) {
    %c0_i32 = arith.constant 0 : i32
    %c0_i32_0 = arith.constant 0 : i32
    %c0_i32_1 = arith.constant 0 : i32
    return %c0_i32, %c0_i32_0 : i32, i32
  }
  func.func @transform_13(%arg0: i32) -> (i32, i32) {
    %c0_i32 = arith.constant 0 : i32
    %c0_i32_0 = arith.constant 0 : i32
    %c0_i32_1 = arith.constant 0 : i32
    return %c0_i32, %c0_i32_0 : i32, i32
  }
  func.func @transform_14(%arg0: i32) -> (i32, i32) {
    %c0_i32 = arith.constant 0 : i32
    %c0_i32_0 = arith.constant 0 : i32
    %c0_i32_1 = arith.constant 0 : i32
    return %c0_i32, %c0_i32_0 : i32, i32
  }
  func.func @transform_15(%arg0: i32) -> (i32, i32, i32) {
    %c0_i32 = arith.constant 0 : i32
    %c0_i32_0 = arith.constant 0 : i32
    %c0_i32_1 = arith.constant 0 : i32
    %c0_i32_2 = arith.constant 0 : i32
    return %c0_i32, %c0_i32_0, %c0_i32_1 : i32, i32, i32
  }
  func.func @transform_16(%arg0: i32) -> (i32, i32, i32) {
    %c0_i32 = arith.constant 0 : i32
    %c0_i32_0 = arith.constant 0 : i32
    %c0_i32_1 = arith.constant 0 : i32
    %c0_i32_2 = arith.constant 0 : i32
    return %c0_i32, %c0_i32_0, %c0_i32_1 : i32, i32, i32
  }
  func.func @transform_17(%arg0: i32) -> (i32, i32, i32) {
    %c0_i32 = arith.constant 0 : i32
    %c0_i32_0 = arith.constant 0 : i32
    %c0_i32_1 = arith.constant 0 : i32
    %c0_i32_2 = arith.constant 0 : i32
    return %c0_i32, %c0_i32_0, %c0_i32_1 : i32, i32, i32
  }
  func.func @transform_18(%arg0: i32) -> (i32, i32, i32) {
    %c0_i32 = arith.constant 0 : i32
    %c0_i32_0 = arith.constant 0 : i32
    %c0_i32_1 = arith.constant 0 : i32
    %c0_i32_2 = arith.constant 0 : i32
    return %c0_i32, %c0_i32_0, %c0_i32_1 : i32, i32, i32
  }
  func.func @transform_19(%arg0: i32) -> (i32, i32) {
    %c0_i32 = arith.constant 0 : i32
    %c0_i32_0 = arith.constant 0 : i32
    %c0_i32_1 = arith.constant 0 : i32
    return %c0_i32, %c0_i32_0 : i32, i32
  }
  func.func @transform_20(%arg0: i32) -> (i32, i32) {
    %c0_i32 = arith.constant 0 : i32
    %c0_i32_0 = arith.constant 0 : i32
    %c0_i32_1 = arith.constant 0 : i32
    return %c0_i32, %c0_i32_0 : i32, i32
  }
  func.func @transform_21(%arg0: i32) -> (i32, i32) {
    %c0_i32 = arith.constant 0 : i32
    %c0_i32_0 = arith.constant 0 : i32
    %c0_i32_1 = arith.constant 0 : i32
    return %c0_i32, %c0_i32_0 : i32, i32
  }
  func.func @transform_22(%arg0: i32) -> (i32, i32) {
    %c0_i32 = arith.constant 0 : i32
    %c0_i32_0 = arith.constant 0 : i32
    %c0_i32_1 = arith.constant 0 : i32
    return %c0_i32, %c0_i32_0 : i32, i32
  }
  func.func @transform_23(%arg0: i32) -> (i32, i32, i32) {
    %c0_i32 = arith.constant 0 : i32
    %c0_i32_0 = arith.constant 0 : i32
    %c0_i32_1 = arith.constant 0 : i32
    %c0_i32_2 = arith.constant 0 : i32
    return %c0_i32, %c0_i32_0, %c0_i32_1 : i32, i32, i32
  }
}

</mosaic_0001>

<llo_original>
// kernel: tpu_custom_call.1
$region0: #{tpu_custom_call.1}
  #allocation0 [shape = 'u32[]', space=smem, size = 0x4, offset = 0x4, fixed_abs, tag = 'smem constant byte address 0x4 - core index']
  #allocation1 [shape = 'u32[144,128]{1,0:T(1,128)}', space=vmem, size = 0x12000, scoped, tag = 'internal scratch']
  %s0 = inlined_call_operand.vmem [shape: f32[2,8,32], index: 0, kind: input, shape index: {}]
  %s1 = inlined_call_operand.vmem [shape: f32[2,16,32], index: 1, kind: input, shape index: {}]
  %s2 = inlined_call_operand.vmem [shape: f32[8,32], index: 2, kind: input, shape index: {}]
  %s3 = inlined_call_operand.vmem [shape: f32[1,32], index: 3, kind: input, shape index: {}]
  %s4 = inlined_call_operand.vmem [shape: f32[1,32], index: 4, kind: input, shape index: {}]
  %s5 = inlined_call_operand.vmem [shape: f32[1,32], index: 5, kind: input, shape index: {}]
  %s6 = inlined_call_operand.vmem [shape: f32[1,32], index: 6, kind: input, shape index: {}]
  %s7 = inlined_call_operand.vmem [shape: f32[4,32,8], index: 7, kind: input, shape index: {}]
  %s8 = inlined_call_operand.vmem [shape: f32[4,32,8], index: 8, kind: input, shape index: {}]
  %s9 = inlined_call_operand.vmem [shape: f32[4,32,8], index: 9, kind: input, shape index: {}]
  %s10 = inlined_call_operand.vmem [shape: f32[4,8,32], index: 10, kind: input, shape index: {}]
  %s11 = inlined_call_operand.vmem [shape: f32[1,32], index: 11, kind: input, shape index: {}]
  %s12 = inlined_call_operand.vmem [shape: f32[1,32], index: 12, kind: input, shape index: {}]
  %s13 = inlined_call_operand.vmem [shape: f32[1,32], index: 13, kind: input, shape index: {}]
  %s14 = inlined_call_operand.vmem [shape: f32[1,32], index: 14, kind: input, shape index: {}]
  %s15 = inlined_call_operand.vmem [shape: f32[4,32,8], index: 15, kind: input, shape index: {}]
  %s16 = inlined_call_operand.vmem [shape: f32[4,32,8], index: 16, kind: input, shape index: {}]
  %s17 = inlined_call_operand.vmem [shape: f32[4,32,8], index: 17, kind: input, shape index: {}]
  %s18 = inlined_call_operand.vmem [shape: f32[4,8,32], index: 18, kind: input, shape index: {}]
  %s19 = inlined_call_operand.vmem [shape: f32[32,64], index: 19, kind: input, shape index: {}]
  %s20 = inlined_call_operand.vmem [shape: f32[1,64], index: 20, kind: input, shape index: {}]
  %s21 = inlined_call_operand.vmem [shape: f32[64,32], index: 21, kind: input, shape index: {}]
  %s22 = inlined_call_operand.vmem [shape: f32[1,32], index: 22, kind: input, shape index: {}]
  %s23 = inlined_call_operand.hbm [shape: f32[2,8,32], index: 23, kind: output, shape index: {}]
  %s24 = sld [smem:[#allocation0]]
  $region102: #{tpu_custom_call.1} parent=0
    _
  %s26 = ssub.s32 1, %s24
  %s27 = scalar_select 0, %s26, %s24
  $region1: #{tpu_custom_call.1} parent=0
    #allocation2 [shape = 'u8[8192]{0}', space=vmem, size = 0x2000, scoped, tag = 'output window, operand 0, single buffered']
    #allocation3 [shape = 's32[1]{0}', space=sflag, size = 0x4, scoped, tag = 'scoped memory for tpu_custom_call.1']
    %28 = vsyncpa [#allocation3], 0
    // Predicated region
    $region2: #{tpu_custom_call.1} parent=1 // pred_check
      _
    $region3: #{tpu_custom_call.1} parent=1 // pred_check_branch
      %30 = sbr.rel (0) target = $region5
    $region4: #{tpu_custom_call.1} parent=1 // pred_region
      _
    $region5: #{tpu_custom_call.1} parent=1 // pred_fallthru
      _
    // Predicated region
    $region6: #{tpu_custom_call.1} parent=1 // pred_check
      _
    $region7: #{tpu_custom_call.1} parent=1 // pred_check_branch
      %32 = sbr.rel (0) target = $region9
    $region8: #{tpu_custom_call.1} parent=1 // pred_region
      _
    $region9: #{tpu_custom_call.1} parent=1 // pred_fallthru
      _
    // Predicated region
    $region10: #{tpu_custom_call.1} parent=1 // pred_check
      _
    $region11: #{tpu_custom_call.1} parent=1 // pred_check_branch
      %34 = sbr.rel (0) target = $region13
    $region12: #{tpu_custom_call.1} parent=1 // pred_region
      _
    $region13: #{tpu_custom_call.1} parent=1 // pred_fallthru
      _
    // Predicated region
    $region14: #{tpu_custom_call.1} parent=1 // pred_check
      _
    $region15: #{tpu_custom_call.1} parent=1 // pred_check_branch
      %36 = sbr.rel (0) target = $region17
    $region16: #{tpu_custom_call.1} parent=1 // pred_region
      _
    $region17: #{tpu_custom_call.1} parent=1 // pred_fallthru
      _
    // Predicated region
    $region18: #{tpu_custom_call.1} parent=1 // pred_check
      _
    $region19: #{tpu_custom_call.1} parent=1 // pred_check_branch
      %38 = sbr.rel (0) target = $region21
    $region20: #{tpu_custom_call.1} parent=1 // pred_region
      _
    $region21: #{tpu_custom_call.1} parent=1 // pred_fallthru
      _
    // Predicated region
    $region22: #{tpu_custom_call.1} parent=1 // pred_check
      _
    $region23: #{tpu_custom_call.1} parent=1 // pred_check_branch
      %40 = sbr.rel (0) target = $region25
    $region24: #{tpu_custom_call.1} parent=1 // pred_region
      _
    $region25: #{tpu_custom_call.1} parent=1 // pred_fallthru
      _
    // Predicated region
    $region26: #{tpu_custom_call.1} parent=1 // pred_check
      _
    $region27: #{tpu_custom_call.1} parent=1 // pred_check_branch
      %42 = sbr.rel (0) target = $region29
    $region28: #{tpu_custom_call.1} parent=1 // pred_region
      _
    $region29: #{tpu_custom_call.1} parent=1 // pred_fallthru
      _
    // Predicated region
    $region30: #{tpu_custom_call.1} parent=1 // pred_check
      _
    $region31: #{tpu_custom_call.1} parent=1 // pred_check_branch
      %44 = sbr.rel (0) target = $region33
    $region32: #{tpu_custom_call.1} parent=1 // pred_region
      _
    $region33: #{tpu_custom_call.1} parent=1 // pred_fallthru
      _
    // Predicated region
    $region34: #{tpu_custom_call.1} parent=1 // pred_check
      _
    $region35: #{tpu_custom_call.1} parent=1 // pred_check_branch
      %46 = sbr.rel (0) target = $region37
    $region36: #{tpu_custom_call.1} parent=1 // pred_region
      _
    $region37: #{tpu_custom_call.1} parent=1 // pred_fallthru
      _
    // Predicated region
    $region38: #{tpu_custom_call.1} parent=1 // pred_check
      _
    $region39: #{tpu_custom_call.1} parent=1 // pred_check_branch
      %48 = sbr.rel (0) target = $region41
    $region40: #{tpu_custom_call.1} parent=1 // pred_region
      _
    $region41: #{tpu_custom_call.1} parent=1 // pred_fallthru
      _
    // Predicated region
    $region42: #{tpu_custom_call.1} parent=1 // pred_check
      _
    $region43: #{tpu_custom_call.1} parent=1 // pred_check_branch
      %50 = sbr.rel (0) target = $region45
    $region44: #{tpu_custom_call.1} parent=1 // pred_region
      _
    $region45: #{tpu_custom_call.1} parent=1 // pred_fallthru
      _
    // Predicated region
    $region46: #{tpu_custom_call.1} parent=1 // pred_check
      _
    $region47: #{tpu_custom_call.1} parent=1 // pred_check_branch
      %52 = sbr.rel (0) target = $region49
    $region48: #{tpu_custom_call.1} parent=1 // pred_region
      _
    $region49: #{tpu_custom_call.1} parent=1 // pred_fallthru
      _
    // Predicated region
    $region50: #{tpu_custom_call.1} parent=1 // pred_check
      _
    $region51: #{tpu_custom_call.1} parent=1 // pred_check_branch
      %54 = sbr.rel (0) target = $region53
    $region52: #{tpu_custom_call.1} parent=1 // pred_region
      _
    $region53: #{tpu_custom_call.1} parent=1 // pred_fallthru
      _
    // Predicated region
    $region54: #{tpu_custom_call.1} parent=1 // pred_check
      _
    $region55: #{tpu_custom_call.1} parent=1 // pred_check_branch
      %56 = sbr.rel (0) target = $region57
    $region56: #{tpu_custom_call.1} parent=1 // pred_region
      _
    $region57: #{tpu_custom_call.1} parent=1 // pred_fallthru
      _
    // Predicated region
    $region58: #{tpu_custom_call.1} parent=1 // pred_check
      _
    $region59: #{tpu_custom_call.1} parent=1 // pred_check_branch
      %58 = sbr.rel (0) target = $region61
    $region60: #{tpu_custom_call.1} parent=1 // pred_region
      _
    $region61: #{tpu_custom_call.1} parent=1 // pred_fallthru
      _
    // Predicated region
    $region62: #{tpu_custom_call.1} parent=1 // pred_check
      _
    $region63: #{tpu_custom_call.1} parent=1 // pred_check_branch
      %60 = sbr.rel (0) target = $region65
    $region64: #{tpu_custom_call.1} parent=1 // pred_region
      _
    $region65: #{tpu_custom_call.1} parent=1 // pred_fallthru
      _
    // Predicated region
    $region66: #{tpu_custom_call.1} parent=1 // pred_check
      _
    $region67: #{tpu_custom_call.1} parent=1 // pred_check_branch
      %62 = sbr.rel (0) target = $region69
    $region68: #{tpu_custom_call.1} parent=1 // pred_region
      _
    $region69: #{tpu_custom_call.1} parent=1 // pred_fallthru
      _
    // Predicated region
    $region70: #{tpu_custom_call.1} parent=1 // pred_check
      _
    $region71: #{tpu_custom_call.1} parent=1 // pred_check_branch
      %64 = sbr.rel (0) target = $region73
    $region72: #{tpu_custom_call.1} parent=1 // pred_region
      _
    $region73: #{tpu_custom_call.1} parent=1 // pred_fallthru
      _
    // Predicated region
    $region74: #{tpu_custom_call.1} parent=1 // pred_check
      _
    $region75: #{tpu_custom_call.1} parent=1 // pred_check_branch
      %66 = sbr.rel (0) target = $region77
    $region76: #{tpu_custom_call.1} parent=1 // pred_region
      _
    $region77: #{tpu_custom_call.1} parent=1 // pred_fallthru
      _
    // Predicated region
    $region78: #{tpu_custom_call.1} parent=1 // pred_check
      _
    $region79: #{tpu_custom_call.1} parent=1 // pred_check_branch
      %68 = sbr.rel (0) target = $region81
    $region80: #{tpu_custom_call.1} parent=1 // pred_region
      _
    $region81: #{tpu_custom_call.1} parent=1 // pred_fallthru
      _
    // Predicated region
    $region82: #{tpu_custom_call.1} parent=1 // pred_check
      _
    $region83: #{tpu_custom_call.1} parent=1 // pred_check_branch
      %70 = sbr.rel (0) target = $region85
    $region84: #{tpu_custom_call.1} parent=1 // pred_region
      _
    $region85: #{tpu_custom_call.1} parent=1 // pred_fallthru
      _
    // Predicated region
    $region86: #{tpu_custom_call.1} parent=1 // pred_check
      _
    $region87: #{tpu_custom_call.1} parent=1 // pred_check_branch
      %72 = sbr.rel (0) target = $region89
    $region88: #{tpu_custom_call.1} parent=1 // pred_region
      _
    $region89: #{tpu_custom_call.1} parent=1 // pred_fallthru
      _
    // Predicated region
    $region90: #{tpu_custom_call.1} parent=1 // pred_check
      _
    $region91: #{tpu_custom_call.1} parent=1 // pred_check_branch
      %74 = sbr.rel (0) target = $region93
    $region92: #{tpu_custom_call.1} parent=1 // pred_region
      _
    $region93: #{tpu_custom_call.1} parent=1 // pred_fallthru
      _
    %v75 = vld [vmem:[%s0] sm:$0xff]
    %v76 = vld [vmem:[%s0 + $0x8] sm:$0xff]
    %v77 = vld [vmem:[%s2] sm:$0xff]
    %v78 = vadd.f32 %v75, %v77
    %v79 = vadd.f32 %v76, %v77
    %v80 = vld [vmem:[%s1] sm:$0xff]
    %v81 = vld [vmem:[%s1 + $0x8] sm:$0xff]
    %v82 = vld [vmem:[%s1 + $0x10] sm:$0xff]
    %v83 = vld [vmem:[%s1 + $0x18] sm:$0xff]
    %vm84 = vcmask 261120
    %v85 = vsel %vm84, %v78, 0.0
    %86 = vadd.xlane.f32.xlu0 %v85
    %v87 = vpop.xlane.xlu0 %86
    %v88 = vsel %vm84, %v79, 0.0
    %89 = vadd.xlane.f32.xlu0 %v88
    %v90 = vpop.xlane.xlu0 %89
    %v91 = vrcp.pop 32.0
    %v92 = vmul.f32 %v87, %v91
    %v93 = vmul.f32 %v90, %v91
    %v94 = vsub.f32 %v78, %v92
    %v95 = vsub.f32 %v79, %v93
    %v96 = vmul.f32 %v94, %v94
    %v97 = vmul.f32 %v95, %v95
    %v98 = vsel %vm84, %v96, 0.0
    %99 = vadd.xlane.f32.xlu0 %v98
    %v100 = vpop.xlane.xlu0 %99
    %v101 = vsel %vm84, %v97, 0.0
    %102 = vadd.xlane.f32.xlu0 %v101
    %v103 = vpop.xlane.xlu0 %102
    %v104 = vmul.f32 %v100, %v91
    %v105 = vmul.f32 %v103, %v91
    %v106 = vadd.f32 %v104, 1e-05
    %v107 = vadd.f32 %v105, 1e-05
    %v108 = vrsqrt.pop %v106
    %v109 = vrsqrt.pop %v107
    %v110 = vmul.f32 %v94, %v108
    %v111 = vmul.f32 %v95, %v109
    %v112 = vld [vmem:[%s3] sm:$0x1]
    %v114 = vlaneseq
    %v115 = vshrl.u32 %v114, 7
    %v116 = vsub.s32 0, %v115
    %v117 = vrot.slane %v112, %v116
    %v119 = vmul.f32 %v110, %v117
    %v120 = vmul.f32 %v111, %v117
    %v121 = vld [vmem:[%s4] sm:$0x1]
    %v123 = vlaneseq
    %v124 = vshrl.u32 %v123, 7
    %v125 = vsub.s32 0, %v124
    %v126 = vrot.slane %v121, %v125
    %v128 = vadd.f32 %v119, %v126
    %v129 = vadd.f32 %v120, %v126
    %v130 = vld [vmem:[%s5] sm:$0x1]
    %v132 = vlaneseq
    %v133 = vshrl.u32 %v132, 7
    %v134 = vsub.s32 0, %v133
    %v135 = vrot.slane %v130, %v134
    %v137 = vmul.f32 %v110, %v135
    %v138 = vmul.f32 %v111, %v135
    %v139 = vld [vmem:[%s6] sm:$0x1]
    %v141 = vlaneseq
    %v142 = vshrl.u32 %v141, 7
    %v143 = vsub.s32 0, %v142
    %v144 = vrot.slane %v139, %v143
    %v146 = vadd.f32 %v137, %v144
    %v147 = vadd.f32 %v138, %v144
    %v148 = vld [vmem:[%s7] sm:$0xff]
    %v149 = vld [vmem:[%s7 + $0x8] sm:$0xff]
    %v150 = vld [vmem:[%s7 + $0x10] sm:$0xff]
    %v151 = vld [vmem:[%s7 + $0x18] sm:$0xff]
    %v152 = vld [vmem:[%s7 + $0x20] sm:$0xff]
    %v153 = vld [vmem:[%s7 + $0x28] sm:$0xff]
    %v154 = vld [vmem:[%s7 + $0x30] sm:$0xff]
    %v155 = vld [vmem:[%s7 + $0x38] sm:$0xff]
    %v156 = vld [vmem:[%s7 + $0x40] sm:$0xff]
    %v157 = vld [vmem:[%s7 + $0x48] sm:$0xff]
    %v158 = vld [vmem:[%s7 + $0x50] sm:$0xff]
    %v159 = vld [vmem:[%s7 + $0x58] sm:$0xff]
    %v160 = vld [vmem:[%s7 + $0x60] sm:$0xff]
    %v161 = vld [vmem:[%s7 + $0x68] sm:$0xff]
    %v162 = vld [vmem:[%s7 + $0x70] sm:$0xff]
    %v163 = vld [vmem:[%s7 + $0x78] sm:$0xff]
    %v164 = vld [vmem:[%s8] sm:$0xff]
    %v165 = vld [vmem:[%s8 + $0x8] sm:$0xff]
    %v166 = vld [vmem:[%s8 + $0x10] sm:$0xff]
    %v167 = vld [vmem:[%s8 + $0x18] sm:$0xff]
    %v168 = vld [vmem:[%s8 + $0x20] sm:$0xff]
    %v169 = vld [vmem:[%s8 + $0x28] sm:$0xff]
    %v170 = vld [vmem:[%s8 + $0x30] sm:$0xff]
    %v171 = vld [vmem:[%s8 + $0x38] sm:$0xff]
    %v172 = vld [vmem:[%s8 + $0x40] sm:$0xff]
    %v173 = vld [vmem:[%s8 + $0x48] sm:$0xff]
    %v174 = vld [vmem:[%s8 + $0x50] sm:$0xff]
    %v175 = vld [vmem:[%s8 + $0x58] sm:$0xff]
    %v176 = vld [vmem:[%s8 + $0x60] sm:$0xff]
    %v177 = vld [vmem:[%s8 + $0x68] sm:$0xff]
    %v178 = vld [vmem:[%s8 + $0x70] sm:$0xff]
    %v179 = vld [vmem:[%s8 + $0x78] sm:$0xff]
    %v180 = vld [vmem:[%s9] sm:$0xff]
    %v181 = vld [vmem:[%s9 + $0x8] sm:$0xff]
    %v182 = vld [vmem:[%s9 + $0x10] sm:$0xff]
    %v183 = vld [vmem:[%s9 + $0x18] sm:$0xff]
    %v184 = vld [vmem:[%s9 + $0x20] sm:$0xff]
    %v185 = vld [vmem:[%s9 + $0x28] sm:$0xff]
    %v186 = vld [vmem:[%s9 + $0x30] sm:$0xff]
    %v187 = vld [vmem:[%s9 + $0x38] sm:$0xff]
    %v188 = vld [vmem:[%s9 + $0x40] sm:$0xff]
    %v189 = vld [vmem:[%s9 + $0x48] sm:$0xff]
    %v190 = vld [vmem:[%s9 + $0x50] sm:$0xff]
    %v191 = vld [vmem:[%s9 + $0x58] sm:$0xff]
    %v192 = vld [vmem:[%s9 + $0x60] sm:$0xff]
    %v193 = vld [vmem:[%s9 + $0x68] sm:$0xff]
    %v194 = vld [vmem:[%s9 + $0x70] sm:$0xff]
    %v195 = vld [vmem:[%s9 + $0x78] sm:$0xff]
    %v196 = vld [vmem:[%s10] sm:$0xff]
    %v197 = vld [vmem:[%s10 + $0x8] sm:$0xff]
    %v198 = vld [vmem:[%s10 + $0x10] sm:$0xff]
    %v199 = vld [vmem:[%s10 + $0x18] sm:$0xff]
    %v201 = vsel %vm84, %v128, 0
    %v204 = vsel %vm84, %v129, 0
    %206 = vmatprep.subr.mxu0 0.0
    %207 = vmatpush1.msra.mxu0 %v148
    %208 = vmatprep.subr.mxu0 0.0
    %209 = vmatpush1.msra.mxu0 %v149
    %210 = vmatprep.subr.mxu0 0.0
    %211 = vmatpush1.msra.mxu0 %v150
    %212 = vmatprep.subr.mxu0 0.0
    %213 = vmatpush1.msra.mxu0 %v151
    %214 = vmatprep.subr.mxu0 0.0
    %215 = vmatpush1.msra.mxu0 0.0
    %216 = vmatprep.subr.mxu0 0.0
    %217 = vmatpush1.msra.mxu0 0.0
    %218 = vmatprep.subr.mxu0 0.0
    %219 = vmatpush1.msra.mxu0 0.0
    %220 = vmatprep.subr.mxu0 0.0
    %221 = vmatpush1.msra.mxu0 0.0
    %222 = vmatprep.subr.mxu0 0.0
    %223 = vmatpush1.msra.mxu0 0.0
    %224 = vmatprep.subr.mxu0 0.0
    %225 = vmatpush1.msra.mxu0 0.0
    %226 = vmatprep.subr.mxu0 0.0
    %227 = vmatpush1.msra.mxu0 0.0
    %228 = vmatprep.subr.mxu0 0.0
    %229 = vmatpush1.msra.mxu0 0.0
    %230 = vmatprep.subr.mxu0 0.0
    %231 = vmatpush1.msra.mxu0 0.0
    %232 = vmatprep.subr.mxu0 0.0
    %233 = vmatpush1.msra.mxu0 0.0
    %234 = vmatprep.subr.mxu0 0.0
    %235 = vmatpush1.msra.mxu0 0.0
    %236 = vmatprep.subr.mxu0 0.0
    %237 = vmatpush1.msra.mxu0 0.0
    %238 = vmatprep.subr.mxu0 0.0
    %239 = vmatpush1.msra.mxu0 0.0
    %240 = vmatprep.subr.mxu0 0.0
    %241 = vmatpush1.msra.mxu0 0.0
    %242 = vmatprep.subr.mxu0 0.0
    %243 = vmatpush1.msra.mxu0 0.0
    %244 = vmatprep.subr.mxu0 0.0
    %245 = vmatpush1.msra.mxu0 0.0
    %246 = vmatprep.subr.mxu0 0.0
    %247 = vmatpush1.msra.mxu0 0.0
    %248 = vmatprep.subr.mxu0 0.0
    %249 = vmatpush1.msra.mxu0 0.0
    %250 = vmatprep.subr.mxu0 0.0
    %251 = vmatpush1.msra.mxu0 0.0
    %252 = vmatprep.subr.mxu0 0.0
    %253 = vmatpush1.msra.mxu0 0.0
    %254 = vmatprep.subr.mxu0 0.0
    %255 = vmatpush1.msra.mxu0 0.0
    %256 = vmatprep.subr.mxu0 0.0
    %257 = vmatpush1.msra.mxu0 0.0
    %258 = vmatprep.subr.mxu0 0.0
    %259 = vmatpush1.msra.mxu0 0.0
    %260 = vmatprep.subr.mxu0 0.0
    %261 = vmatpush1.msra.mxu0 0.0
    %262 = vmatprep.subr.mxu0 0.0
    %263 = vmatpush1.msra.mxu0 0.0
    %264 = vmatprep.subr.mxu0 0.0
    %265 = vmatpush1.msra.mxu0 0.0
    %266 = vmatprep.subr.mxu0 0.0
    %267 = vmatpush1.msra.mxu0 0.0
    %268 = vmatprep.subr.mxu0 0.0
    %269 = vmatpush1.msra.mxu0 0.0
    %270 = vmatprep.mubr.f32.mxu0 0.0
    %271 = vmatmul.mubr.f32.gmra.mrb[0].mxu0 %v201
    %v272 = vpop.f32.mrb[0].mxu0
    %v273 = vadd.f32 0.0, %v272
    %v274 = vpop.f32.mrb[0].mxu0
    %275 = vmatprep.mubr.f32.mxu0 0.0
    %276 = vmatmul.mubr.f32.gmra.mrb[0].mxu0 %v204
    %v277 = vpop.f32.mrb[0].mxu0
    %v278 = vadd.f32 0.0, %v277
    %v279 = vpop.f32.mrb[0].mxu0
    %280 = vdwg.mxu0
    %v282 = vsel %vm84, %v146, 0
    %v285 = vsel %vm84, %v147, 0
    %287 = vmatprep.subr.mxu0 0.0
    %288 = vmatpush1.msra.mxu0 %v164
    %289 = vmatprep.subr.mxu0 0.0
    %290 = vmatpush1.msra.mxu0 %v165
    %291 = vmatprep.subr.mxu0 0.0
    %292 = vmatpush1.msra.mxu0 %v166
    %293 = vmatprep.subr.mxu0 0.0
    %294 = vmatpush1.msra.mxu0 %v167
    %295 = vmatprep.subr.mxu0 0.0
    %296 = vmatpush1.msra.mxu0 0.0
    %297 = vmatprep.subr.mxu0 0.0
    %298 = vmatpush1.msra.mxu0 0.0
    %299 = vmatprep.subr.mxu0 0.0
    %300 = vmatpush1.msra.mxu0 0.0
    %301 = vmatprep.subr.mxu0 0.0
    %302 = vmatpush1.msra.mxu0 0.0
    %303 = vmatprep.subr.mxu0 0.0
    %304 = vmatpush1.msra.mxu0 0.0
    %305 = vmatprep.subr.mxu0 0.0
    %306 = vmatpush1.msra.mxu0 0.0
    %307 = vmatprep.subr.mxu0 0.0
    %308 = vmatpush1.msra.mxu0 0.0
    %309 = vmatprep.subr.mxu0 0.0
    %310 = vmatpush1.msra.mxu0 0.0
    %311 = vmatprep.subr.mxu0 0.0
    %312 = vmatpush1.msra.mxu0 0.0
    %313 = vmatprep.subr.mxu0 0.0
    %314 = vmatpush1.msra.mxu0 0.0
    %315 = vmatprep.subr.mxu0 0.0
    %316 = vmatpush1.msra.mxu0 0.0
    %317 = vmatprep.subr.mxu0 0.0
    %318 = vmatpush1.msra.mxu0 0.0
    %319 = vmatprep.subr.mxu0 0.0
    %320 = vmatpush1.msra.mxu0 0.0
    %321 = vmatprep.subr.mxu0 0.0
    %322 = vmatpush1.msra.mxu0 0.0
    %323 = vmatprep.subr.mxu0 0.0
    %324 = vmatpush1.msra.mxu0 0.0
    %325 = vmatprep.subr.mxu0 0.0
    %326 = vmatpush1.msra.mxu0 0.0
    %327 = vmatprep.subr.mxu0 0.0
    %328 = vmatpush1.msra.mxu0 0.0
    %329 = vmatprep.subr.mxu0 0.0
    %330 = vmatpush1.msra.mxu0 0.0
    %331 = vmatprep.subr.mxu0 0.0
    %332 = vmatpush1.msra.mxu0 0.0
    %333 = vmatprep.subr.mxu0 0.0
    %334 = vmatpush1.msra.mxu0 0.0
    %335 = vmatprep.subr.mxu0 0.0
    %336 = vmatpush1.msra.mxu0 0.0
    %337 = vmatprep.subr.mxu0 0.0
    %338 = vmatpush1.msra.mxu0 0.0
    %339 = vmatprep.subr.mxu0 0.0
    %340 = vmatpush1.msra.mxu0 0.0
    %341 = vmatprep.subr.mxu0 0.0
    %342 = vmatpush1.msra.mxu0 0.0
    %343 = vmatprep.subr.mxu0 0.0
    %344 = vmatpush1.msra.mxu0 0.0
    %345 = vmatprep.subr.mxu0 0.0
    %346 = vmatpush1.msra.mxu0 0.0
    %347 = vmatprep.subr.mxu0 0.0
    %348 = vmatpush1.msra.mxu0 0.0
    %349 = vmatprep.subr.mxu0 0.0
    %350 = vmatpush1.msra.mxu0 0.0
    %351 = vmatprep.mubr.f32.mxu0 0.0
    %352 = vmatmul.mubr.f32.gmra.mrb[0].mxu0 %v282
    %v353 = vpop.f32.mrb[0].mxu0
    %v354 = vadd.f32 0.0, %v353
    %v355 = vpop.f32.mrb[0].mxu0
    %356 = vmatprep.mubr.f32.mxu0 0.0
    %357 = vmatmul.mubr.f32.gmra.mrb[0].mxu0 %v285
    %v358 = vpop.f32.mrb[0].mxu0
    %v359 = vadd.f32 0.0, %v358
    %v360 = vpop.f32.mrb[0].mxu0
    %361 = vdwg.mxu0
    %362 = vmatprep.subr.mxu0 0.0
    %363 = vmatpush1.msra.mxu0 %v180
    %364 = vmatprep.subr.mxu0 0.0
    %365 = vmatpush1.msra.mxu0 %v181
    %366 = vmatprep.subr.mxu0 0.0
    %367 = vmatpush1.msra.mxu0 %v182
    %368 = vmatprep.subr.mxu0 0.0
    %369 = vmatpush1.msra.mxu0 %v183
    %370 = vmatprep.subr.mxu0 0.0
    %371 = vmatpush1.msra.mxu0 0.0
    %372 = vmatprep.subr.mxu0 0.0
    %373 = vmatpush1.msra.mxu0 0.0
    %374 = vmatprep.subr.mxu0 0.0
    %375 = vmatpush1.msra.mxu0 0.0
    %376 = vmatprep.subr.mxu0 0.0
    %377 = vmatpush1.msra.mxu0 0.0
    %378 = vmatprep.subr.mxu0 0.0
    %379 = vmatpush1.msra.mxu0 0.0
    %380 = vmatprep.subr.mxu0 0.0
    %381 = vmatpush1.msra.mxu0 0.0
    %382 = vmatprep.subr.mxu0 0.0
    %383 = vmatpush1.msra.mxu0 0.0
    %384 = vmatprep.subr.mxu0 0.0
    %385 = vmatpush1.msra.mxu0 0.0
    %386 = vmatprep.subr.mxu0 0.0
    %387 = vmatpush1.msra.mxu0 0.0
    %388 = vmatprep.subr.mxu0 0.0
    %389 = vmatpush1.msra.mxu0 0.0
    %390 = vmatprep.subr.mxu0 0.0
    %391 = vmatpush1.msra.mxu0 0.0
    %392 = vmatprep.subr.mxu0 0.0
    %393 = vmatpush1.msra.mxu0 0.0
    %394 = vmatprep.subr.mxu0 0.0
    %395 = vmatpush1.msra.mxu0 0.0
    %396 = vmatprep.subr.mxu0 0.0
    %397 = vmatpush1.msra.mxu0 0.0
    %398 = vmatprep.subr.mxu0 0.0
    %399 = vmatpush1.msra.mxu0 0.0
    %400 = vmatprep.subr.mxu0 0.0
    %401 = vmatpush1.msra.mxu0 0.0
    %402 = vmatprep.subr.mxu0 0.0
    %403 = vmatpush1.msra.mxu0 0.0
    %404 = vmatprep.subr.mxu0 0.0
    %405 = vmatpush1.msra.mxu0 0.0
    %406 = vmatprep.subr.mxu0 0.0
    %407 = vmatpush1.msra.mxu0 0.0
    %408 = vmatprep.subr.mxu0 0.0
    %409 = vmatpush1.msra.mxu0 0.0
    %410 = vmatprep.subr.mxu0 0.0
    %411 = vmatpush1.msra.mxu0 0.0
    %412 = vmatprep.subr.mxu0 0.0
    %413 = vmatpush1.msra.mxu0 0.0
    %414 = vmatprep.subr.mxu0 0.0
    %415 = vmatpush1.msra.mxu0 0.0
    %416 = vmatprep.subr.mxu0 0.0
    %417 = vmatpush1.msra.mxu0 0.0
    %418 = vmatprep.subr.mxu0 0.0
    %419 = vmatpush1.msra.mxu0 0.0
    %420 = vmatprep.subr.mxu0 0.0
    %421 = vmatpush1.msra.mxu0 0.0
    %422 = vmatprep.subr.mxu0 0.0
    %423 = vmatpush1.msra.mxu0 0.0
    %424 = vmatprep.subr.mxu0 0.0
    %425 = vmatpush1.msra.mxu0 0.0
    %426 = vmatprep.mubr.f32.mxu0 0.0
    %427 = vmatmul.mubr.f32.gmra.mrb[0].mxu0 %v282
    %v428 = vpop.f32.mrb[0].mxu0
    %v429 = vadd.f32 0.0, %v428
    %v430 = vpop.f32.mrb[0].mxu0
    %431 = vmatprep.mubr.f32.mxu0 0.0
    %432 = vmatmul.mubr.f32.gmra.mrb[0].mxu0 %v285
    %v433 = vpop.f32.mrb[0].mxu0
    %v434 = vadd.f32 0.0, %v433
    %v435 = vpop.f32.mrb[0].mxu0
    %436 = vdwg.mxu0
    %vm437 = vcmask 64512
    %v439 = vsel %vm437, %v273, 0
    %v442 = vsel %vm437, %v354, 0
    %444 = vmatprep.subr.mxu0 0.0
    %445 = vmatpush1.xpose.msra.mxu0 %v442
    %446 = vmatprep.subr.mxu0 0.0
    %447 = vmatpush1.xpose.msra.mxu0 0.0
    %448 = vmatprep.subr.mxu0 0.0
    %449 = vmatpush1.xpose.msra.mxu0 0.0
    %450 = vmatprep.subr.mxu0 0.0
    %451 = vmatpush1.xpose.msra.mxu0 0.0
    %452 = vmatprep.subr.mxu0 0.0
    %453 = vmatpush1.xpose.msra.mxu0 0.0
    %454 = vmatprep.subr.mxu0 0.0
    %455 = vmatpush1.xpose.msra.mxu0 0.0
    %456 = vmatprep.subr.mxu0 0.0
    %457 = vmatpush1.xpose.msra.mxu0 0.0
    %458 = vmatprep.subr.mxu0 0.0
    %459 = vmatpush1.xpose.msra.mxu0 0.0
    %460 = vmatprep.subr.mxu0 0.0
    %461 = vmatpush1.xpose.msra.mxu0 0.0
    %462 = vmatprep.subr.mxu0 0.0
    %463 = vmatpush1.xpose.msra.mxu0 0.0
    %464 = vmatprep.subr.mxu0 0.0
    %465 = vmatpush1.xpose.msra.mxu0 0.0
    %466 = vmatprep.subr.mxu0 0.0
    %467 = vmatpush1.xpose.msra.mxu0 0.0
    %468 = vmatprep.subr.mxu0 0.0
    %469 = vmatpush1.xpose.msra.mxu0 0.0
    %470 = vmatprep.subr.mxu0 0.0
    %471 = vmatpush1.xpose.msra.mxu0 0.0
    %472 = vmatprep.subr.mxu0 0.0
    %473 = vmatpush1.xpose.msra.mxu0 0.0
    %474 = vmatprep.subr.mxu0 0.0
    %475 = vmatpush1.xpose.msra.mxu0 0.0
    %476 = vmatprep.subr.mxu0 0.0
    %477 = vmatpush1.xpose.msra.mxu0 0.0
    %478 = vmatprep.subr.mxu0 0.0
    %479 = vmatpush1.xpose.msra.mxu0 0.0
    %480 = vmatprep.subr.mxu0 0.0
    %481 = vmatpush1.xpose.msra.mxu0 0.0
    %482 = vmatprep.subr.mxu0 0.0
    %483 = vmatpush1.xpose.msra.mxu0 0.0
    %484 = vmatprep.subr.mxu0 0.0
    %485 = vmatpush1.xpose.msra.mxu0 0.0
    %486 = vmatprep.subr.mxu0 0.0
    %487 = vmatpush1.xpose.msra.mxu0 0.0
    %488 = vmatprep.subr.mxu0 0.0
    %489 = vmatpush1.xpose.msra.mxu0 0.0
    %490 = vmatprep.subr.mxu0 0.0
    %491 = vmatpush1.xpose.msra.mxu0 0.0
    %492 = vmatprep.subr.mxu0 0.0
    %493 = vmatpush1.xpose.msra.mxu0 0.0
    %494 = vmatprep.subr.mxu0 0.0
    %495 = vmatpush1.xpose.msra.mxu0 0.0
    %496 = vmatprep.subr.mxu0 0.0
    %497 = vmatpush1.xpose.msra.mxu0 0.0
    %498 = vmatprep.subr.mxu0 0.0
    %499 = vmatpush1.xpose.msra.mxu0 0.0
    %500 = vmatprep.subr.mxu0 0.0
    %501 = vmatpush1.xpose.msra.mxu0 0.0
    %502 = vmatprep.subr.mxu0 0.0
    %503 = vmatpush1.xpose.msra.mxu0 0.0
    %504 = vmatprep.subr.mxu0 0.0
    %505 = vmatpush1.xpose.msra.mxu0 0.0
    %506 = vmatprep.subr.mxu0 0.0
    %507 = vmatpush1.xpose.msra.mxu0 0.0
    %508 = vmatprep.mubr.f32.mxu0 0.0
    %509 = vmatmul.mubr.f32.gmra.mrb[0].mxu0 %v439
    %v510 = vpop.f32.mrb[0].mxu0
    %v511 = vadd.f32 0.0, %v510
    %v512 = vpop.f32.mrb[0].mxu0
    %513 = vdwg.mxu0
    %v515 = vsel %vm437, %v278, 0
    %v518 = vsel %vm437, %v359, 0
    %520 = vmatprep.subr.mxu0 0.0
    %521 = vmatpush1.xpose.msra.mxu0 %v518
    %522 = vmatprep.subr.mxu0 0.0
    %523 = vmatpush1.xpose.msra.mxu0 0.0
    %524 = vmatprep.subr.mxu0 0.0
    %525 = vmatpush1.xpose.msra.mxu0 0.0
    %526 = vmatprep.subr.mxu0 0.0
    %527 = vmatpush1.xpose.msra.mxu0 0.0
    %528 = vmatprep.subr.mxu0 0.0
    %529 = vmatpush1.xpose.msra.mxu0 0.0
    %530 = vmatprep.subr.mxu0 0.0
    %531 = vmatpush1.xpose.msra.mxu0 0.0
    %532 = vmatprep.subr.mxu0 0.0
    %533 = vmatpush1.xpose.msra.mxu0 0.0
    %534 = vmatprep.subr.mxu0 0.0
    %535 = vmatpush1.xpose.msra.mxu0 0.0
    %536 = vmatprep.subr.mxu0 0.0
    %537 = vmatpush1.xpose.msra.mxu0 0.0
    %538 = vmatprep.subr.mxu0 0.0
    %539 = vmatpush1.xpose.msra.mxu0 0.0
    %540 = vmatprep.subr.mxu0 0.0
    %541 = vmatpush1.xpose.msra.mxu0 0.0
    %542 = vmatprep.subr.mxu0 0.0
    %543 = vmatpush1.xpose.msra.mxu0 0.0
    %544 = vmatprep.subr.mxu0 0.0
    %545 = vmatpush1.xpose.msra.mxu0 0.0
    %546 = vmatprep.subr.mxu0 0.0
    %547 = vmatpush1.xpose.msra.mxu0 0.0
    %548 = vmatprep.subr.mxu0 0.0
    %549 = vmatpush1.xpose.msra.mxu0 0.0
    %550 = vmatprep.subr.mxu0 0.0
    %551 = vmatpush1.xpose.msra.mxu0 0.0
    %552 = vmatprep.subr.mxu0 0.0
    %553 = vmatpush1.xpose.msra.mxu0 0.0
    %554 = vmatprep.subr.mxu0 0.0
    %555 = vmatpush1.xpose.msra.mxu0 0.0
    %556 = vmatprep.subr.mxu0 0.0
    %557 = vmatpush1.xpose.msra.mxu0 0.0
    %558 = vmatprep.subr.mxu0 0.0
    %559 = vmatpush1.xpose.msra.mxu0 0.0
    %560 = vmatprep.subr.mxu0 0.0
    %561 = vmatpush1.xpose.msra.mxu0 0.0
    %562 = vmatprep.subr.mxu0 0.0
    %563 = vmatpush1.xpose.msra.mxu0 0.0
    %564 = vmatprep.subr.mxu0 0.0
    %565 = vmatpush1.xpose.msra.mxu0 0.0
    %566 = vmatprep.subr.mxu0 0.0
    %567 = vmatpush1.xpose.msra.mxu0 0.0
    %568 = vmatprep.subr.mxu0 0.0
    %569 = vmatpush1.xpose.msra.mxu0 0.0
    %570 = vmatprep.subr.mxu0 0.0
    %571 = vmatpush1.xpose.msra.mxu0 0.0
    %572 = vmatprep.subr.mxu0 0.0
    %573 = vmatpush1.xpose.msra.mxu0 0.0
    %574 = vmatprep.subr.mxu0 0.0
    %575 = vmatpush1.xpose.msra.mxu0 0.0
    %576 = vmatprep.subr.mxu0 0.0
    %577 = vmatpush1.xpose.msra.mxu0 0.0
    %578 = vmatprep.subr.mxu0 0.0
    %579 = vmatpush1.xpose.msra.mxu0 0.0
    %580 = vmatprep.subr.mxu0 0.0
    %581 = vmatpush1.xpose.msra.mxu0 0.0
    %582 = vmatprep.subr.mxu0 0.0
    %583 = vmatpush1.xpose.msra.mxu0 0.0
    %584 = vmatprep.mubr.f32.mxu0 0.0
    %585 = vmatmul.mubr.f32.gmra.mrb[0].mxu0 %v515
    %v586 = vpop.f32.mrb[0].mxu0
    %v587 = vadd.f32 0.0, %v586
    %v588 = vpop.f32.mrb[0].mxu0
    %589 = vdwg.mxu0
    %v590 = vmul.f32 %v511, 0.35355338
    %v591 = vmul.f32 %v587, 0.35355338
    %v592 = vsel %vm437, %v590, -inf
    %593 = vmax.xlane.f32.xlu0 %v592
    %v594 = vpop.xlane.xlu0 %593
    %v595 = vsel %vm437, %v591, -inf
    %596 = vmax.xlane.f32.xlu0 %v595
    %v597 = vpop.xlane.xlu0 %596
    %v598 = vsub.f32 %v590, %v594
    %v599 = vsub.f32 %v591, %v597
    %v600 = vmul.f32 %v598, 1.442695
    %v601 = vpow.pop %v600
    %v602 = vmul.f32 %v599, 1.442695
    %v603 = vpow.pop %v602
    %v604 = vsel %vm437, %v601, 0.0
    %605 = vadd.xlane.f32.xlu0 %v604
    %v606 = vpop.xlane.xlu0 %605
    %v607 = vsel %vm437, %v603, 0.0
    %608 = vadd.xlane.f32.xlu0 %v607
    %v609 = vpop.xlane.xlu0 %608
    %v610 = vrcp.pop %v606
    %v611 = vrcp.pop %v609
    %v612 = vmul.f32 %v601, %v610
    %v613 = vmul.f32 %v603, %v611
    %v615 = vsel %vm437, %v612, 0
    %617 = vmatprep.subr.mxu0 0.0
    %618 = vmatpush1.msra.mxu0 %v429
    %619 = vmatprep.subr.mxu0 0.0
    %620 = vmatpush1.msra.mxu0 0.0
    %621 = vmatprep.subr.mxu0 0.0
    %622 = vmatpush1.msra.mxu0 0.0
    %623 = vmatprep.subr.mxu0 0.0
    %624 = vmatpush1.msra.mxu0 0.0
    %625 = vmatprep.subr.mxu0 0.0
    %626 = vmatpush1.msra.mxu0 0.0
    %627 = vmatprep.subr.mxu0 0.0
    %628 = vmatpush1.msra.mxu0 0.0
    %629 = vmatprep.subr.mxu0 0.0
    %630 = vmatpush1.msra.mxu0 0.0
    %631 = vmatprep.subr.mxu0 0.0
    %632 = vmatpush1.msra.mxu0 0.0
    %633 = vmatprep.subr.mxu0 0.0
    %634 = vmatpush1.msra.mxu0 0.0
    %635 = vmatprep.subr.mxu0 0.0
    %636 = vmatpush1.msra.mxu0 0.0
    %637 = vmatprep.subr.mxu0 0.0
    %638 = vmatpush1.msra.mxu0 0.0
    %639 = vmatprep.subr.mxu0 0.0
    %640 = vmatpush1.msra.mxu0 0.0
    %641 = vmatprep.subr.mxu0 0.0
    %642 = vmatpush1.msra.mxu0 0.0
    %643 = vmatprep.subr.mxu0 0.0
    %644 = vmatpush1.msra.mxu0 0.0
    %645 = vmatprep.subr.mxu0 0.0
    %646 = vmatpush1.msra.mxu0 0.0
    %647 = vmatprep.subr.mxu0 0.0
    %648 = vmatpush1.msra.mxu0 0.0
    %649 = vmatprep.subr.mxu0 0.0
    %650 = vmatpush1.msra.mxu0 0.0
    %651 = vmatprep.subr.mxu0 0.0
    %652 = vmatpush1.msra.mxu0 0.0
    %653 = vmatprep.subr.mxu0 0.0
    %654 = vmatpush1.msra.mxu0 0.0
    %655 = vmatprep.subr.mxu0 0.0
    %656 = vmatpush1.msra.mxu0 0.0
    %657 = vmatprep.subr.mxu0 0.0
    %658 = vmatpush1.msra.mxu0 0.0
    %659 = vmatprep.subr.mxu0 0.0
    %660 = vmatpush1.msra.mxu0 0.0
    %661 = vmatprep.subr.mxu0 0.0
    %662 = vmatpush1.msra.mxu0 0.0
    %663 = vmatprep.subr.mxu0 0.0
    %664 = vmatpush1.msra.mxu0 0.0
    %665 = vmatprep.subr.mxu0 0.0
    %666 = vmatpush1.msra.mxu0 0.0
    %667 = vmatprep.subr.mxu0 0.0
    %668 = vmatpush1.msra.mxu0 0.0
    %669 = vmatprep.subr.mxu0 0.0
    %670 = vmatpush1.msra.mxu0 0.0
    %671 = vmatprep.subr.mxu0 0.0
    %672 = vmatpush1.msra.mxu0 0.0
    %673 = vmatprep.subr.mxu0 0.0
    %674 = vmatpush1.msra.mxu0 0.0
    %675 = vmatprep.subr.mxu0 0.0
    %676 = vmatpush1.msra.mxu0 0.0
    %677 = vmatprep.subr.mxu0 0.0
    %678 = vmatpush1.msra.mxu0 0.0
    %679 = vmatprep.subr.mxu0 0.0
    %680 = vmatpush1.msra.mxu0 0.0
    %681 = vmatprep.mubr.f32.mxu0 0.0
    %682 = vmatmul.mubr.f32.gmra.mrb[0].mxu0 %v615
    %v683 = vpop.f32.mrb[0].mxu0
    %v684 = vadd.f32 0.0, %v683
    %v685 = vpop.f32.mrb[0].mxu0
    %686 = vdwg.mxu0
    %v688 = vsel %vm437, %v613, 0
    %690 = vmatprep.subr.mxu0 0.0
    %691 = vmatpush1.msra.mxu0 %v434
    %692 = vmatprep.subr.mxu0 0.0
    %693 = vmatpush1.msra.mxu0 0.0
    %694 = vmatprep.subr.mxu0 0.0
    %695 = vmatpush1.msra.mxu0 0.0
    %696 = vmatprep.subr.mxu0 0.0
    %697 = vmatpush1.msra.mxu0 0.0
    %698 = vmatprep.subr.mxu0 0.0
    %699 = vmatpush1.msra.mxu0 0.0
    %700 = vmatprep.subr.mxu0 0.0
    %701 = vmatpush1.msra.mxu0 0.0
    %702 = vmatprep.subr.mxu0 0.0
    %703 = vmatpush1.msra.mxu0 0.0
    %704 = vmatprep.subr.mxu0 0.0
    %705 = vmatpush1.msra.mxu0 0.0
    %706 = vmatprep.subr.mxu0 0.0
    %707 = vmatpush1.msra.mxu0 0.0
    %708 = vmatprep.subr.mxu0 0.0
    %709 = vmatpush1.msra.mxu0 0.0
    %710 = vmatprep.subr.mxu0 0.0
    %711 = vmatpush1.msra.mxu0 0.0
    %712 = vmatprep.subr.mxu0 0.0
    %713 = vmatpush1.msra.mxu0 0.0
    %714 = vmatprep.subr.mxu0 0.0
    %715 = vmatpush1.msra.mxu0 0.0
    %716 = vmatprep.subr.mxu0 0.0
    %717 = vmatpush1.msra.mxu0 0.0
    %718 = vmatprep.subr.mxu0 0.0
    %719 = vmatpush1.msra.mxu0 0.0
    %720 = vmatprep.subr.mxu0 0.0
    %721 = vmatpush1.msra.mxu0 0.0
    %722 = vmatprep.subr.mxu0 0.0
    %723 = vmatpush1.msra.mxu0 0.0
    %724 = vmatprep.subr.mxu0 0.0
    %725 = vmatpush1.msra.mxu0 0.0
    %726 = vmatprep.subr.mxu0 0.0
    %727 = vmatpush1.msra.mxu0 0.0
    %728 = vmatprep.subr.mxu0 0.0
    %729 = vmatpush1.msra.mxu0 0.0
    %730 = vmatprep.subr.mxu0 0.0
    %731 = vmatpush1.msra.mxu0 0.0
    %732 = vmatprep.subr.mxu0 0.0
    %733 = vmatpush1.msra.mxu0 0.0
    %734 = vmatprep.subr.mxu0 0.0
    %735 = vmatpush1.msra.mxu0 0.0
    %736 = vmatprep.subr.mxu0 0.0
    %737 = vmatpush1.msra.mxu0 0.0
    %738 = vmatprep.subr.mxu0 0.0
    %739 = vmatpush1.msra.mxu0 0.0
    %740 = vmatprep.subr.mxu0 0.0
    %741 = vmatpush1.msra.mxu0 0.0
    %742 = vmatprep.subr.mxu0 0.0
    %743 = vmatpush1.msra.mxu0 0.0
    %744 = vmatprep.subr.mxu0 0.0
    %745 = vmatpush1.msra.mxu0 0.0
    %746 = vmatprep.subr.mxu0 0.0
    %747 = vmatpush1.msra.mxu0 0.0
    %748 = vmatprep.subr.mxu0 0.0
    %749 = vmatpush1.msra.mxu0 0.0
    %750 = vmatprep.subr.mxu0 0.0
    %751 = vmatpush1.msra.mxu0 0.0
    %752 = vmatprep.subr.mxu0 0.0
    %753 = vmatpush1.msra.mxu0 0.0
    %754 = vmatprep.mubr.f32.mxu0 0.0
    %755 = vmatmul.mubr.f32.gmra.mrb[0].mxu0 %v688
    %v756 = vpop.f32.mrb[0].mxu0
    %v757 = vadd.f32 0.0, %v756
    %v758 = vpop.f32.mrb[0].mxu0
    %759 = vdwg.mxu0
    %760 = vmatprep.subr.mxu0 0.0
    %761 = vmatpush1.msra.mxu0 %v152
    %762 = vmatprep.subr.mxu0 0.0
    %763 = vmatpush1.msra.mxu0 %v153
    %764 = vmatprep.subr.mxu0 0.0
    %765 = vmatpush1.msra.mxu0 %v154
    %766 = vmatprep.subr.mxu0 0.0
    %767 = vmatpush1.msra.mxu0 %v155
    %768 = vmatprep.subr.mxu0 0.0
    %769 = vmatpush1.msra.mxu0 0.0
    %770 = vmatprep.subr.mxu0 0.0
    %771 = vmatpush1.msra.mxu0 0.0
    %772 = vmatprep.subr.mxu0 0.0
    %773 = vmatpush1.msra.mxu0 0.0
    %774 = vmatprep.subr.mxu0 0.0
    %775 = vmatpush1.msra.mxu0 0.0
    %776 = vmatprep.subr.mxu0 0.0
    %777 = vmatpush1.msra.mxu0 0.0
    %778 = vmatprep.subr.mxu0 0.0
    %779 = vmatpush1.msra.mxu0 0.0
    %780 = vmatprep.subr.mxu0 0.0
    %781 = vmatpush1.msra.mxu0 0.0
    %782 = vmatprep.subr.mxu0 0.0
    %783 = vmatpush1.msra.mxu0 0.0
    %784 = vmatprep.subr.mxu0 0.0
    %785 = vmatpush1.msra.mxu0 0.0
    %786 = vmatprep.subr.mxu0 0.0
    %787 = vmatpush1.msra.mxu0 0.0
    %788 = vmatprep.subr.mxu0 0.0
    %789 = vmatpush1.msra.mxu0 0.0
    %790 = vmatprep.subr.mxu0 0.0
    %791 = vmatpush1.msra.mxu0 0.0
    %792 = vmatprep.subr.mxu0 0.0
    %793 = vmatpush1.msra.mxu0 0.0
    %794 = vmatprep.subr.mxu0 0.0
    %795 = vmatpush1.msra.mxu0 0.0
    %796 = vmatprep.subr.mxu0 0.0
    %797 = vmatpush1.msra.mxu0 0.0
    %798 = vmatprep.subr.mxu0 0.0
    %799 = vmatpush1.msra.mxu0 0.0
    %800 = vmatprep.subr.mxu0 0.0
    %801 = vmatpush1.msra.mxu0 0.0
    %802 = vmatprep.subr.mxu0 0.0
    %803 = vmatpush1.msra.mxu0 0.0
    %804 = vmatprep.subr.mxu0 0.0
    %805 = vmatpush1.msra.mxu0 0.0
    %806 = vmatprep.subr.mxu0 0.0
    %807 = vmatpush1.msra.mxu0 0.0
    %808 = vmatprep.subr.mxu0 0.0
    %809 = vmatpush1.msra.mxu0 0.0
    %810 = vmatprep.subr.mxu0 0.0
    %811 = vmatpush1.msra.mxu0 0.0
    %812 = vmatprep.subr.mxu0 0.0
    %813 = vmatpush1.msra.mxu0 0.0
    %814 = vmatprep.subr.mxu0 0.0
    %815 = vmatpush1.msra.mxu0 0.0
    %816 = vmatprep.subr.mxu0 0.0
    %817 = vmatpush1.msra.mxu0 0.0
    %818 = vmatprep.subr.mxu0 0.0
    %819 = vmatpush1.msra.mxu0 0.0
    %820 = vmatprep.subr.mxu0 0.0
    %821 = vmatpush1.msra.mxu0 0.0
    %822 = vmatprep.subr.mxu0 0.0
    %823 = vmatpush1.msra.mxu0 0.0
    %824 = vmatprep.mubr.f32.mxu0 0.0
    %825 = vmatmul.mubr.f32.gmra.mrb[0].mxu0 %v201
    %v826 = vpop.f32.mrb[0].mxu0
    %v827 = vadd.f32 0.0, %v826
    %v828 = vpop.f32.mrb[0].mxu0
    %829 = vmatprep.mubr.f32.mxu0 0.0
    %830 = vmatmul.mubr.f32.gmra.mrb[0].mxu0 %v204
    %v831 = vpop.f32.mrb[0].mxu0
    %v832 = vadd.f32 0.0, %v831
    %v833 = vpop.f32.mrb[0].mxu0
    %834 = vdwg.mxu0
    %835 = vmatprep.subr.mxu0 0.0
    %836 = vmatpush1.msra.mxu0 %v168
    %837 = vmatprep.subr.mxu0 0.0
    %838 = vmatpush1.msra.mxu0 %v169
    %839 = vmatprep.subr.mxu0 0.0
    %840 = vmatpush1.msra.mxu0 %v170
    %841 = vmatprep.subr.mxu0 0.0
    %842 = vmatpush1.msra.mxu0 %v171
    %843 = vmatprep.subr.mxu0 0.0
    %844 = vmatpush1.msra.mxu0 0.0
    %845 = vmatprep.subr.mxu0 0.0
    %846 = vmatpush1.msra.mxu0 0.0
    %847 = vmatprep.subr.mxu0 0.0
    %848 = vmatpush1.msra.mxu0 0.0
    %849 = vmatprep.subr.mxu0 0.0
    %850 = vmatpush1.msra.mxu0 0.0
    %851 = vmatprep.subr.mxu0 0.0
    %852 = vmatpush1.msra.mxu0 0.0
    %853 = vmatprep.subr.mxu0 0.0
    %854 = vmatpush1.msra.mxu0 0.0
    %855 = vmatprep.subr.mxu0 0.0
    %856 = vmatpush1.msra.mxu0 0.0
    %857 = vmatprep.subr.mxu0 0.0
    %858 = vmatpush1.msra.mxu0 0.0
    %859 = vmatprep.subr.mxu0 0.0
    %860 = vmatpush1.msra.mxu0 0.0
    %861 = vmatprep.subr.mxu0 0.0
    %862 = vmatpush1.msra.mxu0 0.0
    %863 = vmatprep.subr.mxu0 0.0
    %864 = vmatpush1.msra.mxu0 0.0
    %865 = vmatprep.subr.mxu0 0.0
    %866 = vmatpush1.msra.mxu0 0.0
    %867 = vmatprep.subr.mxu0 0.0
    %868 = vmatpush1.msra.mxu0 0.0
    %869 = vmatprep.subr.mxu0 0.0
    %870 = vmatpush1.msra.mxu0 0.0
    %871 = vmatprep.subr.mxu0 0.0
    %872 = vmatpush1.msra.mxu0 0.0
    %873 = vmatprep.subr.mxu0 0.0
    %874 = vmatpush1.msra.mxu0 0.0
    %875 = vmatprep.subr.mxu0 0.0
    %876 = vmatpush1.msra.mxu0 0.0
    %877 = vmatprep.subr.mxu0 0.0
    %878 = vmatpush1.msra.mxu0 0.0
    %879 = vmatprep.subr.mxu0 0.0
    %880 = vmatpush1.msra.mxu0 0.0
    %881 = vmatprep.subr.mxu0 0.0
    %882 = vmatpush1.msra.mxu0 0.0
    %883 = vmatprep.subr.mxu0 0.0
    %884 = vmatpush1.msra.mxu0 0.0
    %885 = vmatprep.subr.mxu0 0.0
    %886 = vmatpush1.msra.mxu0 0.0
    %887 = vmatprep.subr.mxu0 0.0
    %888 = vmatpush1.msra.mxu0 0.0
    %889 = vmatprep.subr.mxu0 0.0
    %890 = vmatpush1.msra.mxu0 0.0
    %891 = vmatprep.subr.mxu0 0.0
    %892 = vmatpush1.msra.mxu0 0.0
    %893 = vmatprep.subr.mxu0 0.0
    %894 = vmatpush1.msra.mxu0 0.0
    %895 = vmatprep.subr.mxu0 0.0
    %896 = vmatpush1.msra.mxu0 0.0
    %897 = vmatprep.subr.mxu0 0.0
    %898 = vmatpush1.msra.mxu0 0.0
    %899 = vmatprep.mubr.f32.mxu0 0.0
    %900 = vmatmul.mubr.f32.gmra.mrb[0].mxu0 %v282
    %v901 = vpop.f32.mrb[0].mxu0
    %v902 = vadd.f32 0.0, %v901
    %v903 = vpop.f32.mrb[0].mxu0
    %904 = vmatprep.mubr.f32.mxu0 0.0
    %905 = vmatmul.mubr.f32.gmra.mrb[0].mxu0 %v285
    %v906 = vpop.f32.mrb[0].mxu0
    %v907 = vadd.f32 0.0, %v906
    %v908 = vpop.f32.mrb[0].mxu0
    %909 = vdwg.mxu0
    %910 = vmatprep.subr.mxu0 0.0
    %911 = vmatpush1.msra.mxu0 %v184
    %912 = vmatprep.subr.mxu0 0.0
    %913 = vmatpush1.msra.mxu0 %v185
    %914 = vmatprep.subr.mxu0 0.0
    %915 = vmatpush1.msra.mxu0 %v186
    %916 = vmatprep.subr.mxu0 0.0
    %917 = vmatpush1.msra.mxu0 %v187
    %918 = vmatprep.subr.mxu0 0.0
    %919 = vmatpush1.msra.mxu0 0.0
    %920 = vmatprep.subr.mxu0 0.0
    %921 = vmatpush1.msra.mxu0 0.0
    %922 = vmatprep.subr.mxu0 0.0
    %923 = vmatpush1.msra.mxu0 0.0
    %924 = vmatprep.subr.mxu0 0.0
    %925 = vmatpush1.msra.mxu0 0.0
    %926 = vmatprep.subr.mxu0 0.0
    %927 = vmatpush1.msra.mxu0 0.0
    %928 = vmatprep.subr.mxu0 0.0
    %929 = vmatpush1.msra.mxu0 0.0
    %930 = vmatprep.subr.mxu0 0.0
    %931 = vmatpush1.msra.mxu0 0.0
    %932 = vmatprep.subr.mxu0 0.0
    %933 = vmatpush1.msra.mxu0 0.0
    %934 = vmatprep.subr.mxu0 0.0
    %935 = vmatpush1.msra.mxu0 0.0
    %936 = vmatprep.subr.mxu0 0.0
    %937 = vmatpush1.msra.mxu0 0.0
    %938 = vmatprep.subr.mxu0 0.0
    %939 = vmatpush1.msra.mxu0 0.0
    %940 = vmatprep.subr.mxu0 0.0
    %941 = vmatpush1.msra.mxu0 0.0
    %942 = vmatprep.subr.mxu0 0.0
    %943 = vmatpush1.msra.mxu0 0.0
    %944 = vmatprep.subr.mxu0 0.0
    %945 = vmatpush1.msra.mxu0 0.0
    %946 = vmatprep.subr.mxu0 0.0
    %947 = vmatpush1.msra.mxu0 0.0
    %948 = vmatprep.subr.mxu0 0.0
    %949 = vmatpush1.msra.mxu0 0.0
    %950 = vmatprep.subr.mxu0 0.0
    %951 = vmatpush1.msra.mxu0 0.0
    %952 = vmatprep.subr.mxu0 0.0
    %953 = vmatpush1.msra.mxu0 0.0
    %954 = vmatprep.subr.mxu0 0.0
    %955 = vmatpush1.msra.mxu0 0.0
    %956 = vmatprep.subr.mxu0 0.0
    %957 = vmatpush1.msra.mxu0 0.0
    %958 = vmatprep.subr.mxu0 0.0
    %959 = vmatpush1.msra.mxu0 0.0
    %960 = vmatprep.subr.mxu0 0.0
    %961 = vmatpush1.msra.mxu0 0.0
    %962 = vmatprep.subr.mxu0 0.0
    %963 = vmatpush1.msra.mxu0 0.0
    %964 = vmatprep.subr.mxu0 0.0
    %965 = vmatpush1.msra.mxu0 0.0
    %966 = vmatprep.subr.mxu0 0.0
    %967 = vmatpush1.msra.mxu0 0.0
    %968 = vmatprep.subr.mxu0 0.0
    %969 = vmatpush1.msra.mxu0 0.0
    %970 = vmatprep.subr.mxu0 0.0
    %971 = vmatpush1.msra.mxu0 0.0
    %972 = vmatprep.subr.mxu0 0.0
    %973 = vmatpush1.msra.mxu0 0.0
    %974 = vmatprep.mubr.f32.mxu0 0.0
    %975 = vmatmul.mubr.f32.gmra.mrb[0].mxu0 %v282
    %v976 = vpop.f32.mrb[0].mxu0
    %v977 = vadd.f32 0.0, %v976
    %v978 = vpop.f32.mrb[0].mxu0
    %979 = vmatprep.mubr.f32.mxu0 0.0
    %980 = vmatmul.mubr.f32.gmra.mrb[0].mxu0 %v285
    %v981 = vpop.f32.mrb[0].mxu0
    %v982 = vadd.f32 0.0, %v981
    %v983 = vpop.f32.mrb[0].mxu0
    %984 = vdwg.mxu0
    %v986 = vsel %vm437, %v827, 0
    %v989 = vsel %vm437, %v902, 0
    %991 = vmatprep.subr.mxu0 0.0
    %992 = vmatpush1.xpose.msra.mxu0 %v989
    %993 = vmatprep.subr.mxu0 0.0
    %994 = vmatpush1.xpose.msra.mxu0 0.0
    %995 = vmatprep.subr.mxu0 0.0
    %996 = vmatpush1.xpose.msra.mxu0 0.0
    %997 = vmatprep.subr.mxu0 0.0
    %998 = vmatpush1.xpose.msra.mxu0 0.0
    %999 = vmatprep.subr.mxu0 0.0
    %1000 = vmatpush1.xpose.msra.mxu0 0.0
    %1001 = vmatprep.subr.mxu0 0.0
    %1002 = vmatpush1.xpose.msra.mxu0 0.0
    %1003 = vmatprep.subr.mxu0 0.0
    %1004 = vmatpush1.xpose.msra.mxu0 0.0
    %1005 = vmatprep.subr.mxu0 0.0
    %1006 = vmatpush1.xpose.msra.mxu0 0.0
    %1007 = vmatprep.subr.mxu0 0.0
    %1008 = vmatpush1.xpose.msra.mxu0 0.0
    %1009 = vmatprep.subr.mxu0 0.0
    %1010 = vmatpush1.xpose.msra.mxu0 0.0
    %1011 = vmatprep.subr.mxu0 0.0
    %1012 = vmatpush1.xpose.msra.mxu0 0.0
    %1013 = vmatprep.subr.mxu0 0.0
    %1014 = vmatpush1.xpose.msra.mxu0 0.0
    %1015 = vmatprep.subr.mxu0 0.0
    %1016 = vmatpush1.xpose.msra.mxu0 0.0
    %1017 = vmatprep.subr.mxu0 0.0
    %1018 = vmatpush1.xpose.msra.mxu0 0.0
    %1019 = vmatprep.subr.mxu0 0.0
    %1020 = vmatpush1.xpose.msra.mxu0 0.0
    %1021 = vmatprep.subr.mxu0 0.0
    %1022 = vmatpush1.xpose.msra.mxu0 0.0
    %1023 = vmatprep.subr.mxu0 0.0
    %1024 = vmatpush1.xpose.msra.mxu0 0.0
    %1025 = vmatprep.subr.mxu0 0.0
    %1026 = vmatpush1.xpose.msra.mxu0 0.0
    %1027 = vmatprep.subr.mxu0 0.0
    %1028 = vmatpush1.xpose.msra.mxu0 0.0
    %1029 = vmatprep.subr.mxu0 0.0
    %1030 = vmatpush1.xpose.msra.mxu0 0.0
    %1031 = vmatprep.subr.mxu0 0.0
    %1032 = vmatpush1.xpose.msra.mxu0 0.0
    %1033 = vmatprep.subr.mxu0 0.0
    %1034 = vmatpush1.xpose.msra.mxu0 0.0
    %1035 = vmatprep.subr.mxu0 0.0
    %1036 = vmatpush1.xpose.msra.mxu0 0.0
    %1037 = vmatprep.subr.mxu0 0.0
    %1038 = vmatpush1.xpose.msra.mxu0 0.0
    %1039 = vmatprep.subr.mxu0 0.0
    %1040 = vmatpush1.xpose.msra.mxu0 0.0
    %1041 = vmatprep.subr.mxu0 0.0
    %1042 = vmatpush1.xpose.msra.mxu0 0.0
    %1043 = vmatprep.subr.mxu0 0.0
    %1044 = vmatpush1.xpose.msra.mxu0 0.0
    %1045 = vmatprep.subr.mxu0 0.0
    %1046 = vmatpush1.xpose.msra.mxu0 0.0
    %1047 = vmatprep.subr.mxu0 0.0
    %1048 = vmatpush1.xpose.msra.mxu0 0.0
    %1049 = vmatprep.subr.mxu0 0.0
    %1050 = vmatpush1.xpose.msra.mxu0 0.0
    %1051 = vmatprep.subr.mxu0 0.0
    %1052 = vmatpush1.xpose.msra.mxu0 0.0
    %1053 = vmatprep.subr.mxu0 0.0
    %1054 = vmatpush1.xpose.msra.mxu0 0.0
    %1055 = vmatprep.mubr.f32.mxu0 0.0
    %1056 = vmatmul.mubr.f32.gmra.mrb[0].mxu0 %v986
    %v1057 = vpop.f32.mrb[0].mxu0
    %v1058 = vadd.f32 0.0, %v1057
    %v1059 = vpop.f32.mrb[0].mxu0
    %1060 = vdwg.mxu0
    %v1062 = vsel %vm437, %v832, 0
    %v1065 = vsel %vm437, %v907, 0
    %1067 = vmatprep.subr.mxu0 0.0
    %1068 = vmatpush1.xpose.msra.mxu0 %v1065
    %1069 = vmatprep.subr.mxu0 0.0
    %1070 = vmatpush1.xpose.msra.mxu0 0.0
    %1071 = vmatprep.subr.mxu0 0.0
    %1072 = vmatpush1.xpose.msra.mxu0 0.0
    %1073 = vmatprep.subr.mxu0 0.0
    %1074 = vmatpush1.xpose.msra.mxu0 0.0
    %1075 = vmatprep.subr.mxu0 0.0
    %1076 = vmatpush1.xpose.msra.mxu0 0.0
    %1077 = vmatprep.subr.mxu0 0.0
    %1078 = vmatpush1.xpose.msra.mxu0 0.0
    %1079 = vmatprep.subr.mxu0 0.0
    %1080 = vmatpush1.xpose.msra.mxu0 0.0
    %1081 = vmatprep.subr.mxu0 0.0
    %1082 = vmatpush1.xpose.msra.mxu0 0.0
    %1083 = vmatprep.subr.mxu0 0.0
    %1084 = vmatpush1.xpose.msra.mxu0 0.0
    %1085 = vmatprep.subr.mxu0 0.0
    %1086 = vmatpush1.xpose.msra.mxu0 0.0
    %1087 = vmatprep.subr.mxu0 0.0
    %1088 = vmatpush1.xpose.msra.mxu0 0.0
    %1089 = vmatprep.subr.mxu0 0.0
    %1090 = vmatpush1.xpose.msra.mxu0 0.0
    %1091 = vmatprep.subr.mxu0 0.0
    %1092 = vmatpush1.xpose.msra.mxu0 0.0
    %1093 = vmatprep.subr.mxu0 0.0
    %1094 = vmatpush1.xpose.msra.mxu0 0.0
    %1095 = vmatprep.subr.mxu0 0.0
    %1096 = vmatpush1.xpose.msra.mxu0 0.0
    %1097 = vmatprep.subr.mxu0 0.0
    %1098 = vmatpush1.xpose.msra.mxu0 0.0
    %1099 = vmatprep.subr.mxu0 0.0
    %1100 = vmatpush1.xpose.msra.mxu0 0.0
    %1101 = vmatprep.subr.mxu0 0.0
    %1102 = vmatpush1.xpose.msra.mxu0 0.0
    %1103 = vmatprep.subr.mxu0 0.0
    %1104 = vmatpush1.xpose.msra.mxu0 0.0
    %1105 = vmatprep.subr.mxu0 0.0
    %1106 = vmatpush1.xpose.msra.mxu0 0.0
    %1107 = vmatprep.subr.mxu0 0.0
    %1108 = vmatpush1.xpose.msra.mxu0 0.0
    %1109 = vmatprep.subr.mxu0 0.0
    %1110 = vmatpush1.xpose.msra.mxu0 0.0
    %1111 = vmatprep.subr.mxu0 0.0
    %1112 = vmatpush1.xpose.msra.mxu0 0.0
    %1113 = vmatprep.subr.mxu0 0.0
    %1114 = vmatpush1.xpose.msra.mxu0 0.0
    %1115 = vmatprep.subr.mxu0 0.0
    %1116 = vmatpush1.xpose.msra.mxu0 0.0
    %1117 = vmatprep.subr.mxu0 0.0
    %1118 = vmatpush1.xpose.msra.mxu0 0.0
    %1119 = vmatprep.subr.mxu0 0.0
    %1120 = vmatpush1.xpose.msra.mxu0 0.0
    %1121 = vmatprep.subr.mxu0 0.0
    %1122 = vmatpush1.xpose.msra.mxu0 0.0
    %1123 = vmatprep.subr.mxu0 0.0
    %1124 = vmatpush1.xpose.msra.mxu0 0.0
    %1125 = vmatprep.subr.mxu0 0.0
    %1126 = vmatpush1.xpose.msra.mxu0 0.0
    %1127 = vmatprep.subr.mxu0 0.0
    %1128 = vmatpush1.xpose.msra.mxu0 0.0
    %1129 = vmatprep.subr.mxu0 0.0
    %1130 = vmatpush1.xpose.msra.mxu0 0.0
    %1131 = vmatprep.mubr.f32.mxu0 0.0
    %1132 = vmatmul.mubr.f32.gmra.mrb[0].mxu0 %v1062
    %v1133 = vpop.f32.mrb[0].mxu0
    %v1134 = vadd.f32 0.0, %v1133
    %v1135 = vpop.f32.mrb[0].mxu0
    %1136 = vdwg.mxu0
    %v1137 = vmul.f32 %v1058, 0.35355338
    %v1138 = vmul.f32 %v1134, 0.35355338
    %v1139 = vsel %vm437, %v1137, -inf
    %1140 = vmax.xlane.f32.xlu0 %v1139
    %v1141 = vpop.xlane.xlu0 %1140
    %v1142 = vsel %vm437, %v1138, -inf
    %1143 = vmax.xlane.f32.xlu0 %v1142
    %v1144 = vpop.xlane.xlu0 %1143
    %v1145 = vsub.f32 %v1137, %v1141
    %v1146 = vsub.f32 %v1138, %v1144
    %v1147 = vmul.f32 %v1145, 1.442695
    %v1148 = vpow.pop %v1147
    %v1149 = vmul.f32 %v1146, 1.442695
    %v1150 = vpow.pop %v1149
    %v1151 = vsel %vm437, %v1148, 0.0
    %1152 = vadd.xlane.f32.xlu0 %v1151
    %v1153 = vpop.xlane.xlu0 %1152
    %v1154 = vsel %vm437, %v1150, 0.0
    %1155 = vadd.xlane.f32.xlu0 %v1154
    %v1156 = vpop.xlane.xlu0 %1155
    %v1157 = vrcp.pop %v1153
    %v1158 = vrcp.pop %v1156
    %v1159 = vmul.f32 %v1148, %v1157
    %v1160 = vmul.f32 %v1150, %v1158
    %v1162 = vsel %vm437, %v1159, 0
    %1164 = vmatprep.subr.mxu0 0.0
    %1165 = vmatpush1.msra.mxu0 %v977
    %1166 = vmatprep.subr.mxu0 0.0
    %1167 = vmatpush1.msra.mxu0 0.0
    %1168 = vmatprep.subr.mxu0 0.0
    %1169 = vmatpush1.msra.mxu0 0.0
    %1170 = vmatprep.subr.mxu0 0.0
    %1171 = vmatpush1.msra.mxu0 0.0
    %1172 = vmatprep.subr.mxu0 0.0
    %1173 = vmatpush1.msra.mxu0 0.0
    %1174 = vmatprep.subr.mxu0 0.0
    %1175 = vmatpush1.msra.mxu0 0.0
    %1176 = vmatprep.subr.mxu0 0.0
    %1177 = vmatpush1.msra.mxu0 0.0
    %1178 = vmatprep.subr.mxu0 0.0
    %1179 = vmatpush1.msra.mxu0 0.0
    %1180 = vmatprep.subr.mxu0 0.0
    %1181 = vmatpush1.msra.mxu0 0.0
    %1182 = vmatprep.subr.mxu0 0.0
    %1183 = vmatpush1.msra.mxu0 0.0
    %1184 = vmatprep.subr.mxu0 0.0
    %1185 = vmatpush1.msra.mxu0 0.0
    %1186 = vmatprep.subr.mxu0 0.0
    %1187 = vmatpush1.msra.mxu0 0.0
    %1188 = vmatprep.subr.mxu0 0.0
    %1189 = vmatpush1.msra.mxu0 0.0
    %1190 = vmatprep.subr.mxu0 0.0
    %1191 = vmatpush1.msra.mxu0 0.0
    %1192 = vmatprep.subr.mxu0 0.0
    %1193 = vmatpush1.msra.mxu0 0.0
    %1194 = vmatprep.subr.mxu0 0.0
    %1195 = vmatpush1.msra.mxu0 0.0
    %1196 = vmatprep.subr.mxu0 0.0
    %1197 = vmatpush1.msra.mxu0 0.0
    %1198 = vmatprep.subr.mxu0 0.0
    %1199 = vmatpush1.msra.mxu0 0.0
    %1200 = vmatprep.subr.mxu0 0.0
    %1201 = vmatpush1.msra.mxu0 0.0
    %1202 = vmatprep.subr.mxu0 0.0
    %1203 = vmatpush1.msra.mxu0 0.0
    %1204 = vmatprep.subr.mxu0 0.0
    %1205 = vmatpush1.msra.mxu0 0.0
    %1206 = vmatprep.subr.mxu0 0.0
    %1207 = vmatpush1.msra.mxu0 0.0
    %1208 = vmatprep.subr.mxu0 0.0
    %1209 = vmatpush1.msra.mxu0 0.0
    %1210 = vmatprep.subr.mxu0 0.0
    %1211 = vmatpush1.msra.mxu0 0.0
    %1212 = vmatprep.subr.mxu0 0.0
    %1213 = vmatpush1.msra.mxu0 0.0
    %1214 = vmatprep.subr.mxu0 0.0
    %1215 = vmatpush1.msra.mxu0 0.0
    %1216 = vmatprep.subr.mxu0 0.0
    %1217 = vmatpush1.msra.mxu0 0.0
    %1218 = vmatprep.subr.mxu0 0.0
    %1219 = vmatpush1.msra.mxu0 0.0
    %1220 = vmatprep.subr.mxu0 0.0
    %1221 = vmatpush1.msra.mxu0 0.0
    %1222 = vmatprep.subr.mxu0 0.0
    %1223 = vmatpush1.msra.mxu0 0.0
    %1224 = vmatprep.subr.mxu0 0.0
    %1225 = vmatpush1.msra.mxu0 0.0
    %1226 = vmatprep.subr.mxu0 0.0
    %1227 = vmatpush1.msra.mxu0 0.0
    %1228 = vmatprep.mubr.f32.mxu0 0.0
    %1229 = vmatmul.mubr.f32.gmra.mrb[0].mxu0 %v1162
    %v1230 = vpop.f32.mrb[0].mxu0
    %v1231 = vadd.f32 0.0, %v1230
    %v1232 = vpop.f32.mrb[0].mxu0
    %1233 = vdwg.mxu0
    %v1235 = vsel %vm437, %v1160, 0
    %1237 = vmatprep.subr.mxu0 0.0
    %1238 = vmatpush1.msra.mxu0 %v982
    %1239 = vmatprep.subr.mxu0 0.0
    %1240 = vmatpush1.msra.mxu0 0.0
    %1241 = vmatprep.subr.mxu0 0.0
    %1242 = vmatpush1.msra.mxu0 0.0
    %1243 = vmatprep.subr.mxu0 0.0
    %1244 = vmatpush1.msra.mxu0 0.0
    %1245 = vmatprep.subr.mxu0 0.0
    %1246 = vmatpush1.msra.mxu0 0.0
    %1247 = vmatprep.subr.mxu0 0.0
    %1248 = vmatpush1.msra.mxu0 0.0
    %1249 = vmatprep.subr.mxu0 0.0
    %1250 = vmatpush1.msra.mxu0 0.0
    %1251 = vmatprep.subr.mxu0 0.0
    %1252 = vmatpush1.msra.mxu0 0.0
    %1253 = vmatprep.subr.mxu0 0.0
    %1254 = vmatpush1.msra.mxu0 0.0
    %1255 = vmatprep.subr.mxu0 0.0
    %1256 = vmatpush1.msra.mxu0 0.0
    %1257 = vmatprep.subr.mxu0 0.0
    %1258 = vmatpush1.msra.mxu0 0.0
    %1259 = vmatprep.subr.mxu0 0.0
    %1260 = vmatpush1.msra.mxu0 0.0
    %1261 = vmatprep.subr.mxu0 0.0
    %1262 = vmatpush1.msra.mxu0 0.0
    %1263 = vmatprep.subr.mxu0 0.0
    %1264 = vmatpush1.msra.mxu0 0.0
    %1265 = vmatprep.subr.mxu0 0.0
    %1266 = vmatpush1.msra.mxu0 0.0
    %1267 = vmatprep.subr.mxu0 0.0
    %1268 = vmatpush1.msra.mxu0 0.0
    %1269 = vmatprep.subr.mxu0 0.0
    %1270 = vmatpush1.msra.mxu0 0.0
    %1271 = vmatprep.subr.mxu0 0.0
    %1272 = vmatpush1.msra.mxu0 0.0
    %1273 = vmatprep.subr.mxu0 0.0
    %1274 = vmatpush1.msra.mxu0 0.0
    %1275 = vmatprep.subr.mxu0 0.0
    %1276 = vmatpush1.msra.mxu0 0.0
    %1277 = vmatprep.subr.mxu0 0.0
    %1278 = vmatpush1.msra.mxu0 0.0
    %1279 = vmatprep.subr.mxu0 0.0
    %1280 = vmatpush1.msra.mxu0 0.0
    %1281 = vmatprep.subr.mxu0 0.0
    %1282 = vmatpush1.msra.mxu0 0.0
    %1283 = vmatprep.subr.mxu0 0.0
    %1284 = vmatpush1.msra.mxu0 0.0
    %1285 = vmatprep.subr.mxu0 0.0
    %1286 = vmatpush1.msra.mxu0 0.0
    %1287 = vmatprep.subr.mxu0 0.0
    %1288 = vmatpush1.msra.mxu0 0.0
    %1289 = vmatprep.subr.mxu0 0.0
    %1290 = vmatpush1.msra.mxu0 0.0
    %1291 = vmatprep.subr.mxu0 0.0
    %1292 = vmatpush1.msra.mxu0 0.0
    %1293 = vmatprep.subr.mxu0 0.0
    %1294 = vmatpush1.msra.mxu0 0.0
    %1295 = vmatprep.subr.mxu0 0.0
    %1296 = vmatpush1.msra.mxu0 0.0
    %1297 = vmatprep.subr.mxu0 0.0
    %1298 = vmatpush1.msra.mxu0 0.0
    %1299 = vmatprep.subr.mxu0 0.0
    %1300 = vmatpush1.msra.mxu0 0.0
    %1301 = vmatprep.mubr.f32.mxu0 0.0
    %1302 = vmatmul.mubr.f32.gmra.mrb[0].mxu0 %v1235
    %v1303 = vpop.f32.mrb[0].mxu0
    %v1304 = vadd.f32 0.0, %v1303
    %v1305 = vpop.f32.mrb[0].mxu0
    %1306 = vdwg.mxu0
    %v1308 = vsel %vm437, %v1231, 0
    %v1311 = vsel %vm437, %v1304, 0
    %1313 = vmatprep.subr.mxu0 0.0
    %1314 = vmatpush1.msra.mxu0 %v197
    %1315 = vmatprep.subr.mxu0 0.0
    %1316 = vmatpush1.msra.mxu0 0.0
    %1317 = vmatprep.subr.mxu0 0.0
    %1318 = vmatpush1.msra.mxu0 0.0
    %1319 = vmatprep.subr.mxu0 0.0
    %1320 = vmatpush1.msra.mxu0 0.0
    %1321 = vmatprep.subr.mxu0 0.0
    %1322 = vmatpush1.msra.mxu0 0.0
    %1323 = vmatprep.subr.mxu0 0.0
    %1324 = vmatpush1.msra.mxu0 0.0
    %1325 = vmatprep.subr.mxu0 0.0
    %1326 = vmatpush1.msra.mxu0 0.0
    %1327 = vmatprep.subr.mxu0 0.0
    %1328 = vmatpush1.msra.mxu0 0.0
    %1329 = vmatprep.subr.mxu0 0.0
    %1330 = vmatpush1.msra.mxu0 0.0
    %1331 = vmatprep.subr.mxu0 0.0
    %1332 = vmatpush1.msra.mxu0 0.0
    %1333 = vmatprep.subr.mxu0 0.0
    %1334 = vmatpush1.msra.mxu0 0.0
    %1335 = vmatprep.subr.mxu0 0.0
    %1336 = vmatpush1.msra.mxu0 0.0
    %1337 = vmatprep.subr.mxu0 0.0
    %1338 = vmatpush1.msra.mxu0 0.0
    %1339 = vmatprep.subr.mxu0 0.0
    %1340 = vmatpush1.msra.mxu0 0.0
    %1341 = vmatprep.subr.mxu0 0.0
    %1342 = vmatpush1.msra.mxu0 0.0
    %1343 = vmatprep.subr.mxu0 0.0
    %1344 = vmatpush1.msra.mxu0 0.0
    %1345 = vmatprep.subr.mxu0 0.0
    %1346 = vmatpush1.msra.mxu0 0.0
    %1347 = vmatprep.subr.mxu0 0.0
    %1348 = vmatpush1.msra.mxu0 0.0
    %1349 = vmatprep.subr.mxu0 0.0
    %1350 = vmatpush1.msra.mxu0 0.0
    %1351 = vmatprep.subr.mxu0 0.0
    %1352 = vmatpush1.msra.mxu0 0.0
    %1353 = vmatprep.subr.mxu0 0.0
    %1354 = vmatpush1.msra.mxu0 0.0
    %1355 = vmatprep.subr.mxu0 0.0
    %1356 = vmatpush1.msra.mxu0 0.0
    %1357 = vmatprep.subr.mxu0 0.0
    %1358 = vmatpush1.msra.mxu0 0.0
    %1359 = vmatprep.subr.mxu0 0.0
    %1360 = vmatpush1.msra.mxu0 0.0
    %1361 = vmatprep.subr.mxu0 0.0
    %1362 = vmatpush1.msra.mxu0 0.0
    %1363 = vmatprep.subr.mxu0 0.0
    %1364 = vmatpush1.msra.mxu0 0.0
    %1365 = vmatprep.subr.mxu0 0.0
    %1366 = vmatpush1.msra.mxu0 0.0
    %1367 = vmatprep.subr.mxu0 0.0
    %1368 = vmatpush1.msra.mxu0 0.0
    %1369 = vmatprep.subr.mxu0 0.0
    %1370 = vmatpush1.msra.mxu0 0.0
    %1371 = vmatprep.subr.mxu0 0.0
    %1372 = vmatpush1.msra.mxu0 0.0
    %1373 = vmatprep.subr.mxu0 0.0
    %1374 = vmatpush1.msra.mxu0 0.0
    %1375 = vmatprep.subr.mxu0 0.0
    %1376 = vmatpush1.msra.mxu0 0.0
    %1377 = vmatprep.mubr.f32.mxu0 0.0
    %1378 = vmatmul.mubr.f32.gmra.mrb[0].mxu0 %v1308
    %v1379 = vpop.f32.mrb[0].mxu0
    %v1380 = vadd.f32 0.0, %v1379
    %v1381 = vpop.f32.mrb[0].mxu0
    %1382 = vmatprep.mubr.f32.mxu0 0.0
    %1383 = vmatmul.mubr.f32.gmra.mrb[0].mxu0 %v1311
    %v1384 = vpop.f32.mrb[0].mxu0
    %v1385 = vadd.f32 0.0, %v1384
    %v1386 = vpop.f32.mrb[0].mxu0
    %1387 = vdwg.mxu0
    %v1389 = vsel %vm437, %v684, 0
    %v1392 = vsel %vm437, %v757, 0
    %1394 = vmatprep.subr.mxu0 0.0
    %1395 = vmatpush1.msra.mxu0 %v196
    %1396 = vmatprep.subr.mxu0 0.0
    %1397 = vmatpush1.msra.mxu0 0.0
    %1398 = vmatprep.subr.mxu0 0.0
    %1399 = vmatpush1.msra.mxu0 0.0
    %1400 = vmatprep.subr.mxu0 0.0
    %1401 = vmatpush1.msra.mxu0 0.0
    %1402 = vmatprep.subr.mxu0 0.0
    %1403 = vmatpush1.msra.mxu0 0.0
    %1404 = vmatprep.subr.mxu0 0.0
    %1405 = vmatpush1.msra.mxu0 0.0
    %1406 = vmatprep.subr.mxu0 0.0
    %1407 = vmatpush1.msra.mxu0 0.0
    %1408 = vmatprep.subr.mxu0 0.0
    %1409 = vmatpush1.msra.mxu0 0.0
    %1410 = vmatprep.subr.mxu0 0.0
    %1411 = vmatpush1.msra.mxu0 0.0
    %1412 = vmatprep.subr.mxu0 0.0
    %1413 = vmatpush1.msra.mxu0 0.0
    %1414 = vmatprep.subr.mxu0 0.0
    %1415 = vmatpush1.msra.mxu0 0.0
    %1416 = vmatprep.subr.mxu0 0.0
    %1417 = vmatpush1.msra.mxu0 0.0
    %1418 = vmatprep.subr.mxu0 0.0
    %1419 = vmatpush1.msra.mxu0 0.0
    %1420 = vmatprep.subr.mxu0 0.0
    %1421 = vmatpush1.msra.mxu0 0.0
    %1422 = vmatprep.subr.mxu0 0.0
    %1423 = vmatpush1.msra.mxu0 0.0
    %1424 = vmatprep.subr.mxu0 0.0
    %1425 = vmatpush1.msra.mxu0 0.0
    %1426 = vmatprep.subr.mxu0 0.0
    %1427 = vmatpush1.msra.mxu0 0.0
    %1428 = vmatprep.subr.mxu0 0.0
    %1429 = vmatpush1.msra.mxu0 0.0
    %1430 = vmatprep.subr.mxu0 0.0
    %1431 = vmatpush1.msra.mxu0 0.0
    %1432 = vmatprep.subr.mxu0 0.0
    %1433 = vmatpush1.msra.mxu0 0.0
    %1434 = vmatprep.subr.mxu0 0.0
    %1435 = vmatpush1.msra.mxu0 0.0
    %1436 = vmatprep.subr.mxu0 0.0
    %1437 = vmatpush1.msra.mxu0 0.0
    %1438 = vmatprep.subr.mxu0 0.0
    %1439 = vmatpush1.msra.mxu0 0.0
    %1440 = vmatprep.subr.mxu0 0.0
    %1441 = vmatpush1.msra.mxu0 0.0
    %1442 = vmatprep.subr.mxu0 0.0
    %1443 = vmatpush1.msra.mxu0 0.0
    %1444 = vmatprep.subr.mxu0 0.0
    %1445 = vmatpush1.msra.mxu0 0.0
    %1446 = vmatprep.subr.mxu0 0.0
    %1447 = vmatpush1.msra.mxu0 0.0
    %1448 = vmatprep.subr.mxu0 0.0
    %1449 = vmatpush1.msra.mxu0 0.0
    %1450 = vmatprep.subr.mxu0 0.0
    %1451 = vmatpush1.msra.mxu0 0.0
    %1452 = vmatprep.subr.mxu0 0.0
    %1453 = vmatpush1.msra.mxu0 0.0
    %1454 = vmatprep.subr.mxu0 0.0
    %1455 = vmatpush1.msra.mxu0 0.0
    %1456 = vmatprep.subr.mxu0 0.0
    %1457 = vmatpush1.msra.mxu0 0.0
    %1458 = vmatprep.mubr.f32.mxu0 0.0
    %1459 = vmatmul.mubr.f32.gmra.mrb[0].mxu0 %v1389
    %v1460 = vpop.f32.mrb[0].mxu0
    %v1461 = vadd.f32 %v1380, %v1460
    %v1462 = vpop.f32.mrb[0].mxu0
    %1463 = vmatprep.mubr.f32.mxu0 0.0
    %1464 = vmatmul.mubr.f32.gmra.mrb[0].mxu0 %v1392
    %v1465 = vpop.f32.mrb[0].mxu0
    %v1466 = vadd.f32 %v1385, %v1465
    %v1467 = vpop.f32.mrb[0].mxu0
    %1468 = vdwg.mxu0
    %1469 = vmatprep.subr.mxu0 0.0
    %1470 = vmatpush1.msra.mxu0 %v156
    %1471 = vmatprep.subr.mxu0 0.0
    %1472 = vmatpush1.msra.mxu0 %v157
    %1473 = vmatprep.subr.mxu0 0.0
    %1474 = vmatpush1.msra.mxu0 %v158
    %1475 = vmatprep.subr.mxu0 0.0
    %1476 = vmatpush1.msra.mxu0 %v159
    %1477 = vmatprep.subr.mxu0 0.0
    %1478 = vmatpush1.msra.mxu0 0.0
    %1479 = vmatprep.subr.mxu0 0.0
    %1480 = vmatpush1.msra.mxu0 0.0
    %1481 = vmatprep.subr.mxu0 0.0
    %1482 = vmatpush1.msra.mxu0 0.0
    %1483 = vmatprep.subr.mxu0 0.0
    %1484 = vmatpush1.msra.mxu0 0.0
    %1485 = vmatprep.subr.mxu0 0.0
    %1486 = vmatpush1.msra.mxu0 0.0
    %1487 = vmatprep.subr.mxu0 0.0
    %1488 = vmatpush1.msra.mxu0 0.0
    %1489 = vmatprep.subr.mxu0 0.0
    %1490 = vmatpush1.msra.mxu0 0.0
    %1491 = vmatprep.subr.mxu0 0.0
    %1492 = vmatpush1.msra.mxu0 0.0
    %1493 = vmatprep.subr.mxu0 0.0
    %1494 = vmatpush1.msra.mxu0 0.0
    %1495 = vmatprep.subr.mxu0 0.0
    %1496 = vmatpush1.msra.mxu0 0.0
    %1497 = vmatprep.subr.mxu0 0.0
    %1498 = vmatpush1.msra.mxu0 0.0
    %1499 = vmatprep.subr.mxu0 0.0
    %1500 = vmatpush1.msra.mxu0 0.0
    %1501 = vmatprep.subr.mxu0 0.0
    %1502 = vmatpush1.msra.mxu0 0.0
    %1503 = vmatprep.subr.mxu0 0.0
    %1504 = vmatpush1.msra.mxu0 0.0
    %1505 = vmatprep.subr.mxu0 0.0
    %1506 = vmatpush1.msra.mxu0 0.0
    %1507 = vmatprep.subr.mxu0 0.0
    %1508 = vmatpush1.msra.mxu0 0.0
    %1509 = vmatprep.subr.mxu0 0.0
    %1510 = vmatpush1.msra.mxu0 0.0
    %1511 = vmatprep.subr.mxu0 0.0
    %1512 = vmatpush1.msra.mxu0 0.0
    %1513 = vmatprep.subr.mxu0 0.0
    %1514 = vmatpush1.msra.mxu0 0.0
    %1515 = vmatprep.subr.mxu0 0.0
    %1516 = vmatpush1.msra.mxu0 0.0
    %1517 = vmatprep.subr.mxu0 0.0
    %1518 = vmatpush1.msra.mxu0 0.0
    %1519 = vmatprep.subr.mxu0 0.0
    %1520 = vmatpush1.msra.mxu0 0.0
    %1521 = vmatprep.subr.mxu0 0.0
    %1522 = vmatpush1.msra.mxu0 0.0
    %1523 = vmatprep.subr.mxu0 0.0
    %1524 = vmatpush1.msra.mxu0 0.0
    %1525 = vmatprep.subr.mxu0 0.0
    %1526 = vmatpush1.msra.mxu0 0.0
    %1527 = vmatprep.subr.mxu0 0.0
    %1528 = vmatpush1.msra.mxu0 0.0
    %1529 = vmatprep.subr.mxu0 0.0
    %1530 = vmatpush1.msra.mxu0 0.0
    %1531 = vmatprep.subr.mxu0 0.0
    %1532 = vmatpush1.msra.mxu0 0.0
    %1533 = vmatprep.mubr.f32.mxu0 0.0
    %1534 = vmatmul.mubr.f32.gmra.mrb[0].mxu0 %v201
    %v1535 = vpop.f32.mrb[0].mxu0
    %v1536 = vadd.f32 0.0, %v1535
    %v1537 = vpop.f32.mrb[0].mxu0
    %1538 = vmatprep.mubr.f32.mxu0 0.0
    %1539 = vmatmul.mubr.f32.gmra.mrb[0].mxu0 %v204
    %v1540 = vpop.f32.mrb[0].mxu0
    %v1541 = vadd.f32 0.0, %v1540
    %v1542 = vpop.f32.mrb[0].mxu0
    %1543 = vdwg.mxu0
    %1544 = vmatprep.subr.mxu0 0.0
    %1545 = vmatpush1.msra.mxu0 %v172
    %1546 = vmatprep.subr.mxu0 0.0
    %1547 = vmatpush1.msra.mxu0 %v173
    %1548 = vmatprep.subr.mxu0 0.0
    %1549 = vmatpush1.msra.mxu0 %v174
    %1550 = vmatprep.subr.mxu0 0.0
    %1551 = vmatpush1.msra.mxu0 %v175
    %1552 = vmatprep.subr.mxu0 0.0
    %1553 = vmatpush1.msra.mxu0 0.0
    %1554 = vmatprep.subr.mxu0 0.0
    %1555 = vmatpush1.msra.mxu0 0.0
    %1556 = vmatprep.subr.mxu0 0.0
    %1557 = vmatpush1.msra.mxu0 0.0
    %1558 = vmatprep.subr.mxu0 0.0
    %1559 = vmatpush1.msra.mxu0 0.0
    %1560 = vmatprep.subr.mxu0 0.0
    %1561 = vmatpush1.msra.mxu0 0.0
    %1562 = vmatprep.subr.mxu0 0.0
    %1563 = vmatpush1.msra.mxu0 0.0
    %1564 = vmatprep.subr.mxu0 0.0
    %1565 = vmatpush1.msra.mxu0 0.0
    %1566 = vmatprep.subr.mxu0 0.0
    %1567 = vmatpush1.msra.mxu0 0.0
    %1568 = vmatprep.subr.mxu0 0.0
    %1569 = vmatpush1.msra.mxu0 0.0
    %1570 = vmatprep.subr.mxu0 0.0
    %1571 = vmatpush1.msra.mxu0 0.0
    %1572 = vmatprep.subr.mxu0 0.0
    %1573 = vmatpush1.msra.mxu0 0.0
    %1574 = vmatprep.subr.mxu0 0.0
    %1575 = vmatpush1.msra.mxu0 0.0
    %1576 = vmatprep.subr.mxu0 0.0
    %1577 = vmatpush1.msra.mxu0 0.0
    %1578 = vmatprep.subr.mxu0 0.0
    %1579 = vmatpush1.msra.mxu0 0.0
    %1580 = vmatprep.subr.mxu0 0.0
    %1581 = vmatpush1.msra.mxu0 0.0
    %1582 = vmatprep.subr.mxu0 0.0
    %1583 = vmatpush1.msra.mxu0 0.0
    %1584 = vmatprep.subr.mxu0 0.0
    %1585 = vmatpush1.msra.mxu0 0.0
    %1586 = vmatprep.subr.mxu0 0.0
    %1587 = vmatpush1.msra.mxu0 0.0
    %1588 = vmatprep.subr.mxu0 0.0
    %1589 = vmatpush1.msra.mxu0 0.0
    %1590 = vmatprep.subr.mxu0 0.0
    %1591 = vmatpush1.msra.mxu0 0.0
    %1592 = vmatprep.subr.mxu0 0.0
    %1593 = vmatpush1.msra.mxu0 0.0
    %1594 = vmatprep.subr.mxu0 0.0
    %1595 = vmatpush1.msra.mxu0 0.0
    %1596 = vmatprep.subr.mxu0 0.0
    %1597 = vmatpush1.msra.mxu0 0.0
    %1598 = vmatprep.subr.mxu0 0.0
    %1599 = vmatpush1.msra.mxu0 0.0
    %1600 = vmatprep.subr.mxu0 0.0
    %1601 = vmatpush1.msra.mxu0 0.0
    %1602 = vmatprep.subr.mxu0 0.0
    %1603 = vmatpush1.msra.mxu0 0.0
    %1604 = vmatprep.subr.mxu0 0.0
    %1605 = vmatpush1.msra.mxu0 0.0
    %1606 = vmatprep.subr.mxu0 0.0
    %1607 = vmatpush1.msra.mxu0 0.0
    %1608 = vmatprep.mubr.f32.mxu0 0.0
    %1609 = vmatmul.mubr.f32.gmra.mrb[0].mxu0 %v282
    %v1610 = vpop.f32.mrb[0].mxu0
    %v1611 = vadd.f32 0.0, %v1610
    %v1612 = vpop.f32.mrb[0].mxu0
    %1613 = vmatprep.mubr.f32.mxu0 0.0
    %1614 = vmatmul.mubr.f32.gmra.mrb[0].mxu0 %v285
    %v1615 = vpop.f32.mrb[0].mxu0
    %v1616 = vadd.f32 0.0, %v1615
    %v1617 = vpop.f32.mrb[0].mxu0
    %1618 = vdwg.mxu0
    %1619 = vmatprep.subr.mxu0 0.0
    %1620 = vmatpush1.msra.mxu0 %v188
    %1621 = vmatprep.subr.mxu0 0.0
    %1622 = vmatpush1.msra.mxu0 %v189
    %1623 = vmatprep.subr.mxu0 0.0
    %1624 = vmatpush1.msra.mxu0 %v190
    %1625 = vmatprep.subr.mxu0 0.0
    %1626 = vmatpush1.msra.mxu0 %v191
    %1627 = vmatprep.subr.mxu0 0.0
    %1628 = vmatpush1.msra.mxu0 0.0
    %1629 = vmatprep.subr.mxu0 0.0
    %1630 = vmatpush1.msra.mxu0 0.0
    %1631 = vmatprep.subr.mxu0 0.0
    %1632 = vmatpush1.msra.mxu0 0.0
    %1633 = vmatprep.subr.mxu0 0.0
    %1634 = vmatpush1.msra.mxu0 0.0
    %1635 = vmatprep.subr.mxu0 0.0
    %1636 = vmatpush1.msra.mxu0 0.0
    %1637 = vmatprep.subr.mxu0 0.0
    %1638 = vmatpush1.msra.mxu0 0.0
    %1639 = vmatprep.subr.mxu0 0.0
    %1640 = vmatpush1.msra.mxu0 0.0
    %1641 = vmatprep.subr.mxu0 0.0
    %1642 = vmatpush1.msra.mxu0 0.0
    %1643 = vmatprep.subr.mxu0 0.0
    %1644 = vmatpush1.msra.mxu0 0.0
    %1645 = vmatprep.subr.mxu0 0.0
    %1646 = vmatpush1.msra.mxu0 0.0
    %1647 = vmatprep.subr.mxu0 0.0
    %1648 = vmatpush1.msra.mxu0 0.0
    %1649 = vmatprep.subr.mxu0 0.0
    %1650 = vmatpush1.msra.mxu0 0.0
    %1651 = vmatprep.subr.mxu0 0.0
    %1652 = vmatpush1.msra.mxu0 0.0
    %1653 = vmatprep.subr.mxu0 0.0
    %1654 = vmatpush1.msra.mxu0 0.0
    %1655 = vmatprep.subr.mxu0 0.0
    %1656 = vmatpush1.msra.mxu0 0.0
    %1657 = vmatprep.subr.mxu0 0.0
    %1658 = vmatpush1.msra.mxu0 0.0
    %1659 = vmatprep.subr.mxu0 0.0
    %1660 = vmatpush1.msra.mxu0 0.0
    %1661 = vmatprep.subr.mxu0 0.0
    %1662 = vmatpush1.msra.mxu0 0.0
    %1663 = vmatprep.subr.mxu0 0.0
    %1664 = vmatpush1.msra.mxu0 0.0
    %1665 = vmatprep.subr.mxu0 0.0
    %1666 = vmatpush1.msra.mxu0 0.0
    %1667 = vmatprep.subr.mxu0 0.0
    %1668 = vmatpush1.msra.mxu0 0.0
    %1669 = vmatprep.subr.mxu0 0.0
    %1670 = vmatpush1.msra.mxu0 0.0
    %1671 = vmatprep.subr.mxu0 0.0
    %1672 = vmatpush1.msra.mxu0 0.0
    %1673 = vmatprep.subr.mxu0 0.0
    %1674 = vmatpush1.msra.mxu0 0.0
    %1675 = vmatprep.subr.mxu0 0.0
    %1676 = vmatpush1.msra.mxu0 0.0
    %1677 = vmatprep.subr.mxu0 0.0
    %1678 = vmatpush1.msra.mxu0 0.0
    %1679 = vmatprep.subr.mxu0 0.0
    %1680 = vmatpush1.msra.mxu0 0.0
    %1681 = vmatprep.subr.mxu0 0.0
    %1682 = vmatpush1.msra.mxu0 0.0
    %1683 = vmatprep.mubr.f32.mxu0 0.0
    %1684 = vmatmul.mubr.f32.gmra.mrb[0].mxu0 %v282
    %v1685 = vpop.f32.mrb[0].mxu0
    %v1686 = vadd.f32 0.0, %v1685
    %v1687 = vpop.f32.mrb[0].mxu0
    %1688 = vmatprep.mubr.f32.mxu0 0.0
    %1689 = vmatmul.mubr.f32.gmra.mrb[0].mxu0 %v285
    %v1690 = vpop.f32.mrb[0].mxu0
    %v1691 = vadd.f32 0.0, %v1690
    %v1692 = vpop.f32.mrb[0].mxu0
    %1693 = vdwg.mxu0
    %v1695 = vsel %vm437, %v1536, 0
    %v1698 = vsel %vm437, %v1611, 0
    %1700 = vmatprep.subr.mxu0 0.0
    %1701 = vmatpush1.xpose.msra.mxu0 %v1698
    %1702 = vmatprep.subr.mxu0 0.0
    %1703 = vmatpush1.xpose.msra.mxu0 0.0
    %1704 = vmatprep.subr.mxu0 0.0
    %1705 = vmatpush1.xpose.msra.mxu0 0.0
    %1706 = vmatprep.subr.mxu0 0.0
    %1707 = vmatpush1.xpose.msra.mxu0 0.0
    %1708 = vmatprep.subr.mxu0 0.0
    %1709 = vmatpush1.xpose.msra.mxu0 0.0
    %1710 = vmatprep.subr.mxu0 0.0
    %1711 = vmatpush1.xpose.msra.mxu0 0.0
    %1712 = vmatprep.subr.mxu0 0.0
    %1713 = vmatpush1.xpose.msra.mxu0 0.0
    %1714 = vmatprep.subr.mxu0 0.0
    %1715 = vmatpush1.xpose.msra.mxu0 0.0
    %1716 = vmatprep.subr.mxu0 0.0
    %1717 = vmatpush1.xpose.msra.mxu0 0.0
    %1718 = vmatprep.subr.mxu0 0.0
    %1719 = vmatpush1.xpose.msra.mxu0 0.0
    %1720 = vmatprep.subr.mxu0 0.0
    %1721 = vmatpush1.xpose.msra.mxu0 0.0
    %1722 = vmatprep.subr.mxu0 0.0
    %1723 = vmatpush1.xpose.msra.mxu0 0.0
    %1724 = vmatprep.subr.mxu0 0.0
    %1725 = vmatpush1.xpose.msra.mxu0 0.0
    %1726 = vmatprep.subr.mxu0 0.0
    %1727 = vmatpush1.xpose.msra.mxu0 0.0
    %1728 = vmatprep.subr.mxu0 0.0
    %1729 = vmatpush1.xpose.msra.mxu0 0.0
    %1730 = vmatprep.subr.mxu0 0.0
    %1731 = vmatpush1.xpose.msra.mxu0 0.0
    %1732 = vmatprep.subr.mxu0 0.0
    %1733 = vmatpush1.xpose.msra.mxu0 0.0
    %1734 = vmatprep.subr.mxu0 0.0
    %1735 = vmatpush1.xpose.msra.mxu0 0.0
    %1736 = vmatprep.subr.mxu0 0.0
    %1737 = vmatpush1.xpose.msra.mxu0 0.0
    %1738 = vmatprep.subr.mxu0 0.0
    %1739 = vmatpush1.xpose.msra.mxu0 0.0
    %1740 = vmatprep.subr.mxu0 0.0
    %1741 = vmatpush1.xpose.msra.mxu0 0.0
    %1742 = vmatprep.subr.mxu0 0.0
    %1743 = vmatpush1.xpose.msra.mxu0 0.0
    %1744 = vmatprep.subr.mxu0 0.0
    %1745 = vmatpush1.xpose.msra.mxu0 0.0
    %1746 = vmatprep.subr.mxu0 0.0
    %1747 = vmatpush1.xpose.msra.mxu0 0.0
    %1748 = vmatprep.subr.mxu0 0.0
    %1749 = vmatpush1.xpose.msra.mxu0 0.0
    %1750 = vmatprep.subr.mxu0 0.0
    %1751 = vmatpush1.xpose.msra.mxu0 0.0
    %1752 = vmatprep.subr.mxu0 0.0
    %1753 = vmatpush1.xpose.msra.mxu0 0.0
    %1754 = vmatprep.subr.mxu0 0.0
    %1755 = vmatpush1.xpose.msra.mxu0 0.0
    %1756 = vmatprep.subr.mxu0 0.0
    %1757 = vmatpush1.xpose.msra.mxu0 0.0
    %1758 = vmatprep.subr.mxu0 0.0
    %1759 = vmatpush1.xpose.msra.mxu0 0.0
    %1760 = vmatprep.subr.mxu0 0.0
    %1761 = vmatpush1.xpose.msra.mxu0 0.0
    %1762 = vmatprep.subr.mxu0 0.0
    %1763 = vmatpush1.xpose.msra.mxu0 0.0
    %1764 = vmatprep.mubr.f32.mxu0 0.0
    %1765 = vmatmul.mubr.f32.gmra.mrb[0].mxu0 %v1695
    %v1766 = vpop.f32.mrb[0].mxu0
    %v1767 = vadd.f32 0.0, %v1766
    %v1768 = vpop.f32.mrb[0].mxu0
    %1769 = vdwg.mxu0
    %v1771 = vsel %vm437, %v1541, 0
    %v1774 = vsel %vm437, %v1616, 0
    %1776 = vmatprep.subr.mxu0 0.0
    %1777 = vmatpush1.xpose.msra.mxu0 %v1774
    %1778 = vmatprep.subr.mxu0 0.0
    %1779 = vmatpush1.xpose.msra.mxu0 0.0
    %1780 = vmatprep.subr.mxu0 0.0
    %1781 = vmatpush1.xpose.msra.mxu0 0.0
    %1782 = vmatprep.subr.mxu0 0.0
    %1783 = vmatpush1.xpose.msra.mxu0 0.0
    %1784 = vmatprep.subr.mxu0 0.0
    %1785 = vmatpush1.xpose.msra.mxu0 0.0
    %1786 = vmatprep.subr.mxu0 0.0
    %1787 = vmatpush1.xpose.msra.mxu0 0.0
    %1788 = vmatprep.subr.mxu0 0.0
    %1789 = vmatpush1.xpose.msra.mxu0 0.0
    %1790 = vmatprep.subr.mxu0 0.0
    %1791 = vmatpush1.xpose.msra.mxu0 0.0
    %1792 = vmatprep.subr.mxu0 0.0
    %1793 = vmatpush1.xpose.msra.mxu0 0.0
    %1794 = vmatprep.subr.mxu0 0.0
    %1795 = vmatpush1.xpose.msra.mxu0 0.0
    %1796 = vmatprep.subr.mxu0 0.0
    %1797 = vmatpush1.xpose.msra.mxu0 0.0
    %1798 = vmatprep.subr.mxu0 0.0
    %1799 = vmatpush1.xpose.msra.mxu0 0.0
    %1800 = vmatprep.subr.mxu0 0.0
    %1801 = vmatpush1.xpose.msra.mxu0 0.0
    %1802 = vmatprep.subr.mxu0 0.0
    %1803 = vmatpush1.xpose.msra.mxu0 0.0
    %1804 = vmatprep.subr.mxu0 0.0
    %1805 = vmatpush1.xpose.msra.mxu0 0.0
    %1806 = vmatprep.subr.mxu0 0.0
    %1807 = vmatpush1.xpose.msra.mxu0 0.0
    %1808 = vmatprep.subr.mxu0 0.0
    %1809 = vmatpush1.xpose.msra.mxu0 0.0
    %1810 = vmatprep.subr.mxu0 0.0
    %1811 = vmatpush1.xpose.msra.mxu0 0.0
    %1812 = vmatprep.subr.mxu0 0.0
    %1813 = vmatpush1.xpose.msra.mxu0 0.0
    %1814 = vmatprep.subr.mxu0 0.0
    %1815 = vmatpush1.xpose.msra.mxu0 0.0
    %1816 = vmatprep.subr.mxu0 0.0
    %1817 = vmatpush1.xpose.msra.mxu0 0.0
    %1818 = vmatprep.subr.mxu0 0.0
    %1819 = vmatpush1.xpose.msra.mxu0 0.0
    %1820 = vmatprep.subr.mxu0 0.0
    %1821 = vmatpush1.xpose.msra.mxu0 0.0
    %1822 = vmatprep.subr.mxu0 0.0
    %1823 = vmatpush1.xpose.msra.mxu0 0.0
    %1824 = vmatprep.subr.mxu0 0.0
    %1825 = vmatpush1.xpose.msra.mxu0 0.0
    %1826 = vmatprep.subr.mxu0 0.0
    %1827 = vmatpush1.xpose.msra.mxu0 0.0
    %1828 = vmatprep.subr.mxu0 0.0
    %1829 = vmatpush1.xpose.msra.mxu0 0.0
    %1830 = vmatprep.subr.mxu0 0.0
    %1831 = vmatpush1.xpose.msra.mxu0 0.0
    %1832 = vmatprep.subr.mxu0 0.0
    %1833 = vmatpush1.xpose.msra.mxu0 0.0
    %1834 = vmatprep.subr.mxu0 0.0
    %1835 = vmatpush1.xpose.msra.mxu0 0.0
    %1836 = vmatprep.subr.mxu0 0.0
    %1837 = vmatpush1.xpose.msra.mxu0 0.0
    %1838 = vmatprep.subr.mxu0 0.0
    %1839 = vmatpush1.xpose.msra.mxu0 0.0
    %1840 = vmatprep.mubr.f32.mxu0 0.0
    %1841 = vmatmul.mubr.f32.gmra.mrb[0].mxu0 %v1771
    %v1842 = vpop.f32.mrb[0].mxu0
    %v1843 = vadd.f32 0.0, %v1842
    %v1844 = vpop.f32.mrb[0].mxu0
    %1845 = vdwg.mxu0
    %v1846 = vmul.f32 %v1767, 0.35355338
    %v1847 = vmul.f32 %v1843, 0.35355338
    %v1848 = vsel %vm437, %v1846, -inf
    %1849 = vmax.xlane.f32.xlu0 %v1848
    %v1850 = vpop.xlane.xlu0 %1849
    %v1851 = vsel %vm437, %v1847, -inf
    %1852 = vmax.xlane.f32.xlu0 %v1851
    %v1853 = vpop.xlane.xlu0 %1852
    %v1854 = vsub.f32 %v1846, %v1850
    %v1855 = vsub.f32 %v1847, %v1853
    %v1856 = vmul.f32 %v1854, 1.442695
    %v1857 = vpow.pop %v1856
    %v1858 = vmul.f32 %v1855, 1.442695
    %v1859 = vpow.pop %v1858
    %v1860 = vsel %vm437, %v1857, 0.0
    %1861 = vadd.xlane.f32.xlu0 %v1860
    %v1862 = vpop.xlane.xlu0 %1861
    %v1863 = vsel %vm437, %v1859, 0.0
    %1864 = vadd.xlane.f32.xlu0 %v1863
    %v1865 = vpop.xlane.xlu0 %1864
    %v1866 = vrcp.pop %v1862
    %v1867 = vrcp.pop %v1865
    %v1868 = vmul.f32 %v1857, %v1866
    %v1869 = vmul.f32 %v1859, %v1867
    %v1871 = vsel %vm437, %v1868, 0
    %1873 = vmatprep.subr.mxu0 0.0
    %1874 = vmatpush1.msra.mxu0 %v1686
    %1875 = vmatprep.subr.mxu0 0.0
    %1876 = vmatpush1.msra.mxu0 0.0
    %1877 = vmatprep.subr.mxu0 0.0
    %1878 = vmatpush1.msra.mxu0 0.0
    %1879 = vmatprep.subr.mxu0 0.0
    %1880 = vmatpush1.msra.mxu0 0.0
    %1881 = vmatprep.subr.mxu0 0.0
    %1882 = vmatpush1.msra.mxu0 0.0
    %1883 = vmatprep.subr.mxu0 0.0
    %1884 = vmatpush1.msra.mxu0 0.0
    %1885 = vmatprep.subr.mxu0 0.0
    %1886 = vmatpush1.msra.mxu0 0.0
    %1887 = vmatprep.subr.mxu0 0.0
    %1888 = vmatpush1.msra.mxu0 0.0
    %1889 = vmatprep.subr.mxu0 0.0
    %1890 = vmatpush1.msra.mxu0 0.0
    %1891 = vmatprep.subr.mxu0 0.0
    %1892 = vmatpush1.msra.mxu0 0.0
    %1893 = vmatprep.subr.mxu0 0.0
    %1894 = vmatpush1.msra.mxu0 0.0
    %1895 = vmatprep.subr.mxu0 0.0
    %1896 = vmatpush1.msra.mxu0 0.0
    %1897 = vmatprep.subr.mxu0 0.0
    %1898 = vmatpush1.msra.mxu0 0.0
    %1899 = vmatprep.subr.mxu0 0.0
    %1900 = vmatpush1.msra.mxu0 0.0
    %1901 = vmatprep.subr.mxu0 0.0
    %1902 = vmatpush1.msra.mxu0 0.0
    %1903 = vmatprep.subr.mxu0 0.0
    %1904 = vmatpush1.msra.mxu0 0.0
    %1905 = vmatprep.subr.mxu0 0.0
    %1906 = vmatpush1.msra.mxu0 0.0
    %1907 = vmatprep.subr.mxu0 0.0
    %1908 = vmatpush1.msra.mxu0 0.0
    %1909 = vmatprep.subr.mxu0 0.0
    %1910 = vmatpush1.msra.mxu0 0.0
    %1911 = vmatprep.subr.mxu0 0.0
    %1912 = vmatpush1.msra.mxu0 0.0
    %1913 = vmatprep.subr.mxu0 0.0
    %1914 = vmatpush1.msra.mxu0 0.0
    %1915 = vmatprep.subr.mxu0 0.0
    %1916 = vmatpush1.msra.mxu0 0.0
    %1917 = vmatprep.subr.mxu0 0.0
    %1918 = vmatpush1.msra.mxu0 0.0
    %1919 = vmatprep.subr.mxu0 0.0
    %1920 = vmatpush1.msra.mxu0 0.0
    %1921 = vmatprep.subr.mxu0 0.0
    %1922 = vmatpush1.msra.mxu0 0.0
    %1923 = vmatprep.subr.mxu0 0.0
    %1924 = vmatpush1.msra.mxu0 0.0
    %1925 = vmatprep.subr.mxu0 0.0
    %1926 = vmatpush1.msra.mxu0 0.0
    %1927 = vmatprep.subr.mxu0 0.0
    %1928 = vmatpush1.msra.mxu0 0.0
    %1929 = vmatprep.subr.mxu0 0.0
    %1930 = vmatpush1.msra.mxu0 0.0
    %1931 = vmatprep.subr.mxu0 0.0
    %1932 = vmatpush1.msra.mxu0 0.0
    %1933 = vmatprep.subr.mxu0 0.0
    %1934 = vmatpush1.msra.mxu0 0.0
    %1935 = vmatprep.subr.mxu0 0.0
    %1936 = vmatpush1.msra.mxu0 0.0
    %1937 = vmatprep.mubr.f32.mxu0 0.0
    %1938 = vmatmul.mubr.f32.gmra.mrb[0].mxu0 %v1871
    %v1939 = vpop.f32.mrb[0].mxu0
    %v1940 = vadd.f32 0.0, %v1939
    %v1941 = vpop.f32.mrb[0].mxu0
    %1942 = vdwg.mxu0
    %v1944 = vsel %vm437, %v1869, 0
    %1946 = vmatprep.subr.mxu0 0.0
    %1947 = vmatpush1.msra.mxu0 %v1691
    %1948 = vmatprep.subr.mxu0 0.0
    %1949 = vmatpush1.msra.mxu0 0.0
    %1950 = vmatprep.subr.mxu0 0.0
    %1951 = vmatpush1.msra.mxu0 0.0
    %1952 = vmatprep.subr.mxu0 0.0
    %1953 = vmatpush1.msra.mxu0 0.0
    %1954 = vmatprep.subr.mxu0 0.0
    %1955 = vmatpush1.msra.mxu0 0.0
    %1956 = vmatprep.subr.mxu0 0.0
    %1957 = vmatpush1.msra.mxu0 0.0
    %1958 = vmatprep.subr.mxu0 0.0
    %1959 = vmatpush1.msra.mxu0 0.0
    %1960 = vmatprep.subr.mxu0 0.0
    %1961 = vmatpush1.msra.mxu0 0.0
    %1962 = vmatprep.subr.mxu0 0.0
    %1963 = vmatpush1.msra.mxu0 0.0
    %1964 = vmatprep.subr.mxu0 0.0
    %1965 = vmatpush1.msra.mxu0 0.0
    %1966 = vmatprep.subr.mxu0 0.0
    %1967 = vmatpush1.msra.mxu0 0.0
    %1968 = vmatprep.subr.mxu0 0.0
    %1969 = vmatpush1.msra.mxu0 0.0
    %1970 = vmatprep.subr.mxu0 0.0
    %1971 = vmatpush1.msra.mxu0 0.0
    %1972 = vmatprep.subr.mxu0 0.0
    %1973 = vmatpush1.msra.mxu0 0.0
    %1974 = vmatprep.subr.mxu0 0.0
    %1975 = vmatpush1.msra.mxu0 0.0
    %1976 = vmatprep.subr.mxu0 0.0
    %1977 = vmatpush1.msra.mxu0 0.0
    %1978 = vmatprep.subr.mxu0 0.0
    %1979 = vmatpush1.msra.mxu0 0.0
    %1980 = vmatprep.subr.mxu0 0.0
    %1981 = vmatpush1.msra.mxu0 0.0
    %1982 = vmatprep.subr.mxu0 0.0
    %1983 = vmatpush1.msra.mxu0 0.0
    %1984 = vmatprep.subr.mxu0 0.0
    %1985 = vmatpush1.msra.mxu0 0.0
    %1986 = vmatprep.subr.mxu0 0.0
    %1987 = vmatpush1.msra.mxu0 0.0
    %1988 = vmatprep.subr.mxu0 0.0
    %1989 = vmatpush1.msra.mxu0 0.0
    %1990 = vmatprep.subr.mxu0 0.0
    %1991 = vmatpush1.msra.mxu0 0.0
    %1992 = vmatprep.subr.mxu0 0.0
    %1993 = vmatpush1.msra.mxu0 0.0
    %1994 = vmatprep.subr.mxu0 0.0
    %1995 = vmatpush1.msra.mxu0 0.0
    %1996 = vmatprep.subr.mxu0 0.0
    %1997 = vmatpush1.msra.mxu0 0.0
    %1998 = vmatprep.subr.mxu0 0.0
    %1999 = vmatpush1.msra.mxu0 0.0
    %2000 = vmatprep.subr.mxu0 0.0
    %2001 = vmatpush1.msra.mxu0 0.0
    %2002 = vmatprep.subr.mxu0 0.0
    %2003 = vmatpush1.msra.mxu0 0.0
    %2004 = vmatprep.subr.mxu0 0.0
    %2005 = vmatpush1.msra.mxu0 0.0
    %2006 = vmatprep.subr.mxu0 0.0
    %2007 = vmatpush1.msra.mxu0 0.0
    %2008 = vmatprep.subr.mxu0 0.0
    %2009 = vmatpush1.msra.mxu0 0.0
    %2010 = vmatprep.mubr.f32.mxu0 0.0
    %2011 = vmatmul.mubr.f32.gmra.mrb[0].mxu0 %v1944
    %v2012 = vpop.f32.mrb[0].mxu0
    %v2013 = vadd.f32 0.0, %v2012
    %v2014 = vpop.f32.mrb[0].mxu0
    %2015 = vdwg.mxu0
    %v2017 = vsel %vm437, %v1940, 0
    %v2020 = vsel %vm437, %v2013, 0
    %2022 = vmatprep.subr.mxu0 0.0
    %2023 = vmatpush1.msra.mxu0 %v198
    %2024 = vmatprep.subr.mxu0 0.0
    %2025 = vmatpush1.msra.mxu0 0.0
    %2026 = vmatprep.subr.mxu0 0.0
    %2027 = vmatpush1.msra.mxu0 0.0
    %2028 = vmatprep.subr.mxu0 0.0
    %2029 = vmatpush1.msra.mxu0 0.0
    %2030 = vmatprep.subr.mxu0 0.0
    %2031 = vmatpush1.msra.mxu0 0.0
    %2032 = vmatprep.subr.mxu0 0.0
    %2033 = vmatpush1.msra.mxu0 0.0
    %2034 = vmatprep.subr.mxu0 0.0
    %2035 = vmatpush1.msra.mxu0 0.0
    %2036 = vmatprep.subr.mxu0 0.0
    %2037 = vmatpush1.msra.mxu0 0.0
    %2038 = vmatprep.subr.mxu0 0.0
    %2039 = vmatpush1.msra.mxu0 0.0
    %2040 = vmatprep.subr.mxu0 0.0
    %2041 = vmatpush1.msra.mxu0 0.0
    %2042 = vmatprep.subr.mxu0 0.0
    %2043 = vmatpush1.msra.mxu0 0.0
    %2044 = vmatprep.subr.mxu0 0.0
    %2045 = vmatpush1.msra.mxu0 0.0
    %2046 = vmatprep.subr.mxu0 0.0
    %2047 = vmatpush1.msra.mxu0 0.0
    %2048 = vmatprep.subr.mxu0 0.0
    %2049 = vmatpush1.msra.mxu0 0.0
    %2050 = vmatprep.subr.mxu0 0.0
    %2051 = vmatpush1.msra.mxu0 0.0
    %2052 = vmatprep.subr.mxu0 0.0
    %2053 = vmatpush1.msra.mxu0 0.0
    %2054 = vmatprep.subr.mxu0 0.0
    %2055 = vmatpush1.msra.mxu0 0.0
    %2056 = vmatprep.subr.mxu0 0.0
    %2057 = vmatpush1.msra.mxu0 0.0
    %2058 = vmatprep.subr.mxu0 0.0
    %2059 = vmatpush1.msra.mxu0 0.0
    %2060 = vmatprep.subr.mxu0 0.0
    %2061 = vmatpush1.msra.mxu0 0.0
    %2062 = vmatprep.subr.mxu0 0.0
    %2063 = vmatpush1.msra.mxu0 0.0
    %2064 = vmatprep.subr.mxu0 0.0
    %2065 = vmatpush1.msra.mxu0 0.0
    %2066 = vmatprep.subr.mxu0 0.0
    %2067 = vmatpush1.msra.mxu0 0.0
    %2068 = vmatprep.subr.mxu0 0.0
    %2069 = vmatpush1.msra.mxu0 0.0
    %2070 = vmatprep.subr.mxu0 0.0
    %2071 = vmatpush1.msra.mxu0 0.0
    %2072 = vmatprep.subr.mxu0 0.0
    %2073 = vmatpush1.msra.mxu0 0.0
    %2074 = vmatprep.subr.mxu0 0.0
    %2075 = vmatpush1.msra.mxu0 0.0
    %2076 = vmatprep.subr.mxu0 0.0
    %2077 = vmatpush1.msra.mxu0 0.0
    %2078 = vmatprep.subr.mxu0 0.0
    %2079 = vmatpush1.msra.mxu0 0.0
    %2080 = vmatprep.subr.mxu0 0.0
    %2081 = vmatpush1.msra.mxu0 0.0
    %2082 = vmatprep.subr.mxu0 0.0
    %2083 = vmatpush1.msra.mxu0 0.0
    %2084 = vmatprep.subr.mxu0 0.0
    %2085 = vmatpush1.msra.mxu0 0.0
    %2086 = vmatprep.mubr.f32.mxu0 0.0
    %2087 = vmatmul.mubr.f32.gmra.mrb[0].mxu0 %v2017
    %v2088 = vpop.f32.mrb[0].mxu0
    %v2089 = vadd.f32 0.0, %v2088
    %v2090 = vpop.f32.mrb[0].mxu0
    %2091 = vmatprep.mubr.f32.mxu0 0.0
    %2092 = vmatmul.mubr.f32.gmra.mrb[0].mxu0 %v2020
    %v2093 = vpop.f32.mrb[0].mxu0
    %v2094 = vadd.f32 0.0, %v2093
    %v2095 = vpop.f32.mrb[0].mxu0
    %2096 = vdwg.mxu0
    %v2097 = vadd.f32 %v1461, %v2089
    %v2098 = vadd.f32 %v1466, %v2094
    %2099 = vmatprep.subr.mxu0 0.0
    %2100 = vmatpush1.msra.mxu0 %v160
    %2101 = vmatprep.subr.mxu0 0.0
    %2102 = vmatpush1.msra.mxu0 %v161
    %2103 = vmatprep.subr.mxu0 0.0
    %2104 = vmatpush1.msra.mxu0 %v162
    %2105 = vmatprep.subr.mxu0 0.0
    %2106 = vmatpush1.msra.mxu0 %v163
    %2107 = vmatprep.subr.mxu0 0.0
    %2108 = vmatpush1.msra.mxu0 0.0
    %2109 = vmatprep.subr.mxu0 0.0
    %2110 = vmatpush1.msra.mxu0 0.0
    %2111 = vmatprep.subr.mxu0 0.0
    %2112 = vmatpush1.msra.mxu0 0.0
    %2113 = vmatprep.subr.mxu0 0.0
    %2114 = vmatpush1.msra.mxu0 0.0
    %2115 = vmatprep.subr.mxu0 0.0
    %2116 = vmatpush1.msra.mxu0 0.0
    %2117 = vmatprep.subr.mxu0 0.0
    %2118 = vmatpush1.msra.mxu0 0.0
    %2119 = vmatprep.subr.mxu0 0.0
    %2120 = vmatpush1.msra.mxu0 0.0
    %2121 = vmatprep.subr.mxu0 0.0
    %2122 = vmatpush1.msra.mxu0 0.0
    %2123 = vmatprep.subr.mxu0 0.0
    %2124 = vmatpush1.msra.mxu0 0.0
    %2125 = vmatprep.subr.mxu0 0.0
    %2126 = vmatpush1.msra.mxu0 0.0
    %2127 = vmatprep.subr.mxu0 0.0
    %2128 = vmatpush1.msra.mxu0 0.0
    %2129 = vmatprep.subr.mxu0 0.0
    %2130 = vmatpush1.msra.mxu0 0.0
    %2131 = vmatprep.subr.mxu0 0.0
    %2132 = vmatpush1.msra.mxu0 0.0
    %2133 = vmatprep.subr.mxu0 0.0
    %2134 = vmatpush1.msra.mxu0 0.0
    %2135 = vmatprep.subr.mxu0 0.0
    %2136 = vmatpush1.msra.mxu0 0.0
    %2137 = vmatprep.subr.mxu0 0.0
    %2138 = vmatpush1.msra.mxu0 0.0
    %2139 = vmatprep.subr.mxu0 0.0
    %2140 = vmatpush1.msra.mxu0 0.0
    %2141 = vmatprep.subr.mxu0 0.0
    %2142 = vmatpush1.msra.mxu0 0.0
    %2143 = vmatprep.subr.mxu0 0.0
    %2144 = vmatpush1.msra.mxu0 0.0
    %2145 = vmatprep.subr.mxu0 0.0
    %2146 = vmatpush1.msra.mxu0 0.0
    %2147 = vmatprep.subr.mxu0 0.0
    %2148 = vmatpush1.msra.mxu0 0.0
    %2149 = vmatprep.subr.mxu0 0.0
    %2150 = vmatpush1.msra.mxu0 0.0
    %2151 = vmatprep.subr.mxu0 0.0
    %2152 = vmatpush1.msra.mxu0 0.0
    %2153 = vmatprep.subr.mxu0 0.0
    %2154 = vmatpush1.msra.mxu0 0.0
    %2155 = vmatprep.subr.mxu0 0.0
    %2156 = vmatpush1.msra.mxu0 0.0
    %2157 = vmatprep.subr.mxu0 0.0
    %2158 = vmatpush1.msra.mxu0 0.0
    %2159 = vmatprep.subr.mxu0 0.0
    %2160 = vmatpush1.msra.mxu0 0.0
    %2161 = vmatprep.subr.mxu0 0.0
    %2162 = vmatpush1.msra.mxu0 0.0
    %2163 = vmatprep.mubr.f32.mxu0 0.0
    %2164 = vmatmul.mubr.f32.gmra.mrb[0].mxu0 %v201
    %v2165 = vpop.f32.mrb[0].mxu0
    %v2166 = vadd.f32 0.0, %v2165
    %v2167 = vpop.f32.mrb[0].mxu0
    %2168 = vmatprep.mubr.f32.mxu0 0.0
    %2169 = vmatmul.mubr.f32.gmra.mrb[0].mxu0 %v204
    %v2170 = vpop.f32.mrb[0].mxu0
    %v2171 = vadd.f32 0.0, %v2170
    %v2172 = vpop.f32.mrb[0].mxu0
    %2173 = vdwg.mxu0
    %2174 = vmatprep.subr.mxu0 0.0
    %2175 = vmatpush1.msra.mxu0 %v176
    %2176 = vmatprep.subr.mxu0 0.0
    %2177 = vmatpush1.msra.mxu0 %v177
    %2178 = vmatprep.subr.mxu0 0.0
    %2179 = vmatpush1.msra.mxu0 %v178
    %2180 = vmatprep.subr.mxu0 0.0
    %2181 = vmatpush1.msra.mxu0 %v179
    %2182 = vmatprep.subr.mxu0 0.0
    %2183 = vmatpush1.msra.mxu0 0.0
    %2184 = vmatprep.subr.mxu0 0.0
    %2185 = vmatpush1.msra.mxu0 0.0
    %2186 = vmatprep.subr.mxu0 0.0
    %2187 = vmatpush1.msra.mxu0 0.0
    %2188 = vmatprep.subr.mxu0 0.0
    %2189 = vmatpush1.msra.mxu0 0.0
    %2190 = vmatprep.subr.mxu0 0.0
    %2191 = vmatpush1.msra.mxu0 0.0
    %2192 = vmatprep.subr.mxu0 0.0
    %2193 = vmatpush1.msra.mxu0 0.0
    %2194 = vmatprep.subr.mxu0 0.0
    %2195 = vmatpush1.msra.mxu0 0.0
    %2196 = vmatprep.subr.mxu0 0.0
    %2197 = vmatpush1.msra.mxu0 0.0
    %2198 = vmatprep.subr.mxu0 0.0
    %2199 = vmatpush1.msra.mxu0 0.0
    %2200 = vmatprep.subr.mxu0 0.0
    %2201 = vmatpush1.msra.mxu0 0.0
    %2202 = vmatprep.subr.mxu0 0.0
    %2203 = vmatpush1.msra.mxu0 0.0
    %2204 = vmatprep.subr.mxu0 0.0
    %2205 = vmatpush1.msra.mxu0 0.0
    %2206 = vmatprep.subr.mxu0 0.0
    %2207 = vmatpush1.msra.mxu0 0.0
    %2208 = vmatprep.subr.mxu0 0.0
    %2209 = vmatpush1.msra.mxu0 0.0
    %2210 = vmatprep.subr.mxu0 0.0
    %2211 = vmatpush1.msra.mxu0 0.0
    %2212 = vmatprep.subr.mxu0 0.0
    %2213 = vmatpush1.msra.mxu0 0.0
    %2214 = vmatprep.subr.mxu0 0.0
    %2215 = vmatpush1.msra.mxu0 0.0
    %2216 = vmatprep.subr.mxu0 0.0
    %2217 = vmatpush1.msra.mxu0 0.0
    %2218 = vmatprep.subr.mxu0 0.0
    %2219 = vmatpush1.msra.mxu0 0.0
    %2220 = vmatprep.subr.mxu0 0.0
    %2221 = vmatpush1.msra.mxu0 0.0
    %2222 = vmatprep.subr.mxu0 0.0
    %2223 = vmatpush1.msra.mxu0 0.0
    %2224 = vmatprep.subr.mxu0 0.0
    %2225 = vmatpush1.msra.mxu0 0.0
    %2226 = vmatprep.subr.mxu0 0.0
    %2227 = vmatpush1.msra.mxu0 0.0
    %2228 = vmatprep.subr.mxu0 0.0
    %2229 = vmatpush1.msra.mxu0 0.0
    %2230 = vmatprep.subr.mxu0 0.0
    %2231 = vmatpush1.msra.mxu0 0.0
    %2232 = vmatprep.subr.mxu0 0.0
    %2233 = vmatpush1.msra.mxu0 0.0
    %2234 = vmatprep.subr.mxu0 0.0
    %2235 = vmatpush1.msra.mxu0 0.0
    %2236 = vmatprep.subr.mxu0 0.0
    %2237 = vmatpush1.msra.mxu0 0.0
    %2238 = vmatprep.mubr.f32.mxu0 0.0
    %2239 = vmatmul.mubr.f32.gmra.mrb[0].mxu0 %v282
    %v2240 = vpop.f32.mrb[0].mxu0
    %v2241 = vadd.f32 0.0, %v2240
    %v2242 = vpop.f32.mrb[0].mxu0
    %2243 = vmatprep.mubr.f32.mxu0 0.0
    %2244 = vmatmul.mubr.f32.gmra.mrb[0].mxu0 %v285
    %v2245 = vpop.f32.mrb[0].mxu0
    %v2246 = vadd.f32 0.0, %v2245
    %v2247 = vpop.f32.mrb[0].mxu0
    %2248 = vdwg.mxu0
    %2249 = vmatprep.subr.mxu0 0.0
    %2250 = vmatpush1.msra.mxu0 %v192
    %2251 = vmatprep.subr.mxu0 0.0
    %2252 = vmatpush1.msra.mxu0 %v193
    %2253 = vmatprep.subr.mxu0 0.0
    %2254 = vmatpush1.msra.mxu0 %v194
    %2255 = vmatprep.subr.mxu0 0.0
    %2256 = vmatpush1.msra.mxu0 %v195
    %2257 = vmatprep.subr.mxu0 0.0
    %2258 = vmatpush1.msra.mxu0 0.0
    %2259 = vmatprep.subr.mxu0 0.0
    %2260 = vmatpush1.msra.mxu0 0.0
    %2261 = vmatprep.subr.mxu0 0.0
    %2262 = vmatpush1.msra.mxu0 0.0
    %2263 = vmatprep.subr.mxu0 0.0
    %2264 = vmatpush1.msra.mxu0 0.0
    %2265 = vmatprep.subr.mxu0 0.0
    %2266 = vmatpush1.msra.mxu0 0.0
    %2267 = vmatprep.subr.mxu0 0.0
    %2268 = vmatpush1.msra.mxu0 0.0
    %2269 = vmatprep.subr.mxu0 0.0
    %2270 = vmatpush1.msra.mxu0 0.0
    %2271 = vmatprep.subr.mxu0 0.0
    %2272 = vmatpush1.msra.mxu0 0.0
    %2273 = vmatprep.subr.mxu0 0.0
    %2274 = vmatpush1.msra.mxu0 0.0
    %2275 = vmatprep.subr.mxu0 0.0
    %2276 = vmatpush1.msra.mxu0 0.0
    %2277 = vmatprep.subr.mxu0 0.0
    %2278 = vmatpush1.msra.mxu0 0.0
    %2279 = vmatprep.subr.mxu0 0.0
    %2280 = vmatpush1.msra.mxu0 0.0
    %2281 = vmatprep.subr.mxu0 0.0
    %2282 = vmatpush1.msra.mxu0 0.0
    %2283 = vmatprep.subr.mxu0 0.0
    %2284 = vmatpush1.msra.mxu0 0.0
    %2285 = vmatprep.subr.mxu0 0.0
    %2286 = vmatpush1.msra.mxu0 0.0
    %2287 = vmatprep.subr.mxu0 0.0
    %2288 = vmatpush1.msra.mxu0 0.0
    %2289 = vmatprep.subr.mxu0 0.0
    %2290 = vmatpush1.msra.mxu0 0.0
    %2291 = vmatprep.subr.mxu0 0.0
    %2292 = vmatpush1.msra.mxu0 0.0
    %2293 = vmatprep.subr.mxu0 0.0
    %2294 = vmatpush1.msra.mxu0 0.0
    %2295 = vmatprep.subr.mxu0 0.0
    %2296 = vmatpush1.msra.mxu0 0.0
    %2297 = vmatprep.subr.mxu0 0.0
    %2298 = vmatpush1.msra.mxu0 0.0
    %2299 = vmatprep.subr.mxu0 0.0
    %2300 = vmatpush1.msra.mxu0 0.0
    %2301 = vmatprep.subr.mxu0 0.0
    %2302 = vmatpush1.msra.mxu0 0.0
    %2303 = vmatprep.subr.mxu0 0.0
    %2304 = vmatpush1.msra.mxu0 0.0
    %2305 = vmatprep.subr.mxu0 0.0
    %2306 = vmatpush1.msra.mxu0 0.0
    %2307 = vmatprep.subr.mxu0 0.0
    %2308 = vmatpush1.msra.mxu0 0.0
    %2309 = vmatprep.subr.mxu0 0.0
    %2310 = vmatpush1.msra.mxu0 0.0
    %2311 = vmatprep.subr.mxu0 0.0
    %2312 = vmatpush1.msra.mxu0 0.0
    %2313 = vmatprep.mubr.f32.mxu0 0.0
    %2314 = vmatmul.mubr.f32.gmra.mrb[0].mxu0 %v282
    %v2315 = vpop.f32.mrb[0].mxu0
    %v2316 = vadd.f32 0.0, %v2315
    %v2317 = vpop.f32.mrb[0].mxu0
    %2318 = vmatprep.mubr.f32.mxu0 0.0
    %2319 = vmatmul.mubr.f32.gmra.mrb[0].mxu0 %v285
    %v2320 = vpop.f32.mrb[0].mxu0
    %v2321 = vadd.f32 0.0, %v2320
    %v2322 = vpop.f32.mrb[0].mxu0
    %2323 = vdwg.mxu0
    %v2325 = vsel %vm437, %v2166, 0
    %v2328 = vsel %vm437, %v2241, 0
    %2330 = vmatprep.subr.mxu0 0.0
    %2331 = vmatpush1.xpose.msra.mxu0 %v2328
    %2332 = vmatprep.subr.mxu0 0.0
    %2333 = vmatpush1.xpose.msra.mxu0 0.0
    %2334 = vmatprep.subr.mxu0 0.0
    %2335 = vmatpush1.xpose.msra.mxu0 0.0
    %2336 = vmatprep.subr.mxu0 0.0
    %2337 = vmatpush1.xpose.msra.mxu0 0.0
    %2338 = vmatprep.subr.mxu0 0.0
    %2339 = vmatpush1.xpose.msra.mxu0 0.0
    %2340 = vmatprep.subr.mxu0 0.0
    %2341 = vmatpush1.xpose.msra.mxu0 0.0
    %2342 = vmatprep.subr.mxu0 0.0
    %2343 = vmatpush1.xpose.msra.mxu0 0.0
    %2344 = vmatprep.subr.mxu0 0.0
    %2345 = vmatpush1.xpose.msra.mxu0 0.0
    %2346 = vmatprep.subr.mxu0 0.0
    %2347 = vmatpush1.xpose.msra.mxu0 0.0
    %2348 = vmatprep.subr.mxu0 0.0
    %2349 = vmatpush1.xpose.msra.mxu0 0.0
    %2350 = vmatprep.subr.mxu0 0.0
    %2351 = vmatpush1.xpose.msra.mxu0 0.0
    %2352 = vmatprep.subr.mxu0 0.0
    %2353 = vmatpush1.xpose.msra.mxu0 0.0
    %2354 = vmatprep.subr.mxu0 0.0
    %2355 = vmatpush1.xpose.msra.mxu0 0.0
    %2356 = vmatprep.subr.mxu0 0.0
    %2357 = vmatpush1.xpose.msra.mxu0 0.0
    %2358 = vmatprep.subr.mxu0 0.0
    %2359 = vmatpush1.xpose.msra.mxu0 0.0
    %2360 = vmatprep.subr.mxu0 0.0
    %2361 = vmatpush1.xpose.msra.mxu0 0.0
    %2362 = vmatprep.subr.mxu0 0.0
    %2363 = vmatpush1.xpose.msra.mxu0 0.0
    %2364 = vmatprep.subr.mxu0 0.0
    %2365 = vmatpush1.xpose.msra.mxu0 0.0
    %2366 = vmatprep.subr.mxu0 0.0
    %2367 = vmatpush1.xpose.msra.mxu0 0.0
    %2368 = vmatprep.subr.mxu0 0.0
    %2369 = vmatpush1.xpose.msra.mxu0 0.0
    %2370 = vmatprep.subr.mxu0 0.0
    %2371 = vmatpush1.xpose.msra.mxu0 0.0
    %2372 = vmatprep.subr.mxu0 0.0
    %2373 = vmatpush1.xpose.msra.mxu0 0.0
    %2374 = vmatprep.subr.mxu0 0.0
    %2375 = vmatpush1.xpose.msra.mxu0 0.0
    %2376 = vmatprep.subr.mxu0 0.0
    %2377 = vmatpush1.xpose.msra.mxu0 0.0
    %2378 = vmatprep.subr.mxu0 0.0
    %2379 = vmatpush1.xpose.msra.mxu0 0.0
    %2380 = vmatprep.subr.mxu0 0.0
    %2381 = vmatpush1.xpose.msra.mxu0 0.0
    %2382 = vmatprep.subr.mxu0 0.0
    %2383 = vmatpush1.xpose.msra.mxu0 0.0
    %2384 = vmatprep.subr.mxu0 0.0
    %2385 = vmatpush1.xpose.msra.mxu0 0.0
    %2386 = vmatprep.subr.mxu0 0.0
    %2387 = vmatpush1.xpose.msra.mxu0 0.0
    %2388 = vmatprep.subr.mxu0 0.0
    %2389 = vmatpush1.xpose.msra.mxu0 0.0
    %2390 = vmatprep.subr.mxu0 0.0
    %2391 = vmatpush1.xpose.msra.mxu0 0.0
    %2392 = vmatprep.subr.mxu0 0.0
    %2393 = vmatpush1.xpose.msra.mxu0 0.0
    %2394 = vmatprep.mubr.f32.mxu0 0.0
    %2395 = vmatmul.mubr.f32.gmra.mrb[0].mxu0 %v2325
    %v2396 = vpop.f32.mrb[0].mxu0
    %v2397 = vadd.f32 0.0, %v2396
    %v2398 = vpop.f32.mrb[0].mxu0
    %2399 = vdwg.mxu0
    %v2401 = vsel %vm437, %v2171, 0
    %v2404 = vsel %vm437, %v2246, 0
    %2406 = vmatprep.subr.mxu0 0.0
    %2407 = vmatpush1.xpose.msra.mxu0 %v2404
    %2408 = vmatprep.subr.mxu0 0.0
    %2409 = vmatpush1.xpose.msra.mxu0 0.0
    %2410 = vmatprep.subr.mxu0 0.0
    %2411 = vmatpush1.xpose.msra.mxu0 0.0
    %2412 = vmatprep.subr.mxu0 0.0
    %2413 = vmatpush1.xpose.msra.mxu0 0.0
    %2414 = vmatprep.subr.mxu0 0.0
    %2415 = vmatpush1.xpose.msra.mxu0 0.0
    %2416 = vmatprep.subr.mxu0 0.0
    %2417 = vmatpush1.xpose.msra.mxu0 0.0
    %2418 = vmatprep.subr.mxu0 0.0
    %2419 = vmatpush1.xpose.msra.mxu0 0.0
    %2420 = vmatprep.subr.mxu0 0.0
    %2421 = vmatpush1.xpose.msra.mxu0 0.0
    %2422 = vmatprep.subr.mxu0 0.0
    %2423 = vmatpush1.xpose.msra.mxu0 0.0
    %2424 = vmatprep.subr.mxu0 0.0
    %2425 = vmatpush1.xpose.msra.mxu0 0.0
    %2426 = vmatprep.subr.mxu0 0.0
    %2427 = vmatpush1.xpose.msra.mxu0 0.0
    %2428 = vmatprep.subr.mxu0 0.0
    %2429 = vmatpush1.xpose.msra.mxu0 0.0
    %2430 = vmatprep.subr.mxu0 0.0
    %2431 = vmatpush1.xpose.msra.mxu0 0.0
    %2432 = vmatprep.subr.mxu0 0.0
    %2433 = vmatpush1.xpose.msra.mxu0 0.0
    %2434 = vmatprep.subr.mxu0 0.0
    %2435 = vmatpush1.xpose.msra.mxu0 0.0
    %2436 = vmatprep.subr.mxu0 0.0
    %2437 = vmatpush1.xpose.msra.mxu0 0.0
    %2438 = vmatprep.subr.mxu0 0.0
    %2439 = vmatpush1.xpose.msra.mxu0 0.0
    %2440 = vmatprep.subr.mxu0 0.0
    %2441 = vmatpush1.xpose.msra.mxu0 0.0
    %2442 = vmatprep.subr.mxu0 0.0
    %2443 = vmatpush1.xpose.msra.mxu0 0.0
    %2444 = vmatprep.subr.mxu0 0.0
    %2445 = vmatpush1.xpose.msra.mxu0 0.0
    %2446 = vmatprep.subr.mxu0 0.0
    %2447 = vmatpush1.xpose.msra.mxu0 0.0
    %2448 = vmatprep.subr.mxu0 0.0
    %2449 = vmatpush1.xpose.msra.mxu0 0.0
    %2450 = vmatprep.subr.mxu0 0.0
    %2451 = vmatpush1.xpose.msra.mxu0 0.0
    %2452 = vmatprep.subr.mxu0 0.0
    %2453 = vmatpush1.xpose.msra.mxu0 0.0
    %2454 = vmatprep.subr.mxu0 0.0
    %2455 = vmatpush1.xpose.msra.mxu0 0.0
    %2456 = vmatprep.subr.mxu0 0.0
    %2457 = vmatpush1.xpose.msra.mxu0 0.0
    %2458 = vmatprep.subr.mxu0 0.0
    %2459 = vmatpush1.xpose.msra.mxu0 0.0
    %2460 = vmatprep.subr.mxu0 0.0
    %2461 = vmatpush1.xpose.msra.mxu0 0.0
    %2462 = vmatprep.subr.mxu0 0.0
    %2463 = vmatpush1.xpose.msra.mxu0 0.0
    %2464 = vmatprep.subr.mxu0 0.0
    %2465 = vmatpush1.xpose.msra.mxu0 0.0
    %2466 = vmatprep.subr.mxu0 0.0
    %2467 = vmatpush1.xpose.msra.mxu0 0.0
    %2468 = vmatprep.subr.mxu0 0.0
    %2469 = vmatpush1.xpose.msra.mxu0 0.0
    %2470 = vmatprep.mubr.f32.mxu0 0.0
    %2471 = vmatmul.mubr.f32.gmra.mrb[0].mxu0 %v2401
    %v2472 = vpop.f32.mrb[0].mxu0
    %v2473 = vadd.f32 0.0, %v2472
    %v2474 = vpop.f32.mrb[0].mxu0
    %2475 = vdwg.mxu0
    %v2476 = vmul.f32 %v2397, 0.35355338
    %v2477 = vmul.f32 %v2473, 0.35355338
    %v2478 = vsel %vm437, %v2476, -inf
    %2479 = vmax.xlane.f32.xlu0 %v2478
    %v2480 = vpop.xlane.xlu0 %2479
    %v2481 = vsel %vm437, %v2477, -inf
    %2482 = vmax.xlane.f32.xlu0 %v2481
    %v2483 = vpop.xlane.xlu0 %2482
    %v2484 = vsub.f32 %v2476, %v2480
    %v2485 = vsub.f32 %v2477, %v2483
    %v2486 = vmul.f32 %v2484, 1.442695
    %v2487 = vpow.pop %v2486
    %v2488 = vmul.f32 %v2485, 1.442695
    %v2489 = vpow.pop %v2488
    %v2490 = vsel %vm437, %v2487, 0.0
    %2491 = vadd.xlane.f32.xlu0 %v2490
    %v2492 = vpop.xlane.xlu0 %2491
    %v2493 = vsel %vm437, %v2489, 0.0
    %2494 = vadd.xlane.f32.xlu0 %v2493
    %v2495 = vpop.xlane.xlu0 %2494
    %v2496 = vrcp.pop %v2492
    %v2497 = vrcp.pop %v2495
    %v2498 = vmul.f32 %v2487, %v2496
    %v2499 = vmul.f32 %v2489, %v2497
    %v2501 = vsel %vm437, %v2498, 0
    %2503 = vmatprep.subr.mxu0 0.0
    %2504 = vmatpush1.msra.mxu0 %v2316
    %2505 = vmatprep.subr.mxu0 0.0
    %2506 = vmatpush1.msra.mxu0 0.0
    %2507 = vmatprep.subr.mxu0 0.0
    %2508 = vmatpush1.msra.mxu0 0.0
    %2509 = vmatprep.subr.mxu0 0.0
    %2510 = vmatpush1.msra.mxu0 0.0
    %2511 = vmatprep.subr.mxu0 0.0
    %2512 = vmatpush1.msra.mxu0 0.0
    %2513 = vmatprep.subr.mxu0 0.0
    %2514 = vmatpush1.msra.mxu0 0.0
    %2515 = vmatprep.subr.mxu0 0.0
    %2516 = vmatpush1.msra.mxu0 0.0
    %2517 = vmatprep.subr.mxu0 0.0
    %2518 = vmatpush1.msra.mxu0 0.0
    %2519 = vmatprep.subr.mxu0 0.0
    %2520 = vmatpush1.msra.mxu0 0.0
    %2521 = vmatprep.subr.mxu0 0.0
    %2522 = vmatpush1.msra.mxu0 0.0
    %2523 = vmatprep.subr.mxu0 0.0
    %2524 = vmatpush1.msra.mxu0 0.0
    %2525 = vmatprep.subr.mxu0 0.0
    %2526 = vmatpush1.msra.mxu0 0.0
    %2527 = vmatprep.subr.mxu0 0.0
    %2528 = vmatpush1.msra.mxu0 0.0
    %2529 = vmatprep.subr.mxu0 0.0
    %2530 = vmatpush1.msra.mxu0 0.0
    %2531 = vmatprep.subr.mxu0 0.0
    %2532 = vmatpush1.msra.mxu0 0.0
    %2533 = vmatprep.subr.mxu0 0.0
    %2534 = vmatpush1.msra.mxu0 0.0
    %2535 = vmatprep.subr.mxu0 0.0
    %2536 = vmatpush1.msra.mxu0 0.0
    %2537 = vmatprep.subr.mxu0 0.0
    %2538 = vmatpush1.msra.mxu0 0.0
    %2539 = vmatprep.subr.mxu0 0.0
    %2540 = vmatpush1.msra.mxu0 0.0
    %2541 = vmatprep.subr.mxu0 0.0
    %2542 = vmatpush1.msra.mxu0 0.0
    %2543 = vmatprep.subr.mxu0 0.0
    %2544 = vmatpush1.msra.mxu0 0.0
    %2545 = vmatprep.subr.mxu0 0.0
    %2546 = vmatpush1.msra.mxu0 0.0
    %2547 = vmatprep.subr.mxu0 0.0
    %2548 = vmatpush1.msra.mxu0 0.0
    %2549 = vmatprep.subr.mxu0 0.0
    %2550 = vmatpush1.msra.mxu0 0.0
    %2551 = vmatprep.subr.mxu0 0.0
    %2552 = vmatpush1.msra.mxu0 0.0
    %2553 = vmatprep.subr.mxu0 0.0
    %2554 = vmatpush1.msra.mxu0 0.0
    %2555 = vmatprep.subr.mxu0 0.0
    %2556 = vmatpush1.msra.mxu0 0.0
    %2557 = vmatprep.subr.mxu0 0.0
    %2558 = vmatpush1.msra.mxu0 0.0
    %2559 = vmatprep.subr.mxu0 0.0
    %2560 = vmatpush1.msra.mxu0 0.0
    %2561 = vmatprep.subr.mxu0 0.0
    %2562 = vmatpush1.msra.mxu0 0.0
    %2563 = vmatprep.subr.mxu0 0.0
    %2564 = vmatpush1.msra.mxu0 0.0
    %2565 = vmatprep.subr.mxu0 0.0
    %2566 = vmatpush1.msra.mxu0 0.0
    %2567 = vmatprep.mubr.f32.mxu0 0.0
    %2568 = vmatmul.mubr.f32.gmra.mrb[0].mxu0 %v2501
    %v2569 = vpop.f32.mrb[0].mxu0
    %v2570 = vadd.f32 0.0, %v2569
    %v2571 = vpop.f32.mrb[0].mxu0
    %2572 = vdwg.mxu0
    %v2574 = vsel %vm437, %v2499, 0
    %2576 = vmatprep.subr.mxu0 0.0
    %2577 = vmatpush1.msra.mxu0 %v2321
    %2578 = vmatprep.subr.mxu0 0.0
    %2579 = vmatpush1.msra.mxu0 0.0
    %2580 = vmatprep.subr.mxu0 0.0
    %2581 = vmatpush1.msra.mxu0 0.0
    %2582 = vmatprep.subr.mxu0 0.0
    %2583 = vmatpush1.msra.mxu0 0.0
    %2584 = vmatprep.subr.mxu0 0.0
    %2585 = vmatpush1.msra.mxu0 0.0
    %2586 = vmatprep.subr.mxu0 0.0
    %2587 = vmatpush1.msra.mxu0 0.0
    %2588 = vmatprep.subr.mxu0 0.0
    %2589 = vmatpush1.msra.mxu0 0.0
    %2590 = vmatprep.subr.mxu0 0.0
    %2591 = vmatpush1.msra.mxu0 0.0
    %2592 = vmatprep.subr.mxu0 0.0
    %2593 = vmatpush1.msra.mxu0 0.0
    %2594 = vmatprep.subr.mxu0 0.0
    %2595 = vmatpush1.msra.mxu0 0.0
    %2596 = vmatprep.subr.mxu0 0.0
    %2597 = vmatpush1.msra.mxu0 0.0
    %2598 = vmatprep.subr.mxu0 0.0
    %2599 = vmatpush1.msra.mxu0 0.0
    %2600 = vmatprep.subr.mxu0 0.0
    %2601 = vmatpush1.msra.mxu0 0.0
    %2602 = vmatprep.subr.mxu0 0.0
    %2603 = vmatpush1.msra.mxu0 0.0
    %2604 = vmatprep.subr.mxu0 0.0
    %2605 = vmatpush1.msra.mxu0 0.0
    %2606 = vmatprep.subr.mxu0 0.0
    %2607 = vmatpush1.msra.mxu0 0.0
    %2608 = vmatprep.subr.mxu0 0.0
    %2609 = vmatpush1.msra.mxu0 0.0
    %2610 = vmatprep.subr.mxu0 0.0
    %2611 = vmatpush1.msra.mxu0 0.0
    %2612 = vmatprep.subr.mxu0 0.0
    %2613 = vmatpush1.msra.mxu0 0.0
    %2614 = vmatprep.subr.mxu0 0.0
    %2615 = vmatpush1.msra.mxu0 0.0
    %2616 = vmatprep.subr.mxu0 0.0
    %2617 = vmatpush1.msra.mxu0 0.0
    %2618 = vmatprep.subr.mxu0 0.0
    %2619 = vmatpush1.msra.mxu0 0.0
    %2620 = vmatprep.subr.mxu0 0.0
    %2621 = vmatpush1.msra.mxu0 0.0
    %2622 = vmatprep.subr.mxu0 0.0
    %2623 = vmatpush1.msra.mxu0 0.0
    %2624 = vmatprep.subr.mxu0 0.0
    %2625 = vmatpush1.msra.mxu0 0.0
    %2626 = vmatprep.subr.mxu0 0.0
    %2627 = vmatpush1.msra.mxu0 0.0
    %2628 = vmatprep.subr.mxu0 0.0
    %2629 = vmatpush1.msra.mxu0 0.0
    %2630 = vmatprep.subr.mxu0 0.0
    %2631 = vmatpush1.msra.mxu0 0.0
    %2632 = vmatprep.subr.mxu0 0.0
    %2633 = vmatpush1.msra.mxu0 0.0
    %2634 = vmatprep.subr.mxu0 0.0
    %2635 = vmatpush1.msra.mxu0 0.0
    %2636 = vmatprep.subr.mxu0 0.0
    %2637 = vmatpush1.msra.mxu0 0.0
    %2638 = vmatprep.subr.mxu0 0.0
    %2639 = vmatpush1.msra.mxu0 0.0
    %2640 = vmatprep.mubr.f32.mxu0 0.0
    %2641 = vmatmul.mubr.f32.gmra.mrb[0].mxu0 %v2574
    %v2642 = vpop.f32.mrb[0].mxu0
    %v2643 = vadd.f32 0.0, %v2642
    %v2644 = vpop.f32.mrb[0].mxu0
    %2645 = vdwg.mxu0
    %v2647 = vsel %vm437, %v2570, 0
    %v2650 = vsel %vm437, %v2643, 0
    %2652 = vmatprep.subr.mxu0 0.0
    %2653 = vmatpush1.msra.mxu0 %v199
    %2654 = vmatprep.subr.mxu0 0.0
    %2655 = vmatpush1.msra.mxu0 0.0
    %2656 = vmatprep.subr.mxu0 0.0
    %2657 = vmatpush1.msra.mxu0 0.0
    %2658 = vmatprep.subr.mxu0 0.0
    %2659 = vmatpush1.msra.mxu0 0.0
    %2660 = vmatprep.subr.mxu0 0.0
    %2661 = vmatpush1.msra.mxu0 0.0
    %2662 = vmatprep.subr.mxu0 0.0
    %2663 = vmatpush1.msra.mxu0 0.0
    %2664 = vmatprep.subr.mxu0 0.0
    %2665 = vmatpush1.msra.mxu0 0.0
    %2666 = vmatprep.subr.mxu0 0.0
    %2667 = vmatpush1.msra.mxu0 0.0
    %2668 = vmatprep.subr.mxu0 0.0
    %2669 = vmatpush1.msra.mxu0 0.0
    %2670 = vmatprep.subr.mxu0 0.0
    %2671 = vmatpush1.msra.mxu0 0.0
    %2672 = vmatprep.subr.mxu0 0.0
    %2673 = vmatpush1.msra.mxu0 0.0
    %2674 = vmatprep.subr.mxu0 0.0
    %2675 = vmatpush1.msra.mxu0 0.0
    %2676 = vmatprep.subr.mxu0 0.0
    %2677 = vmatpush1.msra.mxu0 0.0
    %2678 = vmatprep.subr.mxu0 0.0
    %2679 = vmatpush1.msra.mxu0 0.0
    %2680 = vmatprep.subr.mxu0 0.0
    %2681 = vmatpush1.msra.mxu0 0.0
    %2682 = vmatprep.subr.mxu0 0.0
    %2683 = vmatpush1.msra.mxu0 0.0
    %2684 = vmatprep.subr.mxu0 0.0
    %2685 = vmatpush1.msra.mxu0 0.0
    %2686 = vmatprep.subr.mxu0 0.0
    %2687 = vmatpush1.msra.mxu0 0.0
    %2688 = vmatprep.subr.mxu0 0.0
    %2689 = vmatpush1.msra.mxu0 0.0
    %2690 = vmatprep.subr.mxu0 0.0
    %2691 = vmatpush1.msra.mxu0 0.0
    %2692 = vmatprep.subr.mxu0 0.0
    %2693 = vmatpush1.msra.mxu0 0.0
    %2694 = vmatprep.subr.mxu0 0.0
    %2695 = vmatpush1.msra.mxu0 0.0
    %2696 = vmatprep.subr.mxu0 0.0
    %2697 = vmatpush1.msra.mxu0 0.0
    %2698 = vmatprep.subr.mxu0 0.0
    %2699 = vmatpush1.msra.mxu0 0.0
    %2700 = vmatprep.subr.mxu0 0.0
    %2701 = vmatpush1.msra.mxu0 0.0
    %2702 = vmatprep.subr.mxu0 0.0
    %2703 = vmatpush1.msra.mxu0 0.0
    %2704 = vmatprep.subr.mxu0 0.0
    %2705 = vmatpush1.msra.mxu0 0.0
    %2706 = vmatprep.subr.mxu0 0.0
    %2707 = vmatpush1.msra.mxu0 0.0
    %2708 = vmatprep.subr.mxu0 0.0
    %2709 = vmatpush1.msra.mxu0 0.0
    %2710 = vmatprep.subr.mxu0 0.0
    %2711 = vmatpush1.msra.mxu0 0.0
    %2712 = vmatprep.subr.mxu0 0.0
    %2713 = vmatpush1.msra.mxu0 0.0
    %2714 = vmatprep.subr.mxu0 0.0
    %2715 = vmatpush1.msra.mxu0 0.0
    %2716 = vmatprep.mubr.f32.mxu0 0.0
    %2717 = vmatmul.mubr.f32.gmra.mrb[0].mxu0 %v2647
    %v2718 = vpop.f32.mrb[0].mxu0
    %v2719 = vadd.f32 0.0, %v2718
    %v2720 = vpop.f32.mrb[0].mxu0
    %2721 = vmatprep.mubr.f32.mxu0 0.0
    %2722 = vmatmul.mubr.f32.gmra.mrb[0].mxu0 %v2650
    %v2723 = vpop.f32.mrb[0].mxu0
    %v2724 = vadd.f32 0.0, %v2723
    %v2725 = vpop.f32.mrb[0].mxu0
    %2726 = vdwg.mxu0
    %v2727 = vadd.f32 %v2097, %v2719
    %v2728 = vadd.f32 %v2098, %v2724
    %v2729 = vadd.f32 %v78, %v2727
    %v2730 = vadd.f32 %v79, %v2728
    %v2731 = vsel %vm84, %v2729, 0.0
    %2732 = vadd.xlane.f32.xlu0 %v2731
    %v2733 = vpop.xlane.xlu0 %2732
    %v2734 = vsel %vm84, %v2730, 0.0
    %2735 = vadd.xlane.f32.xlu0 %v2734
    %v2736 = vpop.xlane.xlu0 %2735
    %v2737 = vmul.f32 %v2733, %v91
    %v2738 = vmul.f32 %v2736, %v91
    %v2739 = vsub.f32 %v2729, %v2737
    %v2740 = vsub.f32 %v2730, %v2738
    %v2741 = vmul.f32 %v2739, %v2739
    %v2742 = vmul.f32 %v2740, %v2740
    %v2743 = vsel %vm84, %v2741, 0.0
    %2744 = vadd.xlane.f32.xlu0 %v2743
    %v2745 = vpop.xlane.xlu0 %2744
    %v2746 = vsel %vm84, %v2742, 0.0
    %2747 = vadd.xlane.f32.xlu0 %v2746
    %v2748 = vpop.xlane.xlu0 %2747
    %v2749 = vmul.f32 %v2745, %v91
    %v2750 = vmul.f32 %v2748, %v91
    %v2751 = vadd.f32 %v2749, 1e-05
    %v2752 = vadd.f32 %v2750, 1e-05
    %v2753 = vrsqrt.pop %v2751
    %v2754 = vrsqrt.pop %v2752
    %v2755 = vmul.f32 %v2739, %v2753
    %v2756 = vmul.f32 %v2740, %v2754
    %v2757 = vld [vmem:[%s11] sm:$0x1]
    %v2759 = vlaneseq
    %v2760 = vshrl.u32 %v2759, 7
    %v2761 = vsub.s32 0, %v2760
    %v2762 = vrot.slane %v2757, %v2761
    %v2764 = vmul.f32 %v2755, %v2762
    %v2765 = vmul.f32 %v2756, %v2762
    %v2766 = vld [vmem:[%s12] sm:$0x1]
    %v2768 = vlaneseq
    %v2769 = vshrl.u32 %v2768, 7
    %v2770 = vsub.s32 0, %v2769
    %v2771 = vrot.slane %v2766, %v2770
    %v2773 = vadd.f32 %v2764, %v2771
    %v2774 = vadd.f32 %v2765, %v2771
    %v2775 = vsel %vm84, %v80, 0.0
    %2776 = vadd.xlane.f32.xlu0 %v2775
    %v2777 = vpop.xlane.xlu0 %2776
    %v2778 = vsel %vm84, %v81, 0.0
    %2779 = vadd.xlane.f32.xlu0 %v2778
    %v2780 = vpop.xlane.xlu0 %2779
    %v2781 = vsel %vm84, %v82, 0.0
    %2782 = vadd.xlane.f32.xlu0 %v2781
    %v2783 = vpop.xlane.xlu0 %2782
    %v2784 = vsel %vm84, %v83, 0.0
    %2785 = vadd.xlane.f32.xlu0 %v2784
    %v2786 = vpop.xlane.xlu0 %2785
    %v2787 = vmul.f32 %v2777, %v91
    %v2788 = vmul.f32 %v2780, %v91
    %v2789 = vmul.f32 %v2783, %v91
    %v2790 = vmul.f32 %v2786, %v91
    %v2791 = vsub.f32 %v80, %v2787
    %v2792 = vsub.f32 %v81, %v2788
    %v2793 = vsub.f32 %v82, %v2789
    %v2794 = vsub.f32 %v83, %v2790
    %v2795 = vmul.f32 %v2791, %v2791
    %v2796 = vmul.f32 %v2792, %v2792
    %v2797 = vmul.f32 %v2793, %v2793
    %v2798 = vmul.f32 %v2794, %v2794
    %v2799 = vsel %vm84, %v2795, 0.0
    %2800 = vadd.xlane.f32.xlu0 %v2799
    %v2801 = vpop.xlane.xlu0 %2800
    %v2802 = vsel %vm84, %v2796, 0.0
    %2803 = vadd.xlane.f32.xlu0 %v2802
    %v2804 = vpop.xlane.xlu0 %2803
    %v2805 = vsel %vm84, %v2797, 0.0
    %2806 = vadd.xlane.f32.xlu0 %v2805
    %v2807 = vpop.xlane.xlu0 %2806
    %v2808 = vsel %vm84, %v2798, 0.0
    %2809 = vadd.xlane.f32.xlu0 %v2808
    %v2810 = vpop.xlane.xlu0 %2809
    %v2811 = vmul.f32 %v2801, %v91
    %v2812 = vmul.f32 %v2804, %v91
    %v2813 = vmul.f32 %v2807, %v91
    %v2814 = vmul.f32 %v2810, %v91
    %v2815 = vadd.f32 %v2811, 1e-05
    %v2816 = vadd.f32 %v2812, 1e-05
    %v2817 = vadd.f32 %v2813, 1e-05
    %v2818 = vadd.f32 %v2814, 1e-05
    %v2819 = vrsqrt.pop %v2815
    %v2820 = vrsqrt.pop %v2816
    %v2821 = vrsqrt.pop %v2817
    %v2822 = vrsqrt.pop %v2818
    %v2823 = vmul.f32 %v2791, %v2819
    %v2824 = vmul.f32 %v2792, %v2820
    %v2825 = vmul.f32 %v2793, %v2821
    %v2826 = vmul.f32 %v2794, %v2822
    %v2827 = vld [vmem:[%s13] sm:$0x1]
    %v2829 = vlaneseq
    %v2830 = vshrl.u32 %v2829, 7
    %v2831 = vsub.s32 0, %v2830
    %v2832 = vrot.slane %v2827, %v2831
    %v2834 = vmul.f32 %v2823, %v2832
    %v2835 = vmul.f32 %v2824, %v2832
    %v2836 = vmul.f32 %v2825, %v2832
    %v2837 = vmul.f32 %v2826, %v2832
    %v2838 = vld [vmem:[%s14] sm:$0x1]
    %v2840 = vlaneseq
    %v2841 = vshrl.u32 %v2840, 7
    %v2842 = vsub.s32 0, %v2841
    %v2843 = vrot.slane %v2838, %v2842
    %v2845 = vadd.f32 %v2834, %v2843
    %v2846 = vadd.f32 %v2835, %v2843
    %v2847 = vadd.f32 %v2836, %v2843
    %v2848 = vadd.f32 %v2837, %v2843
    %v2849 = vld [vmem:[%s15] sm:$0xff]
    %v2850 = vld [vmem:[%s15 + $0x8] sm:$0xff]
    %v2851 = vld [vmem:[%s15 + $0x10] sm:$0xff]
    %v2852 = vld [vmem:[%s15 + $0x18] sm:$0xff]
    %v2853 = vld [vmem:[%s15 + $0x20] sm:$0xff]
    %v2854 = vld [vmem:[%s15 + $0x28] sm:$0xff]
    %v2855 = vld [vmem:[%s15 + $0x30] sm:$0xff]
    %v2856 = vld [vmem:[%s15 + $0x38] sm:$0xff]
    %v2857 = vld [vmem:[%s15 + $0x40] sm:$0xff]
    %v2858 = vld [vmem:[%s15 + $0x48] sm:$0xff]
    %v2859 = vld [vmem:[%s15 + $0x50] sm:$0xff]
    %v2860 = vld [vmem:[%s15 + $0x58] sm:$0xff]
    %v2861 = vld [vmem:[%s15 + $0x60] sm:$0xff]
    %v2862 = vld [vmem:[%s15 + $0x68] sm:$0xff]
    %v2863 = vld [vmem:[%s15 + $0x70] sm:$0xff]
    %v2864 = vld [vmem:[%s15 + $0x78] sm:$0xff]
    %v2865 = vld [vmem:[%s16] sm:$0xff]
    %v2866 = vld [vmem:[%s16 + $0x8] sm:$0xff]
    %v2867 = vld [vmem:[%s16 + $0x10] sm:$0xff]
    %v2868 = vld [vmem:[%s16 + $0x18] sm:$0xff]
    %v2869 = vld [vmem:[%s16 + $0x20] sm:$0xff]
    %v2870 = vld [vmem:[%s16 + $0x28] sm:$0xff]
    %v2871 = vld [vmem:[%s16 + $0x30] sm:$0xff]
    %v2872 = vld [vmem:[%s16 + $0x38] sm:$0xff]
    %v2873 = vld [vmem:[%s16 + $0x40] sm:$0xff]
    %v2874 = vld [vmem:[%s16 + $0x48] sm:$0xff]
    %v2875 = vld [vmem:[%s16 + $0x50] sm:$0xff]
    %v2876 = vld [vmem:[%s16 + $0x58] sm:$0xff]
    %v2877 = vld [vmem:[%s16 + $0x60] sm:$0xff]
    %v2878 = vld [vmem:[%s16 + $0x68] sm:$0xff]
    %v2879 = vld [vmem:[%s16 + $0x70] sm:$0xff]
    %v2880 = vld [vmem:[%s16 + $0x78] sm:$0xff]
    %v2881 = vld [vmem:[%s17] sm:$0xff]
    %v2882 = vld [vmem:[%s17 + $0x8] sm:$0xff]
    %v2883 = vld [vmem:[%s17 + $0x10] sm:$0xff]
    %v2884 = vld [vmem:[%s17 + $0x18] sm:$0xff]
    %v2885 = vld [vmem:[%s17 + $0x20] sm:$0xff]
    %v2886 = vld [vmem:[%s17 + $0x28] sm:$0xff]
    %v2887 = vld [vmem:[%s17 + $0x30] sm:$0xff]
    %v2888 = vld [vmem:[%s17 + $0x38] sm:$0xff]
    %v2889 = vld [vmem:[%s17 + $0x40] sm:$0xff]
    %v2890 = vld [vmem:[%s17 + $0x48] sm:$0xff]
    %v2891 = vld [vmem:[%s17 + $0x50] sm:$0xff]
    %v2892 = vld [vmem:[%s17 + $0x58] sm:$0xff]
    %v2893 = vld [vmem:[%s17 + $0x60] sm:$0xff]
    %v2894 = vld [vmem:[%s17 + $0x68] sm:$0xff]
    %v2895 = vld [vmem:[%s17 + $0x70] sm:$0xff]
    %v2896 = vld [vmem:[%s17 + $0x78] sm:$0xff]
    %v2897 = vld [vmem:[%s18] sm:$0xff]
    %v2898 = vld [vmem:[%s18 + $0x8] sm:$0xff]
    %v2899 = vld [vmem:[%s18 + $0x10] sm:$0xff]
    %v2900 = vld [vmem:[%s18 + $0x18] sm:$0xff]
    %v2902 = vsel %vm84, %v2773, 0
    %v2905 = vsel %vm84, %v2774, 0
    %2907 = vmatprep.subr.mxu0 0.0
    %2908 = vmatpush1.msra.mxu0 %v2849
    %2909 = vmatprep.subr.mxu0 0.0
    %2910 = vmatpush1.msra.mxu0 %v2850
    %2911 = vmatprep.subr.mxu0 0.0
    %2912 = vmatpush1.msra.mxu0 %v2851
    %2913 = vmatprep.subr.mxu0 0.0
    %2914 = vmatpush1.msra.mxu0 %v2852
    %2915 = vmatprep.subr.mxu0 0.0
    %2916 = vmatpush1.msra.mxu0 0.0
    %2917 = vmatprep.subr.mxu0 0.0
    %2918 = vmatpush1.msra.mxu0 0.0
    %2919 = vmatprep.subr.mxu0 0.0
    %2920 = vmatpush1.msra.mxu0 0.0
    %2921 = vmatprep.subr.mxu0 0.0
    %2922 = vmatpush1.msra.mxu0 0.0
    %2923 = vmatprep.subr.mxu0 0.0
    %2924 = vmatpush1.msra.mxu0 0.0
    %2925 = vmatprep.subr.mxu0 0.0
    %2926 = vmatpush1.msra.mxu0 0.0
    %2927 = vmatprep.subr.mxu0 0.0
    %2928 = vmatpush1.msra.mxu0 0.0
    %2929 = vmatprep.subr.mxu0 0.0
    %2930 = vmatpush1.msra.mxu0 0.0
    %2931 = vmatprep.subr.mxu0 0.0
    %2932 = vmatpush1.msra.mxu0 0.0
    %2933 = vmatprep.subr.mxu0 0.0
    %2934 = vmatpush1.msra.mxu0 0.0
    %2935 = vmatprep.subr.mxu0 0.0
    %2936 = vmatpush1.msra.mxu0 0.0
    %2937 = vmatprep.subr.mxu0 0.0
    %2938 = vmatpush1.msra.mxu0 0.0
    %2939 = vmatprep.subr.mxu0 0.0
    %2940 = vmatpush1.msra.mxu0 0.0
    %2941 = vmatprep.subr.mxu0 0.0
    %2942 = vmatpush1.msra.mxu0 0.0
    %2943 = vmatprep.subr.mxu0 0.0
    %2944 = vmatpush1.msra.mxu0 0.0
    %2945 = vmatprep.subr.mxu0 0.0
    %2946 = vmatpush1.msra.mxu0 0.0
    %2947 = vmatprep.subr.mxu0 0.0
    %2948 = vmatpush1.msra.mxu0 0.0
    %2949 = vmatprep.subr.mxu0 0.0
    %2950 = vmatpush1.msra.mxu0 0.0
    %2951 = vmatprep.subr.mxu0 0.0
    %2952 = vmatpush1.msra.mxu0 0.0
    %2953 = vmatprep.subr.mxu0 0.0
    %2954 = vmatpush1.msra.mxu0 0.0
    %2955 = vmatprep.subr.mxu0 0.0
    %2956 = vmatpush1.msra.mxu0 0.0
    %2957 = vmatprep.subr.mxu0 0.0
    %2958 = vmatpush1.msra.mxu0 0.0
    %2959 = vmatprep.subr.mxu0 0.0
    %2960 = vmatpush1.msra.mxu0 0.0
    %2961 = vmatprep.subr.mxu0 0.0
    %2962 = vmatpush1.msra.mxu0 0.0
    %2963 = vmatprep.subr.mxu0 0.0
    %2964 = vmatpush1.msra.mxu0 0.0
    %2965 = vmatprep.subr.mxu0 0.0
    %2966 = vmatpush1.msra.mxu0 0.0
    %2967 = vmatprep.subr.mxu0 0.0
    %2968 = vmatpush1.msra.mxu0 0.0
    %2969 = vmatprep.subr.mxu0 0.0
    %2970 = vmatpush1.msra.mxu0 0.0
    %2971 = vmatprep.mubr.f32.mxu0 0.0
    %2972 = vmatmul.mubr.f32.gmra.mrb[0].mxu0 %v2902
    %v2973 = vpop.f32.mrb[0].mxu0
    %v2974 = vadd.f32 0.0, %v2973
    %v2975 = vpop.f32.mrb[0].mxu0
    %2976 = vmatprep.mubr.f32.mxu0 0.0
    %2977 = vmatmul.mubr.f32.gmra.mrb[0].mxu0 %v2905
    %v2978 = vpop.f32.mrb[0].mxu0
    %v2979 = vadd.f32 0.0, %v2978
    %v2980 = vpop.f32.mrb[0].mxu0
    %2981 = vdwg.mxu0
    %v2983 = vsel %vm84, %v2845, 0
    %v2986 = vsel %vm84, %v2846, 0
    %v2989 = vsel %vm84, %v2847, 0
    %v2992 = vsel %vm84, %v2848, 0
    %2994 = vmatprep.subr.mxu0 0.0
    %2995 = vmatpush1.msra.mxu0 %v2865
    %2996 = vmatprep.subr.mxu0 0.0
    %2997 = vmatpush1.msra.mxu0 %v2866
    %2998 = vmatprep.subr.mxu0 0.0
    %2999 = vmatpush1.msra.mxu0 %v2867
    %3000 = vmatprep.subr.mxu0 0.0
    %3001 = vmatpush1.msra.mxu0 %v2868
    %3002 = vmatprep.subr.mxu0 0.0
    %3003 = vmatpush1.msra.mxu0 0.0
    %3004 = vmatprep.subr.mxu0 0.0
    %3005 = vmatpush1.msra.mxu0 0.0
    %3006 = vmatprep.subr.mxu0 0.0
    %3007 = vmatpush1.msra.mxu0 0.0
    %3008 = vmatprep.subr.mxu0 0.0
    %3009 = vmatpush1.msra.mxu0 0.0
    %3010 = vmatprep.subr.mxu0 0.0
    %3011 = vmatpush1.msra.mxu0 0.0
    %3012 = vmatprep.subr.mxu0 0.0
    %3013 = vmatpush1.msra.mxu0 0.0
    %3014 = vmatprep.subr.mxu0 0.0
    %3015 = vmatpush1.msra.mxu0 0.0
    %3016 = vmatprep.subr.mxu0 0.0
    %3017 = vmatpush1.msra.mxu0 0.0
    %3018 = vmatprep.subr.mxu0 0.0
    %3019 = vmatpush1.msra.mxu0 0.0
    %3020 = vmatprep.subr.mxu0 0.0
    %3021 = vmatpush1.msra.mxu0 0.0
    %3022 = vmatprep.subr.mxu0 0.0
    %3023 = vmatpush1.msra.mxu0 0.0
    %3024 = vmatprep.subr.mxu0 0.0
    %3025 = vmatpush1.msra.mxu0 0.0
    %3026 = vmatprep.subr.mxu0 0.0
    %3027 = vmatpush1.msra.mxu0 0.0
    %3028 = vmatprep.subr.mxu0 0.0
    %3029 = vmatpush1.msra.mxu0 0.0
    %3030 = vmatprep.subr.mxu0 0.0
    %3031 = vmatpush1.msra.mxu0 0.0
    %3032 = vmatprep.subr.mxu0 0.0
    %3033 = vmatpush1.msra.mxu0 0.0
    %3034 = vmatprep.subr.mxu0 0.0
    %3035 = vmatpush1.msra.mxu0 0.0
    %3036 = vmatprep.subr.mxu0 0.0
    %3037 = vmatpush1.msra.mxu0 0.0
    %3038 = vmatprep.subr.mxu0 0.0
    %3039 = vmatpush1.msra.mxu0 0.0
    %3040 = vmatprep.subr.mxu0 0.0
    %3041 = vmatpush1.msra.mxu0 0.0
    %3042 = vmatprep.subr.mxu0 0.0
    %3043 = vmatpush1.msra.mxu0 0.0
    %3044 = vmatprep.subr.mxu0 0.0
    %3045 = vmatpush1.msra.mxu0 0.0
    %3046 = vmatprep.subr.mxu0 0.0
    %3047 = vmatpush1.msra.mxu0 0.0
    %3048 = vmatprep.subr.mxu0 0.0
    %3049 = vmatpush1.msra.mxu0 0.0
    %3050 = vmatprep.subr.mxu0 0.0
    %3051 = vmatpush1.msra.mxu0 0.0
    %3052 = vmatprep.subr.mxu0 0.0
    %3053 = vmatpush1.msra.mxu0 0.0
    %3054 = vmatprep.subr.mxu0 0.0
    %3055 = vmatpush1.msra.mxu0 0.0
    %3056 = vmatprep.subr.mxu0 0.0
    %3057 = vmatpush1.msra.mxu0 0.0
    %3058 = vmatprep.mubr.f32.mxu0 0.0
    %3059 = vmatmul.mubr.f32.gmra.mrb[0].mxu0 %v2983
    %v3060 = vpop.f32.mrb[0].mxu0
    %v3061 = vadd.f32 0.0, %v3060
    %v3062 = vpop.f32.mrb[0].mxu0
    %3063 = vmatprep.mubr.f32.mxu0 0.0
    %3064 = vmatmul.mubr.f32.gmra.mrb[0].mxu0 %v2986
    %v3065 = vpop.f32.mrb[0].mxu0
    %v3066 = vadd.f32 0.0, %v3065
    %v3067 = vpop.f32.mrb[0].mxu0
    %3068 = vmatprep.mubr.f32.mxu0 0.0
    %3069 = vmatmul.mubr.f32.gmra.mrb[0].mxu0 %v2989
    %v3070 = vpop.f32.mrb[0].mxu0
    %v3071 = vadd.f32 0.0, %v3070
    %v3072 = vpop.f32.mrb[0].mxu0
    %3073 = vmatprep.mubr.f32.mxu0 0.0
    %3074 = vmatmul.mubr.f32.gmra.mrb[0].mxu0 %v2992
    %v3075 = vpop.f32.mrb[0].mxu0
    %v3076 = vadd.f32 0.0, %v3075
    %v3077 = vpop.f32.mrb[0].mxu0
    %3078 = vdwg.mxu0
    %3079 = vmatprep.subr.mxu0 0.0
    %3080 = vmatpush1.msra.mxu0 %v2881
    %3081 = vmatprep.subr.mxu0 0.0
    %3082 = vmatpush1.msra.mxu0 %v2882
    %3083 = vmatprep.subr.mxu0 0.0
    %3084 = vmatpush1.msra.mxu0 %v2883
    %3085 = vmatprep.subr.mxu0 0.0
    %3086 = vmatpush1.msra.mxu0 %v2884
    %3087 = vmatprep.subr.mxu0 0.0
    %3088 = vmatpush1.msra.mxu0 0.0
    %3089 = vmatprep.subr.mxu0 0.0
    %3090 = vmatpush1.msra.mxu0 0.0
    %3091 = vmatprep.subr.mxu0 0.0
    %3092 = vmatpush1.msra.mxu0 0.0
    %3093 = vmatprep.subr.mxu0 0.0
    %3094 = vmatpush1.msra.mxu0 0.0
    %3095 = vmatprep.subr.mxu0 0.0
    %3096 = vmatpush1.msra.mxu0 0.0
    %3097 = vmatprep.subr.mxu0 0.0
    %3098 = vmatpush1.msra.mxu0 0.0
    %3099 = vmatprep.subr.mxu0 0.0
    %3100 = vmatpush1.msra.mxu0 0.0
    %3101 = vmatprep.subr.mxu0 0.0
    %3102 = vmatpush1.msra.mxu0 0.0
    %3103 = vmatprep.subr.mxu0 0.0
    %3104 = vmatpush1.msra.mxu0 0.0
    %3105 = vmatprep.subr.mxu0 0.0
    %3106 = vmatpush1.msra.mxu0 0.0
    %3107 = vmatprep.subr.mxu0 0.0
    %3108 = vmatpush1.msra.mxu0 0.0
    %3109 = vmatprep.subr.mxu0 0.0
    %3110 = vmatpush1.msra.mxu0 0.0
    %3111 = vmatprep.subr.mxu0 0.0
    %3112 = vmatpush1.msra.mxu0 0.0
    %3113 = vmatprep.subr.mxu0 0.0
    %3114 = vmatpush1.msra.mxu0 0.0
    %3115 = vmatprep.subr.mxu0 0.0
    %3116 = vmatpush1.msra.mxu0 0.0
    %3117 = vmatprep.subr.mxu0 0.0
    %3118 = vmatpush1.msra.mxu0 0.0
    %3119 = vmatprep.subr.mxu0 0.0
    %3120 = vmatpush1.msra.mxu0 0.0
    %3121 = vmatprep.subr.mxu0 0.0
    %3122 = vmatpush1.msra.mxu0 0.0
    %3123 = vmatprep.subr.mxu0 0.0
    %3124 = vmatpush1.msra.mxu0 0.0
    %3125 = vmatprep.subr.mxu0 0.0
    %3126 = vmatpush1.msra.mxu0 0.0
    %3127 = vmatprep.subr.mxu0 0.0
    %3128 = vmatpush1.msra.mxu0 0.0
    %3129 = vmatprep.subr.mxu0 0.0
    %3130 = vmatpush1.msra.mxu0 0.0
    %3131 = vmatprep.subr.mxu0 0.0
    %3132 = vmatpush1.msra.mxu0 0.0
    %3133 = vmatprep.subr.mxu0 0.0
    %3134 = vmatpush1.msra.mxu0 0.0
    %3135 = vmatprep.subr.mxu0 0.0
    %3136 = vmatpush1.msra.mxu0 0.0
    %3137 = vmatprep.subr.mxu0 0.0
    %3138 = vmatpush1.msra.mxu0 0.0
    %3139 = vmatprep.subr.mxu0 0.0
    %3140 = vmatpush1.msra.mxu0 0.0
    %3141 = vmatprep.subr.mxu0 0.0
    %3142 = vmatpush1.msra.mxu0 0.0
    %3143 = vmatprep.mubr.f32.mxu0 0.0
    %3144 = vmatmul.mubr.f32.gmra.mrb[0].mxu0 %v2983
    %v3145 = vpop.f32.mrb[0].mxu0
    %v3146 = vadd.f32 0.0, %v3145
    %v3147 = vpop.f32.mrb[0].mxu0
    %3148 = vmatprep.mubr.f32.mxu0 0.0
    %3149 = vmatmul.mubr.f32.gmra.mrb[0].mxu0 %v2986
    %v3150 = vpop.f32.mrb[0].mxu0
    %v3151 = vadd.f32 0.0, %v3150
    %v3152 = vpop.f32.mrb[0].mxu0
    %3153 = vmatprep.mubr.f32.mxu0 0.0
    %3154 = vmatmul.mubr.f32.gmra.mrb[0].mxu0 %v2989
    %v3155 = vpop.f32.mrb[0].mxu0
    %v3156 = vadd.f32 0.0, %v3155
    %v3157 = vpop.f32.mrb[0].mxu0
    %3158 = vmatprep.mubr.f32.mxu0 0.0
    %3159 = vmatmul.mubr.f32.gmra.mrb[0].mxu0 %v2992
    %v3160 = vpop.f32.mrb[0].mxu0
    %v3161 = vadd.f32 0.0, %v3160
    %v3162 = vpop.f32.mrb[0].mxu0
    %3163 = vdwg.mxu0
    %v3165 = vsel %vm437, %v2974, 0
    %v3168 = vsel %vm437, %v3061, 0
    %v3171 = vsel %vm437, %v3066, 0
    %3173 = vmatprep.subr.mxu0 0.0
    %3174 = vmatpush1.xpose.msra.mxu0 %v3168
    %3175 = vmatprep.subr.mxu0 0.0
    %3176 = vmatpush1.xpose.msra.mxu0 %v3171
    %3177 = vmatprep.subr.mxu0 0.0
    %3178 = vmatpush1.xpose.msra.mxu0 0.0
    %3179 = vmatprep.subr.mxu0 0.0
    %3180 = vmatpush1.xpose.msra.mxu0 0.0
    %3181 = vmatprep.subr.mxu0 0.0
    %3182 = vmatpush1.xpose.msra.mxu0 0.0
    %3183 = vmatprep.subr.mxu0 0.0
    %3184 = vmatpush1.xpose.msra.mxu0 0.0
    %3185 = vmatprep.subr.mxu0 0.0
    %3186 = vmatpush1.xpose.msra.mxu0 0.0
    %3187 = vmatprep.subr.mxu0 0.0
    %3188 = vmatpush1.xpose.msra.mxu0 0.0
    %3189 = vmatprep.subr.mxu0 0.0
    %3190 = vmatpush1.xpose.msra.mxu0 0.0
    %3191 = vmatprep.subr.mxu0 0.0
    %3192 = vmatpush1.xpose.msra.mxu0 0.0
    %3193 = vmatprep.subr.mxu0 0.0
    %3194 = vmatpush1.xpose.msra.mxu0 0.0
    %3195 = vmatprep.subr.mxu0 0.0
    %3196 = vmatpush1.xpose.msra.mxu0 0.0
    %3197 = vmatprep.subr.mxu0 0.0
    %3198 = vmatpush1.xpose.msra.mxu0 0.0
    %3199 = vmatprep.subr.mxu0 0.0
    %3200 = vmatpush1.xpose.msra.mxu0 0.0
    %3201 = vmatprep.subr.mxu0 0.0
    %3202 = vmatpush1.xpose.msra.mxu0 0.0
    %3203 = vmatprep.subr.mxu0 0.0
    %3204 = vmatpush1.xpose.msra.mxu0 0.0
    %3205 = vmatprep.subr.mxu0 0.0
    %3206 = vmatpush1.xpose.msra.mxu0 0.0
    %3207 = vmatprep.subr.mxu0 0.0
    %3208 = vmatpush1.xpose.msra.mxu0 0.0
    %3209 = vmatprep.subr.mxu0 0.0
    %3210 = vmatpush1.xpose.msra.mxu0 0.0
    %3211 = vmatprep.subr.mxu0 0.0
    %3212 = vmatpush1.xpose.msra.mxu0 0.0
    %3213 = vmatprep.subr.mxu0 0.0
    %3214 = vmatpush1.xpose.msra.mxu0 0.0
    %3215 = vmatprep.subr.mxu0 0.0
    %3216 = vmatpush1.xpose.msra.mxu0 0.0
    %3217 = vmatprep.subr.mxu0 0.0
    %3218 = vmatpush1.xpose.msra.mxu0 0.0
    %3219 = vmatprep.subr.mxu0 0.0
    %3220 = vmatpush1.xpose.msra.mxu0 0.0
    %3221 = vmatprep.subr.mxu0 0.0
    %3222 = vmatpush1.xpose.msra.mxu0 0.0
    %3223 = vmatprep.subr.mxu0 0.0
    %3224 = vmatpush1.xpose.msra.mxu0 0.0
    %3225 = vmatprep.subr.mxu0 0.0
    %3226 = vmatpush1.xpose.msra.mxu0 0.0
    %3227 = vmatprep.subr.mxu0 0.0
    %3228 = vmatpush1.xpose.msra.mxu0 0.0
    %3229 = vmatprep.subr.mxu0 0.0
    %3230 = vmatpush1.xpose.msra.mxu0 0.0
    %3231 = vmatprep.subr.mxu0 0.0
    %3232 = vmatpush1.xpose.msra.mxu0 0.0
    %3233 = vmatprep.subr.mxu0 0.0
    %3234 = vmatpush1.xpose.msra.mxu0 0.0
    %3235 = vmatprep.subr.mxu0 0.0
    %3236 = vmatpush1.xpose.msra.mxu0 0.0
    %3237 = vmatprep.mubr.f32.mxu0 0.0
    %3238 = vmatmul.mubr.f32.gmra.mrb[0].mxu0 %v3165
    %v3239 = vpop.f32.mrb[0].mxu0
    %v3240 = vadd.f32 0.0, %v3239
    %v3241 = vpop.f32.mrb[0].mxu0
    %3242 = vdwg.mxu0
    %v3244 = vsel %vm437, %v2979, 0
    %v3247 = vsel %vm437, %v3071, 0
    %v3250 = vsel %vm437, %v3076, 0
    %3252 = vmatprep.subr.mxu0 0.0
    %3253 = vmatpush1.xpose.msra.mxu0 %v3247
    %3254 = vmatprep.subr.mxu0 0.0
    %3255 = vmatpush1.xpose.msra.mxu0 %v3250
    %3256 = vmatprep.subr.mxu0 0.0
    %3257 = vmatpush1.xpose.msra.mxu0 0.0
    %3258 = vmatprep.subr.mxu0 0.0
    %3259 = vmatpush1.xpose.msra.mxu0 0.0
    %3260 = vmatprep.subr.mxu0 0.0
    %3261 = vmatpush1.xpose.msra.mxu0 0.0
    %3262 = vmatprep.subr.mxu0 0.0
    %3263 = vmatpush1.xpose.msra.mxu0 0.0
    %3264 = vmatprep.subr.mxu0 0.0
    %3265 = vmatpush1.xpose.msra.mxu0 0.0
    %3266 = vmatprep.subr.mxu0 0.0
    %3267 = vmatpush1.xpose.msra.mxu0 0.0
    %3268 = vmatprep.subr.mxu0 0.0
    %3269 = vmatpush1.xpose.msra.mxu0 0.0
    %3270 = vmatprep.subr.mxu0 0.0
    %3271 = vmatpush1.xpose.msra.mxu0 0.0
    %3272 = vmatprep.subr.mxu0 0.0
    %3273 = vmatpush1.xpose.msra.mxu0 0.0
    %3274 = vmatprep.subr.mxu0 0.0
    %3275 = vmatpush1.xpose.msra.mxu0 0.0
    %3276 = vmatprep.subr.mxu0 0.0
    %3277 = vmatpush1.xpose.msra.mxu0 0.0
    %3278 = vmatprep.subr.mxu0 0.0
    %3279 = vmatpush1.xpose.msra.mxu0 0.0
    %3280 = vmatprep.subr.mxu0 0.0
    %3281 = vmatpush1.xpose.msra.mxu0 0.0
    %3282 = vmatprep.subr.mxu0 0.0
    %3283 = vmatpush1.xpose.msra.mxu0 0.0
    %3284 = vmatprep.subr.mxu0 0.0
    %3285 = vmatpush1.xpose.msra.mxu0 0.0
    %3286 = vmatprep.subr.mxu0 0.0
    %3287 = vmatpush1.xpose.msra.mxu0 0.0
    %3288 = vmatprep.subr.mxu0 0.0
    %3289 = vmatpush1.xpose.msra.mxu0 0.0
    %3290 = vmatprep.subr.mxu0 0.0
    %3291 = vmatpush1.xpose.msra.mxu0 0.0
    %3292 = vmatprep.subr.mxu0 0.0
    %3293 = vmatpush1.xpose.msra.mxu0 0.0
    %3294 = vmatprep.subr.mxu0 0.0
    %3295 = vmatpush1.xpose.msra.mxu0 0.0
    %3296 = vmatprep.subr.mxu0 0.0
    %3297 = vmatpush1.xpose.msra.mxu0 0.0
    %3298 = vmatprep.subr.mxu0 0.0
    %3299 = vmatpush1.xpose.msra.mxu0 0.0
    %3300 = vmatprep.subr.mxu0 0.0
    %3301 = vmatpush1.xpose.msra.mxu0 0.0
    %3302 = vmatprep.subr.mxu0 0.0
    %3303 = vmatpush1.xpose.msra.mxu0 0.0
    %3304 = vmatprep.subr.mxu0 0.0
    %3305 = vmatpush1.xpose.msra.mxu0 0.0
    %3306 = vmatprep.subr.mxu0 0.0
    %3307 = vmatpush1.xpose.msra.mxu0 0.0
    %3308 = vmatprep.subr.mxu0 0.0
    %3309 = vmatpush1.xpose.msra.mxu0 0.0
    %3310 = vmatprep.subr.mxu0 0.0
    %3311 = vmatpush1.xpose.msra.mxu0 0.0
    %3312 = vmatprep.subr.mxu0 0.0
    %3313 = vmatpush1.xpose.msra.mxu0 0.0
    %3314 = vmatprep.subr.mxu0 0.0
    %3315 = vmatpush1.xpose.msra.mxu0 0.0
    %3316 = vmatprep.mubr.f32.mxu0 0.0
    %3317 = vmatmul.mubr.f32.gmra.mrb[0].mxu0 %v3244
    %v3318 = vpop.f32.mrb[0].mxu0
    %v3319 = vadd.f32 0.0, %v3318
    %v3320 = vpop.f32.mrb[0].mxu0
    %3321 = vdwg.mxu0
    %v3322 = vmul.f32 %v3240, 0.35355338
    %v3323 = vmul.f32 %v3319, 0.35355338
    %vm3324 = vcmask 130048
    %v3325 = vsel %vm3324, %v3322, -inf
    %3326 = vmax.xlane.f32.xlu0 %v3325
    %v3327 = vpop.xlane.xlu0 %3326
    %v3328 = vsel %vm3324, %v3323, -inf
    %3329 = vmax.xlane.f32.xlu0 %v3328
    %v3330 = vpop.xlane.xlu0 %3329
    %v3331 = vsub.f32 %v3322, %v3327
    %v3332 = vsub.f32 %v3323, %v3330
    %v3333 = vmul.f32 %v3331, 1.442695
    %v3334 = vpow.pop %v3333
    %v3335 = vmul.f32 %v3332, 1.442695
    %v3336 = vpow.pop %v3335
    %v3337 = vsel %vm3324, %v3334, 0.0
    %3338 = vadd.xlane.f32.xlu0 %v3337
    %v3339 = vpop.xlane.xlu0 %3338
    %v3340 = vsel %vm3324, %v3336, 0.0
    %3341 = vadd.xlane.f32.xlu0 %v3340
    %v3342 = vpop.xlane.xlu0 %3341
    %v3343 = vrcp.pop %v3339
    %v3344 = vrcp.pop %v3342
    %v3345 = vmul.f32 %v3334, %v3343
    %v3346 = vmul.f32 %v3336, %v3344
    %v3348 = vsel %vm3324, %v3345, 0
    %3350 = vmatprep.subr.mxu0 0.0
    %3351 = vmatpush1.msra.mxu0 %v3146
    %3352 = vmatprep.subr.mxu0 0.0
    %3353 = vmatpush1.msra.mxu0 %v3151
    %3354 = vmatprep.subr.mxu0 0.0
    %3355 = vmatpush1.msra.mxu0 0.0
    %3356 = vmatprep.subr.mxu0 0.0
    %3357 = vmatpush1.msra.mxu0 0.0
    %3358 = vmatprep.subr.mxu0 0.0
    %3359 = vmatpush1.msra.mxu0 0.0
    %3360 = vmatprep.subr.mxu0 0.0
    %3361 = vmatpush1.msra.mxu0 0.0
    %3362 = vmatprep.subr.mxu0 0.0
    %3363 = vmatpush1.msra.mxu0 0.0
    %3364 = vmatprep.subr.mxu0 0.0
    %3365 = vmatpush1.msra.mxu0 0.0
    %3366 = vmatprep.subr.mxu0 0.0
    %3367 = vmatpush1.msra.mxu0 0.0
    %3368 = vmatprep.subr.mxu0 0.0
    %3369 = vmatpush1.msra.mxu0 0.0
    %3370 = vmatprep.subr.mxu0 0.0
    %3371 = vmatpush1.msra.mxu0 0.0
    %3372 = vmatprep.subr.mxu0 0.0
    %3373 = vmatpush1.msra.mxu0 0.0
    %3374 = vmatprep.subr.mxu0 0.0
    %3375 = vmatpush1.msra.mxu0 0.0
    %3376 = vmatprep.subr.mxu0 0.0
    %3377 = vmatpush1.msra.mxu0 0.0
    %3378 = vmatprep.subr.mxu0 0.0
    %3379 = vmatpush1.msra.mxu0 0.0
    %3380 = vmatprep.subr.mxu0 0.0
    %3381 = vmatpush1.msra.mxu0 0.0
    %3382 = vmatprep.subr.mxu0 0.0
    %3383 = vmatpush1.msra.mxu0 0.0
    %3384 = vmatprep.subr.mxu0 0.0
    %3385 = vmatpush1.msra.mxu0 0.0
    %3386 = vmatprep.subr.mxu0 0.0
    %3387 = vmatpush1.msra.mxu0 0.0
    %3388 = vmatprep.subr.mxu0 0.0
    %3389 = vmatpush1.msra.mxu0 0.0
    %3390 = vmatprep.subr.mxu0 0.0
    %3391 = vmatpush1.msra.mxu0 0.0
    %3392 = vmatprep.subr.mxu0 0.0
    %3393 = vmatpush1.msra.mxu0 0.0
    %3394 = vmatprep.subr.mxu0 0.0
    %3395 = vmatpush1.msra.mxu0 0.0
    %3396 = vmatprep.subr.mxu0 0.0
    %3397 = vmatpush1.msra.mxu0 0.0
    %3398 = vmatprep.subr.mxu0 0.0
    %3399 = vmatpush1.msra.mxu0 0.0
    %3400 = vmatprep.subr.mxu0 0.0
    %3401 = vmatpush1.msra.mxu0 0.0
    %3402 = vmatprep.subr.mxu0 0.0
    %3403 = vmatpush1.msra.mxu0 0.0
    %3404 = vmatprep.subr.mxu0 0.0
    %3405 = vmatpush1.msra.mxu0 0.0
    %3406 = vmatprep.subr.mxu0 0.0
    %3407 = vmatpush1.msra.mxu0 0.0
    %3408 = vmatprep.subr.mxu0 0.0
    %3409 = vmatpush1.msra.mxu0 0.0
    %3410 = vmatprep.subr.mxu0 0.0
    %3411 = vmatpush1.msra.mxu0 0.0
    %3412 = vmatprep.subr.mxu0 0.0
    %3413 = vmatpush1.msra.mxu0 0.0
    %3414 = vmatprep.mubr.f32.mxu0 0.0
    %3415 = vmatmul.mubr.f32.gmra.mrb[0].mxu0 %v3348
    %v3416 = vpop.f32.mrb[0].mxu0
    %v3417 = vadd.f32 0.0, %v3416
    %v3418 = vpop.f32.mrb[0].mxu0
    %3419 = vdwg.mxu0
    %v3421 = vsel %vm3324, %v3346, 0
    %3423 = vmatprep.subr.mxu0 0.0
    %3424 = vmatpush1.msra.mxu0 %v3156
    %3425 = vmatprep.subr.mxu0 0.0
    %3426 = vmatpush1.msra.mxu0 %v3161
    %3427 = vmatprep.subr.mxu0 0.0
    %3428 = vmatpush1.msra.mxu0 0.0
    %3429 = vmatprep.subr.mxu0 0.0
    %3430 = vmatpush1.msra.mxu0 0.0
    %3431 = vmatprep.subr.mxu0 0.0
    %3432 = vmatpush1.msra.mxu0 0.0
    %3433 = vmatprep.subr.mxu0 0.0
    %3434 = vmatpush1.msra.mxu0 0.0
    %3435 = vmatprep.subr.mxu0 0.0
    %3436 = vmatpush1.msra.mxu0 0.0
    %3437 = vmatprep.subr.mxu0 0.0
    %3438 = vmatpush1.msra.mxu0 0.0
    %3439 = vmatprep.subr.mxu0 0.0
    %3440 = vmatpush1.msra.mxu0 0.0
    %3441 = vmatprep.subr.mxu0 0.0
    %3442 = vmatpush1.msra.mxu0 0.0
    %3443 = vmatprep.subr.mxu0 0.0
    %3444 = vmatpush1.msra.mxu0 0.0
    %3445 = vmatprep.subr.mxu0 0.0
    %3446 = vmatpush1.msra.mxu0 0.0
    %3447 = vmatprep.subr.mxu0 0.0
    %3448 = vmatpush1.msra.mxu0 0.0
    %3449 = vmatprep.subr.mxu0 0.0
    %3450 = vmatpush1.msra.mxu0 0.0
    %3451 = vmatprep.subr.mxu0 0.0
    %3452 = vmatpush1.msra.mxu0 0.0
    %3453 = vmatprep.subr.mxu0 0.0
    %3454 = vmatpush1.msra.mxu0 0.0
    %3455 = vmatprep.subr.mxu0 0.0
    %3456 = vmatpush1.msra.mxu0 0.0
    %3457 = vmatprep.subr.mxu0 0.0
    %3458 = vmatpush1.msra.mxu0 0.0
    %3459 = vmatprep.subr.mxu0 0.0
    %3460 = vmatpush1.msra.mxu0 0.0
    %3461 = vmatprep.subr.mxu0 0.0
    %3462 = vmatpush1.msra.mxu0 0.0
    %3463 = vmatprep.subr.mxu0 0.0
    %3464 = vmatpush1.msra.mxu0 0.0
    %3465 = vmatprep.subr.mxu0 0.0
    %3466 = vmatpush1.msra.mxu0 0.0
    %3467 = vmatprep.subr.mxu0 0.0
    %3468 = vmatpush1.msra.mxu0 0.0
    %3469 = vmatprep.subr.mxu0 0.0
    %3470 = vmatpush1.msra.mxu0 0.0
    %3471 = vmatprep.subr.mxu0 0.0
    %3472 = vmatpush1.msra.mxu0 0.0
    %3473 = vmatprep.subr.mxu0 0.0
    %3474 = vmatpush1.msra.mxu0 0.0
    %3475 = vmatprep.subr.mxu0 0.0
    %3476 = vmatpush1.msra.mxu0 0.0
    %3477 = vmatprep.subr.mxu0 0.0
    %3478 = vmatpush1.msra.mxu0 0.0
    %3479 = vmatprep.subr.mxu0 0.0
    %3480 = vmatpush1.msra.mxu0 0.0
    %3481 = vmatprep.subr.mxu0 0.0
    %3482 = vmatpush1.msra.mxu0 0.0
    %3483 = vmatprep.subr.mxu0 0.0
    %3484 = vmatpush1.msra.mxu0 0.0
    %3485 = vmatprep.subr.mxu0 0.0
    %3486 = vmatpush1.msra.mxu0 0.0
    %3487 = vmatprep.mubr.f32.mxu0 0.0
    %3488 = vmatmul.mubr.f32.gmra.mrb[0].mxu0 %v3421
    %v3489 = vpop.f32.mrb[0].mxu0
    %v3490 = vadd.f32 0.0, %v3489
    %v3491 = vpop.f32.mrb[0].mxu0
    %3492 = vdwg.mxu0
    %3493 = vmatprep.subr.mxu0 0.0
    %3494 = vmatpush1.msra.mxu0 %v2853
    %3495 = vmatprep.subr.mxu0 0.0
    %3496 = vmatpush1.msra.mxu0 %v2854
    %3497 = vmatprep.subr.mxu0 0.0
    %3498 = vmatpush1.msra.mxu0 %v2855
    %3499 = vmatprep.subr.mxu0 0.0
    %3500 = vmatpush1.msra.mxu0 %v2856
    %3501 = vmatprep.subr.mxu0 0.0
    %3502 = vmatpush1.msra.mxu0 0.0
    %3503 = vmatprep.subr.mxu0 0.0
    %3504 = vmatpush1.msra.mxu0 0.0
    %3505 = vmatprep.subr.mxu0 0.0
    %3506 = vmatpush1.msra.mxu0 0.0
    %3507 = vmatprep.subr.mxu0 0.0
    %3508 = vmatpush1.msra.mxu0 0.0
    %3509 = vmatprep.subr.mxu0 0.0
    %3510 = vmatpush1.msra.mxu0 0.0
    %3511 = vmatprep.subr.mxu0 0.0
    %3512 = vmatpush1.msra.mxu0 0.0
    %3513 = vmatprep.subr.mxu0 0.0
    %3514 = vmatpush1.msra.mxu0 0.0
    %3515 = vmatprep.subr.mxu0 0.0
    %3516 = vmatpush1.msra.mxu0 0.0
    %3517 = vmatprep.subr.mxu0 0.0
    %3518 = vmatpush1.msra.mxu0 0.0
    %3519 = vmatprep.subr.mxu0 0.0
    %3520 = vmatpush1.msra.mxu0 0.0
    %3521 = vmatprep.subr.mxu0 0.0
    %3522 = vmatpush1.msra.mxu0 0.0
    %3523 = vmatprep.subr.mxu0 0.0
    %3524 = vmatpush1.msra.mxu0 0.0
    %3525 = vmatprep.subr.mxu0 0.0
    %3526 = vmatpush1.msra.mxu0 0.0
    %3527 = vmatprep.subr.mxu0 0.0
    %3528 = vmatpush1.msra.mxu0 0.0
    %3529 = vmatprep.subr.mxu0 0.0
    %3530 = vmatpush1.msra.mxu0 0.0
    %3531 = vmatprep.subr.mxu0 0.0
    %3532 = vmatpush1.msra.mxu0 0.0
    %3533 = vmatprep.subr.mxu0 0.0
    %3534 = vmatpush1.msra.mxu0 0.0
    %3535 = vmatprep.subr.mxu0 0.0
    %3536 = vmatpush1.msra.mxu0 0.0
    %3537 = vmatprep.subr.mxu0 0.0
    %3538 = vmatpush1.msra.mxu0 0.0
    %3539 = vmatprep.subr.mxu0 0.0
    %3540 = vmatpush1.msra.mxu0 0.0
    %3541 = vmatprep.subr.mxu0 0.0
    %3542 = vmatpush1.msra.mxu0 0.0
    %3543 = vmatprep.subr.mxu0 0.0
    %3544 = vmatpush1.msra.mxu0 0.0
    %3545 = vmatprep.subr.mxu0 0.0
    %3546 = vmatpush1.msra.mxu0 0.0
    %3547 = vmatprep.subr.mxu0 0.0
    %3548 = vmatpush1.msra.mxu0 0.0
    %3549 = vmatprep.subr.mxu0 0.0
    %3550 = vmatpush1.msra.mxu0 0.0
    %3551 = vmatprep.subr.mxu0 0.0
    %3552 = vmatpush1.msra.mxu0 0.0
    %3553 = vmatprep.subr.mxu0 0.0
    %3554 = vmatpush1.msra.mxu0 0.0
    %3555 = vmatprep.subr.mxu0 0.0
    %3556 = vmatpush1.msra.mxu0 0.0
    %3557 = vmatprep.mubr.f32.mxu0 0.0
    %3558 = vmatmul.mubr.f32.gmra.mrb[0].mxu0 %v2902
    %v3559 = vpop.f32.mrb[0].mxu0
    %v3560 = vadd.f32 0.0, %v3559
    %v3561 = vpop.f32.mrb[0].mxu0
    %3562 = vmatprep.mubr.f32.mxu0 0.0
    %3563 = vmatmul.mubr.f32.gmra.mrb[0].mxu0 %v2905
    %v3564 = vpop.f32.mrb[0].mxu0
    %v3565 = vadd.f32 0.0, %v3564
    %v3566 = vpop.f32.mrb[0].mxu0
    %3567 = vdwg.mxu0
    %3568 = vmatprep.subr.mxu0 0.0
    %3569 = vmatpush1.msra.mxu0 %v2869
    %3570 = vmatprep.subr.mxu0 0.0
    %3571 = vmatpush1.msra.mxu0 %v2870
    %3572 = vmatprep.subr.mxu0 0.0
    %3573 = vmatpush1.msra.mxu0 %v2871
    %3574 = vmatprep.subr.mxu0 0.0
    %3575 = vmatpush1.msra.mxu0 %v2872
    %3576 = vmatprep.subr.mxu0 0.0
    %3577 = vmatpush1.msra.mxu0 0.0
    %3578 = vmatprep.subr.mxu0 0.0
    %3579 = vmatpush1.msra.mxu0 0.0
    %3580 = vmatprep.subr.mxu0 0.0
    %3581 = vmatpush1.msra.mxu0 0.0
    %3582 = vmatprep.subr.mxu0 0.0
    %3583 = vmatpush1.msra.mxu0 0.0
    %3584 = vmatprep.subr.mxu0 0.0
    %3585 = vmatpush1.msra.mxu0 0.0
    %3586 = vmatprep.subr.mxu0 0.0
    %3587 = vmatpush1.msra.mxu0 0.0
    %3588 = vmatprep.subr.mxu0 0.0
    %3589 = vmatpush1.msra.mxu0 0.0
    %3590 = vmatprep.subr.mxu0 0.0
    %3591 = vmatpush1.msra.mxu0 0.0
    %3592 = vmatprep.subr.mxu0 0.0
    %3593 = vmatpush1.msra.mxu0 0.0
    %3594 = vmatprep.subr.mxu0 0.0
    %3595 = vmatpush1.msra.mxu0 0.0
    %3596 = vmatprep.subr.mxu0 0.0
    %3597 = vmatpush1.msra.mxu0 0.0
    %3598 = vmatprep.subr.mxu0 0.0
    %3599 = vmatpush1.msra.mxu0 0.0
    %3600 = vmatprep.subr.mxu0 0.0
    %3601 = vmatpush1.msra.mxu0 0.0
    %3602 = vmatprep.subr.mxu0 0.0
    %3603 = vmatpush1.msra.mxu0 0.0
    %3604 = vmatprep.subr.mxu0 0.0
    %3605 = vmatpush1.msra.mxu0 0.0
    %3606 = vmatprep.subr.mxu0 0.0
    %3607 = vmatpush1.msra.mxu0 0.0
    %3608 = vmatprep.subr.mxu0 0.0
    %3609 = vmatpush1.msra.mxu0 0.0
    %3610 = vmatprep.subr.mxu0 0.0
    %3611 = vmatpush1.msra.mxu0 0.0
    %3612 = vmatprep.subr.mxu0 0.0
    %3613 = vmatpush1.msra.mxu0 0.0
    %3614 = vmatprep.subr.mxu0 0.0
    %3615 = vmatpush1.msra.mxu0 0.0
    %3616 = vmatprep.subr.mxu0 0.0
    %3617 = vmatpush1.msra.mxu0 0.0
    %3618 = vmatprep.subr.mxu0 0.0
    %3619 = vmatpush1.msra.mxu0 0.0
    %3620 = vmatprep.subr.mxu0 0.0
    %3621 = vmatpush1.msra.mxu0 0.0
    %3622 = vmatprep.subr.mxu0 0.0
    %3623 = vmatpush1.msra.mxu0 0.0
    %3624 = vmatprep.subr.mxu0 0.0
    %3625 = vmatpush1.msra.mxu0 0.0
    %3626 = vmatprep.subr.mxu0 0.0
    %3627 = vmatpush1.msra.mxu0 0.0
    %3628 = vmatprep.subr.mxu0 0.0
    %3629 = vmatpush1.msra.mxu0 0.0
    %3630 = vmatprep.subr.mxu0 0.0
    %3631 = vmatpush1.msra.mxu0 0.0
    %3632 = vmatprep.mubr.f32.mxu0 0.0
    %3633 = vmatmul.mubr.f32.gmra.mrb[0].mxu0 %v2983
    %v3634 = vpop.f32.mrb[0].mxu0
    %v3635 = vadd.f32 0.0, %v3634
    %v3636 = vpop.f32.mrb[0].mxu0
    %3637 = vmatprep.mubr.f32.mxu0 0.0
    %3638 = vmatmul.mubr.f32.gmra.mrb[0].mxu0 %v2986
    %v3639 = vpop.f32.mrb[0].mxu0
    %v3640 = vadd.f32 0.0, %v3639
    %v3641 = vpop.f32.mrb[0].mxu0
    %3642 = vmatprep.mubr.f32.mxu0 0.0
    %3643 = vmatmul.mubr.f32.gmra.mrb[0].mxu0 %v2989
    %v3644 = vpop.f32.mrb[0].mxu0
    %v3645 = vadd.f32 0.0, %v3644
    %v3646 = vpop.f32.mrb[0].mxu0
    %3647 = vmatprep.mubr.f32.mxu0 0.0
    %3648 = vmatmul.mubr.f32.gmra.mrb[0].mxu0 %v2992
    %v3649 = vpop.f32.mrb[0].mxu0
    %v3650 = vadd.f32 0.0, %v3649
    %v3651 = vpop.f32.mrb[0].mxu0
    %3652 = vdwg.mxu0
    %3653 = vmatprep.subr.mxu0 0.0
    %3654 = vmatpush1.msra.mxu0 %v2885
    %3655 = vmatprep.subr.mxu0 0.0
    %3656 = vmatpush1.msra.mxu0 %v2886
    %3657 = vmatprep.subr.mxu0 0.0
    %3658 = vmatpush1.msra.mxu0 %v2887
    %3659 = vmatprep.subr.mxu0 0.0
    %3660 = vmatpush1.msra.mxu0 %v2888
    %3661 = vmatprep.subr.mxu0 0.0
    %3662 = vmatpush1.msra.mxu0 0.0
    %3663 = vmatprep.subr.mxu0 0.0
    %3664 = vmatpush1.msra.mxu0 0.0
    %3665 = vmatprep.subr.mxu0 0.0
    %3666 = vmatpush1.msra.mxu0 0.0
    %3667 = vmatprep.subr.mxu0 0.0
    %3668 = vmatpush1.msra.mxu0 0.0
    %3669 = vmatprep.subr.mxu0 0.0
    %3670 = vmatpush1.msra.mxu0 0.0
    %3671 = vmatprep.subr.mxu0 0.0
    %3672 = vmatpush1.msra.mxu0 0.0
    %3673 = vmatprep.subr.mxu0 0.0
    %3674 = vmatpush1.msra.mxu0 0.0
    %3675 = vmatprep.subr.mxu0 0.0
    %3676 = vmatpush1.msra.mxu0 0.0
    %3677 = vmatprep.subr.mxu0 0.0
    %3678 = vmatpush1.msra.mxu0 0.0
    %3679 = vmatprep.subr.mxu0 0.0
    %3680 = vmatpush1.msra.mxu0 0.0
    %3681 = vmatprep.subr.mxu0 0.0
    %3682 = vmatpush1.msra.mxu0 0.0
    %3683 = vmatprep.subr.mxu0 0.0
    %3684 = vmatpush1.msra.mxu0 0.0
    %3685 = vmatprep.subr.mxu0 0.0
    %3686 = vmatpush1.msra.mxu0 0.0
    %3687 = vmatprep.subr.mxu0 0.0
    %3688 = vmatpush1.msra.mxu0 0.0
    %3689 = vmatprep.subr.mxu0 0.0
    %3690 = vmatpush1.msra.mxu0 0.0
    %3691 = vmatprep.subr.mxu0 0.0
    %3692 = vmatpush1.msra.mxu0 0.0
    %3693 = vmatprep.subr.mxu0 0.0
    %3694 = vmatpush1.msra.mxu0 0.0
    %3695 = vmatprep.subr.mxu0 0.0
    %3696 = vmatpush1.msra.mxu0 0.0
    %3697 = vmatprep.subr.mxu0 0.0
    %3698 = vmatpush1.msra.mxu0 0.0
    %3699 = vmatprep.subr.mxu0 0.0
    %3700 = vmatpush1.msra.mxu0 0.0
    %3701 = vmatprep.subr.mxu0 0.0
    %3702 = vmatpush1.msra.mxu0 0.0
    %3703 = vmatprep.subr.mxu0 0.0
    %3704 = vmatpush1.msra.mxu0 0.0
    %3705 = vmatprep.subr.mxu0 0.0
    %3706 = vmatpush1.msra.mxu0 0.0
    %3707 = vmatprep.subr.mxu0 0.0
    %3708 = vmatpush1.msra.mxu0 0.0
    %3709 = vmatprep.subr.mxu0 0.0
    %3710 = vmatpush1.msra.mxu0 0.0
    %3711 = vmatprep.subr.mxu0 0.0
    %3712 = vmatpush1.msra.mxu0 0.0
    %3713 = vmatprep.subr.mxu0 0.0
    %3714 = vmatpush1.msra.mxu0 0.0
    %3715 = vmatprep.subr.mxu0 0.0
    %3716 = vmatpush1.msra.mxu0 0.0
    %3717 = vmatprep.mubr.f32.mxu0 0.0
    %3718 = vmatmul.mubr.f32.gmra.mrb[0].mxu0 %v2983
    %v3719 = vpop.f32.mrb[0].mxu0
    %v3720 = vadd.f32 0.0, %v3719
    %v3721 = vpop.f32.mrb[0].mxu0
    %3722 = vmatprep.mubr.f32.mxu0 0.0
    %3723 = vmatmul.mubr.f32.gmra.mrb[0].mxu0 %v2986
    %v3724 = vpop.f32.mrb[0].mxu0
    %v3725 = vadd.f32 0.0, %v3724
    %v3726 = vpop.f32.mrb[0].mxu0
    %3727 = vmatprep.mubr.f32.mxu0 0.0
    %3728 = vmatmul.mubr.f32.gmra.mrb[0].mxu0 %v2989
    %v3729 = vpop.f32.mrb[0].mxu0
    %v3730 = vadd.f32 0.0, %v3729
    %v3731 = vpop.f32.mrb[0].mxu0
    %3732 = vmatprep.mubr.f32.mxu0 0.0
    %3733 = vmatmul.mubr.f32.gmra.mrb[0].mxu0 %v2992
    %v3734 = vpop.f32.mrb[0].mxu0
    %v3735 = vadd.f32 0.0, %v3734
    %v3736 = vpop.f32.mrb[0].mxu0
    %3737 = vdwg.mxu0
    %v3739 = vsel %vm437, %v3560, 0
    %v3742 = vsel %vm437, %v3635, 0
    %v3745 = vsel %vm437, %v3640, 0
    %3747 = vmatprep.subr.mxu0 0.0
    %3748 = vmatpush1.xpose.msra.mxu0 %v3742
    %3749 = vmatprep.subr.mxu0 0.0
    %3750 = vmatpush1.xpose.msra.mxu0 %v3745
    %3751 = vmatprep.subr.mxu0 0.0
    %3752 = vmatpush1.xpose.msra.mxu0 0.0
    %3753 = vmatprep.subr.mxu0 0.0
    %3754 = vmatpush1.xpose.msra.mxu0 0.0
    %3755 = vmatprep.subr.mxu0 0.0
    %3756 = vmatpush1.xpose.msra.mxu0 0.0
    %3757 = vmatprep.subr.mxu0 0.0
    %3758 = vmatpush1.xpose.msra.mxu0 0.0
    %3759 = vmatprep.subr.mxu0 0.0
    %3760 = vmatpush1.xpose.msra.mxu0 0.0
    %3761 = vmatprep.subr.mxu0 0.0
    %3762 = vmatpush1.xpose.msra.mxu0 0.0
    %3763 = vmatprep.subr.mxu0 0.0
    %3764 = vmatpush1.xpose.msra.mxu0 0.0
    %3765 = vmatprep.subr.mxu0 0.0
    %3766 = vmatpush1.xpose.msra.mxu0 0.0
    %3767 = vmatprep.subr.mxu0 0.0
    %3768 = vmatpush1.xpose.msra.mxu0 0.0
    %3769 = vmatprep.subr.mxu0 0.0
    %3770 = vmatpush1.xpose.msra.mxu0 0.0
    %3771 = vmatprep.subr.mxu0 0.0
    %3772 = vmatpush1.xpose.msra.mxu0 0.0
    %3773 = vmatprep.subr.mxu0 0.0
    %3774 = vmatpush1.xpose.msra.mxu0 0.0
    %3775 = vmatprep.subr.mxu0 0.0
    %3776 = vmatpush1.xpose.msra.mxu0 0.0
    %3777 = vmatprep.subr.mxu0 0.0
    %3778 = vmatpush1.xpose.msra.mxu0 0.0
    %3779 = vmatprep.subr.mxu0 0.0
    %3780 = vmatpush1.xpose.msra.mxu0 0.0
    %3781 = vmatprep.subr.mxu0 0.0
    %3782 = vmatpush1.xpose.msra.mxu0 0.0
    %3783 = vmatprep.subr.mxu0 0.0
    %3784 = vmatpush1.xpose.msra.mxu0 0.0
    %3785 = vmatprep.subr.mxu0 0.0
    %3786 = vmatpush1.xpose.msra.mxu0 0.0
    %3787 = vmatprep.subr.mxu0 0.0
    %3788 = vmatpush1.xpose.msra.mxu0 0.0
    %3789 = vmatprep.subr.mxu0 0.0
    %3790 = vmatpush1.xpose.msra.mxu0 0.0
    %3791 = vmatprep.subr.mxu0 0.0
    %3792 = vmatpush1.xpose.msra.mxu0 0.0
    %3793 = vmatprep.subr.mxu0 0.0
    %3794 = vmatpush1.xpose.msra.mxu0 0.0
    %3795 = vmatprep.subr.mxu0 0.0
    %3796 = vmatpush1.xpose.msra.mxu0 0.0
    %3797 = vmatprep.subr.mxu0 0.0
    %3798 = vmatpush1.xpose.msra.mxu0 0.0
    %3799 = vmatprep.subr.mxu0 0.0
    %3800 = vmatpush1.xpose.msra.mxu0 0.0
    %3801 = vmatprep.subr.mxu0 0.0
    %3802 = vmatpush1.xpose.msra.mxu0 0.0
    %3803 = vmatprep.subr.mxu0 0.0
    %3804 = vmatpush1.xpose.msra.mxu0 0.0
    %3805 = vmatprep.subr.mxu0 0.0
    %3806 = vmatpush1.xpose.msra.mxu0 0.0
    %3807 = vmatprep.subr.mxu0 0.0
    %3808 = vmatpush1.xpose.msra.mxu0 0.0
    %3809 = vmatprep.subr.mxu0 0.0
    %3810 = vmatpush1.xpose.msra.mxu0 0.0
    %3811 = vmatprep.mubr.f32.mxu0 0.0
    %3812 = vmatmul.mubr.f32.gmra.mrb[0].mxu0 %v3739
    %v3813 = vpop.f32.mrb[0].mxu0
    %v3814 = vadd.f32 0.0, %v3813
    %v3815 = vpop.f32.mrb[0].mxu0
    %3816 = vdwg.mxu0
    %v3818 = vsel %vm437, %v3565, 0
    %v3821 = vsel %vm437, %v3645, 0
    %v3824 = vsel %vm437, %v3650, 0
    %3826 = vmatprep.subr.mxu0 0.0
    %3827 = vmatpush1.xpose.msra.mxu0 %v3821
    %3828 = vmatprep.subr.mxu0 0.0
    %3829 = vmatpush1.xpose.msra.mxu0 %v3824
    %3830 = vmatprep.subr.mxu0 0.0
    %3831 = vmatpush1.xpose.msra.mxu0 0.0
    %3832 = vmatprep.subr.mxu0 0.0
    %3833 = vmatpush1.xpose.msra.mxu0 0.0
    %3834 = vmatprep.subr.mxu0 0.0
    %3835 = vmatpush1.xpose.msra.mxu0 0.0
    %3836 = vmatprep.subr.mxu0 0.0
    %3837 = vmatpush1.xpose.msra.mxu0 0.0
    %3838 = vmatprep.subr.mxu0 0.0
    %3839 = vmatpush1.xpose.msra.mxu0 0.0
    %3840 = vmatprep.subr.mxu0 0.0
    %3841 = vmatpush1.xpose.msra.mxu0 0.0
    %3842 = vmatprep.subr.mxu0 0.0
    %3843 = vmatpush1.xpose.msra.mxu0 0.0
    %3844 = vmatprep.subr.mxu0 0.0
    %3845 = vmatpush1.xpose.msra.mxu0 0.0
    %3846 = vmatprep.subr.mxu0 0.0
    %3847 = vmatpush1.xpose.msra.mxu0 0.0
    %3848 = vmatprep.subr.mxu0 0.0
    %3849 = vmatpush1.xpose.msra.mxu0 0.0
    %3850 = vmatprep.subr.mxu0 0.0
    %3851 = vmatpush1.xpose.msra.mxu0 0.0
    %3852 = vmatprep.subr.mxu0 0.0
    %3853 = vmatpush1.xpose.msra.mxu0 0.0
    %3854 = vmatprep.subr.mxu0 0.0
    %3855 = vmatpush1.xpose.msra.mxu0 0.0
    %3856 = vmatprep.subr.mxu0 0.0
    %3857 = vmatpush1.xpose.msra.mxu0 0.0
    %3858 = vmatprep.subr.mxu0 0.0
    %3859 = vmatpush1.xpose.msra.mxu0 0.0
    %3860 = vmatprep.subr.mxu0 0.0
    %3861 = vmatpush1.xpose.msra.mxu0 0.0
    %3862 = vmatprep.subr.mxu0 0.0
    %3863 = vmatpush1.xpose.msra.mxu0 0.0
    %3864 = vmatprep.subr.mxu0 0.0
    %3865 = vmatpush1.xpose.msra.mxu0 0.0
    %3866 = vmatprep.subr.mxu0 0.0
    %3867 = vmatpush1.xpose.msra.mxu0 0.0
    %3868 = vmatprep.subr.mxu0 0.0
    %3869 = vmatpush1.xpose.msra.mxu0 0.0
    %3870 = vmatprep.subr.mxu0 0.0
    %3871 = vmatpush1.xpose.msra.mxu0 0.0
    %3872 = vmatprep.subr.mxu0 0.0
    %3873 = vmatpush1.xpose.msra.mxu0 0.0
    %3874 = vmatprep.subr.mxu0 0.0
    %3875 = vmatpush1.xpose.msra.mxu0 0.0
    %3876 = vmatprep.subr.mxu0 0.0
    %3877 = vmatpush1.xpose.msra.mxu0 0.0
    %3878 = vmatprep.subr.mxu0 0.0
    %3879 = vmatpush1.xpose.msra.mxu0 0.0
    %3880 = vmatprep.subr.mxu0 0.0
    %3881 = vmatpush1.xpose.msra.mxu0 0.0
    %3882 = vmatprep.subr.mxu0 0.0
    %3883 = vmatpush1.xpose.msra.mxu0 0.0
    %3884 = vmatprep.subr.mxu0 0.0
    %3885 = vmatpush1.xpose.msra.mxu0 0.0
    %3886 = vmatprep.subr.mxu0 0.0
    %3887 = vmatpush1.xpose.msra.mxu0 0.0
    %3888 = vmatprep.subr.mxu0 0.0
    %3889 = vmatpush1.xpose.msra.mxu0 0.0
    %3890 = vmatprep.mubr.f32.mxu0 0.0
    %3891 = vmatmul.mubr.f32.gmra.mrb[0].mxu0 %v3818
    %v3892 = vpop.f32.mrb[0].mxu0
    %v3893 = vadd.f32 0.0, %v3892
    %v3894 = vpop.f32.mrb[0].mxu0
    %3895 = vdwg.mxu0
    %v3896 = vmul.f32 %v3814, 0.35355338
    %v3897 = vmul.f32 %v3893, 0.35355338
    %v3898 = vsel %vm3324, %v3896, -inf
    %3899 = vmax.xlane.f32.xlu0 %v3898
    %v3900 = vpop.xlane.xlu0 %3899
    %v3901 = vsel %vm3324, %v3897, -inf
    %3902 = vmax.xlane.f32.xlu0 %v3901
    %v3903 = vpop.xlane.xlu0 %3902
    %v3904 = vsub.f32 %v3896, %v3900
    %v3905 = vsub.f32 %v3897, %v3903
    %v3906 = vmul.f32 %v3904, 1.442695
    %v3907 = vpow.pop %v3906
    %v3908 = vmul.f32 %v3905, 1.442695
    %v3909 = vpow.pop %v3908
    %v3910 = vsel %vm3324, %v3907, 0.0
    %3911 = vadd.xlane.f32.xlu0 %v3910
    %v3912 = vpop.xlane.xlu0 %3911
    %v3913 = vsel %vm3324, %v3909, 0.0
    %3914 = vadd.xlane.f32.xlu0 %v3913
    %v3915 = vpop.xlane.xlu0 %3914
    %v3916 = vrcp.pop %v3912
    %v3917 = vrcp.pop %v3915
    %v3918 = vmul.f32 %v3907, %v3916
    %v3919 = vmul.f32 %v3909, %v3917
    %v3921 = vsel %vm3324, %v3918, 0
    %3923 = vmatprep.subr.mxu0 0.0
    %3924 = vmatpush1.msra.mxu0 %v3720
    %3925 = vmatprep.subr.mxu0 0.0
    %3926 = vmatpush1.msra.mxu0 %v3725
    %3927 = vmatprep.subr.mxu0 0.0
    %3928 = vmatpush1.msra.mxu0 0.0
    %3929 = vmatprep.subr.mxu0 0.0
    %3930 = vmatpush1.msra.mxu0 0.0
    %3931 = vmatprep.subr.mxu0 0.0
    %3932 = vmatpush1.msra.mxu0 0.0
    %3933 = vmatprep.subr.mxu0 0.0
    %3934 = vmatpush1.msra.mxu0 0.0
    %3935 = vmatprep.subr.mxu0 0.0
    %3936 = vmatpush1.msra.mxu0 0.0
    %3937 = vmatprep.subr.mxu0 0.0
    %3938 = vmatpush1.msra.mxu0 0.0
    %3939 = vmatprep.subr.mxu0 0.0
    %3940 = vmatpush1.msra.mxu0 0.0
    %3941 = vmatprep.subr.mxu0 0.0
    %3942 = vmatpush1.msra.mxu0 0.0
    %3943 = vmatprep.subr.mxu0 0.0
    %3944 = vmatpush1.msra.mxu0 0.0
    %3945 = vmatprep.subr.mxu0 0.0
    %3946 = vmatpush1.msra.mxu0 0.0
    %3947 = vmatprep.subr.mxu0 0.0
    %3948 = vmatpush1.msra.mxu0 0.0
    %3949 = vmatprep.subr.mxu0 0.0
    %3950 = vmatpush1.msra.mxu0 0.0
    %3951 = vmatprep.subr.mxu0 0.0
    %3952 = vmatpush1.msra.mxu0 0.0
    %3953 = vmatprep.subr.mxu0 0.0
    %3954 = vmatpush1.msra.mxu0 0.0
    %3955 = vmatprep.subr.mxu0 0.0
    %3956 = vmatpush1.msra.mxu0 0.0
    %3957 = vmatprep.subr.mxu0 0.0
    %3958 = vmatpush1.msra.mxu0 0.0
    %3959 = vmatprep.subr.mxu0 0.0
    %3960 = vmatpush1.msra.mxu0 0.0
    %3961 = vmatprep.subr.mxu0 0.0
    %3962 = vmatpush1.msra.mxu0 0.0
    %3963 = vmatprep.subr.mxu0 0.0
    %3964 = vmatpush1.msra.mxu0 0.0
    %3965 = vmatprep.subr.mxu0 0.0
    %3966 = vmatpush1.msra.mxu0 0.0
    %3967 = vmatprep.subr.mxu0 0.0
    %3968 = vmatpush1.msra.mxu0 0.0
    %3969 = vmatprep.subr.mxu0 0.0
    %3970 = vmatpush1.msra.mxu0 0.0
    %3971 = vmatprep.subr.mxu0 0.0
    %3972 = vmatpush1.msra.mxu0 0.0
    %3973 = vmatprep.subr.mxu0 0.0
    %3974 = vmatpush1.msra.mxu0 0.0
    %3975 = vmatprep.subr.mxu0 0.0
    %3976 = vmatpush1.msra.mxu0 0.0
    %3977 = vmatprep.subr.mxu0 0.0
    %3978 = vmatpush1.msra.mxu0 0.0
    %3979 = vmatprep.subr.mxu0 0.0
    %3980 = vmatpush1.msra.mxu0 0.0
    %3981 = vmatprep.subr.mxu0 0.0
    %3982 = vmatpush1.msra.mxu0 0.0
    %3983 = vmatprep.subr.mxu0 0.0
    %3984 = vmatpush1.msra.mxu0 0.0
    %3985 = vmatprep.subr.mxu0 0.0
    %3986 = vmatpush1.msra.mxu0 0.0
    %3987 = vmatprep.mubr.f32.mxu0 0.0
    %3988 = vmatmul.mubr.f32.gmra.mrb[0].mxu0 %v3921
    %v3989 = vpop.f32.mrb[0].mxu0
    %v3990 = vadd.f32 0.0, %v3989
    %v3991 = vpop.f32.mrb[0].mxu0
    %3992 = vdwg.mxu0
    %v3994 = vsel %vm3324, %v3919, 0
    %3996 = vmatprep.subr.mxu0 0.0
    %3997 = vmatpush1.msra.mxu0 %v3730
    %3998 = vmatprep.subr.mxu0 0.0
    %3999 = vmatpush1.msra.mxu0 %v3735
    %4000 = vmatprep.subr.mxu0 0.0
    %4001 = vmatpush1.msra.mxu0 0.0
    %4002 = vmatprep.subr.mxu0 0.0
    %4003 = vmatpush1.msra.mxu0 0.0
    %4004 = vmatprep.subr.mxu0 0.0
    %4005 = vmatpush1.msra.mxu0 0.0
    %4006 = vmatprep.subr.mxu0 0.0
    %4007 = vmatpush1.msra.mxu0 0.0
    %4008 = vmatprep.subr.mxu0 0.0
    %4009 = vmatpush1.msra.mxu0 0.0
    %4010 = vmatprep.subr.mxu0 0.0
    %4011 = vmatpush1.msra.mxu0 0.0
    %4012 = vmatprep.subr.mxu0 0.0
    %4013 = vmatpush1.msra.mxu0 0.0
    %4014 = vmatprep.subr.mxu0 0.0
    %4015 = vmatpush1.msra.mxu0 0.0
    %4016 = vmatprep.subr.mxu0 0.0
    %4017 = vmatpush1.msra.mxu0 0.0
    %4018 = vmatprep.subr.mxu0 0.0
    %4019 = vmatpush1.msra.mxu0 0.0
    %4020 = vmatprep.subr.mxu0 0.0
    %4021 = vmatpush1.msra.mxu0 0.0
    %4022 = vmatprep.subr.mxu0 0.0
    %4023 = vmatpush1.msra.mxu0 0.0
    %4024 = vmatprep.subr.mxu0 0.0
    %4025 = vmatpush1.msra.mxu0 0.0
    %4026 = vmatprep.subr.mxu0 0.0
    %4027 = vmatpush1.msra.mxu0 0.0
    %4028 = vmatprep.subr.mxu0 0.0
    %4029 = vmatpush1.msra.mxu0 0.0
    %4030 = vmatprep.subr.mxu0 0.0
    %4031 = vmatpush1.msra.mxu0 0.0
    %4032 = vmatprep.subr.mxu0 0.0
    %4033 = vmatpush1.msra.mxu0 0.0
    %4034 = vmatprep.subr.mxu0 0.0
    %4035 = vmatpush1.msra.mxu0 0.0
    %4036 = vmatprep.subr.mxu0 0.0
    %4037 = vmatpush1.msra.mxu0 0.0
    %4038 = vmatprep.subr.mxu0 0.0
    %4039 = vmatpush1.msra.mxu0 0.0
    %4040 = vmatprep.subr.mxu0 0.0
    %4041 = vmatpush1.msra.mxu0 0.0
    %4042 = vmatprep.subr.mxu0 0.0
    %4043 = vmatpush1.msra.mxu0 0.0
    %4044 = vmatprep.subr.mxu0 0.0
    %4045 = vmatpush1.msra.mxu0 0.0
    %4046 = vmatprep.subr.mxu0 0.0
    %4047 = vmatpush1.msra.mxu0 0.0
    %4048 = vmatprep.subr.mxu0 0.0
    %4049 = vmatpush1.msra.mxu0 0.0
    %4050 = vmatprep.subr.mxu0 0.0
    %4051 = vmatpush1.msra.mxu0 0.0
    %4052 = vmatprep.subr.mxu0 0.0
    %4053 = vmatpush1.msra.mxu0 0.0
    %4054 = vmatprep.subr.mxu0 0.0
    %4055 = vmatpush1.msra.mxu0 0.0
    %4056 = vmatprep.subr.mxu0 0.0
    %4057 = vmatpush1.msra.mxu0 0.0
    %4058 = vmatprep.subr.mxu0 0.0
    %4059 = vmatpush1.msra.mxu0 0.0
    %4060 = vmatprep.mubr.f32.mxu0 0.0
    %4061 = vmatmul.mubr.f32.gmra.mrb[0].mxu0 %v3994
    %v4062 = vpop.f32.mrb[0].mxu0
    %v4063 = vadd.f32 0.0, %v4062
    %v4064 = vpop.f32.mrb[0].mxu0
    %4065 = vdwg.mxu0
    %v4067 = vsel %vm437, %v3990, 0
    %v4070 = vsel %vm437, %v4063, 0
    %4072 = vmatprep.subr.mxu0 0.0
    %4073 = vmatpush1.msra.mxu0 %v2898
    %4074 = vmatprep.subr.mxu0 0.0
    %4075 = vmatpush1.msra.mxu0 0.0
    %4076 = vmatprep.subr.mxu0 0.0
    %4077 = vmatpush1.msra.mxu0 0.0
    %4078 = vmatprep.subr.mxu0 0.0
    %4079 = vmatpush1.msra.mxu0 0.0
    %4080 = vmatprep.subr.mxu0 0.0
    %4081 = vmatpush1.msra.mxu0 0.0
    %4082 = vmatprep.subr.mxu0 0.0
    %4083 = vmatpush1.msra.mxu0 0.0
    %4084 = vmatprep.subr.mxu0 0.0
    %4085 = vmatpush1.msra.mxu0 0.0
    %4086 = vmatprep.subr.mxu0 0.0
    %4087 = vmatpush1.msra.mxu0 0.0
    %4088 = vmatprep.subr.mxu0 0.0
    %4089 = vmatpush1.msra.mxu0 0.0
    %4090 = vmatprep.subr.mxu0 0.0
    %4091 = vmatpush1.msra.mxu0 0.0
    %4092 = vmatprep.subr.mxu0 0.0
    %4093 = vmatpush1.msra.mxu0 0.0
    %4094 = vmatprep.subr.mxu0 0.0
    %4095 = vmatpush1.msra.mxu0 0.0
    %4096 = vmatprep.subr.mxu0 0.0
    %4097 = vmatpush1.msra.mxu0 0.0
    %4098 = vmatprep.subr.mxu0 0.0
    %4099 = vmatpush1.msra.mxu0 0.0
    %4100 = vmatprep.subr.mxu0 0.0
    %4101 = vmatpush1.msra.mxu0 0.0
    %4102 = vmatprep.subr.mxu0 0.0
    %4103 = vmatpush1.msra.mxu0 0.0
    %4104 = vmatprep.subr.mxu0 0.0
    %4105 = vmatpush1.msra.mxu0 0.0
    %4106 = vmatprep.subr.mxu0 0.0
    %4107 = vmatpush1.msra.mxu0 0.0
    %4108 = vmatprep.subr.mxu0 0.0
    %4109 = vmatpush1.msra.mxu0 0.0
    %4110 = vmatprep.subr.mxu0 0.0
    %4111 = vmatpush1.msra.mxu0 0.0
    %4112 = vmatprep.subr.mxu0 0.0
    %4113 = vmatpush1.msra.mxu0 0.0
    %4114 = vmatprep.subr.mxu0 0.0
    %4115 = vmatpush1.msra.mxu0 0.0
    %4116 = vmatprep.subr.mxu0 0.0
    %4117 = vmatpush1.msra.mxu0 0.0
    %4118 = vmatprep.subr.mxu0 0.0
    %4119 = vmatpush1.msra.mxu0 0.0
    %4120 = vmatprep.subr.mxu0 0.0
    %4121 = vmatpush1.msra.mxu0 0.0
    %4122 = vmatprep.subr.mxu0 0.0
    %4123 = vmatpush1.msra.mxu0 0.0
    %4124 = vmatprep.subr.mxu0 0.0
    %4125 = vmatpush1.msra.mxu0 0.0
    %4126 = vmatprep.subr.mxu0 0.0
    %4127 = vmatpush1.msra.mxu0 0.0
    %4128 = vmatprep.subr.mxu0 0.0
    %4129 = vmatpush1.msra.mxu0 0.0
    %4130 = vmatprep.subr.mxu0 0.0
    %4131 = vmatpush1.msra.mxu0 0.0
    %4132 = vmatprep.subr.mxu0 0.0
    %4133 = vmatpush1.msra.mxu0 0.0
    %4134 = vmatprep.subr.mxu0 0.0
    %4135 = vmatpush1.msra.mxu0 0.0
    %4136 = vmatprep.mubr.f32.mxu0 0.0
    %4137 = vmatmul.mubr.f32.gmra.mrb[0].mxu0 %v4067
    %v4138 = vpop.f32.mrb[0].mxu0
    %v4139 = vadd.f32 0.0, %v4138
    %v4140 = vpop.f32.mrb[0].mxu0
    %4141 = vmatprep.mubr.f32.mxu0 0.0
    %4142 = vmatmul.mubr.f32.gmra.mrb[0].mxu0 %v4070
    %v4143 = vpop.f32.mrb[0].mxu0
    %v4144 = vadd.f32 0.0, %v4143
    %v4145 = vpop.f32.mrb[0].mxu0
    %4146 = vdwg.mxu0
    %v4148 = vsel %vm437, %v3417, 0
    %v4151 = vsel %vm437, %v3490, 0
    %4153 = vmatprep.subr.mxu0 0.0
    %4154 = vmatpush1.msra.mxu0 %v2897
    %4155 = vmatprep.subr.mxu0 0.0
    %4156 = vmatpush1.msra.mxu0 0.0
    %4157 = vmatprep.subr.mxu0 0.0
    %4158 = vmatpush1.msra.mxu0 0.0
    %4159 = vmatprep.subr.mxu0 0.0
    %4160 = vmatpush1.msra.mxu0 0.0
    %4161 = vmatprep.subr.mxu0 0.0
    %4162 = vmatpush1.msra.mxu0 0.0
    %4163 = vmatprep.subr.mxu0 0.0
    %4164 = vmatpush1.msra.mxu0 0.0
    %4165 = vmatprep.subr.mxu0 0.0
    %4166 = vmatpush1.msra.mxu0 0.0
    %4167 = vmatprep.subr.mxu0 0.0
    %4168 = vmatpush1.msra.mxu0 0.0
    %4169 = vmatprep.subr.mxu0 0.0
    %4170 = vmatpush1.msra.mxu0 0.0
    %4171 = vmatprep.subr.mxu0 0.0
    %4172 = vmatpush1.msra.mxu0 0.0
    %4173 = vmatprep.subr.mxu0 0.0
    %4174 = vmatpush1.msra.mxu0 0.0
    %4175 = vmatprep.subr.mxu0 0.0
    %4176 = vmatpush1.msra.mxu0 0.0
    %4177 = vmatprep.subr.mxu0 0.0
    %4178 = vmatpush1.msra.mxu0 0.0
    %4179 = vmatprep.subr.mxu0 0.0
    %4180 = vmatpush1.msra.mxu0 0.0
    %4181 = vmatprep.subr.mxu0 0.0
    %4182 = vmatpush1.msra.mxu0 0.0
    %4183 = vmatprep.subr.mxu0 0.0
    %4184 = vmatpush1.msra.mxu0 0.0
    %4185 = vmatprep.subr.mxu0 0.0
    %4186 = vmatpush1.msra.mxu0 0.0
    %4187 = vmatprep.subr.mxu0 0.0
    %4188 = vmatpush1.msra.mxu0 0.0
    %4189 = vmatprep.subr.mxu0 0.0
    %4190 = vmatpush1.msra.mxu0 0.0
    %4191 = vmatprep.subr.mxu0 0.0
    %4192 = vmatpush1.msra.mxu0 0.0
    %4193 = vmatprep.subr.mxu0 0.0
    %4194 = vmatpush1.msra.mxu0 0.0
    %4195 = vmatprep.subr.mxu0 0.0
    %4196 = vmatpush1.msra.mxu0 0.0
    %4197 = vmatprep.subr.mxu0 0.0
    %4198 = vmatpush1.msra.mxu0 0.0
    %4199 = vmatprep.subr.mxu0 0.0
    %4200 = vmatpush1.msra.mxu0 0.0
    %4201 = vmatprep.subr.mxu0 0.0
    %4202 = vmatpush1.msra.mxu0 0.0
    %4203 = vmatprep.subr.mxu0 0.0
    %4204 = vmatpush1.msra.mxu0 0.0
    %4205 = vmatprep.subr.mxu0 0.0
    %4206 = vmatpush1.msra.mxu0 0.0
    %4207 = vmatprep.subr.mxu0 0.0
    %4208 = vmatpush1.msra.mxu0 0.0
    %4209 = vmatprep.subr.mxu0 0.0
    %4210 = vmatpush1.msra.mxu0 0.0
    %4211 = vmatprep.subr.mxu0 0.0
    %4212 = vmatpush1.msra.mxu0 0.0
    %4213 = vmatprep.subr.mxu0 0.0
    %4214 = vmatpush1.msra.mxu0 0.0
    %4215 = vmatprep.subr.mxu0 0.0
    %4216 = vmatpush1.msra.mxu0 0.0
    %4217 = vmatprep.mubr.f32.mxu0 0.0
    %4218 = vmatmul.mubr.f32.gmra.mrb[0].mxu0 %v4148
    %v4219 = vpop.f32.mrb[0].mxu0
    %v4220 = vadd.f32 %v4139, %v4219
    %v4221 = vpop.f32.mrb[0].mxu0
    %4222 = vmatprep.mubr.f32.mxu0 0.0
    %4223 = vmatmul.mubr.f32.gmra.mrb[0].mxu0 %v4151
    %v4224 = vpop.f32.mrb[0].mxu0
    %v4225 = vadd.f32 %v4144, %v4224
    %v4226 = vpop.f32.mrb[0].mxu0
    %4227 = vdwg.mxu0
    %4228 = vmatprep.subr.mxu0 0.0
    %4229 = vmatpush1.msra.mxu0 %v2857
    %4230 = vmatprep.subr.mxu0 0.0
    %4231 = vmatpush1.msra.mxu0 %v2858
    %4232 = vmatprep.subr.mxu0 0.0
    %4233 = vmatpush1.msra.mxu0 %v2859
    %4234 = vmatprep.subr.mxu0 0.0
    %4235 = vmatpush1.msra.mxu0 %v2860
    %4236 = vmatprep.subr.mxu0 0.0
    %4237 = vmatpush1.msra.mxu0 0.0
    %4238 = vmatprep.subr.mxu0 0.0
    %4239 = vmatpush1.msra.mxu0 0.0
    %4240 = vmatprep.subr.mxu0 0.0
    %4241 = vmatpush1.msra.mxu0 0.0
    %4242 = vmatprep.subr.mxu0 0.0
    %4243 = vmatpush1.msra.mxu0 0.0
    %4244 = vmatprep.subr.mxu0 0.0
    %4245 = vmatpush1.msra.mxu0 0.0
    %4246 = vmatprep.subr.mxu0 0.0
    %4247 = vmatpush1.msra.mxu0 0.0
    %4248 = vmatprep.subr.mxu0 0.0
    %4249 = vmatpush1.msra.mxu0 0.0
    %4250 = vmatprep.subr.mxu0 0.0
    %4251 = vmatpush1.msra.mxu0 0.0
    %4252 = vmatprep.subr.mxu0 0.0
    %4253 = vmatpush1.msra.mxu0 0.0
    %4254 = vmatprep.subr.mxu0 0.0
    %4255 = vmatpush1.msra.mxu0 0.0
    %4256 = vmatprep.subr.mxu0 0.0
    %4257 = vmatpush1.msra.mxu0 0.0
    %4258 = vmatprep.subr.mxu0 0.0
    %4259 = vmatpush1.msra.mxu0 0.0
    %4260 = vmatprep.subr.mxu0 0.0
    %4261 = vmatpush1.msra.mxu0 0.0
    %4262 = vmatprep.subr.mxu0 0.0
    %4263 = vmatpush1.msra.mxu0 0.0
    %4264 = vmatprep.subr.mxu0 0.0
    %4265 = vmatpush1.msra.mxu0 0.0
    %4266 = vmatprep.subr.mxu0 0.0
    %4267 = vmatpush1.msra.mxu0 0.0
    %4268 = vmatprep.subr.mxu0 0.0
    %4269 = vmatpush1.msra.mxu0 0.0
    %4270 = vmatprep.subr.mxu0 0.0
    %4271 = vmatpush1.msra.mxu0 0.0
    %4272 = vmatprep.subr.mxu0 0.0
    %4273 = vmatpush1.msra.mxu0 0.0
    %4274 = vmatprep.subr.mxu0 0.0
    %4275 = vmatpush1.msra.mxu0 0.0
    %4276 = vmatprep.subr.mxu0 0.0
    %4277 = vmatpush1.msra.mxu0 0.0
    %4278 = vmatprep.subr.mxu0 0.0
    %4279 = vmatpush1.msra.mxu0 0.0
    %4280 = vmatprep.subr.mxu0 0.0
    %4281 = vmatpush1.msra.mxu0 0.0
    %4282 = vmatprep.subr.mxu0 0.0
    %4283 = vmatpush1.msra.mxu0 0.0
    %4284 = vmatprep.subr.mxu0 0.0
    %4285 = vmatpush1.msra.mxu0 0.0
    %4286 = vmatprep.subr.mxu0 0.0
    %4287 = vmatpush1.msra.mxu0 0.0
    %4288 = vmatprep.subr.mxu0 0.0
    %4289 = vmatpush1.msra.mxu0 0.0
    %4290 = vmatprep.subr.mxu0 0.0
    %4291 = vmatpush1.msra.mxu0 0.0
    %4292 = vmatprep.mubr.f32.mxu0 0.0
    %4293 = vmatmul.mubr.f32.gmra.mrb[0].mxu0 %v2902
    %v4294 = vpop.f32.mrb[0].mxu0
    %v4295 = vadd.f32 0.0, %v4294
    %v4296 = vpop.f32.mrb[0].mxu0
    %4297 = vmatprep.mubr.f32.mxu0 0.0
    %4298 = vmatmul.mubr.f32.gmra.mrb[0].mxu0 %v2905
    %v4299 = vpop.f32.mrb[0].mxu0
    %v4300 = vadd.f32 0.0, %v4299
    %v4301 = vpop.f32.mrb[0].mxu0
    %4302 = vdwg.mxu0
    %4303 = vmatprep.subr.mxu0 0.0
    %4304 = vmatpush1.msra.mxu0 %v2873
    %4305 = vmatprep.subr.mxu0 0.0
    %4306 = vmatpush1.msra.mxu0 %v2874
    %4307 = vmatprep.subr.mxu0 0.0
    %4308 = vmatpush1.msra.mxu0 %v2875
    %4309 = vmatprep.subr.mxu0 0.0
    %4310 = vmatpush1.msra.mxu0 %v2876
    %4311 = vmatprep.subr.mxu0 0.0
    %4312 = vmatpush1.msra.mxu0 0.0
    %4313 = vmatprep.subr.mxu0 0.0
    %4314 = vmatpush1.msra.mxu0 0.0
    %4315 = vmatprep.subr.mxu0 0.0
    %4316 = vmatpush1.msra.mxu0 0.0
    %4317 = vmatprep.subr.mxu0 0.0
    %4318 = vmatpush1.msra.mxu0 0.0
    %4319 = vmatprep.subr.mxu0 0.0
    %4320 = vmatpush1.msra.mxu0 0.0
    %4321 = vmatprep.subr.mxu0 0.0
    %4322 = vmatpush1.msra.mxu0 0.0
    %4323 = vmatprep.subr.mxu0 0.0
    %4324 = vmatpush1.msra.mxu0 0.0
    %4325 = vmatprep.subr.mxu0 0.0
    %4326 = vmatpush1.msra.mxu0 0.0
    %4327 = vmatprep.subr.mxu0 0.0
    %4328 = vmatpush1.msra.mxu0 0.0
    %4329 = vmatprep.subr.mxu0 0.0
    %4330 = vmatpush1.msra.mxu0 0.0
    %4331 = vmatprep.subr.mxu0 0.0
    %4332 = vmatpush1.msra.mxu0 0.0
    %4333 = vmatprep.subr.mxu0 0.0
    %4334 = vmatpush1.msra.mxu0 0.0
    %4335 = vmatprep.subr.mxu0 0.0
    %4336 = vmatpush1.msra.mxu0 0.0
    %4337 = vmatprep.subr.mxu0 0.0
    %4338 = vmatpush1.msra.mxu0 0.0
    %4339 = vmatprep.subr.mxu0 0.0
    %4340 = vmatpush1.msra.mxu0 0.0
    %4341 = vmatprep.subr.mxu0 0.0
    %4342 = vmatpush1.msra.mxu0 0.0
    %4343 = vmatprep.subr.mxu0 0.0
    %4344 = vmatpush1.msra.mxu0 0.0
    %4345 = vmatprep.subr.mxu0 0.0
    %4346 = vmatpush1.msra.mxu0 0.0
    %4347 = vmatprep.subr.mxu0 0.0
    %4348 = vmatpush1.msra.mxu0 0.0
    %4349 = vmatprep.subr.mxu0 0.0
    %4350 = vmatpush1.msra.mxu0 0.0
    %4351 = vmatprep.subr.mxu0 0.0
    %4352 = vmatpush1.msra.mxu0 0.0
    %4353 = vmatprep.subr.mxu0 0.0
    %4354 = vmatpush1.msra.mxu0 0.0
    %4355 = vmatprep.subr.mxu0 0.0
    %4356 = vmatpush1.msra.mxu0 0.0
    %4357 = vmatprep.subr.mxu0 0.0
    %4358 = vmatpush1.msra.mxu0 0.0
    %4359 = vmatprep.subr.mxu0 0.0
    %4360 = vmatpush1.msra.mxu0 0.0
    %4361 = vmatprep.subr.mxu0 0.0
    %4362 = vmatpush1.msra.mxu0 0.0
    %4363 = vmatprep.subr.mxu0 0.0
    %4364 = vmatpush1.msra.mxu0 0.0
    %4365 = vmatprep.subr.mxu0 0.0
    %4366 = vmatpush1.msra.mxu0 0.0
    %4367 = vmatprep.mubr.f32.mxu0 0.0
    %4368 = vmatmul.mubr.f32.gmra.mrb[0].mxu0 %v2983
    %v4369 = vpop.f32.mrb[0].mxu0
    %v4370 = vadd.f32 0.0, %v4369
    %v4371 = vpop.f32.mrb[0].mxu0
    %4372 = vmatprep.mubr.f32.mxu0 0.0
    %4373 = vmatmul.mubr.f32.gmra.mrb[0].mxu0 %v2986
    %v4374 = vpop.f32.mrb[0].mxu0
    %v4375 = vadd.f32 0.0, %v4374
    %v4376 = vpop.f32.mrb[0].mxu0
    %4377 = vmatprep.mubr.f32.mxu0 0.0
    %4378 = vmatmul.mubr.f32.gmra.mrb[0].mxu0 %v2989
    %v4379 = vpop.f32.mrb[0].mxu0
    %v4380 = vadd.f32 0.0, %v4379
    %v4381 = vpop.f32.mrb[0].mxu0
    %4382 = vmatprep.mubr.f32.mxu0 0.0
    %4383 = vmatmul.mubr.f32.gmra.mrb[0].mxu0 %v2992
    %v4384 = vpop.f32.mrb[0].mxu0
    %v4385 = vadd.f32 0.0, %v4384
    %v4386 = vpop.f32.mrb[0].mxu0
    %4387 = vdwg.mxu0
    %4388 = vmatprep.subr.mxu0 0.0
    %4389 = vmatpush1.msra.mxu0 %v2889
    %4390 = vmatprep.subr.mxu0 0.0
    %4391 = vmatpush1.msra.mxu0 %v2890
    %4392 = vmatprep.subr.mxu0 0.0
    %4393 = vmatpush1.msra.mxu0 %v2891
    %4394 = vmatprep.subr.mxu0 0.0
    %4395 = vmatpush1.msra.mxu0 %v2892
    %4396 = vmatprep.subr.mxu0 0.0
    %4397 = vmatpush1.msra.mxu0 0.0
    %4398 = vmatprep.subr.mxu0 0.0
    %4399 = vmatpush1.msra.mxu0 0.0
    %4400 = vmatprep.subr.mxu0 0.0
    %4401 = vmatpush1.msra.mxu0 0.0
    %4402 = vmatprep.subr.mxu0 0.0
    %4403 = vmatpush1.msra.mxu0 0.0
    %4404 = vmatprep.subr.mxu0 0.0
    %4405 = vmatpush1.msra.mxu0 0.0
    %4406 = vmatprep.subr.mxu0 0.0
    %4407 = vmatpush1.msra.mxu0 0.0
    %4408 = vmatprep.subr.mxu0 0.0
    %4409 = vmatpush1.msra.mxu0 0.0
    %4410 = vmatprep.subr.mxu0 0.0
    %4411 = vmatpush1.msra.mxu0 0.0
    %4412 = vmatprep.subr.mxu0 0.0
    %4413 = vmatpush1.msra.mxu0 0.0
    %4414 = vmatprep.subr.mxu0 0.0
    %4415 = vmatpush1.msra.mxu0 0.0
    %4416 = vmatprep.subr.mxu0 0.0
    %4417 = vmatpush1.msra.mxu0 0.0
    %4418 = vmatprep.subr.mxu0 0.0
    %4419 = vmatpush1.msra.mxu0 0.0
    %4420 = vmatprep.subr.mxu0 0.0
    %4421 = vmatpush1.msra.mxu0 0.0
    %4422 = vmatprep.subr.mxu0 0.0
    %4423 = vmatpush1.msra.mxu0 0.0
    %4424 = vmatprep.subr.mxu0 0.0
    %4425 = vmatpush1.msra.mxu0 0.0
    %4426 = vmatprep.subr.mxu0 0.0
    %4427 = vmatpush1.msra.mxu0 0.0
    %4428 = vmatprep.subr.mxu0 0.0
    %4429 = vmatpush1.msra.mxu0 0.0
    %4430 = vmatprep.subr.mxu0 0.0
    %4431 = vmatpush1.msra.mxu0 0.0
    %4432 = vmatprep.subr.mxu0 0.0
    %4433 = vmatpush1.msra.mxu0 0.0
    %4434 = vmatprep.subr.mxu0 0.0
    %4435 = vmatpush1.msra.mxu0 0.0
    %4436 = vmatprep.subr.mxu0 0.0
    %4437 = vmatpush1.msra.mxu0 0.0
    %4438 = vmatprep.subr.mxu0 0.0
    %4439 = vmatpush1.msra.mxu0 0.0
    %4440 = vmatprep.subr.mxu0 0.0
    %4441 = vmatpush1.msra.mxu0 0.0
    %4442 = vmatprep.subr.mxu0 0.0
    %4443 = vmatpush1.msra.mxu0 0.0
    %4444 = vmatprep.subr.mxu0 0.0
    %4445 = vmatpush1.msra.mxu0 0.0
    %4446 = vmatprep.subr.mxu0 0.0
    %4447 = vmatpush1.msra.mxu0 0.0
    %4448 = vmatprep.subr.mxu0 0.0
    %4449 = vmatpush1.msra.mxu0 0.0
    %4450 = vmatprep.subr.mxu0 0.0
    %4451 = vmatpush1.msra.mxu0 0.0
    %4452 = vmatprep.mubr.f32.mxu0 0.0
    %4453 = vmatmul.mubr.f32.gmra.mrb[0].mxu0 %v2983
    %v4454 = vpop.f32.mrb[0].mxu0
    %v4455 = vadd.f32 0.0, %v4454
    %v4456 = vpop.f32.mrb[0].mxu0
    %4457 = vmatprep.mubr.f32.mxu0 0.0
    %4458 = vmatmul.mubr.f32.gmra.mrb[0].mxu0 %v2986
    %v4459 = vpop.f32.mrb[0].mxu0
    %v4460 = vadd.f32 0.0, %v4459
    %v4461 = vpop.f32.mrb[0].mxu0
    %4462 = vmatprep.mubr.f32.mxu0 0.0
    %4463 = vmatmul.mubr.f32.gmra.mrb[0].mxu0 %v2989
    %v4464 = vpop.f32.mrb[0].mxu0
    %v4465 = vadd.f32 0.0, %v4464
    %v4466 = vpop.f32.mrb[0].mxu0
    %4467 = vmatprep.mubr.f32.mxu0 0.0
    %4468 = vmatmul.mubr.f32.gmra.mrb[0].mxu0 %v2992
    %v4469 = vpop.f32.mrb[0].mxu0
    %v4470 = vadd.f32 0.0, %v4469
    %v4471 = vpop.f32.mrb[0].mxu0
    %4472 = vdwg.mxu0
    %v4474 = vsel %vm437, %v4295, 0
    %v4477 = vsel %vm437, %v4370, 0
    %v4480 = vsel %vm437, %v4375, 0
    %4482 = vmatprep.subr.mxu0 0.0
    %4483 = vmatpush1.xpose.msra.mxu0 %v4477
    %4484 = vmatprep.subr.mxu0 0.0
    %4485 = vmatpush1.xpose.msra.mxu0 %v4480
    %4486 = vmatprep.subr.mxu0 0.0
    %4487 = vmatpush1.xpose.msra.mxu0 0.0
    %4488 = vmatprep.subr.mxu0 0.0
    %4489 = vmatpush1.xpose.msra.mxu0 0.0
    %4490 = vmatprep.subr.mxu0 0.0
    %4491 = vmatpush1.xpose.msra.mxu0 0.0
    %4492 = vmatprep.subr.mxu0 0.0
    %4493 = vmatpush1.xpose.msra.mxu0 0.0
    %4494 = vmatprep.subr.mxu0 0.0
    %4495 = vmatpush1.xpose.msra.mxu0 0.0
    %4496 = vmatprep.subr.mxu0 0.0
    %4497 = vmatpush1.xpose.msra.mxu0 0.0
    %4498 = vmatprep.subr.mxu0 0.0
    %4499 = vmatpush1.xpose.msra.mxu0 0.0
    %4500 = vmatprep.subr.mxu0 0.0
    %4501 = vmatpush1.xpose.msra.mxu0 0.0
    %4502 = vmatprep.subr.mxu0 0.0
    %4503 = vmatpush1.xpose.msra.mxu0 0.0
    %4504 = vmatprep.subr.mxu0 0.0
    %4505 = vmatpush1.xpose.msra.mxu0 0.0
    %4506 = vmatprep.subr.mxu0 0.0
    %4507 = vmatpush1.xpose.msra.mxu0 0.0
    %4508 = vmatprep.subr.mxu0 0.0
    %4509 = vmatpush1.xpose.msra.mxu0 0.0
    %4510 = vmatprep.subr.mxu0 0.0
    %4511 = vmatpush1.xpose.msra.mxu0 0.0
    %4512 = vmatprep.subr.mxu0 0.0
    %4513 = vmatpush1.xpose.msra.mxu0 0.0
    %4514 = vmatprep.subr.mxu0 0.0
    %4515 = vmatpush1.xpose.msra.mxu0 0.0
    %4516 = vmatprep.subr.mxu0 0.0
    %4517 = vmatpush1.xpose.msra.mxu0 0.0
    %4518 = vmatprep.subr.mxu0 0.0
    %4519 = vmatpush1.xpose.msra.mxu0 0.0
    %4520 = vmatprep.subr.mxu0 0.0
    %4521 = vmatpush1.xpose.msra.mxu0 0.0
    %4522 = vmatprep.subr.mxu0 0.0
    %4523 = vmatpush1.xpose.msra.mxu0 0.0
    %4524 = vmatprep.subr.mxu0 0.0
    %4525 = vmatpush1.xpose.msra.mxu0 0.0
    %4526 = vmatprep.subr.mxu0 0.0
    %4527 = vmatpush1.xpose.msra.mxu0 0.0
    %4528 = vmatprep.subr.mxu0 0.0
    %4529 = vmatpush1.xpose.msra.mxu0 0.0
    %4530 = vmatprep.subr.mxu0 0.0
    %4531 = vmatpush1.xpose.msra.mxu0 0.0
    %4532 = vmatprep.subr.mxu0 0.0
    %4533 = vmatpush1.xpose.msra.mxu0 0.0
    %4534 = vmatprep.subr.mxu0 0.0
    %4535 = vmatpush1.xpose.msra.mxu0 0.0
    %4536 = vmatprep.subr.mxu0 0.0
    %4537 = vmatpush1.xpose.msra.mxu0 0.0
    %4538 = vmatprep.subr.mxu0 0.0
    %4539 = vmatpush1.xpose.msra.mxu0 0.0
    %4540 = vmatprep.subr.mxu0 0.0
    %4541 = vmatpush1.xpose.msra.mxu0 0.0
    %4542 = vmatprep.subr.mxu0 0.0
    %4543 = vmatpush1.xpose.msra.mxu0 0.0
    %4544 = vmatprep.subr.mxu0 0.0
    %4545 = vmatpush1.xpose.msra.mxu0 0.0
    %4546 = vmatprep.mubr.f32.mxu0 0.0
    %4547 = vmatmul.mubr.f32.gmra.mrb[0].mxu0 %v4474
    %v4548 = vpop.f32.mrb[0].mxu0
    %v4549 = vadd.f32 0.0, %v4548
    %v4550 = vpop.f32.mrb[0].mxu0
    %4551 = vdwg.mxu0
    %v4553 = vsel %vm437, %v4300, 0
    %v4556 = vsel %vm437, %v4380, 0
    %v4559 = vsel %vm437, %v4385, 0
    %4561 = vmatprep.subr.mxu0 0.0
    %4562 = vmatpush1.xpose.msra.mxu0 %v4556
    %4563 = vmatprep.subr.mxu0 0.0
    %4564 = vmatpush1.xpose.msra.mxu0 %v4559
    %4565 = vmatprep.subr.mxu0 0.0
    %4566 = vmatpush1.xpose.msra.mxu0 0.0
    %4567 = vmatprep.subr.mxu0 0.0
    %4568 = vmatpush1.xpose.msra.mxu0 0.0
    %4569 = vmatprep.subr.mxu0 0.0
    %4570 = vmatpush1.xpose.msra.mxu0 0.0
    %4571 = vmatprep.subr.mxu0 0.0
    %4572 = vmatpush1.xpose.msra.mxu0 0.0
    %4573 = vmatprep.subr.mxu0 0.0
    %4574 = vmatpush1.xpose.msra.mxu0 0.0
    %4575 = vmatprep.subr.mxu0 0.0
    %4576 = vmatpush1.xpose.msra.mxu0 0.0
    %4577 = vmatprep.subr.mxu0 0.0
    %4578 = vmatpush1.xpose.msra.mxu0 0.0
    %4579 = vmatprep.subr.mxu0 0.0
    %4580 = vmatpush1.xpose.msra.mxu0 0.0
    %4581 = vmatprep.subr.mxu0 0.0
    %4582 = vmatpush1.xpose.msra.mxu0 0.0
    %4583 = vmatprep.subr.mxu0 0.0
    %4584 = vmatpush1.xpose.msra.mxu0 0.0
    %4585 = vmatprep.subr.mxu0 0.0
    %4586 = vmatpush1.xpose.msra.mxu0 0.0
    %4587 = vmatprep.subr.mxu0 0.0
    %4588 = vmatpush1.xpose.msra.mxu0 0.0
    %4589 = vmatprep.subr.mxu0 0.0
    %4590 = vmatpush1.xpose.msra.mxu0 0.0
    %4591 = vmatprep.subr.mxu0 0.0
    %4592 = vmatpush1.xpose.msra.mxu0 0.0
    %4593 = vmatprep.subr.mxu0 0.0
    %4594 = vmatpush1.xpose.msra.mxu0 0.0
    %4595 = vmatprep.subr.mxu0 0.0
    %4596 = vmatpush1.xpose.msra.mxu0 0.0
    %4597 = vmatprep.subr.mxu0 0.0
    %4598 = vmatpush1.xpose.msra.mxu0 0.0
    %4599 = vmatprep.subr.mxu0 0.0
    %4600 = vmatpush1.xpose.msra.mxu0 0.0
    %4601 = vmatprep.subr.mxu0 0.0
    %4602 = vmatpush1.xpose.msra.mxu0 0.0
    %4603 = vmatprep.subr.mxu0 0.0
    %4604 = vmatpush1.xpose.msra.mxu0 0.0
    %4605 = vmatprep.subr.mxu0 0.0
    %4606 = vmatpush1.xpose.msra.mxu0 0.0
    %4607 = vmatprep.subr.mxu0 0.0
    %4608 = vmatpush1.xpose.msra.mxu0 0.0
    %4609 = vmatprep.subr.mxu0 0.0
    %4610 = vmatpush1.xpose.msra.mxu0 0.0
    %4611 = vmatprep.subr.mxu0 0.0
    %4612 = vmatpush1.xpose.msra.mxu0 0.0
    %4613 = vmatprep.subr.mxu0 0.0
    %4614 = vmatpush1.xpose.msra.mxu0 0.0
    %4615 = vmatprep.subr.mxu0 0.0
    %4616 = vmatpush1.xpose.msra.mxu0 0.0
    %4617 = vmatprep.subr.mxu0 0.0
    %4618 = vmatpush1.xpose.msra.mxu0 0.0
    %4619 = vmatprep.subr.mxu0 0.0
    %4620 = vmatpush1.xpose.msra.mxu0 0.0
    %4621 = vmatprep.subr.mxu0 0.0
    %4622 = vmatpush1.xpose.msra.mxu0 0.0
    %4623 = vmatprep.subr.mxu0 0.0
    %4624 = vmatpush1.xpose.msra.mxu0 0.0
    %4625 = vmatprep.mubr.f32.mxu0 0.0
    %4626 = vmatmul.mubr.f32.gmra.mrb[0].mxu0 %v4553
    %v4627 = vpop.f32.mrb[0].mxu0
    %v4628 = vadd.f32 0.0, %v4627
    %v4629 = vpop.f32.mrb[0].mxu0
    %4630 = vdwg.mxu0
    %v4631 = vmul.f32 %v4549, 0.35355338
    %v4632 = vmul.f32 %v4628, 0.35355338
    %v4633 = vsel %vm3324, %v4631, -inf
    %4634 = vmax.xlane.f32.xlu0 %v4633
    %v4635 = vpop.xlane.xlu0 %4634
    %v4636 = vsel %vm3324, %v4632, -inf
    %4637 = vmax.xlane.f32.xlu0 %v4636
    %v4638 = vpop.xlane.xlu0 %4637
    %v4639 = vsub.f32 %v4631, %v4635
    %v4640 = vsub.f32 %v4632, %v4638
    %v4641 = vmul.f32 %v4639, 1.442695
    %v4642 = vpow.pop %v4641
    %v4643 = vmul.f32 %v4640, 1.442695
    %v4644 = vpow.pop %v4643
    %v4645 = vsel %vm3324, %v4642, 0.0
    %4646 = vadd.xlane.f32.xlu0 %v4645
    %v4647 = vpop.xlane.xlu0 %4646
    %v4648 = vsel %vm3324, %v4644, 0.0
    %4649 = vadd.xlane.f32.xlu0 %v4648
    %v4650 = vpop.xlane.xlu0 %4649
    %v4651 = vrcp.pop %v4647
    %v4652 = vrcp.pop %v4650
    %v4653 = vmul.f32 %v4642, %v4651
    %v4654 = vmul.f32 %v4644, %v4652
    %v4656 = vsel %vm3324, %v4653, 0
    %4658 = vmatprep.subr.mxu0 0.0
    %4659 = vmatpush1.msra.mxu0 %v4455
    %4660 = vmatprep.subr.mxu0 0.0
    %4661 = vmatpush1.msra.mxu0 %v4460
    %4662 = vmatprep.subr.mxu0 0.0
    %4663 = vmatpush1.msra.mxu0 0.0
    %4664 = vmatprep.subr.mxu0 0.0
    %4665 = vmatpush1.msra.mxu0 0.0
    %4666 = vmatprep.subr.mxu0 0.0
    %4667 = vmatpush1.msra.mxu0 0.0
    %4668 = vmatprep.subr.mxu0 0.0
    %4669 = vmatpush1.msra.mxu0 0.0
    %4670 = vmatprep.subr.mxu0 0.0
    %4671 = vmatpush1.msra.mxu0 0.0
    %4672 = vmatprep.subr.mxu0 0.0
    %4673 = vmatpush1.msra.mxu0 0.0
    %4674 = vmatprep.subr.mxu0 0.0
    %4675 = vmatpush1.msra.mxu0 0.0
    %4676 = vmatprep.subr.mxu0 0.0
    %4677 = vmatpush1.msra.mxu0 0.0
    %4678 = vmatprep.subr.mxu0 0.0
    %4679 = vmatpush1.msra.mxu0 0.0
    %4680 = vmatprep.subr.mxu0 0.0
    %4681 = vmatpush1.msra.mxu0 0.0
    %4682 = vmatprep.subr.mxu0 0.0
    %4683 = vmatpush1.msra.mxu0 0.0
    %4684 = vmatprep.subr.mxu0 0.0
    %4685 = vmatpush1.msra.mxu0 0.0
    %4686 = vmatprep.subr.mxu0 0.0
    %4687 = vmatpush1.msra.mxu0 0.0
    %4688 = vmatprep.subr.mxu0 0.0
    %4689 = vmatpush1.msra.mxu0 0.0
    %4690 = vmatprep.subr.mxu0 0.0
    %4691 = vmatpush1.msra.mxu0 0.0
    %4692 = vmatprep.subr.mxu0 0.0
    %4693 = vmatpush1.msra.mxu0 0.0
    %4694 = vmatprep.subr.mxu0 0.0
    %4695 = vmatpush1.msra.mxu0 0.0
    %4696 = vmatprep.subr.mxu0 0.0
    %4697 = vmatpush1.msra.mxu0 0.0
    %4698 = vmatprep.subr.mxu0 0.0
    %4699 = vmatpush1.msra.mxu0 0.0
    %4700 = vmatprep.subr.mxu0 0.0
    %4701 = vmatpush1.msra.mxu0 0.0
    %4702 = vmatprep.subr.mxu0 0.0
    %4703 = vmatpush1.msra.mxu0 0.0
    %4704 = vmatprep.subr.mxu0 0.0
    %4705 = vmatpush1.msra.mxu0 0.0
    %4706 = vmatprep.subr.mxu0 0.0
    %4707 = vmatpush1.msra.mxu0 0.0
    %4708 = vmatprep.subr.mxu0 0.0
    %4709 = vmatpush1.msra.mxu0 0.0
    %4710 = vmatprep.subr.mxu0 0.0
    %4711 = vmatpush1.msra.mxu0 0.0
    %4712 = vmatprep.subr.mxu0 0.0
    %4713 = vmatpush1.msra.mxu0 0.0
    %4714 = vmatprep.subr.mxu0 0.0
    %4715 = vmatpush1.msra.mxu0 0.0
    %4716 = vmatprep.subr.mxu0 0.0
    %4717 = vmatpush1.msra.mxu0 0.0
    %4718 = vmatprep.subr.mxu0 0.0
    %4719 = vmatpush1.msra.mxu0 0.0
    %4720 = vmatprep.subr.mxu0 0.0
    %4721 = vmatpush1.msra.mxu0 0.0
    %4722 = vmatprep.mubr.f32.mxu0 0.0
    %4723 = vmatmul.mubr.f32.gmra.mrb[0].mxu0 %v4656
    %v4724 = vpop.f32.mrb[0].mxu0
    %v4725 = vadd.f32 0.0, %v4724
    %v4726 = vpop.f32.mrb[0].mxu0
    %4727 = vdwg.mxu0
    %v4729 = vsel %vm3324, %v4654, 0
    %4731 = vmatprep.subr.mxu0 0.0
    %4732 = vmatpush1.msra.mxu0 %v4465
    %4733 = vmatprep.subr.mxu0 0.0
    %4734 = vmatpush1.msra.mxu0 %v4470
    %4735 = vmatprep.subr.mxu0 0.0
    %4736 = vmatpush1.msra.mxu0 0.0
    %4737 = vmatprep.subr.mxu0 0.0
    %4738 = vmatpush1.msra.mxu0 0.0
    %4739 = vmatprep.subr.mxu0 0.0
    %4740 = vmatpush1.msra.mxu0 0.0
    %4741 = vmatprep.subr.mxu0 0.0
    %4742 = vmatpush1.msra.mxu0 0.0
    %4743 = vmatprep.subr.mxu0 0.0
    %4744 = vmatpush1.msra.mxu0 0.0
    %4745 = vmatprep.subr.mxu0 0.0
    %4746 = vmatpush1.msra.mxu0 0.0
    %4747 = vmatprep.subr.mxu0 0.0
    %4748 = vmatpush1.msra.mxu0 0.0
    %4749 = vmatprep.subr.mxu0 0.0
    %4750 = vmatpush1.msra.mxu0 0.0
    %4751 = vmatprep.subr.mxu0 0.0
    %4752 = vmatpush1.msra.mxu0 0.0
    %4753 = vmatprep.subr.mxu0 0.0
    %4754 = vmatpush1.msra.mxu0 0.0
    %4755 = vmatprep.subr.mxu0 0.0
    %4756 = vmatpush1.msra.mxu0 0.0
    %4757 = vmatprep.subr.mxu0 0.0
    %4758 = vmatpush1.msra.mxu0 0.0
    %4759 = vmatprep.subr.mxu0 0.0
    %4760 = vmatpush1.msra.mxu0 0.0
    %4761 = vmatprep.subr.mxu0 0.0
    %4762 = vmatpush1.msra.mxu0 0.0
    %4763 = vmatprep.subr.mxu0 0.0
    %4764 = vmatpush1.msra.mxu0 0.0
    %4765 = vmatprep.subr.mxu0 0.0
    %4766 = vmatpush1.msra.mxu0 0.0
    %4767 = vmatprep.subr.mxu0 0.0
    %4768 = vmatpush1.msra.mxu0 0.0
    %4769 = vmatprep.subr.mxu0 0.0
    %4770 = vmatpush1.msra.mxu0 0.0
    %4771 = vmatprep.subr.mxu0 0.0
    %4772 = vmatpush1.msra.mxu0 0.0
    %4773 = vmatprep.subr.mxu0 0.0
    %4774 = vmatpush1.msra.mxu0 0.0
    %4775 = vmatprep.subr.mxu0 0.0
    %4776 = vmatpush1.msra.mxu0 0.0
    %4777 = vmatprep.subr.mxu0 0.0
    %4778 = vmatpush1.msra.mxu0 0.0
    %4779 = vmatprep.subr.mxu0 0.0
    %4780 = vmatpush1.msra.mxu0 0.0
    %4781 = vmatprep.subr.mxu0 0.0
    %4782 = vmatpush1.msra.mxu0 0.0
    %4783 = vmatprep.subr.mxu0 0.0
    %4784 = vmatpush1.msra.mxu0 0.0
    %4785 = vmatprep.subr.mxu0 0.0
    %4786 = vmatpush1.msra.mxu0 0.0
    %4787 = vmatprep.subr.mxu0 0.0
    %4788 = vmatpush1.msra.mxu0 0.0
    %4789 = vmatprep.subr.mxu0 0.0
    %4790 = vmatpush1.msra.mxu0 0.0
    %4791 = vmatprep.subr.mxu0 0.0
    %4792 = vmatpush1.msra.mxu0 0.0
    %4793 = vmatprep.subr.mxu0 0.0
    %4794 = vmatpush1.msra.mxu0 0.0
    %4795 = vmatprep.mubr.f32.mxu0 0.0
    %4796 = vmatmul.mubr.f32.gmra.mrb[0].mxu0 %v4729
    %v4797 = vpop.f32.mrb[0].mxu0
    %v4798 = vadd.f32 0.0, %v4797
    %v4799 = vpop.f32.mrb[0].mxu0
    %4800 = vdwg.mxu0
    %v4802 = vsel %vm437, %v4725, 0
    %v4805 = vsel %vm437, %v4798, 0
    %4807 = vmatprep.subr.mxu0 0.0
    %4808 = vmatpush1.msra.mxu0 %v2899
    %4809 = vmatprep.subr.mxu0 0.0
    %4810 = vmatpush1.msra.mxu0 0.0
    %4811 = vmatprep.subr.mxu0 0.0
    %4812 = vmatpush1.msra.mxu0 0.0
    %4813 = vmatprep.subr.mxu0 0.0
    %4814 = vmatpush1.msra.mxu0 0.0
    %4815 = vmatprep.subr.mxu0 0.0
    %4816 = vmatpush1.msra.mxu0 0.0
    %4817 = vmatprep.subr.mxu0 0.0
    %4818 = vmatpush1.msra.mxu0 0.0
    %4819 = vmatprep.subr.mxu0 0.0
    %4820 = vmatpush1.msra.mxu0 0.0
    %4821 = vmatprep.subr.mxu0 0.0
    %4822 = vmatpush1.msra.mxu0 0.0
    %4823 = vmatprep.subr.mxu0 0.0
    %4824 = vmatpush1.msra.mxu0 0.0
    %4825 = vmatprep.subr.mxu0 0.0
    %4826 = vmatpush1.msra.mxu0 0.0
    %4827 = vmatprep.subr.mxu0 0.0
    %4828 = vmatpush1.msra.mxu0 0.0
    %4829 = vmatprep.subr.mxu0 0.0
    %4830 = vmatpush1.msra.mxu0 0.0
    %4831 = vmatprep.subr.mxu0 0.0
    %4832 = vmatpush1.msra.mxu0 0.0
    %4833 = vmatprep.subr.mxu0 0.0
    %4834 = vmatpush1.msra.mxu0 0.0
    %4835 = vmatprep.subr.mxu0 0.0
    %4836 = vmatpush1.msra.mxu0 0.0
    %4837 = vmatprep.subr.mxu0 0.0
    %4838 = vmatpush1.msra.mxu0 0.0
    %4839 = vmatprep.subr.mxu0 0.0
    %4840 = vmatpush1.msra.mxu0 0.0
    %4841 = vmatprep.subr.mxu0 0.0
    %4842 = vmatpush1.msra.mxu0 0.0
    %4843 = vmatprep.subr.mxu0 0.0
    %4844 = vmatpush1.msra.mxu0 0.0
    %4845 = vmatprep.subr.mxu0 0.0
    %4846 = vmatpush1.msra.mxu0 0.0
    %4847 = vmatprep.subr.mxu0 0.0
    %4848 = vmatpush1.msra.mxu0 0.0
    %4849 = vmatprep.subr.mxu0 0.0
    %4850 = vmatpush1.msra.mxu0 0.0
    %4851 = vmatprep.subr.mxu0 0.0
    %4852 = vmatpush1.msra.mxu0 0.0
    %4853 = vmatprep.subr.mxu0 0.0
    %4854 = vmatpush1.msra.mxu0 0.0
    %4855 = vmatprep.subr.mxu0 0.0
    %4856 = vmatpush1.msra.mxu0 0.0
    %4857 = vmatprep.subr.mxu0 0.0
    %4858 = vmatpush1.msra.mxu0 0.0
    %4859 = vmatprep.subr.mxu0 0.0
    %4860 = vmatpush1.msra.mxu0 0.0
    %4861 = vmatprep.subr.mxu0 0.0
    %4862 = vmatpush1.msra.mxu0 0.0
    %4863 = vmatprep.subr.mxu0 0.0
    %4864 = vmatpush1.msra.mxu0 0.0
    %4865 = vmatprep.subr.mxu0 0.0
    %4866 = vmatpush1.msra.mxu0 0.0
    %4867 = vmatprep.subr.mxu0 0.0
    %4868 = vmatpush1.msra.mxu0 0.0
    %4869 = vmatprep.subr.mxu0 0.0
    %4870 = vmatpush1.msra.mxu0 0.0
    %4871 = vmatprep.mubr.f32.mxu0 0.0
    %4872 = vmatmul.mubr.f32.gmra.mrb[0].mxu0 %v4802
    %v4873 = vpop.f32.mrb[0].mxu0
    %v4874 = vadd.f32 0.0, %v4873
    %v4875 = vpop.f32.mrb[0].mxu0
    %4876 = vmatprep.mubr.f32.mxu0 0.0
    %4877 = vmatmul.mubr.f32.gmra.mrb[0].mxu0 %v4805
    %v4878 = vpop.f32.mrb[0].mxu0
    %v4879 = vadd.f32 0.0, %v4878
    %v4880 = vpop.f32.mrb[0].mxu0
    %4881 = vdwg.mxu0
    %v4882 = vadd.f32 %v4220, %v4874
    %v4883 = vadd.f32 %v4225, %v4879
    %4884 = vmatprep.subr.mxu0 0.0
    %4885 = vmatpush1.msra.mxu0 %v2861
    %4886 = vmatprep.subr.mxu0 0.0
    %4887 = vmatpush1.msra.mxu0 %v2862
    %4888 = vmatprep.subr.mxu0 0.0
    %4889 = vmatpush1.msra.mxu0 %v2863
    %4890 = vmatprep.subr.mxu0 0.0
    %4891 = vmatpush1.msra.mxu0 %v2864
    %4892 = vmatprep.subr.mxu0 0.0
    %4893 = vmatpush1.msra.mxu0 0.0
    %4894 = vmatprep.subr.mxu0 0.0
    %4895 = vmatpush1.msra.mxu0 0.0
    %4896 = vmatprep.subr.mxu0 0.0
    %4897 = vmatpush1.msra.mxu0 0.0
    %4898 = vmatprep.subr.mxu0 0.0
    %4899 = vmatpush1.msra.mxu0 0.0
    %4900 = vmatprep.subr.mxu0 0.0
    %4901 = vmatpush1.msra.mxu0 0.0
    %4902 = vmatprep.subr.mxu0 0.0
    %4903 = vmatpush1.msra.mxu0 0.0
    %4904 = vmatprep.subr.mxu0 0.0
    %4905 = vmatpush1.msra.mxu0 0.0
    %4906 = vmatprep.subr.mxu0 0.0
    %4907 = vmatpush1.msra.mxu0 0.0
    %4908 = vmatprep.subr.mxu0 0.0
    %4909 = vmatpush1.msra.mxu0 0.0
    %4910 = vmatprep.subr.mxu0 0.0
    %4911 = vmatpush1.msra.mxu0 0.0
    %4912 = vmatprep.subr.mxu0 0.0
    %4913 = vmatpush1.msra.mxu0 0.0
    %4914 = vmatprep.subr.mxu0 0.0
    %4915 = vmatpush1.msra.mxu0 0.0
    %4916 = vmatprep.subr.mxu0 0.0
    %4917 = vmatpush1.msra.mxu0 0.0
    %4918 = vmatprep.subr.mxu0 0.0
    %4919 = vmatpush1.msra.mxu0 0.0
    %4920 = vmatprep.subr.mxu0 0.0
    %4921 = vmatpush1.msra.mxu0 0.0
    %4922 = vmatprep.subr.mxu0 0.0
    %4923 = vmatpush1.msra.mxu0 0.0
    %4924 = vmatprep.subr.mxu0 0.0
    %4925 = vmatpush1.msra.mxu0 0.0
    %4926 = vmatprep.subr.mxu0 0.0
    %4927 = vmatpush1.msra.mxu0 0.0
    %4928 = vmatprep.subr.mxu0 0.0
    %4929 = vmatpush1.msra.mxu0 0.0
    %4930 = vmatprep.subr.mxu0 0.0
    %4931 = vmatpush1.msra.mxu0 0.0
    %4932 = vmatprep.subr.mxu0 0.0
    %4933 = vmatpush1.msra.mxu0 0.0
    %4934 = vmatprep.subr.mxu0 0.0
    %4935 = vmatpush1.msra.mxu0 0.0
    %4936 = vmatprep.subr.mxu0 0.0
    %4937 = vmatpush1.msra.mxu0 0.0
    %4938 = vmatprep.subr.mxu0 0.0
    %4939 = vmatpush1.msra.mxu0 0.0
    %4940 = vmatprep.subr.mxu0 0.0
    %4941 = vmatpush1.msra.mxu0 0.0
    %4942 = vmatprep.subr.mxu0 0.0
    %4943 = vmatpush1.msra.mxu0 0.0
    %4944 = vmatprep.subr.mxu0 0.0
    %4945 = vmatpush1.msra.mxu0 0.0
    %4946 = vmatprep.subr.mxu0 0.0
    %4947 = vmatpush1.msra.mxu0 0.0
    %4948 = vmatprep.mubr.f32.mxu0 0.0
    %4949 = vmatmul.mubr.f32.gmra.mrb[0].mxu0 %v2902
    %v4950 = vpop.f32.mrb[0].mxu0
    %v4951 = vadd.f32 0.0, %v4950
    %v4952 = vpop.f32.mrb[0].mxu0
    %4953 = vmatprep.mubr.f32.mxu0 0.0
    %4954 = vmatmul.mubr.f32.gmra.mrb[0].mxu0 %v2905
    %v4955 = vpop.f32.mrb[0].mxu0
    %v4956 = vadd.f32 0.0, %v4955
    %v4957 = vpop.f32.mrb[0].mxu0
    %4958 = vdwg.mxu0
    %4959 = vmatprep.subr.mxu0 0.0
    %4960 = vmatpush1.msra.mxu0 %v2877
    %4961 = vmatprep.subr.mxu0 0.0
    %4962 = vmatpush1.msra.mxu0 %v2878
    %4963 = vmatprep.subr.mxu0 0.0
    %4964 = vmatpush1.msra.mxu0 %v2879
    %4965 = vmatprep.subr.mxu0 0.0
    %4966 = vmatpush1.msra.mxu0 %v2880
    %4967 = vmatprep.subr.mxu0 0.0
    %4968 = vmatpush1.msra.mxu0 0.0
    %4969 = vmatprep.subr.mxu0 0.0
    %4970 = vmatpush1.msra.mxu0 0.0
    %4971 = vmatprep.subr.mxu0 0.0
    %4972 = vmatpush1.msra.mxu0 0.0
    %4973 = vmatprep.subr.mxu0 0.0
    %4974 = vmatpush1.msra.mxu0 0.0
    %4975 = vmatprep.subr.mxu0 0.0
    %4976 = vmatpush1.msra.mxu0 0.0
    %4977 = vmatprep.subr.mxu0 0.0
    %4978 = vmatpush1.msra.mxu0 0.0
    %4979 = vmatprep.subr.mxu0 0.0
    %4980 = vmatpush1.msra.mxu0 0.0
    %4981 = vmatprep.subr.mxu0 0.0
    %4982 = vmatpush1.msra.mxu0 0.0
    %4983 = vmatprep.subr.mxu0 0.0
    %4984 = vmatpush1.msra.mxu0 0.0
    %4985 = vmatprep.subr.mxu0 0.0
    %4986 = vmatpush1.msra.mxu0 0.0
    %4987 = vmatprep.subr.mxu0 0.0
    %4988 = vmatpush1.msra.mxu0 0.0
    %4989 = vmatprep.subr.mxu0 0.0
    %4990 = vmatpush1.msra.mxu0 0.0
    %4991 = vmatprep.subr.mxu0 0.0
    %4992 = vmatpush1.msra.mxu0 0.0
    %4993 = vmatprep.subr.mxu0 0.0
    %4994 = vmatpush1.msra.mxu0 0.0
    %4995 = vmatprep.subr.mxu0 0.0
    %4996 = vmatpush1.msra.mxu0 0.0
    %4997 = vmatprep.subr.mxu0 0.0
    %4998 = vmatpush1.msra.mxu0 0.0
    %4999 = vmatprep.subr.mxu0 0.0
    %5000 = vmatpush1.msra.mxu0 0.0
    %5001 = vmatprep.subr.mxu0 0.0
    %5002 = vmatpush1.msra.mxu0 0.0
    %5003 = vmatprep.subr.mxu0 0.0
    %5004 = vmatpush1.msra.mxu0 0.0
    %5005 = vmatprep.subr.mxu0 0.0
    %5006 = vmatpush1.msra.mxu0 0.0
    %5007 = vmatprep.subr.mxu0 0.0
    %5008 = vmatpush1.msra.mxu0 0.0
    %5009 = vmatprep.subr.mxu0 0.0
    %5010 = vmatpush1.msra.mxu0 0.0
    %5011 = vmatprep.subr.mxu0 0.0
    %5012 = vmatpush1.msra.mxu0 0.0
    %5013 = vmatprep.subr.mxu0 0.0
    %5014 = vmatpush1.msra.mxu0 0.0
    %5015 = vmatprep.subr.mxu0 0.0
    %5016 = vmatpush1.msra.mxu0 0.0
    %5017 = vmatprep.subr.mxu0 0.0
    %5018 = vmatpush1.msra.mxu0 0.0
    %5019 = vmatprep.subr.mxu0 0.0
    %5020 = vmatpush1.msra.mxu0 0.0
    %5021 = vmatprep.subr.mxu0 0.0
    %5022 = vmatpush1.msra.mxu0 0.0
    %5023 = vmatprep.mubr.f32.mxu0 0.0
    %5024 = vmatmul.mubr.f32.gmra.mrb[0].mxu0 %v2983
    %v5025 = vpop.f32.mrb[0].mxu0
    %v5026 = vadd.f32 0.0, %v5025
    %v5027 = vpop.f32.mrb[0].mxu0
    %5028 = vmatprep.mubr.f32.mxu0 0.0
    %5029 = vmatmul.mubr.f32.gmra.mrb[0].mxu0 %v2986
    %v5030 = vpop.f32.mrb[0].mxu0
    %v5031 = vadd.f32 0.0, %v5030
    %v5032 = vpop.f32.mrb[0].mxu0
    %5033 = vmatprep.mubr.f32.mxu0 0.0
    %5034 = vmatmul.mubr.f32.gmra.mrb[0].mxu0 %v2989
    %v5035 = vpop.f32.mrb[0].mxu0
    %v5036 = vadd.f32 0.0, %v5035
    %v5037 = vpop.f32.mrb[0].mxu0
    %5038 = vmatprep.mubr.f32.mxu0 0.0
    %5039 = vmatmul.mubr.f32.gmra.mrb[0].mxu0 %v2992
    %v5040 = vpop.f32.mrb[0].mxu0
    %v5041 = vadd.f32 0.0, %v5040
    %v5042 = vpop.f32.mrb[0].mxu0
    %5043 = vdwg.mxu0
    %5044 = vmatprep.subr.mxu0 0.0
    %5045 = vmatpush1.msra.mxu0 %v2893
    %5046 = vmatprep.subr.mxu0 0.0
    %5047 = vmatpush1.msra.mxu0 %v2894
    %5048 = vmatprep.subr.mxu0 0.0
    %5049 = vmatpush1.msra.mxu0 %v2895
    %5050 = vmatprep.subr.mxu0 0.0
    %5051 = vmatpush1.msra.mxu0 %v2896
    %5052 = vmatprep.subr.mxu0 0.0
    %5053 = vmatpush1.msra.mxu0 0.0
    %5054 = vmatprep.subr.mxu0 0.0
    %5055 = vmatpush1.msra.mxu0 0.0
    %5056 = vmatprep.subr.mxu0 0.0
    %5057 = vmatpush1.msra.mxu0 0.0
    %5058 = vmatprep.subr.mxu0 0.0
    %5059 = vmatpush1.msra.mxu0 0.0
    %5060 = vmatprep.subr.mxu0 0.0
    %5061 = vmatpush1.msra.mxu0 0.0
    %5062 = vmatprep.subr.mxu0 0.0
    %5063 = vmatpush1.msra.mxu0 0.0
    %5064 = vmatprep.subr.mxu0 0.0
    %5065 = vmatpush1.msra.mxu0 0.0
    %5066 = vmatprep.subr.mxu0 0.0
    %5067 = vmatpush1.msra.mxu0 0.0
    %5068 = vmatprep.subr.mxu0 0.0
    %5069 = vmatpush1.msra.mxu0 0.0
    %5070 = vmatprep.subr.mxu0 0.0
    %5071 = vmatpush1.msra.mxu0 0.0
    %5072 = vmatprep.subr.mxu0 0.0
    %5073 = vmatpush1.msra.mxu0 0.0
    %5074 = vmatprep.subr.mxu0 0.0
    %5075 = vmatpush1.msra.mxu0 0.0
    %5076 = vmatprep.subr.mxu0 0.0
    %5077 = vmatpush1.msra.mxu0 0.0
    %5078 = vmatprep.subr.mxu0 0.0
    %5079 = vmatpush1.msra.mxu0 0.0
    %5080 = vmatprep.subr.mxu0 0.0
    %5081 = vmatpush1.msra.mxu0 0.0
    %5082 = vmatprep.subr.mxu0 0.0
    %5083 = vmatpush1.msra.mxu0 0.0
    %5084 = vmatprep.subr.mxu0 0.0
    %5085 = vmatpush1.msra.mxu0 0.0
    %5086 = vmatprep.subr.mxu0 0.0
    %5087 = vmatpush1.msra.mxu0 0.0
    %5088 = vmatprep.subr.mxu0 0.0
    %5089 = vmatpush1.msra.mxu0 0.0
    %5090 = vmatprep.subr.mxu0 0.0
    %5091 = vmatpush1.msra.mxu0 0.0
    %5092 = vmatprep.subr.mxu0 0.0
    %5093 = vmatpush1.msra.mxu0 0.0
    %5094 = vmatprep.subr.mxu0 0.0
    %5095 = vmatpush1.msra.mxu0 0.0
    %5096 = vmatprep.subr.mxu0 0.0
    %5097 = vmatpush1.msra.mxu0 0.0
    %5098 = vmatprep.subr.mxu0 0.0
    %5099 = vmatpush1.msra.mxu0 0.0
    %5100 = vmatprep.subr.mxu0 0.0
    %5101 = vmatpush1.msra.mxu0 0.0
    %5102 = vmatprep.subr.mxu0 0.0
    %5103 = vmatpush1.msra.mxu0 0.0
    %5104 = vmatprep.subr.mxu0 0.0
    %5105 = vmatpush1.msra.mxu0 0.0
    %5106 = vmatprep.subr.mxu0 0.0
    %5107 = vmatpush1.msra.mxu0 0.0
    %5108 = vmatprep.mubr.f32.mxu0 0.0
    %5109 = vmatmul.mubr.f32.gmra.mrb[0].mxu0 %v2983
    %v5110 = vpop.f32.mrb[0].mxu0
    %v5111 = vadd.f32 0.0, %v5110
    %v5112 = vpop.f32.mrb[0].mxu0
    %5113 = vmatprep.mubr.f32.mxu0 0.0
    %5114 = vmatmul.mubr.f32.gmra.mrb[0].mxu0 %v2986
    %v5115 = vpop.f32.mrb[0].mxu0
    %v5116 = vadd.f32 0.0, %v5115
    %v5117 = vpop.f32.mrb[0].mxu0
    %5118 = vmatprep.mubr.f32.mxu0 0.0
    %5119 = vmatmul.mubr.f32.gmra.mrb[0].mxu0 %v2989
    %v5120 = vpop.f32.mrb[0].mxu0
    %v5121 = vadd.f32 0.0, %v5120
    %v5122 = vpop.f32.mrb[0].mxu0
    %5123 = vmatprep.mubr.f32.mxu0 0.0
    %5124 = vmatmul.mubr.f32.gmra.mrb[0].mxu0 %v2992
    %v5125 = vpop.f32.mrb[0].mxu0
    %v5126 = vadd.f32 0.0, %v5125
    %v5127 = vpop.f32.mrb[0].mxu0
    %5128 = vdwg.mxu0
    %v5130 = vsel %vm437, %v4951, 0
    %v5133 = vsel %vm437, %v5026, 0
    %v5136 = vsel %vm437, %v5031, 0
    %5138 = vmatprep.subr.mxu0 0.0
    %5139 = vmatpush1.xpose.msra.mxu0 %v5133
    %5140 = vmatprep.subr.mxu0 0.0
    %5141 = vmatpush1.xpose.msra.mxu0 %v5136
    %5142 = vmatprep.subr.mxu0 0.0
    %5143 = vmatpush1.xpose.msra.mxu0 0.0
    %5144 = vmatprep.subr.mxu0 0.0
    %5145 = vmatpush1.xpose.msra.mxu0 0.0
    %5146 = vmatprep.subr.mxu0 0.0
    %5147 = vmatpush1.xpose.msra.mxu0 0.0
    %5148 = vmatprep.subr.mxu0 0.0
    %5149 = vmatpush1.xpose.msra.mxu0 0.0
    %5150 = vmatprep.subr.mxu0 0.0
    %5151 = vmatpush1.xpose.msra.mxu0 0.0
    %5152 = vmatprep.subr.mxu0 0.0
    %5153 = vmatpush1.xpose.msra.mxu0 0.0
    %5154 = vmatprep.subr.mxu0 0.0
    %5155 = vmatpush1.xpose.msra.mxu0 0.0
    %5156 = vmatprep.subr.mxu0 0.0
    %5157 = vmatpush1.xpose.msra.mxu0 0.0
    %5158 = vmatprep.subr.mxu0 0.0
    %5159 = vmatpush1.xpose.msra.mxu0 0.0
    %5160 = vmatprep.subr.mxu0 0.0
    %5161 = vmatpush1.xpose.msra.mxu0 0.0
    %5162 = vmatprep.subr.mxu0 0.0
    %5163 = vmatpush1.xpose.msra.mxu0 0.0
    %5164 = vmatprep.subr.mxu0 0.0
    %5165 = vmatpush1.xpose.msra.mxu0 0.0
    %5166 = vmatprep.subr.mxu0 0.0
    %5167 = vmatpush1.xpose.msra.mxu0 0.0
    %5168 = vmatprep.subr.mxu0 0.0
    %5169 = vmatpush1.xpose.msra.mxu0 0.0
    %5170 = vmatprep.subr.mxu0 0.0
    %5171 = vmatpush1.xpose.msra.mxu0 0.0
    %5172 = vmatprep.subr.mxu0 0.0
    %5173 = vmatpush1.xpose.msra.mxu0 0.0
    %5174 = vmatprep.subr.mxu0 0.0
    %5175 = vmatpush1.xpose.msra.mxu0 0.0
    %5176 = vmatprep.subr.mxu0 0.0
    %5177 = vmatpush1.xpose.msra.mxu0 0.0
    %5178 = vmatprep.subr.mxu0 0.0
    %5179 = vmatpush1.xpose.msra.mxu0 0.0
    %5180 = vmatprep.subr.mxu0 0.0
    %5181 = vmatpush1.xpose.msra.mxu0 0.0
    %5182 = vmatprep.subr.mxu0 0.0
    %5183 = vmatpush1.xpose.msra.mxu0 0.0
    %5184 = vmatprep.subr.mxu0 0.0
    %5185 = vmatpush1.xpose.msra.mxu0 0.0
    %5186 = vmatprep.subr.mxu0 0.0
    %5187 = vmatpush1.xpose.msra.mxu0 0.0
    %5188 = vmatprep.subr.mxu0 0.0
    %5189 = vmatpush1.xpose.msra.mxu0 0.0
    %5190 = vmatprep.subr.mxu0 0.0
    %5191 = vmatpush1.xpose.msra.mxu0 0.0
    %5192 = vmatprep.subr.mxu0 0.0
    %5193 = vmatpush1.xpose.msra.mxu0 0.0
    %5194 = vmatprep.subr.mxu0 0.0
    %5195 = vmatpush1.xpose.msra.mxu0 0.0
    %5196 = vmatprep.subr.mxu0 0.0
    %5197 = vmatpush1.xpose.msra.mxu0 0.0
    %5198 = vmatprep.subr.mxu0 0.0
    %5199 = vmatpush1.xpose.msra.mxu0 0.0
    %5200 = vmatprep.subr.mxu0 0.0
    %5201 = vmatpush1.xpose.msra.mxu0 0.0
    %5202 = vmatprep.mubr.f32.mxu0 0.0
    %5203 = vmatmul.mubr.f32.gmra.mrb[0].mxu0 %v5130
    %v5204 = vpop.f32.mrb[0].mxu0
    %v5205 = vadd.f32 0.0, %v5204
    %v5206 = vpop.f32.mrb[0].mxu0
    %5207 = vdwg.mxu0
    %v5209 = vsel %vm437, %v4956, 0
    %v5212 = vsel %vm437, %v5036, 0
    %v5215 = vsel %vm437, %v5041, 0
    %5217 = vmatprep.subr.mxu0 0.0
    %5218 = vmatpush1.xpose.msra.mxu0 %v5212
    %5219 = vmatprep.subr.mxu0 0.0
    %5220 = vmatpush1.xpose.msra.mxu0 %v5215
    %5221 = vmatprep.subr.mxu0 0.0
    %5222 = vmatpush1.xpose.msra.mxu0 0.0
    %5223 = vmatprep.subr.mxu0 0.0
    %5224 = vmatpush1.xpose.msra.mxu0 0.0
    %5225 = vmatprep.subr.mxu0 0.0
    %5226 = vmatpush1.xpose.msra.mxu0 0.0
    %5227 = vmatprep.subr.mxu0 0.0
    %5228 = vmatpush1.xpose.msra.mxu0 0.0
    %5229 = vmatprep.subr.mxu0 0.0
    %5230 = vmatpush1.xpose.msra.mxu0 0.0
    %5231 = vmatprep.subr.mxu0 0.0
    %5232 = vmatpush1.xpose.msra.mxu0 0.0
    %5233 = vmatprep.subr.mxu0 0.0
    %5234 = vmatpush1.xpose.msra.mxu0 0.0
    %5235 = vmatprep.subr.mxu0 0.0
    %5236 = vmatpush1.xpose.msra.mxu0 0.0
    %5237 = vmatprep.subr.mxu0 0.0
    %5238 = vmatpush1.xpose.msra.mxu0 0.0
    %5239 = vmatprep.subr.mxu0 0.0
    %5240 = vmatpush1.xpose.msra.mxu0 0.0
    %5241 = vmatprep.subr.mxu0 0.0
    %5242 = vmatpush1.xpose.msra.mxu0 0.0
    %5243 = vmatprep.subr.mxu0 0.0
    %5244 = vmatpush1.xpose.msra.mxu0 0.0
    %5245 = vmatprep.subr.mxu0 0.0
    %5246 = vmatpush1.xpose.msra.mxu0 0.0
    %5247 = vmatprep.subr.mxu0 0.0
    %5248 = vmatpush1.xpose.msra.mxu0 0.0
    %5249 = vmatprep.subr.mxu0 0.0
    %5250 = vmatpush1.xpose.msra.mxu0 0.0
    %5251 = vmatprep.subr.mxu0 0.0
    %5252 = vmatpush1.xpose.msra.mxu0 0.0
    %5253 = vmatprep.subr.mxu0 0.0
    %5254 = vmatpush1.xpose.msra.mxu0 0.0
    %5255 = vmatprep.subr.mxu0 0.0
    %5256 = vmatpush1.xpose.msra.mxu0 0.0
    %5257 = vmatprep.subr.mxu0 0.0
    %5258 = vmatpush1.xpose.msra.mxu0 0.0
    %5259 = vmatprep.subr.mxu0 0.0
    %5260 = vmatpush1.xpose.msra.mxu0 0.0
    %5261 = vmatprep.subr.mxu0 0.0
    %5262 = vmatpush1.xpose.msra.mxu0 0.0
    %5263 = vmatprep.subr.mxu0 0.0
    %5264 = vmatpush1.xpose.msra.mxu0 0.0
    %5265 = vmatprep.subr.mxu0 0.0
    %5266 = vmatpush1.xpose.msra.mxu0 0.0
    %5267 = vmatprep.subr.mxu0 0.0
    %5268 = vmatpush1.xpose.msra.mxu0 0.0
    %5269 = vmatprep.subr.mxu0 0.0
    %5270 = vmatpush1.xpose.msra.mxu0 0.0
    %5271 = vmatprep.subr.mxu0 0.0
    %5272 = vmatpush1.xpose.msra.mxu0 0.0
    %5273 = vmatprep.subr.mxu0 0.0
    %5274 = vmatpush1.xpose.msra.mxu0 0.0
    %5275 = vmatprep.subr.mxu0 0.0
    %5276 = vmatpush1.xpose.msra.mxu0 0.0
    %5277 = vmatprep.subr.mxu0 0.0
    %5278 = vmatpush1.xpose.msra.mxu0 0.0
    %5279 = vmatprep.subr.mxu0 0.0
    %5280 = vmatpush1.xpose.msra.mxu0 0.0
    %5281 = vmatprep.mubr.f32.mxu0 0.0
    %5282 = vmatmul.mubr.f32.gmra.mrb[0].mxu0 %v5209
    %v5283 = vpop.f32.mrb[0].mxu0
    %v5284 = vadd.f32 0.0, %v5283
    %v5285 = vpop.f32.mrb[0].mxu0
    %5286 = vdwg.mxu0
    %v5287 = vmul.f32 %v5205, 0.35355338
    %v5288 = vmul.f32 %v5284, 0.35355338
    %v5289 = vsel %vm3324, %v5287, -inf
    %5290 = vmax.xlane.f32.xlu0 %v5289
    %v5291 = vpop.xlane.xlu0 %5290
    %v5292 = vsel %vm3324, %v5288, -inf
    %5293 = vmax.xlane.f32.xlu0 %v5292
    %v5294 = vpop.xlane.xlu0 %5293
    %v5295 = vsub.f32 %v5287, %v5291
    %v5296 = vsub.f32 %v5288, %v5294
    %v5297 = vmul.f32 %v5295, 1.442695
    %v5298 = vpow.pop %v5297
    %v5299 = vmul.f32 %v5296, 1.442695
    %v5300 = vpow.pop %v5299
    %v5301 = vsel %vm3324, %v5298, 0.0
    %5302 = vadd.xlane.f32.xlu0 %v5301
    %v5303 = vpop.xlane.xlu0 %5302
    %v5304 = vsel %vm3324, %v5300, 0.0
    %5305 = vadd.xlane.f32.xlu0 %v5304
    %v5306 = vpop.xlane.xlu0 %5305
    %v5307 = vrcp.pop %v5303
    %v5308 = vrcp.pop %v5306
    %v5309 = vmul.f32 %v5298, %v5307
    %v5310 = vmul.f32 %v5300, %v5308
    %v5312 = vsel %vm3324, %v5309, 0
    %5314 = vmatprep.subr.mxu0 0.0
    %5315 = vmatpush1.msra.mxu0 %v5111
    %5316 = vmatprep.subr.mxu0 0.0
    %5317 = vmatpush1.msra.mxu0 %v5116
    %5318 = vmatprep.subr.mxu0 0.0
    %5319 = vmatpush1.msra.mxu0 0.0
    %5320 = vmatprep.subr.mxu0 0.0
    %5321 = vmatpush1.msra.mxu0 0.0
    %5322 = vmatprep.subr.mxu0 0.0
    %5323 = vmatpush1.msra.mxu0 0.0
    %5324 = vmatprep.subr.mxu0 0.0
    %5325 = vmatpush1.msra.mxu0 0.0
    %5326 = vmatprep.subr.mxu0 0.0
    %5327 = vmatpush1.msra.mxu0 0.0
    %5328 = vmatprep.subr.mxu0 0.0
    %5329 = vmatpush1.msra.mxu0 0.0
    %5330 = vmatprep.subr.mxu0 0.0
    %5331 = vmatpush1.msra.mxu0 0.0
    %5332 = vmatprep.subr.mxu0 0.0
    %5333 = vmatpush1.msra.mxu0 0.0
    %5334 = vmatprep.subr.mxu0 0.0
    %5335 = vmatpush1.msra.mxu0 0.0
    %5336 = vmatprep.subr.mxu0 0.0
    %5337 = vmatpush1.msra.mxu0 0.0
    %5338 = vmatprep.subr.mxu0 0.0
    %5339 = vmatpush1.msra.mxu0 0.0
    %5340 = vmatprep.subr.mxu0 0.0
    %5341 = vmatpush1.msra.mxu0 0.0
    %5342 = vmatprep.subr.mxu0 0.0
    %5343 = vmatpush1.msra.mxu0 0.0
    %5344 = vmatprep.subr.mxu0 0.0
    %5345 = vmatpush1.msra.mxu0 0.0
    %5346 = vmatprep.subr.mxu0 0.0
    %5347 = vmatpush1.msra.mxu0 0.0
    %5348 = vmatprep.subr.mxu0 0.0
    %5349 = vmatpush1.msra.mxu0 0.0
    %5350 = vmatprep.subr.mxu0 0.0
    %5351 = vmatpush1.msra.mxu0 0.0
    %5352 = vmatprep.subr.mxu0 0.0
    %5353 = vmatpush1.msra.mxu0 0.0
    %5354 = vmatprep.subr.mxu0 0.0
    %5355 = vmatpush1.msra.mxu0 0.0
    %5356 = vmatprep.subr.mxu0 0.0
    %5357 = vmatpush1.msra.mxu0 0.0
    %5358 = vmatprep.subr.mxu0 0.0
    %5359 = vmatpush1.msra.mxu0 0.0
    %5360 = vmatprep.subr.mxu0 0.0
    %5361 = vmatpush1.msra.mxu0 0.0
    %5362 = vmatprep.subr.mxu0 0.0
    %5363 = vmatpush1.msra.mxu0 0.0
    %5364 = vmatprep.subr.mxu0 0.0
    %5365 = vmatpush1.msra.mxu0 0.0
    %5366 = vmatprep.subr.mxu0 0.0
    %5367 = vmatpush1.msra.mxu0 0.0
    %5368 = vmatprep.subr.mxu0 0.0
    %5369 = vmatpush1.msra.mxu0 0.0
    %5370 = vmatprep.subr.mxu0 0.0
    %5371 = vmatpush1.msra.mxu0 0.0
    %5372 = vmatprep.subr.mxu0 0.0
    %5373 = vmatpush1.msra.mxu0 0.0
    %5374 = vmatprep.subr.mxu0 0.0
    %5375 = vmatpush1.msra.mxu0 0.0
    %5376 = vmatprep.subr.mxu0 0.0
    %5377 = vmatpush1.msra.mxu0 0.0
    %5378 = vmatprep.mubr.f32.mxu0 0.0
    %5379 = vmatmul.mubr.f32.gmra.mrb[0].mxu0 %v5312
    %v5380 = vpop.f32.mrb[0].mxu0
    %v5381 = vadd.f32 0.0, %v5380
    %v5382 = vpop.f32.mrb[0].mxu0
    %5383 = vdwg.mxu0
    %v5385 = vsel %vm3324, %v5310, 0
    %5387 = vmatprep.subr.mxu0 0.0
    %5388 = vmatpush1.msra.mxu0 %v5121
    %5389 = vmatprep.subr.mxu0 0.0
    %5390 = vmatpush1.msra.mxu0 %v5126
    %5391 = vmatprep.subr.mxu0 0.0
    %5392 = vmatpush1.msra.mxu0 0.0
    %5393 = vmatprep.subr.mxu0 0.0
    %5394 = vmatpush1.msra.mxu0 0.0
    %5395 = vmatprep.subr.mxu0 0.0
    %5396 = vmatpush1.msra.mxu0 0.0
    %5397 = vmatprep.subr.mxu0 0.0
    %5398 = vmatpush1.msra.mxu0 0.0
    %5399 = vmatprep.subr.mxu0 0.0
    %5400 = vmatpush1.msra.mxu0 0.0
    %5401 = vmatprep.subr.mxu0 0.0
    %5402 = vmatpush1.msra.mxu0 0.0
    %5403 = vmatprep.subr.mxu0 0.0
    %5404 = vmatpush1.msra.mxu0 0.0
    %5405 = vmatprep.subr.mxu0 0.0
    %5406 = vmatpush1.msra.mxu0 0.0
    %5407 = vmatprep.subr.mxu0 0.0
    %5408 = vmatpush1.msra.mxu0 0.0
    %5409 = vmatprep.subr.mxu0 0.0
    %5410 = vmatpush1.msra.mxu0 0.0
    %5411 = vmatprep.subr.mxu0 0.0
    %5412 = vmatpush1.msra.mxu0 0.0
    %5413 = vmatprep.subr.mxu0 0.0
    %5414 = vmatpush1.msra.mxu0 0.0
    %5415 = vmatprep.subr.mxu0 0.0
    %5416 = vmatpush1.msra.mxu0 0.0
    %5417 = vmatprep.subr.mxu0 0.0
    %5418 = vmatpush1.msra.mxu0 0.0
    %5419 = vmatprep.subr.mxu0 0.0
    %5420 = vmatpush1.msra.mxu0 0.0
    %5421 = vmatprep.subr.mxu0 0.0
    %5422 = vmatpush1.msra.mxu0 0.0
    %5423 = vmatprep.subr.mxu0 0.0
    %5424 = vmatpush1.msra.mxu0 0.0
    %5425 = vmatprep.subr.mxu0 0.0
    %5426 = vmatpush1.msra.mxu0 0.0
    %5427 = vmatprep.subr.mxu0 0.0
    %5428 = vmatpush1.msra.mxu0 0.0
    %5429 = vmatprep.subr.mxu0 0.0
    %5430 = vmatpush1.msra.mxu0 0.0
    %5431 = vmatprep.subr.mxu0 0.0
    %5432 = vmatpush1.msra.mxu0 0.0
    %5433 = vmatprep.subr.mxu0 0.0
    %5434 = vmatpush1.msra.mxu0 0.0
    %5435 = vmatprep.subr.mxu0 0.0
    %5436 = vmatpush1.msra.mxu0 0.0
    %5437 = vmatprep.subr.mxu0 0.0
    %5438 = vmatpush1.msra.mxu0 0.0
    %5439 = vmatprep.subr.mxu0 0.0
    %5440 = vmatpush1.msra.mxu0 0.0
    %5441 = vmatprep.subr.mxu0 0.0
    %5442 = vmatpush1.msra.mxu0 0.0
    %5443 = vmatprep.subr.mxu0 0.0
    %5444 = vmatpush1.msra.mxu0 0.0
    %5445 = vmatprep.subr.mxu0 0.0
    %5446 = vmatpush1.msra.mxu0 0.0
    %5447 = vmatprep.subr.mxu0 0.0
    %5448 = vmatpush1.msra.mxu0 0.0
    %5449 = vmatprep.subr.mxu0 0.0
    %5450 = vmatpush1.msra.mxu0 0.0
    %5451 = vmatprep.mubr.f32.mxu0 0.0
    %5452 = vmatmul.mubr.f32.gmra.mrb[0].mxu0 %v5385
    %v5453 = vpop.f32.mrb[0].mxu0
    %v5454 = vadd.f32 0.0, %v5453
    %v5455 = vpop.f32.mrb[0].mxu0
    %5456 = vdwg.mxu0
    %v5458 = vsel %vm437, %v5381, 0
    %v5461 = vsel %vm437, %v5454, 0
    %5463 = vmatprep.subr.mxu0 0.0
    %5464 = vmatpush1.msra.mxu0 %v2900
    %5465 = vmatprep.subr.mxu0 0.0
    %5466 = vmatpush1.msra.mxu0 0.0
    %5467 = vmatprep.subr.mxu0 0.0
    %5468 = vmatpush1.msra.mxu0 0.0
    %5469 = vmatprep.subr.mxu0 0.0
    %5470 = vmatpush1.msra.mxu0 0.0
    %5471 = vmatprep.subr.mxu0 0.0
    %5472 = vmatpush1.msra.mxu0 0.0
    %5473 = vmatprep.subr.mxu0 0.0
    %5474 = vmatpush1.msra.mxu0 0.0
    %5475 = vmatprep.subr.mxu0 0.0
    %5476 = vmatpush1.msra.mxu0 0.0
    %5477 = vmatprep.subr.mxu0 0.0
    %5478 = vmatpush1.msra.mxu0 0.0
    %5479 = vmatprep.subr.mxu0 0.0
    %5480 = vmatpush1.msra.mxu0 0.0
    %5481 = vmatprep.subr.mxu0 0.0
    %5482 = vmatpush1.msra.mxu0 0.0
    %5483 = vmatprep.subr.mxu0 0.0
    %5484 = vmatpush1.msra.mxu0 0.0
    %5485 = vmatprep.subr.mxu0 0.0
    %5486 = vmatpush1.msra.mxu0 0.0
    %5487 = vmatprep.subr.mxu0 0.0
    %5488 = vmatpush1.msra.mxu0 0.0
    %5489 = vmatprep.subr.mxu0 0.0
    %5490 = vmatpush1.msra.mxu0 0.0
    %5491 = vmatprep.subr.mxu0 0.0
    %5492 = vmatpush1.msra.mxu0 0.0
    %5493 = vmatprep.subr.mxu0 0.0
    %5494 = vmatpush1.msra.mxu0 0.0
    %5495 = vmatprep.subr.mxu0 0.0
    %5496 = vmatpush1.msra.mxu0 0.0
    %5497 = vmatprep.subr.mxu0 0.0
    %5498 = vmatpush1.msra.mxu0 0.0
    %5499 = vmatprep.subr.mxu0 0.0
    %5500 = vmatpush1.msra.mxu0 0.0
    %5501 = vmatprep.subr.mxu0 0.0
    %5502 = vmatpush1.msra.mxu0 0.0
    %5503 = vmatprep.subr.mxu0 0.0
    %5504 = vmatpush1.msra.mxu0 0.0
    %5505 = vmatprep.subr.mxu0 0.0
    %5506 = vmatpush1.msra.mxu0 0.0
    %5507 = vmatprep.subr.mxu0 0.0
    %5508 = vmatpush1.msra.mxu0 0.0
    %5509 = vmatprep.subr.mxu0 0.0
    %5510 = vmatpush1.msra.mxu0 0.0
    %5511 = vmatprep.subr.mxu0 0.0
    %5512 = vmatpush1.msra.mxu0 0.0
    %5513 = vmatprep.subr.mxu0 0.0
    %5514 = vmatpush1.msra.mxu0 0.0
    %5515 = vmatprep.subr.mxu0 0.0
    %5516 = vmatpush1.msra.mxu0 0.0
    %5517 = vmatprep.subr.mxu0 0.0
    %5518 = vmatpush1.msra.mxu0 0.0
    %5519 = vmatprep.subr.mxu0 0.0
    %5520 = vmatpush1.msra.mxu0 0.0
    %5521 = vmatprep.subr.mxu0 0.0
    %5522 = vmatpush1.msra.mxu0 0.0
    %5523 = vmatprep.subr.mxu0 0.0
    %5524 = vmatpush1.msra.mxu0 0.0
    %5525 = vmatprep.subr.mxu0 0.0
    %5526 = vmatpush1.msra.mxu0 0.0
    %5527 = vmatprep.mubr.f32.mxu0 0.0
    %5528 = vmatmul.mubr.f32.gmra.mrb[0].mxu0 %v5458
    %v5529 = vpop.f32.mrb[0].mxu0
    %v5530 = vadd.f32 0.0, %v5529
    %v5531 = vpop.f32.mrb[0].mxu0
    %5532 = vmatprep.mubr.f32.mxu0 0.0
    %5533 = vmatmul.mubr.f32.gmra.mrb[0].mxu0 %v5461
    %v5534 = vpop.f32.mrb[0].mxu0
    %v5535 = vadd.f32 0.0, %v5534
    %v5536 = vpop.f32.mrb[0].mxu0
    %5537 = vdwg.mxu0
    %v5538 = vadd.f32 %v4882, %v5530
    %v5539 = vadd.f32 %v4883, %v5535
    %v5540 = vadd.f32 %v2729, %v5538
    %v5541 = vadd.f32 %v2730, %v5539
    %v5542 = vld [vmem:[%s19] sm:$0xff]
    %v5543 = vld [vmem:[%s19 + $0x8] sm:$0xff]
    %v5544 = vld [vmem:[%s19 + $0x10] sm:$0xff]
    %v5545 = vld [vmem:[%s19 + $0x18] sm:$0xff]
    %v5546 = vld [vmem:[%s20] sm:$0x1]
    %v5548 = vlaneseq
    %v5549 = vshrl.u32 %v5548, 7
    %v5550 = vsub.s32 0, %v5549
    %v5551 = vrot.slane %v5546, %v5550
    %v5554 = vsel %vm84, %v5540, 0
    %v5557 = vsel %vm84, %v5541, 0
    %5559 = vmatprep.subr.mxu0 0.0
    %5560 = vmatpush1.msra.mxu0 %v5542
    %5561 = vmatprep.subr.mxu0 0.0
    %5562 = vmatpush1.msra.mxu0 %v5543
    %5563 = vmatprep.subr.mxu0 0.0
    %5564 = vmatpush1.msra.mxu0 %v5544
    %5565 = vmatprep.subr.mxu0 0.0
    %5566 = vmatpush1.msra.mxu0 %v5545
    %5567 = vmatprep.subr.mxu0 0.0
    %5568 = vmatpush1.msra.mxu0 0.0
    %5569 = vmatprep.subr.mxu0 0.0
    %5570 = vmatpush1.msra.mxu0 0.0
    %5571 = vmatprep.subr.mxu0 0.0
    %5572 = vmatpush1.msra.mxu0 0.0
    %5573 = vmatprep.subr.mxu0 0.0
    %5574 = vmatpush1.msra.mxu0 0.0
    %5575 = vmatprep.subr.mxu0 0.0
    %5576 = vmatpush1.msra.mxu0 0.0
    %5577 = vmatprep.subr.mxu0 0.0
    %5578 = vmatpush1.msra.mxu0 0.0
    %5579 = vmatprep.subr.mxu0 0.0
    %5580 = vmatpush1.msra.mxu0 0.0
    %5581 = vmatprep.subr.mxu0 0.0
    %5582 = vmatpush1.msra.mxu0 0.0
    %5583 = vmatprep.subr.mxu0 0.0
    %5584 = vmatpush1.msra.mxu0 0.0
    %5585 = vmatprep.subr.mxu0 0.0
    %5586 = vmatpush1.msra.mxu0 0.0
    %5587 = vmatprep.subr.mxu0 0.0
    %5588 = vmatpush1.msra.mxu0 0.0
    %5589 = vmatprep.subr.mxu0 0.0
    %5590 = vmatpush1.msra.mxu0 0.0
    %5591 = vmatprep.subr.mxu0 0.0
    %5592 = vmatpush1.msra.mxu0 0.0
    %5593 = vmatprep.subr.mxu0 0.0
    %5594 = vmatpush1.msra.mxu0 0.0
    %5595 = vmatprep.subr.mxu0 0.0
    %5596 = vmatpush1.msra.mxu0 0.0
    %5597 = vmatprep.subr.mxu0 0.0
    %5598 = vmatpush1.msra.mxu0 0.0
    %5599 = vmatprep.subr.mxu0 0.0
    %5600 = vmatpush1.msra.mxu0 0.0
    %5601 = vmatprep.subr.mxu0 0.0
    %5602 = vmatpush1.msra.mxu0 0.0
    %5603 = vmatprep.subr.mxu0 0.0
    %5604 = vmatpush1.msra.mxu0 0.0
    %5605 = vmatprep.subr.mxu0 0.0
    %5606 = vmatpush1.msra.mxu0 0.0
    %5607 = vmatprep.subr.mxu0 0.0
    %5608 = vmatpush1.msra.mxu0 0.0
    %5609 = vmatprep.subr.mxu0 0.0
    %5610 = vmatpush1.msra.mxu0 0.0
    %5611 = vmatprep.subr.mxu0 0.0
    %5612 = vmatpush1.msra.mxu0 0.0
    %5613 = vmatprep.subr.mxu0 0.0
    %5614 = vmatpush1.msra.mxu0 0.0
    %5615 = vmatprep.subr.mxu0 0.0
    %5616 = vmatpush1.msra.mxu0 0.0
    %5617 = vmatprep.subr.mxu0 0.0
    %5618 = vmatpush1.msra.mxu0 0.0
    %5619 = vmatprep.subr.mxu0 0.0
    %5620 = vmatpush1.msra.mxu0 0.0
    %5621 = vmatprep.subr.mxu0 0.0
    %5622 = vmatpush1.msra.mxu0 0.0
    %5623 = vmatprep.mubr.f32.mxu0 0.0
    %5624 = vmatmul.mubr.f32.gmra.mrb[0].mxu0 %v5554
    %v5625 = vpop.f32.mrb[0].mxu0
    %v5626 = vadd.f32 %v5551, %v5625
    %v5627 = vpop.f32.mrb[0].mxu0
    %5628 = vmatprep.mubr.f32.mxu0 0.0
    %5629 = vmatmul.mubr.f32.gmra.mrb[0].mxu0 %v5557
    %v5630 = vpop.f32.mrb[0].mxu0
    %v5631 = vadd.f32 %v5551, %v5630
    %v5632 = vpop.f32.mrb[0].mxu0
    %5633 = vdwg.mxu0
    %v5634 = vmul.f32 %v5626, 0.5
    %v5635 = vmul.f32 %v5631, 0.5
    %v5636 = vmul.f32 %v5626, 0.70710677
    %v5637 = vmul.f32 %v5631, 0.70710677
    %v5638 = verf.f32.pop %v5636
    %v5639 = verf.f32.pop %v5637
    %v5640 = vadd.f32 %v5638, 1.0
    %v5641 = vadd.f32 %v5639, 1.0
    %v5642 = vmul.f32 %v5634, %v5640
    %v5643 = vmul.f32 %v5635, %v5641
    %v5644 = vld [vmem:[%s21] sm:$0xff]
    %v5645 = vld [vmem:[%s21 + $0x8] sm:$0xff]
    %v5646 = vld [vmem:[%s21 + $0x10] sm:$0xff]
    %v5647 = vld [vmem:[%s21 + $0x18] sm:$0xff]
    %v5648 = vld [vmem:[%s21 + $0x20] sm:$0xff]
    %v5649 = vld [vmem:[%s21 + $0x28] sm:$0xff]
    %v5650 = vld [vmem:[%s21 + $0x30] sm:$0xff]
    %v5651 = vld [vmem:[%s21 + $0x38] sm:$0xff]
    %vm5652 = vcmask 523264
    %v5654 = vsel %vm5652, %v5642, 0
    %v5657 = vsel %vm5652, %v5643, 0
    %5659 = vmatprep.subr.mxu0 0.0
    %5660 = vmatpush1.msra.mxu0 %v5644
    %5661 = vmatprep.subr.mxu0 0.0
    %5662 = vmatpush1.msra.mxu0 %v5645
    %5663 = vmatprep.subr.mxu0 0.0
    %5664 = vmatpush1.msra.mxu0 %v5646
    %5665 = vmatprep.subr.mxu0 0.0
    %5666 = vmatpush1.msra.mxu0 %v5647
    %5667 = vmatprep.subr.mxu0 0.0
    %5668 = vmatpush1.msra.mxu0 %v5648
    %5669 = vmatprep.subr.mxu0 0.0
    %5670 = vmatpush1.msra.mxu0 %v5649
    %5671 = vmatprep.subr.mxu0 0.0
    %5672 = vmatpush1.msra.mxu0 %v5650
    %5673 = vmatprep.subr.mxu0 0.0
    %5674 = vmatpush1.msra.mxu0 %v5651
    %5675 = vmatprep.subr.mxu0 0.0
    %5676 = vmatpush1.msra.mxu0 0.0
    %5677 = vmatprep.subr.mxu0 0.0
    %5678 = vmatpush1.msra.mxu0 0.0
    %5679 = vmatprep.subr.mxu0 0.0
    %5680 = vmatpush1.msra.mxu0 0.0
    %5681 = vmatprep.subr.mxu0 0.0
    %5682 = vmatpush1.msra.mxu0 0.0
    %5683 = vmatprep.subr.mxu0 0.0
    %5684 = vmatpush1.msra.mxu0 0.0
    %5685 = vmatprep.subr.mxu0 0.0
    %5686 = vmatpush1.msra.mxu0 0.0
    %5687 = vmatprep.subr.mxu0 0.0
    %5688 = vmatpush1.msra.mxu0 0.0
    %5689 = vmatprep.subr.mxu0 0.0
    %5690 = vmatpush1.msra.mxu0 0.0
    %5691 = vmatprep.subr.mxu0 0.0
    %5692 = vmatpush1.msra.mxu0 0.0
    %5693 = vmatprep.subr.mxu0 0.0
    %5694 = vmatpush1.msra.mxu0 0.0
    %5695 = vmatprep.subr.mxu0 0.0
    %5696 = vmatpush1.msra.mxu0 0.0
    %5697 = vmatprep.subr.mxu0 0.0
    %5698 = vmatpush1.msra.mxu0 0.0
    %5699 = vmatprep.subr.mxu0 0.0
    %5700 = vmatpush1.msra.mxu0 0.0
    %5701 = vmatprep.subr.mxu0 0.0
    %5702 = vmatpush1.msra.mxu0 0.0
    %5703 = vmatprep.subr.mxu0 0.0
    %5704 = vmatpush1.msra.mxu0 0.0
    %5705 = vmatprep.subr.mxu0 0.0
    %5706 = vmatpush1.msra.mxu0 0.0
    %5707 = vmatprep.subr.mxu0 0.0
    %5708 = vmatpush1.msra.mxu0 0.0
    %5709 = vmatprep.subr.mxu0 0.0
    %5710 = vmatpush1.msra.mxu0 0.0
    %5711 = vmatprep.subr.mxu0 0.0
    %5712 = vmatpush1.msra.mxu0 0.0
    %5713 = vmatprep.subr.mxu0 0.0
    %5714 = vmatpush1.msra.mxu0 0.0
    %5715 = vmatprep.subr.mxu0 0.0
    %5716 = vmatpush1.msra.mxu0 0.0
    %5717 = vmatprep.subr.mxu0 0.0
    %5718 = vmatpush1.msra.mxu0 0.0
    %5719 = vmatprep.subr.mxu0 0.0
    %5720 = vmatpush1.msra.mxu0 0.0
    %5721 = vmatprep.subr.mxu0 0.0
    %5722 = vmatpush1.msra.mxu0 0.0
    %5723 = vmatprep.mubr.f32.mxu0 0.0
    %5724 = vmatmul.mubr.f32.gmra.mrb[0].mxu0 %v5654
    %v5725 = vpop.f32.mrb[0].mxu0
    %v5726 = vadd.f32 0.0, %v5725
    %v5727 = vpop.f32.mrb[0].mxu0
    %5728 = vmatprep.mubr.f32.mxu0 0.0
    %5729 = vmatmul.mubr.f32.gmra.mrb[0].mxu0 %v5657
    %v5730 = vpop.f32.mrb[0].mxu0
    %v5731 = vadd.f32 0.0, %v5730
    %v5732 = vpop.f32.mrb[0].mxu0
    %5733 = vdwg.mxu0
    %v5734 = vadd.f32 %v5540, %v5726
    %v5735 = vadd.f32 %v5541, %v5731
    %v5736 = vld [vmem:[%s22] sm:$0x1]
    %v5738 = vlaneseq
    %v5739 = vshrl.u32 %v5738, 7
    %v5740 = vsub.s32 0, %v5739
    %v5741 = vrot.slane %v5736, %v5740
    %v5743 = vadd.f32 %v5734, %v5741
    %v5744 = vadd.f32 %v5735, %v5741
    %5745 = vst.msk [vmem:[#allocation2] sm:$0xff] %vm84, %v5743
    %5746 = vst.msk [vmem:[#allocation2 + $0x8] sm:$0xff] %vm84, %v5744
    // Predicated region
    $region94: #{tpu_custom_call.1} parent=1 // pred_check
      _
    $region95: #{tpu_custom_call.1} parent=1 // pred_check_branch
      %5748 = sbr.rel (0) target = $region97
    $region96: #{tpu_custom_call.1} parent=1 // pred_region
      %s5750 = ssub.s32 256, 256
      %5751 = vsyncadd [#allocation3], %s5750
      %s5752 = sshll.u32 [#allocation2], 4
      %s5753 = int_to_ptr.vmem [resolvable:$true] %s5752
      %5758 = dma.vmem_to_hbm [thread:$0]  %s5753, 256, %s23, [#allocation3], 128, 128, 8
    $region97: #{tpu_custom_call.1} parent=1 // pred_fallthru
      _
    // Predicated region
    $region98: #{tpu_custom_call.1} parent=1 // pred_check
      _
    $region99: #{tpu_custom_call.1} parent=1 // pred_check_branch
      %5760 = sbr.rel (0) target = $region101
    $region100: #{tpu_custom_call.1} parent=1 // pred_region
      %5761 = dma.done [#allocation3], 256
    $region101: #{tpu_custom_call.1} parent=1 // pred_fallthru
      _
    %5762 = vsyncpa [#allocation3], 1

</llo_original>
